<compile_context>
chip_gen: v5e
topology: v5e:2x2
jax: 0.10.0
libtpu: 0.0.40
codegen_flags: <defaults>
</compile_context>

<pallas_src>
import functools

import jax
import jax.numpy as jnp
from jax import lax
from jax.experimental import pallas as pl
from jax.experimental.pallas import tpu as pltpu

THETA = 0.8


def cdcconv_kernel(x_ref, w_ref, o_ref, *, nb, h, w, c):
    """x_ref: (nb*h*w, c) f32 block; w_ref: (9, c, c) bf16 folded weight; o_ref like x_ref."""
    hw = h * w
    n = nb * hw
    x = x_ref[...]                                        # (n, c) f32, stacked images

    # Per-row image coordinates, replicated across the c lanes so the per-tap jnp.where
    # needs no broadcast inside the loop (JAX does not CSE broadcast_in_dim).
    r = lax.broadcasted_iota(jnp.int32, (n, c), 0)
    if (w & (w - 1)) == 0 and (h & (h - 1)) == 0:
        col = r & (w - 1)
        row = (r >> (w.bit_length() - 1)) & (h - 1)
    else:
        # Generic fallback (not exercised by the demo shapes).
        col = r % w
        row = (r // w) % h
    m_y = (row >= 1, None, row <= h - 2)                  # needed when ky == 0 / 2
    m_x = (col >= 1, None, col <= w - 2)                  # needed when kx == 0 / 2

    # Residual folded into the f32 accumulator init, then 9 accumulating MXU matmuls.
    acc = x.astype(jnp.float32)
    for k in range(9):
        ky, kx = k // 3, k % 3
        d = (ky - 1) * w + (kx - 1)
        # tap[r] = x[r + d]; circular wrap-around and cross-image reads are exactly the
        # rows zeroed by the H/W-boundary mask below, so a plain roll is sufficient.
        t = x if d == 0 else pltpu.roll(x, (-d) % n, axis=0)
        m = None
        if m_y[ky] is not None and m_x[kx] is not None:
            m = jnp.logical_and(m_y[ky], m_x[kx])
        elif m_y[ky] is not None:
            m = m_y[ky]
        elif m_x[kx] is not None:
            m = m_x[kx]
        if m is not None:
            t = jnp.where(m, t, 0.0)
        acc = acc + jnp.dot(t.astype(jnp.bfloat16), w_ref[k],
                            preferred_element_type=jnp.float32)
    o_ref[...] = acc.astype(o_ref.dtype)


def build_effective_weight(w_h5, w_d5, alpha, theta):
    """Fold both cross-conv branches, their theta*1x1 'diff' kernels and the sigmoid(alpha)
    blend into a single tap-major (9, C_in, C_out) weight.  Tap layouts match the PyTorch
    cat(...).view(C_out, C_in, 3, 3) of the two branches exactly."""
    co, ci = w_h5.shape[0], w_h5.shape[1]
    s = jax.nn.sigmoid(alpha.reshape(()))
    wh = w_h5[:, :, 0, :]                      # (Co, Ci, 5)
    wd = w_d5[:, :, 0, :]
    z = jnp.zeros((co, ci), w_h5.dtype)
    h_taps = [z, wh[..., 0], z,
              wh[..., 1], wh[..., 2], wh[..., 3],
              z, wh[..., 4], z]                # "+" cross
    d_taps = [wd[..., 0], z, wd[..., 1],
              z, wd[..., 2], z,
              wd[..., 3], z, wd[..., 4]]       # "x" cross
    blended = [s * a + (1.0 - s) * b for a, b in zip(h_taps, d_taps)]
    diff = s * wh.sum(-1) + (1.0 - s) * wd.sum(-1)     # the two 1x1 "diff" kernels, blended
    blended[4] = blended[4] - theta * diff             # 1x1 conv == centre tap of the 3x3
    return jnp.stack([t.T for t in blended], axis=0)   # (9, Ci, Co), tap-major


def _num_tensorcores_per_chip():
    """Best-effort TensorCore-per-chip count: 2 on v7x (and v4/v5p megacore), else 1."""
    try:
        kind = jax.devices()[0].device_kind.lower()
        if ("v7" in kind) or ("v4" in kind) or ("v5p" in kind):
            return 2
    except Exception:
        pass
    try:
        info = pltpu.get_tpu_info()
        for attr in ("num_cores", "core_count", "num_tensorcores"):
            v = getattr(info, attr, None)
            if v:
                return int(v)
    except Exception:
        pass
    return 1


def _pick_nb(b):
    """Images per grid step.  Single-TC chips: one step (the grid is a serial loop, extra
    steps are pure overhead at this problem size).  Multi-TC chips: one step per TensorCore
    so the 'parallel' grid splits the batch across cores."""
    n_tc = _num_tensorcores_per_chip()
    if n_tc <= 1 or b < n_tc:
        return b
    nb = max(1, b // n_tc)
    while b % nb:
        nb -= 1
    return nb


def cdcconv_forward(x, w_h5, w_d5, alpha, theta=THETA, nb=None):
    b, h, w, c = x.shape
    assert w_h5.shape == (c, c, 1, 5) and w_d5.shape == (c, c, 1, 5)
    hw = h * w
    if nb is None:
        nb = _pick_nb(b)
    assert b % nb == 0

    # bf16 MXU operands; the kernel keeps an f32 accumulator and f32 residual add.
    w_eff = build_effective_weight(w_h5, w_d5, alpha, theta).astype(jnp.bfloat16)
    x_flat = x.reshape(b * hw, c)              # stacked batch; metadata-only reshape in HBM

    kernel = functools.partial(cdcconv_kernel, nb=nb, h=h, w=w, c=c)
    out = pl.pallas_call(
        kernel,
        out_shape=jax.ShapeDtypeStruct((b * hw, c), x.dtype),
        grid_spec=pltpu.PrefetchScalarGridSpec(
            num_scalar_prefetch=0,
            grid=(b // nb,),
            in_specs=[
                pl.BlockSpec((nb * hw, c), lambda i: (i, 0)),     # nb stacked images / step
                # Folded weight: constant index_map -> fetched once and kept resident.
                # (Double-buffering it costs < 150 KB here; single-buffering not needed.)
                pl.BlockSpec((9, c, c), lambda i: (0, 0, 0)),
            ],
            out_specs=pl.BlockSpec((nb * hw, c), lambda i: (i, 0)),
        ),
        compiler_params=pltpu.CompilerParams(
            dimension_semantics=("parallel",)),
        # NOTE: for large images (e.g. 256x256) add an H-tiled halo variant — live VMEM is
        # ~10x the image bytes here, fine at 16x16x64 but not on v7x's 64 MiB VMEM.
    )(x_flat, w_eff)
    return out.reshape(b, h, w, c)


def ref_forward(x, w_h5, w_d5, alpha, theta=THETA):
    """Pure-JAX NHWC re-implementation of the exact PyTorch module structure (unfused)."""
    def branch(w5, zero_pattern):
        co, ci = w5.shape[0], w5.shape[1]
        wt = w5[:, :, 0, :]                               # (Co, Ci, 5)
        z = jnp.zeros((co, ci), w5.dtype)
        taps, k = [], 0
        for is_zero in zero_pattern:
            if is_zero:
                taps.append(z)
            else:
                taps.append(wt[..., k]); k += 1
        w33 = jnp.stack(taps, axis=-1).reshape(co, ci, 3, 3)   # OIHW
        w_hwio = jnp.transpose(w33, (2, 3, 1, 0))
        out_normal = lax.conv_general_dilated(
            x, w_hwio, (1, 1), ((1, 1), (1, 1)),
            dimension_numbers=("NHWC", "HWIO", "NHWC"),
            precision=lax.Precision.HIGHEST)
        kernel_diff = wt.sum(-1)                               # (Co, Ci)
        out_diff = jnp.einsum("bhwc,oc->bhwo", x, kernel_diff,
                              precision=lax.Precision.HIGHEST)
        return out_normal - theta * out_diff

    out1 = branch(w_h5, [1, 0, 1, 0, 0, 0, 1, 0, 1])   # Conv2d_Hori_Veri_Cross
    out2 = branch(w_d5, [0, 1, 0, 1, 0, 1, 0, 1, 0])   # Conv2d_Diag_Cross
    s = jax.nn.sigmoid(alpha.reshape(()))
    return s * out1 + (1.0 - s) * out2 + x


if __name__ == "__main__":
    B, H, W, C = 4, 16, 16, 64
    key = jax.random.PRNGKey(0)
    k1, k2, k3, k4 = jax.random.split(key, 4)

    scale = 1.0 / (5.0 * C) ** 0.5
    w_h = jax.random.normal(k1, (C, C, 1, 5), jnp.float32) * scale   # torch Conv2d(1,5).weight
    w_d = jax.random.normal(k2, (C, C, 1, 5), jnp.float32) * scale
    alpha = jax.random.normal(k3, (1,), jnp.float32)                 # nn.Parameter of shape (1,)
    x = jax.random.normal(k4, (B, H, W, C), jnp.float32)

    fwd = jax.jit(cdcconv_forward)
    out = jax.block_until_ready(fwd(x, w_h, w_d, alpha))
    ref = ref_forward(x, w_h, w_d, alpha)

    assert out.shape == (B, H, W, C)
    max_err = float(jnp.max(jnp.abs(out - ref)))
    # bf16 MXU operands with f32 accumulation vs. an all-f32 HIGHEST-precision reference.
    assert jnp.allclose(out, ref, rtol=2e-2, atol=2e-2), f"max abs err = {max_err}"
    print("KERNEL_OK")
</pallas_src>

<mosaic_0001>
module attributes {stable_mosaic.version = 11 : i64} {
  func.func @cdcconv_kernel(%arg0: i32, %arg1: memref<1024x64xf32, #tpu.memory_space<vmem>>, %arg2: memref<9x64x64xbf16, #tpu.memory_space<vmem>>, %arg3: memref<1024x64xf32, #tpu.memory_space<vmem>>) attributes {dimension_semantics = [#tpu.dimension_semantics<parallel>], iteration_bounds = array<i64: 1>, scalar_prefetch = 0 : i64, scratch_operands = 0 : i64, tpu.core_type = #tpu.core_type<tc>, window_params = [{transform_indices = @transform_0, window_bounds = array<i64: 1024, 64>}, {pipeline_mode = #tpu.pipeline_mode<synchronous>, transform_indices = @transform_1, window_bounds = array<i64: 9, 64, 64>}, {transform_indices = @transform_2, window_bounds = array<i64: 1024, 64>}]} {
    %c0 = arith.constant 0 : index
    %c0_0 = arith.constant 0 : index
    %0 = vector.load %arg1[%c0, %c0_0] : memref<1024x64xf32, #tpu.memory_space<vmem>>, vector<1024x64xf32>
    %1 = tpu.iota {dimensions = array<i32: 0>} : vector<1024x64xi32>
    %c15_i32 = arith.constant 15 : i32
    %2 = vector.broadcast %c15_i32 : i32 to vector<1024x64xi32>
    %3 = arith.andi %1, %2 : vector<1024x64xi32>
    %c4_i32 = arith.constant 4 : i32
    %4 = vector.broadcast %c4_i32 : i32 to vector<1024x64xi32>
    %5 = arith.shrsi %1, %4 : vector<1024x64xi32>
    %c15_i32_1 = arith.constant 15 : i32
    %6 = vector.broadcast %c15_i32_1 : i32 to vector<1024x64xi32>
    %7 = arith.andi %5, %6 : vector<1024x64xi32>
    %c1_i32 = arith.constant 1 : i32
    %8 = vector.broadcast %c1_i32 : i32 to vector<1024x64xi32>
    %9 = arith.cmpi sge, %7, %8 : vector<1024x64xi32>
    %c14_i32 = arith.constant 14 : i32
    %10 = vector.broadcast %c14_i32 : i32 to vector<1024x64xi32>
    %11 = arith.cmpi sle, %7, %10 : vector<1024x64xi32>
    %c1_i32_2 = arith.constant 1 : i32
    %12 = vector.broadcast %c1_i32_2 : i32 to vector<1024x64xi32>
    %13 = arith.cmpi sge, %3, %12 : vector<1024x64xi32>
    %c14_i32_3 = arith.constant 14 : i32
    %14 = vector.broadcast %c14_i32_3 : i32 to vector<1024x64xi32>
    %15 = arith.cmpi sle, %3, %14 : vector<1024x64xi32>
    %c17_i32 = arith.constant 17 : i32
    %16 = tpu.dynamic_rotate %0 by %c17_i32 dim 0 : vector<1024x64xf32>, i32 -> vector<1024x64xf32>
    %17 = arith.andi %9, %13 : vector<1024x64xi1>
    %cst = arith.constant 0.000000e+00 : f32
    %18 = vector.broadcast %cst : f32 to vector<1024x64xf32>
    %19 = arith.select %17, %16, %18 : vector<1024x64xi1>, vector<1024x64xf32>
    %20 = arith.truncf %19 : vector<1024x64xf32> to vector<1024x64xbf16>
    %c0_4 = arith.constant 0 : index
    %c0_5 = arith.constant 0 : index
    %c0_6 = arith.constant 0 : index
    %21 = vector.load %arg2[%c0_4, %c0_5, %c0_6] : memref<9x64x64xbf16, #tpu.memory_space<vmem>>, vector<1x64x64xbf16>
    %22 = vector.shape_cast %21 : vector<1x64x64xbf16> to vector<64x64xbf16>
    %cst_7 = arith.constant dense<0.000000e+00> : vector<1024x64xf32>
    %23 = tpu.matmul %20, %22, %cst_7 {dimension_numbers = #tpu.dot_dimension_numbers<[1], [0], [0], [1], [0, 0, 1, 1], [], []>} : vector<1024x64xbf16>, vector<64x64xbf16>, vector<1024x64xf32> -> vector<1024x64xf32>
    %24 = arith.addf %0, %23 : vector<1024x64xf32>
    %c16_i32 = arith.constant 16 : i32
    %25 = tpu.dynamic_rotate %0 by %c16_i32 dim 0 : vector<1024x64xf32>, i32 -> vector<1024x64xf32>
    %cst_8 = arith.constant 0.000000e+00 : f32
    %26 = vector.broadcast %cst_8 : f32 to vector<1024x64xf32>
    %27 = arith.select %9, %25, %26 : vector<1024x64xi1>, vector<1024x64xf32>
    %28 = arith.truncf %27 : vector<1024x64xf32> to vector<1024x64xbf16>
    %c1 = arith.constant 1 : index
    %c0_9 = arith.constant 0 : index
    %c0_10 = arith.constant 0 : index
    %29 = vector.load %arg2[%c1, %c0_9, %c0_10] : memref<9x64x64xbf16, #tpu.memory_space<vmem>>, vector<1x64x64xbf16>
    %30 = vector.shape_cast %29 : vector<1x64x64xbf16> to vector<64x64xbf16>
    %cst_11 = arith.constant dense<0.000000e+00> : vector<1024x64xf32>
    %31 = tpu.matmul %28, %30, %cst_11 {dimension_numbers = #tpu.dot_dimension_numbers<[1], [0], [0], [1], [0, 0, 1, 1], [], []>} : vector<1024x64xbf16>, vector<64x64xbf16>, vector<1024x64xf32> -> vector<1024x64xf32>
    %32 = arith.addf %24, %31 : vector<1024x64xf32>
    %c15_i32_12 = arith.constant 15 : i32
    %33 = tpu.dynamic_rotate %0 by %c15_i32_12 dim 0 : vector<1024x64xf32>, i32 -> vector<1024x64xf32>
    %34 = arith.andi %9, %15 : vector<1024x64xi1>
    %cst_13 = arith.constant 0.000000e+00 : f32
    %35 = vector.broadcast %cst_13 : f32 to vector<1024x64xf32>
    %36 = arith.select %34, %33, %35 : vector<1024x64xi1>, vector<1024x64xf32>
    %37 = arith.truncf %36 : vector<1024x64xf32> to vector<1024x64xbf16>
    %c2 = arith.constant 2 : index
    %c0_14 = arith.constant 0 : index
    %c0_15 = arith.constant 0 : index
    %38 = vector.load %arg2[%c2, %c0_14, %c0_15] : memref<9x64x64xbf16, #tpu.memory_space<vmem>>, vector<1x64x64xbf16>
    %39 = vector.shape_cast %38 : vector<1x64x64xbf16> to vector<64x64xbf16>
    %cst_16 = arith.constant dense<0.000000e+00> : vector<1024x64xf32>
    %40 = tpu.matmul %37, %39, %cst_16 {dimension_numbers = #tpu.dot_dimension_numbers<[1], [0], [0], [1], [0, 0, 1, 1], [], []>} : vector<1024x64xbf16>, vector<64x64xbf16>, vector<1024x64xf32> -> vector<1024x64xf32>
    %41 = arith.addf %32, %40 : vector<1024x64xf32>
    %c1_i32_17 = arith.constant 1 : i32
    %42 = tpu.dynamic_rotate %0 by %c1_i32_17 dim 0 : vector<1024x64xf32>, i32 -> vector<1024x64xf32>
    %cst_18 = arith.constant 0.000000e+00 : f32
    %43 = vector.broadcast %cst_18 : f32 to vector<1024x64xf32>
    %44 = arith.select %13, %42, %43 : vector<1024x64xi1>, vector<1024x64xf32>
    %45 = arith.truncf %44 : vector<1024x64xf32> to vector<1024x64xbf16>
    %c3 = arith.constant 3 : index
    %c0_19 = arith.constant 0 : index
    %c0_20 = arith.constant 0 : index
    %46 = vector.load %arg2[%c3, %c0_19, %c0_20] : memref<9x64x64xbf16, #tpu.memory_space<vmem>>, vector<1x64x64xbf16>
    %47 = vector.shape_cast %46 : vector<1x64x64xbf16> to vector<64x64xbf16>
    %cst_21 = arith.constant dense<0.000000e+00> : vector<1024x64xf32>
    %48 = tpu.matmul %45, %47, %cst_21 {dimension_numbers = #tpu.dot_dimension_numbers<[1], [0], [0], [1], [0, 0, 1, 1], [], []>} : vector<1024x64xbf16>, vector<64x64xbf16>, vector<1024x64xf32> -> vector<1024x64xf32>
    %49 = arith.addf %41, %48 : vector<1024x64xf32>
    %50 = arith.truncf %0 : vector<1024x64xf32> to vector<1024x64xbf16>
    %c4 = arith.constant 4 : index
    %c0_22 = arith.constant 0 : index
    %c0_23 = arith.constant 0 : index
    %51 = vector.load %arg2[%c4, %c0_22, %c0_23] : memref<9x64x64xbf16, #tpu.memory_space<vmem>>, vector<1x64x64xbf16>
    %52 = vector.shape_cast %51 : vector<1x64x64xbf16> to vector<64x64xbf16>
    %cst_24 = arith.constant dense<0.000000e+00> : vector<1024x64xf32>
    %53 = tpu.matmul %50, %52, %cst_24 {dimension_numbers = #tpu.dot_dimension_numbers<[1], [0], [0], [1], [0, 0, 1, 1], [], []>} : vector<1024x64xbf16>, vector<64x64xbf16>, vector<1024x64xf32> -> vector<1024x64xf32>
    %54 = arith.addf %49, %53 : vector<1024x64xf32>
    %c1023_i32 = arith.constant 1023 : i32
    %55 = tpu.dynamic_rotate %0 by %c1023_i32 dim 0 : vector<1024x64xf32>, i32 -> vector<1024x64xf32>
    %cst_25 = arith.constant 0.000000e+00 : f32
    %56 = vector.broadcast %cst_25 : f32 to vector<1024x64xf32>
    %57 = arith.select %15, %55, %56 : vector<1024x64xi1>, vector<1024x64xf32>
    %58 = arith.truncf %57 : vector<1024x64xf32> to vector<1024x64xbf16>
    %c5 = arith.constant 5 : index
    %c0_26 = arith.constant 0 : index
    %c0_27 = arith.constant 0 : index
    %59 = vector.load %arg2[%c5, %c0_26, %c0_27] : memref<9x64x64xbf16, #tpu.memory_space<vmem>>, vector<1x64x64xbf16>
    %60 = vector.shape_cast %59 : vector<1x64x64xbf16> to vector<64x64xbf16>
    %cst_28 = arith.constant dense<0.000000e+00> : vector<1024x64xf32>
    %61 = tpu.matmul %58, %60, %cst_28 {dimension_numbers = #tpu.dot_dimension_numbers<[1], [0], [0], [1], [0, 0, 1, 1], [], []>} : vector<1024x64xbf16>, vector<64x64xbf16>, vector<1024x64xf32> -> vector<1024x64xf32>
    %62 = arith.addf %54, %61 : vector<1024x64xf32>
    %c1009_i32 = arith.constant 1009 : i32
    %63 = tpu.dynamic_rotate %0 by %c1009_i32 dim 0 : vector<1024x64xf32>, i32 -> vector<1024x64xf32>
    %64 = arith.andi %11, %13 : vector<1024x64xi1>
    %cst_29 = arith.constant 0.000000e+00 : f32
    %65 = vector.broadcast %cst_29 : f32 to vector<1024x64xf32>
    %66 = arith.select %64, %63, %65 : vector<1024x64xi1>, vector<1024x64xf32>
    %67 = arith.truncf %66 : vector<1024x64xf32> to vector<1024x64xbf16>
    %c6 = arith.constant 6 : index
    %c0_30 = arith.constant 0 : index
    %c0_31 = arith.constant 0 : index
    %68 = vector.load %arg2[%c6, %c0_30, %c0_31] : memref<9x64x64xbf16, #tpu.memory_space<vmem>>, vector<1x64x64xbf16>
    %69 = vector.shape_cast %68 : vector<1x64x64xbf16> to vector<64x64xbf16>
    %cst_32 = arith.constant dense<0.000000e+00> : vector<1024x64xf32>
    %70 = tpu.matmul %67, %69, %cst_32 {dimension_numbers = #tpu.dot_dimension_numbers<[1], [0], [0], [1], [0, 0, 1, 1], [], []>} : vector<1024x64xbf16>, vector<64x64xbf16>, vector<1024x64xf32> -> vector<1024x64xf32>
    %71 = arith.addf %62, %70 : vector<1024x64xf32>
    %c1008_i32 = arith.constant 1008 : i32
    %72 = tpu.dynamic_rotate %0 by %c1008_i32 dim 0 : vector<1024x64xf32>, i32 -> vector<1024x64xf32>
    %cst_33 = arith.constant 0.000000e+00 : f32
    %73 = vector.broadcast %cst_33 : f32 to vector<1024x64xf32>
    %74 = arith.select %11, %72, %73 : vector<1024x64xi1>, vector<1024x64xf32>
    %75 = arith.truncf %74 : vector<1024x64xf32> to vector<1024x64xbf16>
    %c7 = arith.constant 7 : index
    %c0_34 = arith.constant 0 : index
    %c0_35 = arith.constant 0 : index
    %76 = vector.load %arg2[%c7, %c0_34, %c0_35] : memref<9x64x64xbf16, #tpu.memory_space<vmem>>, vector<1x64x64xbf16>
    %77 = vector.shape_cast %76 : vector<1x64x64xbf16> to vector<64x64xbf16>
    %cst_36 = arith.constant dense<0.000000e+00> : vector<1024x64xf32>
    %78 = tpu.matmul %75, %77, %cst_36 {dimension_numbers = #tpu.dot_dimension_numbers<[1], [0], [0], [1], [0, 0, 1, 1], [], []>} : vector<1024x64xbf16>, vector<64x64xbf16>, vector<1024x64xf32> -> vector<1024x64xf32>
    %79 = arith.addf %71, %78 : vector<1024x64xf32>
    %c1007_i32 = arith.constant 1007 : i32
    %80 = tpu.dynamic_rotate %0 by %c1007_i32 dim 0 : vector<1024x64xf32>, i32 -> vector<1024x64xf32>
    %81 = arith.andi %11, %15 : vector<1024x64xi1>
    %cst_37 = arith.constant 0.000000e+00 : f32
    %82 = vector.broadcast %cst_37 : f32 to vector<1024x64xf32>
    %83 = arith.select %81, %80, %82 : vector<1024x64xi1>, vector<1024x64xf32>
    %84 = arith.truncf %83 : vector<1024x64xf32> to vector<1024x64xbf16>
    %c8 = arith.constant 8 : index
    %c0_38 = arith.constant 0 : index
    %c0_39 = arith.constant 0 : index
    %85 = vector.load %arg2[%c8, %c0_38, %c0_39] : memref<9x64x64xbf16, #tpu.memory_space<vmem>>, vector<1x64x64xbf16>
    %86 = vector.shape_cast %85 : vector<1x64x64xbf16> to vector<64x64xbf16>
    %cst_40 = arith.constant dense<0.000000e+00> : vector<1024x64xf32>
    %87 = tpu.matmul %84, %86, %cst_40 {dimension_numbers = #tpu.dot_dimension_numbers<[1], [0], [0], [1], [0, 0, 1, 1], [], []>} : vector<1024x64xbf16>, vector<64x64xbf16>, vector<1024x64xf32> -> vector<1024x64xf32>
    %88 = arith.addf %79, %87 : vector<1024x64xf32>
    %c0_41 = arith.constant 0 : index
    %c0_42 = arith.constant 0 : index
    %89 = vector.load %arg3[%c0_41, %c0_42] : memref<1024x64xf32, #tpu.memory_space<vmem>>, vector<1024x64xf32>
    tpu.vector_store %arg3[%c0_41, %c0_42], %88 {strides = array<i32>} : memref<1024x64xf32, #tpu.memory_space<vmem>>, vector<1024x64xf32>,
    return
  }
  func.func @transform_0(%arg0: i32) -> (i32, i32) {
    %c0_i32 = arith.constant 0 : i32
    %c0_i32_0 = arith.constant 0 : i32
    return %arg0, %c0_i32 : i32, i32
  }
  func.func @transform_1(%arg0: i32) -> (i32, i32, i32) {
    %c0_i32 = arith.constant 0 : i32
    %c0_i32_0 = arith.constant 0 : i32
    %c0_i32_1 = arith.constant 0 : i32
    %c0_i32_2 = arith.constant 0 : i32
    return %c0_i32, %c0_i32_0, %c0_i32_1 : i32, i32, i32
  }
  func.func @transform_2(%arg0: i32) -> (i32, i32) {
    %c0_i32 = arith.constant 0 : i32
    %c0_i32_0 = arith.constant 0 : i32
    return %arg0, %c0_i32 : i32, i32
  }
}

</mosaic_0001>

<llo_original>
// kernel: cdcconv_forward.1
$region0: #{cdcconv_forward.1}
  #allocation0 [shape = 'u32[]', space=smem, size = 0x4, offset = 0x4, fixed_abs, tag = 'smem constant byte address 0x4 - core index']
  #allocation1 [shape = 'u32[72,128]{1,0:T(1,128)}', space=vmem, size = 0x9000, scoped, tag = 'internal scratch']
  %s0 = inlined_call_operand.vmem [shape: f32[1024,64], index: 0, kind: input, shape index: {}]
  %s1 = inlined_call_operand.vmem [shape: bf16[9,64,64], index: 1, kind: input, shape index: {}]
  %s2 = inlined_call_operand.hbm [shape: f32[1024,64], index: 2, kind: output, shape index: {}]
  %s3 = sld [smem:[#allocation0]]
  $region18: #{cdcconv_forward.1} parent=0
    _
  %s5 = ssub.s32 1, %s3
  %s6 = scalar_select 0, %s5, %s3
  $region1: #{cdcconv_forward.1} parent=0
    #allocation2 [shape = 'u8[524288]{0}', space=vmem, size = 0x80000, scoped, tag = 'output window, operand 0, single buffered']
    #allocation3 [shape = 's32[1]{0}', space=sflag, size = 0x4, scoped, tag = 'scoped memory for cdcconv_forward.1']
    %7 = vsyncpa [#allocation3], 0
    // Predicated region
    $region2: #{cdcconv_forward.1} parent=1 // pred_check
      _
    $region3: #{cdcconv_forward.1} parent=1 // pred_check_branch
      %9 = sbr.rel (0) target = $region5
    $region4: #{cdcconv_forward.1} parent=1 // pred_region
      _
    $region5: #{cdcconv_forward.1} parent=1 // pred_fallthru
      _
    // Predicated region
    $region6: #{cdcconv_forward.1} parent=1 // pred_check
      _
    $region7: #{cdcconv_forward.1} parent=1 // pred_check_branch
      %11 = sbr.rel (0) target = $region9
    $region8: #{cdcconv_forward.1} parent=1 // pred_region
      _
    $region9: #{cdcconv_forward.1} parent=1 // pred_fallthru
      _
    %v13 = vld [vmem:[%s0] sm:$0xff]
    %v14 = vld [vmem:[%s0 + $0x8] sm:$0xff]
    %v15 = vld [vmem:[%s0 + $0x10] sm:$0xff]
    %v16 = vld [vmem:[%s0 + $0x18] sm:$0xff]
    %v17 = vld [vmem:[%s0 + $0x20] sm:$0xff]
    %v18 = vld [vmem:[%s0 + $0x28] sm:$0xff]
    %v19 = vld [vmem:[%s0 + $0x30] sm:$0xff]
    %v20 = vld [vmem:[%s0 + $0x38] sm:$0xff]
    %v21 = vld [vmem:[%s0 + $0x40] sm:$0xff]
    %v22 = vld [vmem:[%s0 + $0x48] sm:$0xff]
    %v23 = vld [vmem:[%s0 + $0x50] sm:$0xff]
    %v24 = vld [vmem:[%s0 + $0x58] sm:$0xff]
    %v25 = vld [vmem:[%s0 + $0x60] sm:$0xff]
    %v26 = vld [vmem:[%s0 + $0x68] sm:$0xff]
    %v27 = vld [vmem:[%s0 + $0x70] sm:$0xff]
    %v28 = vld [vmem:[%s0 + $0x78] sm:$0xff]
    %v29 = vld [vmem:[%s0 + $0x80] sm:$0xff]
    %v30 = vld [vmem:[%s0 + $0x88] sm:$0xff]
    %v31 = vld [vmem:[%s0 + $0x90] sm:$0xff]
    %v32 = vld [vmem:[%s0 + $0x98] sm:$0xff]
    %v33 = vld [vmem:[%s0 + $0xa0] sm:$0xff]
    %v34 = vld [vmem:[%s0 + $0xa8] sm:$0xff]
    %v35 = vld [vmem:[%s0 + $0xb0] sm:$0xff]
    %v36 = vld [vmem:[%s0 + $0xb8] sm:$0xff]
    %v37 = vld [vmem:[%s0 + $0xc0] sm:$0xff]
    %v38 = vld [vmem:[%s0 + $0xc8] sm:$0xff]
    %v39 = vld [vmem:[%s0 + $0xd0] sm:$0xff]
    %v40 = vld [vmem:[%s0 + $0xd8] sm:$0xff]
    %v41 = vld [vmem:[%s0 + $0xe0] sm:$0xff]
    %v42 = vld [vmem:[%s0 + $0xe8] sm:$0xff]
    %v43 = vld [vmem:[%s0 + $0xf0] sm:$0xff]
    %v44 = vld [vmem:[%s0 + $0xf8] sm:$0xff]
    %v45 = vld [vmem:[%s0 + $0x100] sm:$0xff]
    %v46 = vld [vmem:[%s0 + $0x108] sm:$0xff]
    %v47 = vld [vmem:[%s0 + $0x110] sm:$0xff]
    %v48 = vld [vmem:[%s0 + $0x118] sm:$0xff]
    %v49 = vld [vmem:[%s0 + $0x120] sm:$0xff]
    %v50 = vld [vmem:[%s0 + $0x128] sm:$0xff]
    %v51 = vld [vmem:[%s0 + $0x130] sm:$0xff]
    %v52 = vld [vmem:[%s0 + $0x138] sm:$0xff]
    %v53 = vld [vmem:[%s0 + $0x140] sm:$0xff]
    %v54 = vld [vmem:[%s0 + $0x148] sm:$0xff]
    %v55 = vld [vmem:[%s0 + $0x150] sm:$0xff]
    %v56 = vld [vmem:[%s0 + $0x158] sm:$0xff]
    %v57 = vld [vmem:[%s0 + $0x160] sm:$0xff]
    %v58 = vld [vmem:[%s0 + $0x168] sm:$0xff]
    %v59 = vld [vmem:[%s0 + $0x170] sm:$0xff]
    %v60 = vld [vmem:[%s0 + $0x178] sm:$0xff]
    %v61 = vld [vmem:[%s0 + $0x180] sm:$0xff]
    %v62 = vld [vmem:[%s0 + $0x188] sm:$0xff]
    %v63 = vld [vmem:[%s0 + $0x190] sm:$0xff]
    %v64 = vld [vmem:[%s0 + $0x198] sm:$0xff]
    %v65 = vld [vmem:[%s0 + $0x1a0] sm:$0xff]
    %v66 = vld [vmem:[%s0 + $0x1a8] sm:$0xff]
    %v67 = vld [vmem:[%s0 + $0x1b0] sm:$0xff]
    %v68 = vld [vmem:[%s0 + $0x1b8] sm:$0xff]
    %v69 = vld [vmem:[%s0 + $0x1c0] sm:$0xff]
    %v70 = vld [vmem:[%s0 + $0x1c8] sm:$0xff]
    %v71 = vld [vmem:[%s0 + $0x1d0] sm:$0xff]
    %v72 = vld [vmem:[%s0 + $0x1d8] sm:$0xff]
    %v73 = vld [vmem:[%s0 + $0x1e0] sm:$0xff]
    %v74 = vld [vmem:[%s0 + $0x1e8] sm:$0xff]
    %v75 = vld [vmem:[%s0 + $0x1f0] sm:$0xff]
    %v76 = vld [vmem:[%s0 + $0x1f8] sm:$0xff]
    %v77 = vld [vmem:[%s0 + $0x200] sm:$0xff]
    %v78 = vld [vmem:[%s0 + $0x208] sm:$0xff]
    %v79 = vld [vmem:[%s0 + $0x210] sm:$0xff]
    %v80 = vld [vmem:[%s0 + $0x218] sm:$0xff]
    %v81 = vld [vmem:[%s0 + $0x220] sm:$0xff]
    %v82 = vld [vmem:[%s0 + $0x228] sm:$0xff]
    %v83 = vld [vmem:[%s0 + $0x230] sm:$0xff]
    %v84 = vld [vmem:[%s0 + $0x238] sm:$0xff]
    %v85 = vld [vmem:[%s0 + $0x240] sm:$0xff]
    %v86 = vld [vmem:[%s0 + $0x248] sm:$0xff]
    %v87 = vld [vmem:[%s0 + $0x250] sm:$0xff]
    %v88 = vld [vmem:[%s0 + $0x258] sm:$0xff]
    %v89 = vld [vmem:[%s0 + $0x260] sm:$0xff]
    %v90 = vld [vmem:[%s0 + $0x268] sm:$0xff]
    %v91 = vld [vmem:[%s0 + $0x270] sm:$0xff]
    %v92 = vld [vmem:[%s0 + $0x278] sm:$0xff]
    %v93 = vld [vmem:[%s0 + $0x280] sm:$0xff]
    %v94 = vld [vmem:[%s0 + $0x288] sm:$0xff]
    %v95 = vld [vmem:[%s0 + $0x290] sm:$0xff]
    %v96 = vld [vmem:[%s0 + $0x298] sm:$0xff]
    %v97 = vld [vmem:[%s0 + $0x2a0] sm:$0xff]
    %v98 = vld [vmem:[%s0 + $0x2a8] sm:$0xff]
    %v99 = vld [vmem:[%s0 + $0x2b0] sm:$0xff]
    %v100 = vld [vmem:[%s0 + $0x2b8] sm:$0xff]
    %v101 = vld [vmem:[%s0 + $0x2c0] sm:$0xff]
    %v102 = vld [vmem:[%s0 + $0x2c8] sm:$0xff]
    %v103 = vld [vmem:[%s0 + $0x2d0] sm:$0xff]
    %v104 = vld [vmem:[%s0 + $0x2d8] sm:$0xff]
    %v105 = vld [vmem:[%s0 + $0x2e0] sm:$0xff]
    %v106 = vld [vmem:[%s0 + $0x2e8] sm:$0xff]
    %v107 = vld [vmem:[%s0 + $0x2f0] sm:$0xff]
    %v108 = vld [vmem:[%s0 + $0x2f8] sm:$0xff]
    %v109 = vld [vmem:[%s0 + $0x300] sm:$0xff]
    %v110 = vld [vmem:[%s0 + $0x308] sm:$0xff]
    %v111 = vld [vmem:[%s0 + $0x310] sm:$0xff]
    %v112 = vld [vmem:[%s0 + $0x318] sm:$0xff]
    %v113 = vld [vmem:[%s0 + $0x320] sm:$0xff]
    %v114 = vld [vmem:[%s0 + $0x328] sm:$0xff]
    %v115 = vld [vmem:[%s0 + $0x330] sm:$0xff]
    %v116 = vld [vmem:[%s0 + $0x338] sm:$0xff]
    %v117 = vld [vmem:[%s0 + $0x340] sm:$0xff]
    %v118 = vld [vmem:[%s0 + $0x348] sm:$0xff]
    %v119 = vld [vmem:[%s0 + $0x350] sm:$0xff]
    %v120 = vld [vmem:[%s0 + $0x358] sm:$0xff]
    %v121 = vld [vmem:[%s0 + $0x360] sm:$0xff]
    %v122 = vld [vmem:[%s0 + $0x368] sm:$0xff]
    %v123 = vld [vmem:[%s0 + $0x370] sm:$0xff]
    %v124 = vld [vmem:[%s0 + $0x378] sm:$0xff]
    %v125 = vld [vmem:[%s0 + $0x380] sm:$0xff]
    %v126 = vld [vmem:[%s0 + $0x388] sm:$0xff]
    %v127 = vld [vmem:[%s0 + $0x390] sm:$0xff]
    %v128 = vld [vmem:[%s0 + $0x398] sm:$0xff]
    %v129 = vld [vmem:[%s0 + $0x3a0] sm:$0xff]
    %v130 = vld [vmem:[%s0 + $0x3a8] sm:$0xff]
    %v131 = vld [vmem:[%s0 + $0x3b0] sm:$0xff]
    %v132 = vld [vmem:[%s0 + $0x3b8] sm:$0xff]
    %v133 = vld [vmem:[%s0 + $0x3c0] sm:$0xff]
    %v134 = vld [vmem:[%s0 + $0x3c8] sm:$0xff]
    %v135 = vld [vmem:[%s0 + $0x3d0] sm:$0xff]
    %v136 = vld [vmem:[%s0 + $0x3d8] sm:$0xff]
    %v137 = vld [vmem:[%s0 + $0x3e0] sm:$0xff]
    %v138 = vld [vmem:[%s0 + $0x3e8] sm:$0xff]
    %v139 = vld [vmem:[%s0 + $0x3f0] sm:$0xff]
    %v140 = vld [vmem:[%s0 + $0x3f8] sm:$0xff]
    %v141 = vlaneseq
    %v142 = vshrl.u32 %v141, 7
    %v143 = vadd.s32 %v142, 8
    %v144 = vadd.s32 %v142, 16
    %v145 = vadd.s32 %v142, 24
    %v146 = vadd.s32 %v142, 32
    %v147 = vadd.s32 %v142, 40
    %v148 = vadd.s32 %v142, 48
    %v149 = vadd.s32 %v142, 56
    %v150 = vadd.s32 %v142, 64
    %v151 = vadd.s32 %v142, 72
    %v152 = vadd.s32 %v142, 80
    %v153 = vadd.s32 %v142, 88
    %v154 = vadd.s32 %v142, 96
    %v155 = vadd.s32 %v142, 104
    %v156 = vadd.s32 %v142, 112
    %v157 = vadd.s32 %v142, 120
    %v158 = vadd.s32 %v142, 128
    %v159 = vadd.s32 %v142, 136
    %v160 = vadd.s32 %v142, 144
    %v161 = vadd.s32 %v142, 152
    %v162 = vadd.s32 %v142, 160
    %v163 = vadd.s32 %v142, 168
    %v164 = vadd.s32 %v142, 176
    %v165 = vadd.s32 %v142, 184
    %v166 = vadd.s32 %v142, 192
    %v167 = vadd.s32 %v142, 200
    %v168 = vadd.s32 %v142, 208
    %v169 = vadd.s32 %v142, 216
    %v170 = vadd.s32 %v142, 224
    %v171 = vadd.s32 %v142, 232
    %v172 = vadd.s32 %v142, 240
    %v173 = vadd.s32 %v142, 248
    %v174 = vadd.s32 %v142, 256
    %v175 = vadd.s32 %v142, 264
    %v176 = vadd.s32 %v142, 272
    %v177 = vadd.s32 %v142, 280
    %v178 = vadd.s32 %v142, 288
    %v179 = vadd.s32 %v142, 296
    %v180 = vadd.s32 %v142, 304
    %v181 = vadd.s32 %v142, 312
    %v182 = vadd.s32 %v142, 320
    %v183 = vadd.s32 %v142, 328
    %v184 = vadd.s32 %v142, 336
    %v185 = vadd.s32 %v142, 344
    %v186 = vadd.s32 %v142, 352
    %v187 = vadd.s32 %v142, 360
    %v188 = vadd.s32 %v142, 368
    %v189 = vadd.s32 %v142, 376
    %v190 = vadd.s32 %v142, 384
    %v191 = vadd.s32 %v142, 392
    %v192 = vadd.s32 %v142, 400
    %v193 = vadd.s32 %v142, 408
    %v194 = vadd.s32 %v142, 416
    %v195 = vadd.s32 %v142, 424
    %v196 = vadd.s32 %v142, 432
    %v197 = vadd.s32 %v142, 440
    %v198 = vadd.s32 %v142, 448
    %v199 = vadd.s32 %v142, 456
    %v200 = vadd.s32 %v142, 464
    %v201 = vadd.s32 %v142, 472
    %v202 = vadd.s32 %v142, 480
    %v203 = vadd.s32 %v142, 488
    %v204 = vadd.s32 %v142, 496
    %v205 = vadd.s32 %v142, 504
    %v206 = vadd.s32 %v142, 512
    %v207 = vadd.s32 %v142, 520
    %v208 = vadd.s32 %v142, 528
    %v209 = vadd.s32 %v142, 536
    %v210 = vadd.s32 %v142, 544
    %v211 = vadd.s32 %v142, 552
    %v212 = vadd.s32 %v142, 560
    %v213 = vadd.s32 %v142, 568
    %v214 = vadd.s32 %v142, 576
    %v215 = vadd.s32 %v142, 584
    %v216 = vadd.s32 %v142, 592
    %v217 = vadd.s32 %v142, 600
    %v218 = vadd.s32 %v142, 608
    %v219 = vadd.s32 %v142, 616
    %v220 = vadd.s32 %v142, 624
    %v221 = vadd.s32 %v142, 632
    %v222 = vadd.s32 %v142, 640
    %v223 = vadd.s32 %v142, 648
    %v224 = vadd.s32 %v142, 656
    %v225 = vadd.s32 %v142, 664
    %v226 = vadd.s32 %v142, 672
    %v227 = vadd.s32 %v142, 680
    %v228 = vadd.s32 %v142, 688
    %v229 = vadd.s32 %v142, 696
    %v230 = vadd.s32 %v142, 704
    %v231 = vadd.s32 %v142, 712
    %v232 = vadd.s32 %v142, 720
    %v233 = vadd.s32 %v142, 728
    %v234 = vadd.s32 %v142, 736
    %v235 = vadd.s32 %v142, 744
    %v236 = vadd.s32 %v142, 752
    %v237 = vadd.s32 %v142, 760
    %v238 = vadd.s32 %v142, 768
    %v239 = vadd.s32 %v142, 776
    %v240 = vadd.s32 %v142, 784
    %v241 = vadd.s32 %v142, 792
    %v242 = vadd.s32 %v142, 800
    %v243 = vadd.s32 %v142, 808
    %v244 = vadd.s32 %v142, 816
    %v245 = vadd.s32 %v142, 824
    %v246 = vadd.s32 %v142, 832
    %v247 = vadd.s32 %v142, 840
    %v248 = vadd.s32 %v142, 848
    %v249 = vadd.s32 %v142, 856
    %v250 = vadd.s32 %v142, 864
    %v251 = vadd.s32 %v142, 872
    %v252 = vadd.s32 %v142, 880
    %v253 = vadd.s32 %v142, 888
    %v254 = vadd.s32 %v142, 896
    %v255 = vadd.s32 %v142, 904
    %v256 = vadd.s32 %v142, 912
    %v257 = vadd.s32 %v142, 920
    %v258 = vadd.s32 %v142, 928
    %v259 = vadd.s32 %v142, 936
    %v260 = vadd.s32 %v142, 944
    %v261 = vadd.s32 %v142, 952
    %v262 = vadd.s32 %v142, 960
    %v263 = vadd.s32 %v142, 968
    %v264 = vadd.s32 %v142, 976
    %v265 = vadd.s32 %v142, 984
    %v266 = vadd.s32 %v142, 992
    %v267 = vadd.s32 %v142, 1000
    %v268 = vadd.s32 %v142, 1008
    %v269 = vadd.s32 %v142, 1016
    %v270 = vand.u32 %v142, 15
    %v271 = vand.u32 %v143, 15
    %v272 = vand.u32 %v144, 15
    %v273 = vand.u32 %v145, 15
    %v274 = vand.u32 %v146, 15
    %v275 = vand.u32 %v147, 15
    %v276 = vand.u32 %v148, 15
    %v277 = vand.u32 %v149, 15
    %v278 = vand.u32 %v150, 15
    %v279 = vand.u32 %v151, 15
    %v280 = vand.u32 %v152, 15
    %v281 = vand.u32 %v153, 15
    %v282 = vand.u32 %v154, 15
    %v283 = vand.u32 %v155, 15
    %v284 = vand.u32 %v156, 15
    %v285 = vand.u32 %v157, 15
    %v286 = vand.u32 %v158, 15
    %v287 = vand.u32 %v159, 15
    %v288 = vand.u32 %v160, 15
    %v289 = vand.u32 %v161, 15
    %v290 = vand.u32 %v162, 15
    %v291 = vand.u32 %v163, 15
    %v292 = vand.u32 %v164, 15
    %v293 = vand.u32 %v165, 15
    %v294 = vand.u32 %v166, 15
    %v295 = vand.u32 %v167, 15
    %v296 = vand.u32 %v168, 15
    %v297 = vand.u32 %v169, 15
    %v298 = vand.u32 %v170, 15
    %v299 = vand.u32 %v171, 15
    %v300 = vand.u32 %v172, 15
    %v301 = vand.u32 %v173, 15
    %v302 = vand.u32 %v174, 15
    %v303 = vand.u32 %v175, 15
    %v304 = vand.u32 %v176, 15
    %v305 = vand.u32 %v177, 15
    %v306 = vand.u32 %v178, 15
    %v307 = vand.u32 %v179, 15
    %v308 = vand.u32 %v180, 15
    %v309 = vand.u32 %v181, 15
    %v310 = vand.u32 %v182, 15
    %v311 = vand.u32 %v183, 15
    %v312 = vand.u32 %v184, 15
    %v313 = vand.u32 %v185, 15
    %v314 = vand.u32 %v186, 15
    %v315 = vand.u32 %v187, 15
    %v316 = vand.u32 %v188, 15
    %v317 = vand.u32 %v189, 15
    %v318 = vand.u32 %v190, 15
    %v319 = vand.u32 %v191, 15
    %v320 = vand.u32 %v192, 15
    %v321 = vand.u32 %v193, 15
    %v322 = vand.u32 %v194, 15
    %v323 = vand.u32 %v195, 15
    %v324 = vand.u32 %v196, 15
    %v325 = vand.u32 %v197, 15
    %v326 = vand.u32 %v198, 15
    %v327 = vand.u32 %v199, 15
    %v328 = vand.u32 %v200, 15
    %v329 = vand.u32 %v201, 15
    %v330 = vand.u32 %v202, 15
    %v331 = vand.u32 %v203, 15
    %v332 = vand.u32 %v204, 15
    %v333 = vand.u32 %v205, 15
    %v334 = vand.u32 %v206, 15
    %v335 = vand.u32 %v207, 15
    %v336 = vand.u32 %v208, 15
    %v337 = vand.u32 %v209, 15
    %v338 = vand.u32 %v210, 15
    %v339 = vand.u32 %v211, 15
    %v340 = vand.u32 %v212, 15
    %v341 = vand.u32 %v213, 15
    %v342 = vand.u32 %v214, 15
    %v343 = vand.u32 %v215, 15
    %v344 = vand.u32 %v216, 15
    %v345 = vand.u32 %v217, 15
    %v346 = vand.u32 %v218, 15
    %v347 = vand.u32 %v219, 15
    %v348 = vand.u32 %v220, 15
    %v349 = vand.u32 %v221, 15
    %v350 = vand.u32 %v222, 15
    %v351 = vand.u32 %v223, 15
    %v352 = vand.u32 %v224, 15
    %v353 = vand.u32 %v225, 15
    %v354 = vand.u32 %v226, 15
    %v355 = vand.u32 %v227, 15
    %v356 = vand.u32 %v228, 15
    %v357 = vand.u32 %v229, 15
    %v358 = vand.u32 %v230, 15
    %v359 = vand.u32 %v231, 15
    %v360 = vand.u32 %v232, 15
    %v361 = vand.u32 %v233, 15
    %v362 = vand.u32 %v234, 15
    %v363 = vand.u32 %v235, 15
    %v364 = vand.u32 %v236, 15
    %v365 = vand.u32 %v237, 15
    %v366 = vand.u32 %v238, 15
    %v367 = vand.u32 %v239, 15
    %v368 = vand.u32 %v240, 15
    %v369 = vand.u32 %v241, 15
    %v370 = vand.u32 %v242, 15
    %v371 = vand.u32 %v243, 15
    %v372 = vand.u32 %v244, 15
    %v373 = vand.u32 %v245, 15
    %v374 = vand.u32 %v246, 15
    %v375 = vand.u32 %v247, 15
    %v376 = vand.u32 %v248, 15
    %v377 = vand.u32 %v249, 15
    %v378 = vand.u32 %v250, 15
    %v379 = vand.u32 %v251, 15
    %v380 = vand.u32 %v252, 15
    %v381 = vand.u32 %v253, 15
    %v382 = vand.u32 %v254, 15
    %v383 = vand.u32 %v255, 15
    %v384 = vand.u32 %v256, 15
    %v385 = vand.u32 %v257, 15
    %v386 = vand.u32 %v258, 15
    %v387 = vand.u32 %v259, 15
    %v388 = vand.u32 %v260, 15
    %v389 = vand.u32 %v261, 15
    %v390 = vand.u32 %v262, 15
    %v391 = vand.u32 %v263, 15
    %v392 = vand.u32 %v264, 15
    %v393 = vand.u32 %v265, 15
    %v394 = vand.u32 %v266, 15
    %v395 = vand.u32 %v267, 15
    %v396 = vand.u32 %v268, 15
    %v397 = vand.u32 %v269, 15
    %v398 = vshra.s32 %v142, 4
    %v399 = vshra.s32 %v143, 4
    %v400 = vshra.s32 %v144, 4
    %v401 = vshra.s32 %v145, 4
    %v402 = vshra.s32 %v146, 4
    %v403 = vshra.s32 %v147, 4
    %v404 = vshra.s32 %v148, 4
    %v405 = vshra.s32 %v149, 4
    %v406 = vshra.s32 %v150, 4
    %v407 = vshra.s32 %v151, 4
    %v408 = vshra.s32 %v152, 4
    %v409 = vshra.s32 %v153, 4
    %v410 = vshra.s32 %v154, 4
    %v411 = vshra.s32 %v155, 4
    %v412 = vshra.s32 %v156, 4
    %v413 = vshra.s32 %v157, 4
    %v414 = vshra.s32 %v158, 4
    %v415 = vshra.s32 %v159, 4
    %v416 = vshra.s32 %v160, 4
    %v417 = vshra.s32 %v161, 4
    %v418 = vshra.s32 %v162, 4
    %v419 = vshra.s32 %v163, 4
    %v420 = vshra.s32 %v164, 4
    %v421 = vshra.s32 %v165, 4
    %v422 = vshra.s32 %v166, 4
    %v423 = vshra.s32 %v167, 4
    %v424 = vshra.s32 %v168, 4
    %v425 = vshra.s32 %v169, 4
    %v426 = vshra.s32 %v170, 4
    %v427 = vshra.s32 %v171, 4
    %v428 = vshra.s32 %v172, 4
    %v429 = vshra.s32 %v173, 4
    %v430 = vshra.s32 %v174, 4
    %v431 = vshra.s32 %v175, 4
    %v432 = vshra.s32 %v176, 4
    %v433 = vshra.s32 %v177, 4
    %v434 = vshra.s32 %v178, 4
    %v435 = vshra.s32 %v179, 4
    %v436 = vshra.s32 %v180, 4
    %v437 = vshra.s32 %v181, 4
    %v438 = vshra.s32 %v182, 4
    %v439 = vshra.s32 %v183, 4
    %v440 = vshra.s32 %v184, 4
    %v441 = vshra.s32 %v185, 4
    %v442 = vshra.s32 %v186, 4
    %v443 = vshra.s32 %v187, 4
    %v444 = vshra.s32 %v188, 4
    %v445 = vshra.s32 %v189, 4
    %v446 = vshra.s32 %v190, 4
    %v447 = vshra.s32 %v191, 4
    %v448 = vshra.s32 %v192, 4
    %v449 = vshra.s32 %v193, 4
    %v450 = vshra.s32 %v194, 4
    %v451 = vshra.s32 %v195, 4
    %v452 = vshra.s32 %v196, 4
    %v453 = vshra.s32 %v197, 4
    %v454 = vshra.s32 %v198, 4
    %v455 = vshra.s32 %v199, 4
    %v456 = vshra.s32 %v200, 4
    %v457 = vshra.s32 %v201, 4
    %v458 = vshra.s32 %v202, 4
    %v459 = vshra.s32 %v203, 4
    %v460 = vshra.s32 %v204, 4
    %v461 = vshra.s32 %v205, 4
    %v462 = vshra.s32 %v206, 4
    %v463 = vshra.s32 %v207, 4
    %v464 = vshra.s32 %v208, 4
    %v465 = vshra.s32 %v209, 4
    %v466 = vshra.s32 %v210, 4
    %v467 = vshra.s32 %v211, 4
    %v468 = vshra.s32 %v212, 4
    %v469 = vshra.s32 %v213, 4
    %v470 = vshra.s32 %v214, 4
    %v471 = vshra.s32 %v215, 4
    %v472 = vshra.s32 %v216, 4
    %v473 = vshra.s32 %v217, 4
    %v474 = vshra.s32 %v218, 4
    %v475 = vshra.s32 %v219, 4
    %v476 = vshra.s32 %v220, 4
    %v477 = vshra.s32 %v221, 4
    %v478 = vshra.s32 %v222, 4
    %v479 = vshra.s32 %v223, 4
    %v480 = vshra.s32 %v224, 4
    %v481 = vshra.s32 %v225, 4
    %v482 = vshra.s32 %v226, 4
    %v483 = vshra.s32 %v227, 4
    %v484 = vshra.s32 %v228, 4
    %v485 = vshra.s32 %v229, 4
    %v486 = vshra.s32 %v230, 4
    %v487 = vshra.s32 %v231, 4
    %v488 = vshra.s32 %v232, 4
    %v489 = vshra.s32 %v233, 4
    %v490 = vshra.s32 %v234, 4
    %v491 = vshra.s32 %v235, 4
    %v492 = vshra.s32 %v236, 4
    %v493 = vshra.s32 %v237, 4
    %v494 = vshra.s32 %v238, 4
    %v495 = vshra.s32 %v239, 4
    %v496 = vshra.s32 %v240, 4
    %v497 = vshra.s32 %v241, 4
    %v498 = vshra.s32 %v242, 4
    %v499 = vshra.s32 %v243, 4
    %v500 = vshra.s32 %v244, 4
    %v501 = vshra.s32 %v245, 4
    %v502 = vshra.s32 %v246, 4
    %v503 = vshra.s32 %v247, 4
    %v504 = vshra.s32 %v248, 4
    %v505 = vshra.s32 %v249, 4
    %v506 = vshra.s32 %v250, 4
    %v507 = vshra.s32 %v251, 4
    %v508 = vshra.s32 %v252, 4
    %v509 = vshra.s32 %v253, 4
    %v510 = vshra.s32 %v254, 4
    %v511 = vshra.s32 %v255, 4
    %v512 = vshra.s32 %v256, 4
    %v513 = vshra.s32 %v257, 4
    %v514 = vshra.s32 %v258, 4
    %v515 = vshra.s32 %v259, 4
    %v516 = vshra.s32 %v260, 4
    %v517 = vshra.s32 %v261, 4
    %v518 = vshra.s32 %v262, 4
    %v519 = vshra.s32 %v263, 4
    %v520 = vshra.s32 %v264, 4
    %v521 = vshra.s32 %v265, 4
    %v522 = vshra.s32 %v266, 4
    %v523 = vshra.s32 %v267, 4
    %v524 = vshra.s32 %v268, 4
    %v525 = vshra.s32 %v269, 4
    %v526 = vand.u32 %v398, 15
    %v527 = vand.u32 %v399, 15
    %v528 = vand.u32 %v400, 15
    %v529 = vand.u32 %v401, 15
    %v530 = vand.u32 %v402, 15
    %v531 = vand.u32 %v403, 15
    %v532 = vand.u32 %v404, 15
    %v533 = vand.u32 %v405, 15
    %v534 = vand.u32 %v406, 15
    %v535 = vand.u32 %v407, 15
    %v536 = vand.u32 %v408, 15
    %v537 = vand.u32 %v409, 15
    %v538 = vand.u32 %v410, 15
    %v539 = vand.u32 %v411, 15
    %v540 = vand.u32 %v412, 15
    %v541 = vand.u32 %v413, 15
    %v542 = vand.u32 %v414, 15
    %v543 = vand.u32 %v415, 15
    %v544 = vand.u32 %v416, 15
    %v545 = vand.u32 %v417, 15
    %v546 = vand.u32 %v418, 15
    %v547 = vand.u32 %v419, 15
    %v548 = vand.u32 %v420, 15
    %v549 = vand.u32 %v421, 15
    %v550 = vand.u32 %v422, 15
    %v551 = vand.u32 %v423, 15
    %v552 = vand.u32 %v424, 15
    %v553 = vand.u32 %v425, 15
    %v554 = vand.u32 %v426, 15
    %v555 = vand.u32 %v427, 15
    %v556 = vand.u32 %v428, 15
    %v557 = vand.u32 %v429, 15
    %v558 = vand.u32 %v430, 15
    %v559 = vand.u32 %v431, 15
    %v560 = vand.u32 %v432, 15
    %v561 = vand.u32 %v433, 15
    %v562 = vand.u32 %v434, 15
    %v563 = vand.u32 %v435, 15
    %v564 = vand.u32 %v436, 15
    %v565 = vand.u32 %v437, 15
    %v566 = vand.u32 %v438, 15
    %v567 = vand.u32 %v439, 15
    %v568 = vand.u32 %v440, 15
    %v569 = vand.u32 %v441, 15
    %v570 = vand.u32 %v442, 15
    %v571 = vand.u32 %v443, 15
    %v572 = vand.u32 %v444, 15
    %v573 = vand.u32 %v445, 15
    %v574 = vand.u32 %v446, 15
    %v575 = vand.u32 %v447, 15
    %v576 = vand.u32 %v448, 15
    %v577 = vand.u32 %v449, 15
    %v578 = vand.u32 %v450, 15
    %v579 = vand.u32 %v451, 15
    %v580 = vand.u32 %v452, 15
    %v581 = vand.u32 %v453, 15
    %v582 = vand.u32 %v454, 15
    %v583 = vand.u32 %v455, 15
    %v584 = vand.u32 %v456, 15
    %v585 = vand.u32 %v457, 15
    %v586 = vand.u32 %v458, 15
    %v587 = vand.u32 %v459, 15
    %v588 = vand.u32 %v460, 15
    %v589 = vand.u32 %v461, 15
    %v590 = vand.u32 %v462, 15
    %v591 = vand.u32 %v463, 15
    %v592 = vand.u32 %v464, 15
    %v593 = vand.u32 %v465, 15
    %v594 = vand.u32 %v466, 15
    %v595 = vand.u32 %v467, 15
    %v596 = vand.u32 %v468, 15
    %v597 = vand.u32 %v469, 15
    %v598 = vand.u32 %v470, 15
    %v599 = vand.u32 %v471, 15
    %v600 = vand.u32 %v472, 15
    %v601 = vand.u32 %v473, 15
    %v602 = vand.u32 %v474, 15
    %v603 = vand.u32 %v475, 15
    %v604 = vand.u32 %v476, 15
    %v605 = vand.u32 %v477, 15
    %v606 = vand.u32 %v478, 15
    %v607 = vand.u32 %v479, 15
    %v608 = vand.u32 %v480, 15
    %v609 = vand.u32 %v481, 15
    %v610 = vand.u32 %v482, 15
    %v611 = vand.u32 %v483, 15
    %v612 = vand.u32 %v484, 15
    %v613 = vand.u32 %v485, 15
    %v614 = vand.u32 %v486, 15
    %v615 = vand.u32 %v487, 15
    %v616 = vand.u32 %v488, 15
    %v617 = vand.u32 %v489, 15
    %v618 = vand.u32 %v490, 15
    %v619 = vand.u32 %v491, 15
    %v620 = vand.u32 %v492, 15
    %v621 = vand.u32 %v493, 15
    %v622 = vand.u32 %v494, 15
    %v623 = vand.u32 %v495, 15
    %v624 = vand.u32 %v496, 15
    %v625 = vand.u32 %v497, 15
    %v626 = vand.u32 %v498, 15
    %v627 = vand.u32 %v499, 15
    %v628 = vand.u32 %v500, 15
    %v629 = vand.u32 %v501, 15
    %v630 = vand.u32 %v502, 15
    %v631 = vand.u32 %v503, 15
    %v632 = vand.u32 %v504, 15
    %v633 = vand.u32 %v505, 15
    %v634 = vand.u32 %v506, 15
    %v635 = vand.u32 %v507, 15
    %v636 = vand.u32 %v508, 15
    %v637 = vand.u32 %v509, 15
    %v638 = vand.u32 %v510, 15
    %v639 = vand.u32 %v511, 15
    %v640 = vand.u32 %v512, 15
    %v641 = vand.u32 %v513, 15
    %v642 = vand.u32 %v514, 15
    %v643 = vand.u32 %v515, 15
    %v644 = vand.u32 %v516, 15
    %v645 = vand.u32 %v517, 15
    %v646 = vand.u32 %v518, 15
    %v647 = vand.u32 %v519, 15
    %v648 = vand.u32 %v520, 15
    %v649 = vand.u32 %v521, 15
    %v650 = vand.u32 %v522, 15
    %v651 = vand.u32 %v523, 15
    %v652 = vand.u32 %v524, 15
    %v653 = vand.u32 %v525, 15
    %vm654 = vcmp.ge.s32.totalorder %v526, 1
    %vm655 = vcmp.ge.s32.totalorder %v527, 1
    %vm656 = vcmp.ge.s32.totalorder %v528, 1
    %vm657 = vcmp.ge.s32.totalorder %v529, 1
    %vm658 = vcmp.ge.s32.totalorder %v530, 1
    %vm659 = vcmp.ge.s32.totalorder %v531, 1
    %vm660 = vcmp.ge.s32.totalorder %v532, 1
    %vm661 = vcmp.ge.s32.totalorder %v533, 1
    %vm662 = vcmp.ge.s32.totalorder %v534, 1
    %vm663 = vcmp.ge.s32.totalorder %v535, 1
    %vm664 = vcmp.ge.s32.totalorder %v536, 1
    %vm665 = vcmp.ge.s32.totalorder %v537, 1
    %vm666 = vcmp.ge.s32.totalorder %v538, 1
    %vm667 = vcmp.ge.s32.totalorder %v539, 1
    %vm668 = vcmp.ge.s32.totalorder %v540, 1
    %vm669 = vcmp.ge.s32.totalorder %v541, 1
    %vm670 = vcmp.ge.s32.totalorder %v542, 1
    %vm671 = vcmp.ge.s32.totalorder %v543, 1
    %vm672 = vcmp.ge.s32.totalorder %v544, 1
    %vm673 = vcmp.ge.s32.totalorder %v545, 1
    %vm674 = vcmp.ge.s32.totalorder %v546, 1
    %vm675 = vcmp.ge.s32.totalorder %v547, 1
    %vm676 = vcmp.ge.s32.totalorder %v548, 1
    %vm677 = vcmp.ge.s32.totalorder %v549, 1
    %vm678 = vcmp.ge.s32.totalorder %v550, 1
    %vm679 = vcmp.ge.s32.totalorder %v551, 1
    %vm680 = vcmp.ge.s32.totalorder %v552, 1
    %vm681 = vcmp.ge.s32.totalorder %v553, 1
    %vm682 = vcmp.ge.s32.totalorder %v554, 1
    %vm683 = vcmp.ge.s32.totalorder %v555, 1
    %vm684 = vcmp.ge.s32.totalorder %v556, 1
    %vm685 = vcmp.ge.s32.totalorder %v557, 1
    %vm686 = vcmp.ge.s32.totalorder %v558, 1
    %vm687 = vcmp.ge.s32.totalorder %v559, 1
    %vm688 = vcmp.ge.s32.totalorder %v560, 1
    %vm689 = vcmp.ge.s32.totalorder %v561, 1
    %vm690 = vcmp.ge.s32.totalorder %v562, 1
    %vm691 = vcmp.ge.s32.totalorder %v563, 1
    %vm692 = vcmp.ge.s32.totalorder %v564, 1
    %vm693 = vcmp.ge.s32.totalorder %v565, 1
    %vm694 = vcmp.ge.s32.totalorder %v566, 1
    %vm695 = vcmp.ge.s32.totalorder %v567, 1
    %vm696 = vcmp.ge.s32.totalorder %v568, 1
    %vm697 = vcmp.ge.s32.totalorder %v569, 1
    %vm698 = vcmp.ge.s32.totalorder %v570, 1
    %vm699 = vcmp.ge.s32.totalorder %v571, 1
    %vm700 = vcmp.ge.s32.totalorder %v572, 1
    %vm701 = vcmp.ge.s32.totalorder %v573, 1
    %vm702 = vcmp.ge.s32.totalorder %v574, 1
    %vm703 = vcmp.ge.s32.totalorder %v575, 1
    %vm704 = vcmp.ge.s32.totalorder %v576, 1
    %vm705 = vcmp.ge.s32.totalorder %v577, 1
    %vm706 = vcmp.ge.s32.totalorder %v578, 1
    %vm707 = vcmp.ge.s32.totalorder %v579, 1
    %vm708 = vcmp.ge.s32.totalorder %v580, 1
    %vm709 = vcmp.ge.s32.totalorder %v581, 1
    %vm710 = vcmp.ge.s32.totalorder %v582, 1
    %vm711 = vcmp.ge.s32.totalorder %v583, 1
    %vm712 = vcmp.ge.s32.totalorder %v584, 1
    %vm713 = vcmp.ge.s32.totalorder %v585, 1
    %vm714 = vcmp.ge.s32.totalorder %v586, 1
    %vm715 = vcmp.ge.s32.totalorder %v587, 1
    %vm716 = vcmp.ge.s32.totalorder %v588, 1
    %vm717 = vcmp.ge.s32.totalorder %v589, 1
    %vm718 = vcmp.ge.s32.totalorder %v590, 1
    %vm719 = vcmp.ge.s32.totalorder %v591, 1
    %vm720 = vcmp.ge.s32.totalorder %v592, 1
    %vm721 = vcmp.ge.s32.totalorder %v593, 1
    %vm722 = vcmp.ge.s32.totalorder %v594, 1
    %vm723 = vcmp.ge.s32.totalorder %v595, 1
    %vm724 = vcmp.ge.s32.totalorder %v596, 1
    %vm725 = vcmp.ge.s32.totalorder %v597, 1
    %vm726 = vcmp.ge.s32.totalorder %v598, 1
    %vm727 = vcmp.ge.s32.totalorder %v599, 1
    %vm728 = vcmp.ge.s32.totalorder %v600, 1
    %vm729 = vcmp.ge.s32.totalorder %v601, 1
    %vm730 = vcmp.ge.s32.totalorder %v602, 1
    %vm731 = vcmp.ge.s32.totalorder %v603, 1
    %vm732 = vcmp.ge.s32.totalorder %v604, 1
    %vm733 = vcmp.ge.s32.totalorder %v605, 1
    %vm734 = vcmp.ge.s32.totalorder %v606, 1
    %vm735 = vcmp.ge.s32.totalorder %v607, 1
    %vm736 = vcmp.ge.s32.totalorder %v608, 1
    %vm737 = vcmp.ge.s32.totalorder %v609, 1
    %vm738 = vcmp.ge.s32.totalorder %v610, 1
    %vm739 = vcmp.ge.s32.totalorder %v611, 1
    %vm740 = vcmp.ge.s32.totalorder %v612, 1
    %vm741 = vcmp.ge.s32.totalorder %v613, 1
    %vm742 = vcmp.ge.s32.totalorder %v614, 1
    %vm743 = vcmp.ge.s32.totalorder %v615, 1
    %vm744 = vcmp.ge.s32.totalorder %v616, 1
    %vm745 = vcmp.ge.s32.totalorder %v617, 1
    %vm746 = vcmp.ge.s32.totalorder %v618, 1
    %vm747 = vcmp.ge.s32.totalorder %v619, 1
    %vm748 = vcmp.ge.s32.totalorder %v620, 1
    %vm749 = vcmp.ge.s32.totalorder %v621, 1
    %vm750 = vcmp.ge.s32.totalorder %v622, 1
    %vm751 = vcmp.ge.s32.totalorder %v623, 1
    %vm752 = vcmp.ge.s32.totalorder %v624, 1
    %vm753 = vcmp.ge.s32.totalorder %v625, 1
    %vm754 = vcmp.ge.s32.totalorder %v626, 1
    %vm755 = vcmp.ge.s32.totalorder %v627, 1
    %vm756 = vcmp.ge.s32.totalorder %v628, 1
    %vm757 = vcmp.ge.s32.totalorder %v629, 1
    %vm758 = vcmp.ge.s32.totalorder %v630, 1
    %vm759 = vcmp.ge.s32.totalorder %v631, 1
    %vm760 = vcmp.ge.s32.totalorder %v632, 1
    %vm761 = vcmp.ge.s32.totalorder %v633, 1
    %vm762 = vcmp.ge.s32.totalorder %v634, 1
    %vm763 = vcmp.ge.s32.totalorder %v635, 1
    %vm764 = vcmp.ge.s32.totalorder %v636, 1
    %vm765 = vcmp.ge.s32.totalorder %v637, 1
    %vm766 = vcmp.ge.s32.totalorder %v638, 1
    %vm767 = vcmp.ge.s32.totalorder %v639, 1
    %vm768 = vcmp.ge.s32.totalorder %v640, 1
    %vm769 = vcmp.ge.s32.totalorder %v641, 1
    %vm770 = vcmp.ge.s32.totalorder %v642, 1
    %vm771 = vcmp.ge.s32.totalorder %v643, 1
    %vm772 = vcmp.ge.s32.totalorder %v644, 1
    %vm773 = vcmp.ge.s32.totalorder %v645, 1
    %vm774 = vcmp.ge.s32.totalorder %v646, 1
    %vm775 = vcmp.ge.s32.totalorder %v647, 1
    %vm776 = vcmp.ge.s32.totalorder %v648, 1
    %vm777 = vcmp.ge.s32.totalorder %v649, 1
    %vm778 = vcmp.ge.s32.totalorder %v650, 1
    %vm779 = vcmp.ge.s32.totalorder %v651, 1
    %vm780 = vcmp.ge.s32.totalorder %v652, 1
    %vm781 = vcmp.ge.s32.totalorder %v653, 1
    %vm782 = vcmp.le.s32.totalorder %v526, 14
    %vm783 = vcmp.le.s32.totalorder %v527, 14
    %vm784 = vcmp.le.s32.totalorder %v528, 14
    %vm785 = vcmp.le.s32.totalorder %v529, 14
    %vm786 = vcmp.le.s32.totalorder %v530, 14
    %vm787 = vcmp.le.s32.totalorder %v531, 14
    %vm788 = vcmp.le.s32.totalorder %v532, 14
    %vm789 = vcmp.le.s32.totalorder %v533, 14
    %vm790 = vcmp.le.s32.totalorder %v534, 14
    %vm791 = vcmp.le.s32.totalorder %v535, 14
    %vm792 = vcmp.le.s32.totalorder %v536, 14
    %vm793 = vcmp.le.s32.totalorder %v537, 14
    %vm794 = vcmp.le.s32.totalorder %v538, 14
    %vm795 = vcmp.le.s32.totalorder %v539, 14
    %vm796 = vcmp.le.s32.totalorder %v540, 14
    %vm797 = vcmp.le.s32.totalorder %v541, 14
    %vm798 = vcmp.le.s32.totalorder %v542, 14
    %vm799 = vcmp.le.s32.totalorder %v543, 14
    %vm800 = vcmp.le.s32.totalorder %v544, 14
    %vm801 = vcmp.le.s32.totalorder %v545, 14
    %vm802 = vcmp.le.s32.totalorder %v546, 14
    %vm803 = vcmp.le.s32.totalorder %v547, 14
    %vm804 = vcmp.le.s32.totalorder %v548, 14
    %vm805 = vcmp.le.s32.totalorder %v549, 14
    %vm806 = vcmp.le.s32.totalorder %v550, 14
    %vm807 = vcmp.le.s32.totalorder %v551, 14
    %vm808 = vcmp.le.s32.totalorder %v552, 14
    %vm809 = vcmp.le.s32.totalorder %v553, 14
    %vm810 = vcmp.le.s32.totalorder %v554, 14
    %vm811 = vcmp.le.s32.totalorder %v555, 14
    %vm812 = vcmp.le.s32.totalorder %v556, 14
    %vm813 = vcmp.le.s32.totalorder %v557, 14
    %vm814 = vcmp.le.s32.totalorder %v558, 14
    %vm815 = vcmp.le.s32.totalorder %v559, 14
    %vm816 = vcmp.le.s32.totalorder %v560, 14
    %vm817 = vcmp.le.s32.totalorder %v561, 14
    %vm818 = vcmp.le.s32.totalorder %v562, 14
    %vm819 = vcmp.le.s32.totalorder %v563, 14
    %vm820 = vcmp.le.s32.totalorder %v564, 14
    %vm821 = vcmp.le.s32.totalorder %v565, 14
    %vm822 = vcmp.le.s32.totalorder %v566, 14
    %vm823 = vcmp.le.s32.totalorder %v567, 14
    %vm824 = vcmp.le.s32.totalorder %v568, 14
    %vm825 = vcmp.le.s32.totalorder %v569, 14
    %vm826 = vcmp.le.s32.totalorder %v570, 14
    %vm827 = vcmp.le.s32.totalorder %v571, 14
    %vm828 = vcmp.le.s32.totalorder %v572, 14
    %vm829 = vcmp.le.s32.totalorder %v573, 14
    %vm830 = vcmp.le.s32.totalorder %v574, 14
    %vm831 = vcmp.le.s32.totalorder %v575, 14
    %vm832 = vcmp.le.s32.totalorder %v576, 14
    %vm833 = vcmp.le.s32.totalorder %v577, 14
    %vm834 = vcmp.le.s32.totalorder %v578, 14
    %vm835 = vcmp.le.s32.totalorder %v579, 14
    %vm836 = vcmp.le.s32.totalorder %v580, 14
    %vm837 = vcmp.le.s32.totalorder %v581, 14
    %vm838 = vcmp.le.s32.totalorder %v582, 14
    %vm839 = vcmp.le.s32.totalorder %v583, 14
    %vm840 = vcmp.le.s32.totalorder %v584, 14
    %vm841 = vcmp.le.s32.totalorder %v585, 14
    %vm842 = vcmp.le.s32.totalorder %v586, 14
    %vm843 = vcmp.le.s32.totalorder %v587, 14
    %vm844 = vcmp.le.s32.totalorder %v588, 14
    %vm845 = vcmp.le.s32.totalorder %v589, 14
    %vm846 = vcmp.le.s32.totalorder %v590, 14
    %vm847 = vcmp.le.s32.totalorder %v591, 14
    %vm848 = vcmp.le.s32.totalorder %v592, 14
    %vm849 = vcmp.le.s32.totalorder %v593, 14
    %vm850 = vcmp.le.s32.totalorder %v594, 14
    %vm851 = vcmp.le.s32.totalorder %v595, 14
    %vm852 = vcmp.le.s32.totalorder %v596, 14
    %vm853 = vcmp.le.s32.totalorder %v597, 14
    %vm854 = vcmp.le.s32.totalorder %v598, 14
    %vm855 = vcmp.le.s32.totalorder %v599, 14
    %vm856 = vcmp.le.s32.totalorder %v600, 14
    %vm857 = vcmp.le.s32.totalorder %v601, 14
    %vm858 = vcmp.le.s32.totalorder %v602, 14
    %vm859 = vcmp.le.s32.totalorder %v603, 14
    %vm860 = vcmp.le.s32.totalorder %v604, 14
    %vm861 = vcmp.le.s32.totalorder %v605, 14
    %vm862 = vcmp.le.s32.totalorder %v606, 14
    %vm863 = vcmp.le.s32.totalorder %v607, 14
    %vm864 = vcmp.le.s32.totalorder %v608, 14
    %vm865 = vcmp.le.s32.totalorder %v609, 14
    %vm866 = vcmp.le.s32.totalorder %v610, 14
    %vm867 = vcmp.le.s32.totalorder %v611, 14
    %vm868 = vcmp.le.s32.totalorder %v612, 14
    %vm869 = vcmp.le.s32.totalorder %v613, 14
    %vm870 = vcmp.le.s32.totalorder %v614, 14
    %vm871 = vcmp.le.s32.totalorder %v615, 14
    %vm872 = vcmp.le.s32.totalorder %v616, 14
    %vm873 = vcmp.le.s32.totalorder %v617, 14
    %vm874 = vcmp.le.s32.totalorder %v618, 14
    %vm875 = vcmp.le.s32.totalorder %v619, 14
    %vm876 = vcmp.le.s32.totalorder %v620, 14
    %vm877 = vcmp.le.s32.totalorder %v621, 14
    %vm878 = vcmp.le.s32.totalorder %v622, 14
    %vm879 = vcmp.le.s32.totalorder %v623, 14
    %vm880 = vcmp.le.s32.totalorder %v624, 14
    %vm881 = vcmp.le.s32.totalorder %v625, 14
    %vm882 = vcmp.le.s32.totalorder %v626, 14
    %vm883 = vcmp.le.s32.totalorder %v627, 14
    %vm884 = vcmp.le.s32.totalorder %v628, 14
    %vm885 = vcmp.le.s32.totalorder %v629, 14
    %vm886 = vcmp.le.s32.totalorder %v630, 14
    %vm887 = vcmp.le.s32.totalorder %v631, 14
    %vm888 = vcmp.le.s32.totalorder %v632, 14
    %vm889 = vcmp.le.s32.totalorder %v633, 14
    %vm890 = vcmp.le.s32.totalorder %v634, 14
    %vm891 = vcmp.le.s32.totalorder %v635, 14
    %vm892 = vcmp.le.s32.totalorder %v636, 14
    %vm893 = vcmp.le.s32.totalorder %v637, 14
    %vm894 = vcmp.le.s32.totalorder %v638, 14
    %vm895 = vcmp.le.s32.totalorder %v639, 14
    %vm896 = vcmp.le.s32.totalorder %v640, 14
    %vm897 = vcmp.le.s32.totalorder %v641, 14
    %vm898 = vcmp.le.s32.totalorder %v642, 14
    %vm899 = vcmp.le.s32.totalorder %v643, 14
    %vm900 = vcmp.le.s32.totalorder %v644, 14
    %vm901 = vcmp.le.s32.totalorder %v645, 14
    %vm902 = vcmp.le.s32.totalorder %v646, 14
    %vm903 = vcmp.le.s32.totalorder %v647, 14
    %vm904 = vcmp.le.s32.totalorder %v648, 14
    %vm905 = vcmp.le.s32.totalorder %v649, 14
    %vm906 = vcmp.le.s32.totalorder %v650, 14
    %vm907 = vcmp.le.s32.totalorder %v651, 14
    %vm908 = vcmp.le.s32.totalorder %v652, 14
    %vm909 = vcmp.le.s32.totalorder %v653, 14
    %vm910 = vcmp.ge.s32.totalorder %v270, 1
    %vm911 = vcmp.ge.s32.totalorder %v271, 1
    %vm912 = vcmp.ge.s32.totalorder %v272, 1
    %vm913 = vcmp.ge.s32.totalorder %v273, 1
    %vm914 = vcmp.ge.s32.totalorder %v274, 1
    %vm915 = vcmp.ge.s32.totalorder %v275, 1
    %vm916 = vcmp.ge.s32.totalorder %v276, 1
    %vm917 = vcmp.ge.s32.totalorder %v277, 1
    %vm918 = vcmp.ge.s32.totalorder %v278, 1
    %vm919 = vcmp.ge.s32.totalorder %v279, 1
    %vm920 = vcmp.ge.s32.totalorder %v280, 1
    %vm921 = vcmp.ge.s32.totalorder %v281, 1
    %vm922 = vcmp.ge.s32.totalorder %v282, 1
    %vm923 = vcmp.ge.s32.totalorder %v283, 1
    %vm924 = vcmp.ge.s32.totalorder %v284, 1
    %vm925 = vcmp.ge.s32.totalorder %v285, 1
    %vm926 = vcmp.ge.s32.totalorder %v286, 1
    %vm927 = vcmp.ge.s32.totalorder %v287, 1
    %vm928 = vcmp.ge.s32.totalorder %v288, 1
    %vm929 = vcmp.ge.s32.totalorder %v289, 1
    %vm930 = vcmp.ge.s32.totalorder %v290, 1
    %vm931 = vcmp.ge.s32.totalorder %v291, 1
    %vm932 = vcmp.ge.s32.totalorder %v292, 1
    %vm933 = vcmp.ge.s32.totalorder %v293, 1
    %vm934 = vcmp.ge.s32.totalorder %v294, 1
    %vm935 = vcmp.ge.s32.totalorder %v295, 1
    %vm936 = vcmp.ge.s32.totalorder %v296, 1
    %vm937 = vcmp.ge.s32.totalorder %v297, 1
    %vm938 = vcmp.ge.s32.totalorder %v298, 1
    %vm939 = vcmp.ge.s32.totalorder %v299, 1
    %vm940 = vcmp.ge.s32.totalorder %v300, 1
    %vm941 = vcmp.ge.s32.totalorder %v301, 1
    %vm942 = vcmp.ge.s32.totalorder %v302, 1
    %vm943 = vcmp.ge.s32.totalorder %v303, 1
    %vm944 = vcmp.ge.s32.totalorder %v304, 1
    %vm945 = vcmp.ge.s32.totalorder %v305, 1
    %vm946 = vcmp.ge.s32.totalorder %v306, 1
    %vm947 = vcmp.ge.s32.totalorder %v307, 1
    %vm948 = vcmp.ge.s32.totalorder %v308, 1
    %vm949 = vcmp.ge.s32.totalorder %v309, 1
    %vm950 = vcmp.ge.s32.totalorder %v310, 1
    %vm951 = vcmp.ge.s32.totalorder %v311, 1
    %vm952 = vcmp.ge.s32.totalorder %v312, 1
    %vm953 = vcmp.ge.s32.totalorder %v313, 1
    %vm954 = vcmp.ge.s32.totalorder %v314, 1
    %vm955 = vcmp.ge.s32.totalorder %v315, 1
    %vm956 = vcmp.ge.s32.totalorder %v316, 1
    %vm957 = vcmp.ge.s32.totalorder %v317, 1
    %vm958 = vcmp.ge.s32.totalorder %v318, 1
    %vm959 = vcmp.ge.s32.totalorder %v319, 1
    %vm960 = vcmp.ge.s32.totalorder %v320, 1
    %vm961 = vcmp.ge.s32.totalorder %v321, 1
    %vm962 = vcmp.ge.s32.totalorder %v322, 1
    %vm963 = vcmp.ge.s32.totalorder %v323, 1
    %vm964 = vcmp.ge.s32.totalorder %v324, 1
    %vm965 = vcmp.ge.s32.totalorder %v325, 1
    %vm966 = vcmp.ge.s32.totalorder %v326, 1
    %vm967 = vcmp.ge.s32.totalorder %v327, 1
    %vm968 = vcmp.ge.s32.totalorder %v328, 1
    %vm969 = vcmp.ge.s32.totalorder %v329, 1
    %vm970 = vcmp.ge.s32.totalorder %v330, 1
    %vm971 = vcmp.ge.s32.totalorder %v331, 1
    %vm972 = vcmp.ge.s32.totalorder %v332, 1
    %vm973 = vcmp.ge.s32.totalorder %v333, 1
    %vm974 = vcmp.ge.s32.totalorder %v334, 1
    %vm975 = vcmp.ge.s32.totalorder %v335, 1
    %vm976 = vcmp.ge.s32.totalorder %v336, 1
    %vm977 = vcmp.ge.s32.totalorder %v337, 1
    %vm978 = vcmp.ge.s32.totalorder %v338, 1
    %vm979 = vcmp.ge.s32.totalorder %v339, 1
    %vm980 = vcmp.ge.s32.totalorder %v340, 1
    %vm981 = vcmp.ge.s32.totalorder %v341, 1
    %vm982 = vcmp.ge.s32.totalorder %v342, 1
    %vm983 = vcmp.ge.s32.totalorder %v343, 1
    %vm984 = vcmp.ge.s32.totalorder %v344, 1
    %vm985 = vcmp.ge.s32.totalorder %v345, 1
    %vm986 = vcmp.ge.s32.totalorder %v346, 1
    %vm987 = vcmp.ge.s32.totalorder %v347, 1
    %vm988 = vcmp.ge.s32.totalorder %v348, 1
    %vm989 = vcmp.ge.s32.totalorder %v349, 1
    %vm990 = vcmp.ge.s32.totalorder %v350, 1
    %vm991 = vcmp.ge.s32.totalorder %v351, 1
    %vm992 = vcmp.ge.s32.totalorder %v352, 1
    %vm993 = vcmp.ge.s32.totalorder %v353, 1
    %vm994 = vcmp.ge.s32.totalorder %v354, 1
    %vm995 = vcmp.ge.s32.totalorder %v355, 1
    %vm996 = vcmp.ge.s32.totalorder %v356, 1
    %vm997 = vcmp.ge.s32.totalorder %v357, 1
    %vm998 = vcmp.ge.s32.totalorder %v358, 1
    %vm999 = vcmp.ge.s32.totalorder %v359, 1
    %vm1000 = vcmp.ge.s32.totalorder %v360, 1
    %vm1001 = vcmp.ge.s32.totalorder %v361, 1
    %vm1002 = vcmp.ge.s32.totalorder %v362, 1
    %vm1003 = vcmp.ge.s32.totalorder %v363, 1
    %vm1004 = vcmp.ge.s32.totalorder %v364, 1
    %vm1005 = vcmp.ge.s32.totalorder %v365, 1
    %vm1006 = vcmp.ge.s32.totalorder %v366, 1
    %vm1007 = vcmp.ge.s32.totalorder %v367, 1
    %vm1008 = vcmp.ge.s32.totalorder %v368, 1
    %vm1009 = vcmp.ge.s32.totalorder %v369, 1
    %vm1010 = vcmp.ge.s32.totalorder %v370, 1
    %vm1011 = vcmp.ge.s32.totalorder %v371, 1
    %vm1012 = vcmp.ge.s32.totalorder %v372, 1
    %vm1013 = vcmp.ge.s32.totalorder %v373, 1
    %vm1014 = vcmp.ge.s32.totalorder %v374, 1
    %vm1015 = vcmp.ge.s32.totalorder %v375, 1
    %vm1016 = vcmp.ge.s32.totalorder %v376, 1
    %vm1017 = vcmp.ge.s32.totalorder %v377, 1
    %vm1018 = vcmp.ge.s32.totalorder %v378, 1
    %vm1019 = vcmp.ge.s32.totalorder %v379, 1
    %vm1020 = vcmp.ge.s32.totalorder %v380, 1
    %vm1021 = vcmp.ge.s32.totalorder %v381, 1
    %vm1022 = vcmp.ge.s32.totalorder %v382, 1
    %vm1023 = vcmp.ge.s32.totalorder %v383, 1
    %vm1024 = vcmp.ge.s32.totalorder %v384, 1
    %vm1025 = vcmp.ge.s32.totalorder %v385, 1
    %vm1026 = vcmp.ge.s32.totalorder %v386, 1
    %vm1027 = vcmp.ge.s32.totalorder %v387, 1
    %vm1028 = vcmp.ge.s32.totalorder %v388, 1
    %vm1029 = vcmp.ge.s32.totalorder %v389, 1
    %vm1030 = vcmp.ge.s32.totalorder %v390, 1
    %vm1031 = vcmp.ge.s32.totalorder %v391, 1
    %vm1032 = vcmp.ge.s32.totalorder %v392, 1
    %vm1033 = vcmp.ge.s32.totalorder %v393, 1
    %vm1034 = vcmp.ge.s32.totalorder %v394, 1
    %vm1035 = vcmp.ge.s32.totalorder %v395, 1
    %vm1036 = vcmp.ge.s32.totalorder %v396, 1
    %vm1037 = vcmp.ge.s32.totalorder %v397, 1
    %vm1038 = vcmp.le.s32.totalorder %v270, 14
    %vm1039 = vcmp.le.s32.totalorder %v271, 14
    %vm1040 = vcmp.le.s32.totalorder %v272, 14
    %vm1041 = vcmp.le.s32.totalorder %v273, 14
    %vm1042 = vcmp.le.s32.totalorder %v274, 14
    %vm1043 = vcmp.le.s32.totalorder %v275, 14
    %vm1044 = vcmp.le.s32.totalorder %v276, 14
    %vm1045 = vcmp.le.s32.totalorder %v277, 14
    %vm1046 = vcmp.le.s32.totalorder %v278, 14
    %vm1047 = vcmp.le.s32.totalorder %v279, 14
    %vm1048 = vcmp.le.s32.totalorder %v280, 14
    %vm1049 = vcmp.le.s32.totalorder %v281, 14
    %vm1050 = vcmp.le.s32.totalorder %v282, 14
    %vm1051 = vcmp.le.s32.totalorder %v283, 14
    %vm1052 = vcmp.le.s32.totalorder %v284, 14
    %vm1053 = vcmp.le.s32.totalorder %v285, 14
    %vm1054 = vcmp.le.s32.totalorder %v286, 14
    %vm1055 = vcmp.le.s32.totalorder %v287, 14
    %vm1056 = vcmp.le.s32.totalorder %v288, 14
    %vm1057 = vcmp.le.s32.totalorder %v289, 14
    %vm1058 = vcmp.le.s32.totalorder %v290, 14
    %vm1059 = vcmp.le.s32.totalorder %v291, 14
    %vm1060 = vcmp.le.s32.totalorder %v292, 14
    %vm1061 = vcmp.le.s32.totalorder %v293, 14
    %vm1062 = vcmp.le.s32.totalorder %v294, 14
    %vm1063 = vcmp.le.s32.totalorder %v295, 14
    %vm1064 = vcmp.le.s32.totalorder %v296, 14
    %vm1065 = vcmp.le.s32.totalorder %v297, 14
    %vm1066 = vcmp.le.s32.totalorder %v298, 14
    %vm1067 = vcmp.le.s32.totalorder %v299, 14
    %vm1068 = vcmp.le.s32.totalorder %v300, 14
    %vm1069 = vcmp.le.s32.totalorder %v301, 14
    %vm1070 = vcmp.le.s32.totalorder %v302, 14
    %vm1071 = vcmp.le.s32.totalorder %v303, 14
    %vm1072 = vcmp.le.s32.totalorder %v304, 14
    %vm1073 = vcmp.le.s32.totalorder %v305, 14
    %vm1074 = vcmp.le.s32.totalorder %v306, 14
    %vm1075 = vcmp.le.s32.totalorder %v307, 14
    %vm1076 = vcmp.le.s32.totalorder %v308, 14
    %vm1077 = vcmp.le.s32.totalorder %v309, 14
    %vm1078 = vcmp.le.s32.totalorder %v310, 14
    %vm1079 = vcmp.le.s32.totalorder %v311, 14
    %vm1080 = vcmp.le.s32.totalorder %v312, 14
    %vm1081 = vcmp.le.s32.totalorder %v313, 14
    %vm1082 = vcmp.le.s32.totalorder %v314, 14
    %vm1083 = vcmp.le.s32.totalorder %v315, 14
    %vm1084 = vcmp.le.s32.totalorder %v316, 14
    %vm1085 = vcmp.le.s32.totalorder %v317, 14
    %vm1086 = vcmp.le.s32.totalorder %v318, 14
    %vm1087 = vcmp.le.s32.totalorder %v319, 14
    %vm1088 = vcmp.le.s32.totalorder %v320, 14
    %vm1089 = vcmp.le.s32.totalorder %v321, 14
    %vm1090 = vcmp.le.s32.totalorder %v322, 14
    %vm1091 = vcmp.le.s32.totalorder %v323, 14
    %vm1092 = vcmp.le.s32.totalorder %v324, 14
    %vm1093 = vcmp.le.s32.totalorder %v325, 14
    %vm1094 = vcmp.le.s32.totalorder %v326, 14
    %vm1095 = vcmp.le.s32.totalorder %v327, 14
    %vm1096 = vcmp.le.s32.totalorder %v328, 14
    %vm1097 = vcmp.le.s32.totalorder %v329, 14
    %vm1098 = vcmp.le.s32.totalorder %v330, 14
    %vm1099 = vcmp.le.s32.totalorder %v331, 14
    %vm1100 = vcmp.le.s32.totalorder %v332, 14
    %vm1101 = vcmp.le.s32.totalorder %v333, 14
    %vm1102 = vcmp.le.s32.totalorder %v334, 14
    %vm1103 = vcmp.le.s32.totalorder %v335, 14
    %vm1104 = vcmp.le.s32.totalorder %v336, 14
    %vm1105 = vcmp.le.s32.totalorder %v337, 14
    %vm1106 = vcmp.le.s32.totalorder %v338, 14
    %vm1107 = vcmp.le.s32.totalorder %v339, 14
    %vm1108 = vcmp.le.s32.totalorder %v340, 14
    %vm1109 = vcmp.le.s32.totalorder %v341, 14
    %vm1110 = vcmp.le.s32.totalorder %v342, 14
    %vm1111 = vcmp.le.s32.totalorder %v343, 14
    %vm1112 = vcmp.le.s32.totalorder %v344, 14
    %vm1113 = vcmp.le.s32.totalorder %v345, 14
    %vm1114 = vcmp.le.s32.totalorder %v346, 14
    %vm1115 = vcmp.le.s32.totalorder %v347, 14
    %vm1116 = vcmp.le.s32.totalorder %v348, 14
    %vm1117 = vcmp.le.s32.totalorder %v349, 14
    %vm1118 = vcmp.le.s32.totalorder %v350, 14
    %vm1119 = vcmp.le.s32.totalorder %v351, 14
    %vm1120 = vcmp.le.s32.totalorder %v352, 14
    %vm1121 = vcmp.le.s32.totalorder %v353, 14
    %vm1122 = vcmp.le.s32.totalorder %v354, 14
    %vm1123 = vcmp.le.s32.totalorder %v355, 14
    %vm1124 = vcmp.le.s32.totalorder %v356, 14
    %vm1125 = vcmp.le.s32.totalorder %v357, 14
    %vm1126 = vcmp.le.s32.totalorder %v358, 14
    %vm1127 = vcmp.le.s32.totalorder %v359, 14
    %vm1128 = vcmp.le.s32.totalorder %v360, 14
    %vm1129 = vcmp.le.s32.totalorder %v361, 14
    %vm1130 = vcmp.le.s32.totalorder %v362, 14
    %vm1131 = vcmp.le.s32.totalorder %v363, 14
    %vm1132 = vcmp.le.s32.totalorder %v364, 14
    %vm1133 = vcmp.le.s32.totalorder %v365, 14
    %vm1134 = vcmp.le.s32.totalorder %v366, 14
    %vm1135 = vcmp.le.s32.totalorder %v367, 14
    %vm1136 = vcmp.le.s32.totalorder %v368, 14
    %vm1137 = vcmp.le.s32.totalorder %v369, 14
    %vm1138 = vcmp.le.s32.totalorder %v370, 14
    %vm1139 = vcmp.le.s32.totalorder %v371, 14
    %vm1140 = vcmp.le.s32.totalorder %v372, 14
    %vm1141 = vcmp.le.s32.totalorder %v373, 14
    %vm1142 = vcmp.le.s32.totalorder %v374, 14
    %vm1143 = vcmp.le.s32.totalorder %v375, 14
    %vm1144 = vcmp.le.s32.totalorder %v376, 14
    %vm1145 = vcmp.le.s32.totalorder %v377, 14
    %vm1146 = vcmp.le.s32.totalorder %v378, 14
    %vm1147 = vcmp.le.s32.totalorder %v379, 14
    %vm1148 = vcmp.le.s32.totalorder %v380, 14
    %vm1149 = vcmp.le.s32.totalorder %v381, 14
    %vm1150 = vcmp.le.s32.totalorder %v382, 14
    %vm1151 = vcmp.le.s32.totalorder %v383, 14
    %vm1152 = vcmp.le.s32.totalorder %v384, 14
    %vm1153 = vcmp.le.s32.totalorder %v385, 14
    %vm1154 = vcmp.le.s32.totalorder %v386, 14
    %vm1155 = vcmp.le.s32.totalorder %v387, 14
    %vm1156 = vcmp.le.s32.totalorder %v388, 14
    %vm1157 = vcmp.le.s32.totalorder %v389, 14
    %vm1158 = vcmp.le.s32.totalorder %v390, 14
    %vm1159 = vcmp.le.s32.totalorder %v391, 14
    %vm1160 = vcmp.le.s32.totalorder %v392, 14
    %vm1161 = vcmp.le.s32.totalorder %v393, 14
    %vm1162 = vcmp.le.s32.totalorder %v394, 14
    %vm1163 = vcmp.le.s32.totalorder %v395, 14
    %vm1164 = vcmp.le.s32.totalorder %v396, 14
    %vm1165 = vcmp.le.s32.totalorder %v397, 14
    %v1166 = vrot.slane %v13, 7
    %v1167 = vrot.slane %v14, 7
    %v1168 = vrot.slane %v15, 7
    %v1169 = vrot.slane %v16, 7
    %v1170 = vrot.slane %v17, 7
    %v1171 = vrot.slane %v18, 7
    %v1172 = vrot.slane %v19, 7
    %v1173 = vrot.slane %v20, 7
    %v1174 = vrot.slane %v21, 7
    %v1175 = vrot.slane %v22, 7
    %v1176 = vrot.slane %v23, 7
    %v1177 = vrot.slane %v24, 7
    %v1178 = vrot.slane %v25, 7
    %v1179 = vrot.slane %v26, 7
    %v1180 = vrot.slane %v27, 7
    %v1181 = vrot.slane %v28, 7
    %v1182 = vrot.slane %v29, 7
    %v1183 = vrot.slane %v30, 7
    %v1184 = vrot.slane %v31, 7
    %v1185 = vrot.slane %v32, 7
    %v1186 = vrot.slane %v33, 7
    %v1187 = vrot.slane %v34, 7
    %v1188 = vrot.slane %v35, 7
    %v1189 = vrot.slane %v36, 7
    %v1190 = vrot.slane %v37, 7
    %v1191 = vrot.slane %v38, 7
    %v1192 = vrot.slane %v39, 7
    %v1193 = vrot.slane %v40, 7
    %v1194 = vrot.slane %v41, 7
    %v1195 = vrot.slane %v42, 7
    %v1196 = vrot.slane %v43, 7
    %v1197 = vrot.slane %v44, 7
    %v1198 = vrot.slane %v45, 7
    %v1199 = vrot.slane %v46, 7
    %v1200 = vrot.slane %v47, 7
    %v1201 = vrot.slane %v48, 7
    %v1202 = vrot.slane %v49, 7
    %v1203 = vrot.slane %v50, 7
    %v1204 = vrot.slane %v51, 7
    %v1205 = vrot.slane %v52, 7
    %v1206 = vrot.slane %v53, 7
    %v1207 = vrot.slane %v54, 7
    %v1208 = vrot.slane %v55, 7
    %v1209 = vrot.slane %v56, 7
    %v1210 = vrot.slane %v57, 7
    %v1211 = vrot.slane %v58, 7
    %v1212 = vrot.slane %v59, 7
    %v1213 = vrot.slane %v60, 7
    %v1214 = vrot.slane %v61, 7
    %v1215 = vrot.slane %v62, 7
    %v1216 = vrot.slane %v63, 7
    %v1217 = vrot.slane %v64, 7
    %v1218 = vrot.slane %v65, 7
    %v1219 = vrot.slane %v66, 7
    %v1220 = vrot.slane %v67, 7
    %v1221 = vrot.slane %v68, 7
    %v1222 = vrot.slane %v69, 7
    %v1223 = vrot.slane %v70, 7
    %v1224 = vrot.slane %v71, 7
    %v1225 = vrot.slane %v72, 7
    %v1226 = vrot.slane %v73, 7
    %v1227 = vrot.slane %v74, 7
    %v1228 = vrot.slane %v75, 7
    %v1229 = vrot.slane %v76, 7
    %v1230 = vrot.slane %v77, 7
    %v1231 = vrot.slane %v78, 7
    %v1232 = vrot.slane %v79, 7
    %v1233 = vrot.slane %v80, 7
    %v1234 = vrot.slane %v81, 7
    %v1235 = vrot.slane %v82, 7
    %v1236 = vrot.slane %v83, 7
    %v1237 = vrot.slane %v84, 7
    %v1238 = vrot.slane %v85, 7
    %v1239 = vrot.slane %v86, 7
    %v1240 = vrot.slane %v87, 7
    %v1241 = vrot.slane %v88, 7
    %v1242 = vrot.slane %v89, 7
    %v1243 = vrot.slane %v90, 7
    %v1244 = vrot.slane %v91, 7
    %v1245 = vrot.slane %v92, 7
    %v1246 = vrot.slane %v93, 7
    %v1247 = vrot.slane %v94, 7
    %v1248 = vrot.slane %v95, 7
    %v1249 = vrot.slane %v96, 7
    %v1250 = vrot.slane %v97, 7
    %v1251 = vrot.slane %v98, 7
    %v1252 = vrot.slane %v99, 7
    %v1253 = vrot.slane %v100, 7
    %v1254 = vrot.slane %v101, 7
    %v1255 = vrot.slane %v102, 7
    %v1256 = vrot.slane %v103, 7
    %v1257 = vrot.slane %v104, 7
    %v1258 = vrot.slane %v105, 7
    %v1259 = vrot.slane %v106, 7
    %v1260 = vrot.slane %v107, 7
    %v1261 = vrot.slane %v108, 7
    %v1262 = vrot.slane %v109, 7
    %v1263 = vrot.slane %v110, 7
    %v1264 = vrot.slane %v111, 7
    %v1265 = vrot.slane %v112, 7
    %v1266 = vrot.slane %v113, 7
    %v1267 = vrot.slane %v114, 7
    %v1268 = vrot.slane %v115, 7
    %v1269 = vrot.slane %v116, 7
    %v1270 = vrot.slane %v117, 7
    %v1271 = vrot.slane %v118, 7
    %v1272 = vrot.slane %v119, 7
    %v1273 = vrot.slane %v120, 7
    %v1274 = vrot.slane %v121, 7
    %v1275 = vrot.slane %v122, 7
    %v1276 = vrot.slane %v123, 7
    %v1277 = vrot.slane %v124, 7
    %v1278 = vrot.slane %v125, 7
    %v1279 = vrot.slane %v126, 7
    %v1280 = vrot.slane %v127, 7
    %v1281 = vrot.slane %v128, 7
    %v1282 = vrot.slane %v129, 7
    %v1283 = vrot.slane %v130, 7
    %v1284 = vrot.slane %v131, 7
    %v1285 = vrot.slane %v132, 7
    %v1286 = vrot.slane %v133, 7
    %v1287 = vrot.slane %v134, 7
    %v1288 = vrot.slane %v135, 7
    %v1289 = vrot.slane %v136, 7
    %v1290 = vrot.slane %v137, 7
    %v1291 = vrot.slane %v138, 7
    %v1292 = vrot.slane %v139, 7
    %v1293 = vrot.slane %v140, 7
    %vm1294 = vcmp.lt.s32.totalorder %v142, 1
    %v1295 = vsel %vm1294, %v1292, %v1293
    %v1296 = vsel %vm1294, %v1291, %v1292
    %v1297 = vsel %vm1294, %v1290, %v1291
    %v1298 = vsel %vm1294, %v1289, %v1290
    %v1299 = vsel %vm1294, %v1288, %v1289
    %v1300 = vsel %vm1294, %v1287, %v1288
    %v1301 = vsel %vm1294, %v1286, %v1287
    %v1302 = vsel %vm1294, %v1285, %v1286
    %v1303 = vsel %vm1294, %v1284, %v1285
    %v1304 = vsel %vm1294, %v1283, %v1284
    %v1305 = vsel %vm1294, %v1282, %v1283
    %v1306 = vsel %vm1294, %v1281, %v1282
    %v1307 = vsel %vm1294, %v1280, %v1281
    %v1308 = vsel %vm1294, %v1279, %v1280
    %v1309 = vsel %vm1294, %v1278, %v1279
    %v1310 = vsel %vm1294, %v1277, %v1278
    %v1311 = vsel %vm1294, %v1276, %v1277
    %v1312 = vsel %vm1294, %v1275, %v1276
    %v1313 = vsel %vm1294, %v1274, %v1275
    %v1314 = vsel %vm1294, %v1273, %v1274
    %v1315 = vsel %vm1294, %v1272, %v1273
    %v1316 = vsel %vm1294, %v1271, %v1272
    %v1317 = vsel %vm1294, %v1270, %v1271
    %v1318 = vsel %vm1294, %v1269, %v1270
    %v1319 = vsel %vm1294, %v1268, %v1269
    %v1320 = vsel %vm1294, %v1267, %v1268
    %v1321 = vsel %vm1294, %v1266, %v1267
    %v1322 = vsel %vm1294, %v1265, %v1266
    %v1323 = vsel %vm1294, %v1264, %v1265
    %v1324 = vsel %vm1294, %v1263, %v1264
    %v1325 = vsel %vm1294, %v1262, %v1263
    %v1326 = vsel %vm1294, %v1261, %v1262
    %v1327 = vsel %vm1294, %v1260, %v1261
    %v1328 = vsel %vm1294, %v1259, %v1260
    %v1329 = vsel %vm1294, %v1258, %v1259
    %v1330 = vsel %vm1294, %v1257, %v1258
    %v1331 = vsel %vm1294, %v1256, %v1257
    %v1332 = vsel %vm1294, %v1255, %v1256
    %v1333 = vsel %vm1294, %v1254, %v1255
    %v1334 = vsel %vm1294, %v1253, %v1254
    %v1335 = vsel %vm1294, %v1252, %v1253
    %v1336 = vsel %vm1294, %v1251, %v1252
    %v1337 = vsel %vm1294, %v1250, %v1251
    %v1338 = vsel %vm1294, %v1249, %v1250
    %v1339 = vsel %vm1294, %v1248, %v1249
    %v1340 = vsel %vm1294, %v1247, %v1248
    %v1341 = vsel %vm1294, %v1246, %v1247
    %v1342 = vsel %vm1294, %v1245, %v1246
    %v1343 = vsel %vm1294, %v1244, %v1245
    %v1344 = vsel %vm1294, %v1243, %v1244
    %v1345 = vsel %vm1294, %v1242, %v1243
    %v1346 = vsel %vm1294, %v1241, %v1242
    %v1347 = vsel %vm1294, %v1240, %v1241
    %v1348 = vsel %vm1294, %v1239, %v1240
    %v1349 = vsel %vm1294, %v1238, %v1239
    %v1350 = vsel %vm1294, %v1237, %v1238
    %v1351 = vsel %vm1294, %v1236, %v1237
    %v1352 = vsel %vm1294, %v1235, %v1236
    %v1353 = vsel %vm1294, %v1234, %v1235
    %v1354 = vsel %vm1294, %v1233, %v1234
    %v1355 = vsel %vm1294, %v1232, %v1233
    %v1356 = vsel %vm1294, %v1231, %v1232
    %v1357 = vsel %vm1294, %v1230, %v1231
    %v1358 = vsel %vm1294, %v1229, %v1230
    %v1359 = vsel %vm1294, %v1228, %v1229
    %v1360 = vsel %vm1294, %v1227, %v1228
    %v1361 = vsel %vm1294, %v1226, %v1227
    %v1362 = vsel %vm1294, %v1225, %v1226
    %v1363 = vsel %vm1294, %v1224, %v1225
    %v1364 = vsel %vm1294, %v1223, %v1224
    %v1365 = vsel %vm1294, %v1222, %v1223
    %v1366 = vsel %vm1294, %v1221, %v1222
    %v1367 = vsel %vm1294, %v1220, %v1221
    %v1368 = vsel %vm1294, %v1219, %v1220
    %v1369 = vsel %vm1294, %v1218, %v1219
    %v1370 = vsel %vm1294, %v1217, %v1218
    %v1371 = vsel %vm1294, %v1216, %v1217
    %v1372 = vsel %vm1294, %v1215, %v1216
    %v1373 = vsel %vm1294, %v1214, %v1215
    %v1374 = vsel %vm1294, %v1213, %v1214
    %v1375 = vsel %vm1294, %v1212, %v1213
    %v1376 = vsel %vm1294, %v1211, %v1212
    %v1377 = vsel %vm1294, %v1210, %v1211
    %v1378 = vsel %vm1294, %v1209, %v1210
    %v1379 = vsel %vm1294, %v1208, %v1209
    %v1380 = vsel %vm1294, %v1207, %v1208
    %v1381 = vsel %vm1294, %v1206, %v1207
    %v1382 = vsel %vm1294, %v1205, %v1206
    %v1383 = vsel %vm1294, %v1204, %v1205
    %v1384 = vsel %vm1294, %v1203, %v1204
    %v1385 = vsel %vm1294, %v1202, %v1203
    %v1386 = vsel %vm1294, %v1201, %v1202
    %v1387 = vsel %vm1294, %v1200, %v1201
    %v1388 = vsel %vm1294, %v1199, %v1200
    %v1389 = vsel %vm1294, %v1198, %v1199
    %v1390 = vsel %vm1294, %v1197, %v1198
    %v1391 = vsel %vm1294, %v1196, %v1197
    %v1392 = vsel %vm1294, %v1195, %v1196
    %v1393 = vsel %vm1294, %v1194, %v1195
    %v1394 = vsel %vm1294, %v1193, %v1194
    %v1395 = vsel %vm1294, %v1192, %v1193
    %v1396 = vsel %vm1294, %v1191, %v1192
    %v1397 = vsel %vm1294, %v1190, %v1191
    %v1398 = vsel %vm1294, %v1189, %v1190
    %v1399 = vsel %vm1294, %v1188, %v1189
    %v1400 = vsel %vm1294, %v1187, %v1188
    %v1401 = vsel %vm1294, %v1186, %v1187
    %v1402 = vsel %vm1294, %v1185, %v1186
    %v1403 = vsel %vm1294, %v1184, %v1185
    %v1404 = vsel %vm1294, %v1183, %v1184
    %v1405 = vsel %vm1294, %v1182, %v1183
    %v1406 = vsel %vm1294, %v1181, %v1182
    %v1407 = vsel %vm1294, %v1180, %v1181
    %v1408 = vsel %vm1294, %v1179, %v1180
    %v1409 = vsel %vm1294, %v1178, %v1179
    %v1410 = vsel %vm1294, %v1177, %v1178
    %v1411 = vsel %vm1294, %v1176, %v1177
    %v1412 = vsel %vm1294, %v1175, %v1176
    %v1413 = vsel %vm1294, %v1174, %v1175
    %v1414 = vsel %vm1294, %v1173, %v1174
    %v1415 = vsel %vm1294, %v1172, %v1173
    %v1416 = vsel %vm1294, %v1171, %v1172
    %v1417 = vsel %vm1294, %v1170, %v1171
    %v1418 = vsel %vm1294, %v1169, %v1170
    %v1419 = vsel %vm1294, %v1168, %v1169
    %v1420 = vsel %vm1294, %v1167, %v1168
    %v1421 = vsel %vm1294, %v1166, %v1167
    %v1422 = vsel %vm1294, %v1293, %v1166
    %vm1423 = vmand %vm654, %vm910
    %vm1424 = vmand %vm655, %vm911
    %vm1425 = vmand %vm656, %vm912
    %vm1426 = vmand %vm657, %vm913
    %vm1427 = vmand %vm658, %vm914
    %vm1428 = vmand %vm659, %vm915
    %vm1429 = vmand %vm660, %vm916
    %vm1430 = vmand %vm661, %vm917
    %vm1431 = vmand %vm662, %vm918
    %vm1432 = vmand %vm663, %vm919
    %vm1433 = vmand %vm664, %vm920
    %vm1434 = vmand %vm665, %vm921
    %vm1435 = vmand %vm666, %vm922
    %vm1436 = vmand %vm667, %vm923
    %vm1437 = vmand %vm668, %vm924
    %vm1438 = vmand %vm669, %vm925
    %vm1439 = vmand %vm670, %vm926
    %vm1440 = vmand %vm671, %vm927
    %vm1441 = vmand %vm672, %vm928
    %vm1442 = vmand %vm673, %vm929
    %vm1443 = vmand %vm674, %vm930
    %vm1444 = vmand %vm675, %vm931
    %vm1445 = vmand %vm676, %vm932
    %vm1446 = vmand %vm677, %vm933
    %vm1447 = vmand %vm678, %vm934
    %vm1448 = vmand %vm679, %vm935
    %vm1449 = vmand %vm680, %vm936
    %vm1450 = vmand %vm681, %vm937
    %vm1451 = vmand %vm682, %vm938
    %vm1452 = vmand %vm683, %vm939
    %vm1453 = vmand %vm684, %vm940
    %vm1454 = vmand %vm685, %vm941
    %vm1455 = vmand %vm686, %vm942
    %vm1456 = vmand %vm687, %vm943
    %vm1457 = vmand %vm688, %vm944
    %vm1458 = vmand %vm689, %vm945
    %vm1459 = vmand %vm690, %vm946
    %vm1460 = vmand %vm691, %vm947
    %vm1461 = vmand %vm692, %vm948
    %vm1462 = vmand %vm693, %vm949
    %vm1463 = vmand %vm694, %vm950
    %vm1464 = vmand %vm695, %vm951
    %vm1465 = vmand %vm696, %vm952
    %vm1466 = vmand %vm697, %vm953
    %vm1467 = vmand %vm698, %vm954
    %vm1468 = vmand %vm699, %vm955
    %vm1469 = vmand %vm700, %vm956
    %vm1470 = vmand %vm701, %vm957
    %vm1471 = vmand %vm702, %vm958
    %vm1472 = vmand %vm703, %vm959
    %vm1473 = vmand %vm704, %vm960
    %vm1474 = vmand %vm705, %vm961
    %vm1475 = vmand %vm706, %vm962
    %vm1476 = vmand %vm707, %vm963
    %vm1477 = vmand %vm708, %vm964
    %vm1478 = vmand %vm709, %vm965
    %vm1479 = vmand %vm710, %vm966
    %vm1480 = vmand %vm711, %vm967
    %vm1481 = vmand %vm712, %vm968
    %vm1482 = vmand %vm713, %vm969
    %vm1483 = vmand %vm714, %vm970
    %vm1484 = vmand %vm715, %vm971
    %vm1485 = vmand %vm716, %vm972
    %vm1486 = vmand %vm717, %vm973
    %vm1487 = vmand %vm718, %vm974
    %vm1488 = vmand %vm719, %vm975
    %vm1489 = vmand %vm720, %vm976
    %vm1490 = vmand %vm721, %vm977
    %vm1491 = vmand %vm722, %vm978
    %vm1492 = vmand %vm723, %vm979
    %vm1493 = vmand %vm724, %vm980
    %vm1494 = vmand %vm725, %vm981
    %vm1495 = vmand %vm726, %vm982
    %vm1496 = vmand %vm727, %vm983
    %vm1497 = vmand %vm728, %vm984
    %vm1498 = vmand %vm729, %vm985
    %vm1499 = vmand %vm730, %vm986
    %vm1500 = vmand %vm731, %vm987
    %vm1501 = vmand %vm732, %vm988
    %vm1502 = vmand %vm733, %vm989
    %vm1503 = vmand %vm734, %vm990
    %vm1504 = vmand %vm735, %vm991
    %vm1505 = vmand %vm736, %vm992
    %vm1506 = vmand %vm737, %vm993
    %vm1507 = vmand %vm738, %vm994
    %vm1508 = vmand %vm739, %vm995
    %vm1509 = vmand %vm740, %vm996
    %vm1510 = vmand %vm741, %vm997
    %vm1511 = vmand %vm742, %vm998
    %vm1512 = vmand %vm743, %vm999
    %vm1513 = vmand %vm744, %vm1000
    %vm1514 = vmand %vm745, %vm1001
    %vm1515 = vmand %vm746, %vm1002
    %vm1516 = vmand %vm747, %vm1003
    %vm1517 = vmand %vm748, %vm1004
    %vm1518 = vmand %vm749, %vm1005
    %vm1519 = vmand %vm750, %vm1006
    %vm1520 = vmand %vm751, %vm1007
    %vm1521 = vmand %vm752, %vm1008
    %vm1522 = vmand %vm753, %vm1009
    %vm1523 = vmand %vm754, %vm1010
    %vm1524 = vmand %vm755, %vm1011
    %vm1525 = vmand %vm756, %vm1012
    %vm1526 = vmand %vm757, %vm1013
    %vm1527 = vmand %vm758, %vm1014
    %vm1528 = vmand %vm759, %vm1015
    %vm1529 = vmand %vm760, %vm1016
    %vm1530 = vmand %vm761, %vm1017
    %vm1531 = vmand %vm762, %vm1018
    %vm1532 = vmand %vm763, %vm1019
    %vm1533 = vmand %vm764, %vm1020
    %vm1534 = vmand %vm765, %vm1021
    %vm1535 = vmand %vm766, %vm1022
    %vm1536 = vmand %vm767, %vm1023
    %vm1537 = vmand %vm768, %vm1024
    %vm1538 = vmand %vm769, %vm1025
    %vm1539 = vmand %vm770, %vm1026
    %vm1540 = vmand %vm771, %vm1027
    %vm1541 = vmand %vm772, %vm1028
    %vm1542 = vmand %vm773, %vm1029
    %vm1543 = vmand %vm774, %vm1030
    %vm1544 = vmand %vm775, %vm1031
    %vm1545 = vmand %vm776, %vm1032
    %vm1546 = vmand %vm777, %vm1033
    %vm1547 = vmand %vm778, %vm1034
    %vm1548 = vmand %vm779, %vm1035
    %vm1549 = vmand %vm780, %vm1036
    %vm1550 = vmand %vm781, %vm1037
    %v1551 = vsel %vm1423, %v1296, 0.0
    %v1552 = vsel %vm1424, %v1295, 0.0
    %v1553 = vsel %vm1425, %v1422, 0.0
    %v1554 = vsel %vm1426, %v1421, 0.0
    %v1555 = vsel %vm1427, %v1420, 0.0
    %v1556 = vsel %vm1428, %v1419, 0.0
    %v1557 = vsel %vm1429, %v1418, 0.0
    %v1558 = vsel %vm1430, %v1417, 0.0
    %v1559 = vsel %vm1431, %v1416, 0.0
    %v1560 = vsel %vm1432, %v1415, 0.0
    %v1561 = vsel %vm1433, %v1414, 0.0
    %v1562 = vsel %vm1434, %v1413, 0.0
    %v1563 = vsel %vm1435, %v1412, 0.0
    %v1564 = vsel %vm1436, %v1411, 0.0
    %v1565 = vsel %vm1437, %v1410, 0.0
    %v1566 = vsel %vm1438, %v1409, 0.0
    %v1567 = vsel %vm1439, %v1408, 0.0
    %v1568 = vsel %vm1440, %v1407, 0.0
    %v1569 = vsel %vm1441, %v1406, 0.0
    %v1570 = vsel %vm1442, %v1405, 0.0
    %v1571 = vsel %vm1443, %v1404, 0.0
    %v1572 = vsel %vm1444, %v1403, 0.0
    %v1573 = vsel %vm1445, %v1402, 0.0
    %v1574 = vsel %vm1446, %v1401, 0.0
    %v1575 = vsel %vm1447, %v1400, 0.0
    %v1576 = vsel %vm1448, %v1399, 0.0
    %v1577 = vsel %vm1449, %v1398, 0.0
    %v1578 = vsel %vm1450, %v1397, 0.0
    %v1579 = vsel %vm1451, %v1396, 0.0
    %v1580 = vsel %vm1452, %v1395, 0.0
    %v1581 = vsel %vm1453, %v1394, 0.0
    %v1582 = vsel %vm1454, %v1393, 0.0
    %v1583 = vsel %vm1455, %v1392, 0.0
    %v1584 = vsel %vm1456, %v1391, 0.0
    %v1585 = vsel %vm1457, %v1390, 0.0
    %v1586 = vsel %vm1458, %v1389, 0.0
    %v1587 = vsel %vm1459, %v1388, 0.0
    %v1588 = vsel %vm1460, %v1387, 0.0
    %v1589 = vsel %vm1461, %v1386, 0.0
    %v1590 = vsel %vm1462, %v1385, 0.0
    %v1591 = vsel %vm1463, %v1384, 0.0
    %v1592 = vsel %vm1464, %v1383, 0.0
    %v1593 = vsel %vm1465, %v1382, 0.0
    %v1594 = vsel %vm1466, %v1381, 0.0
    %v1595 = vsel %vm1467, %v1380, 0.0
    %v1596 = vsel %vm1468, %v1379, 0.0
    %v1597 = vsel %vm1469, %v1378, 0.0
    %v1598 = vsel %vm1470, %v1377, 0.0
    %v1599 = vsel %vm1471, %v1376, 0.0
    %v1600 = vsel %vm1472, %v1375, 0.0
    %v1601 = vsel %vm1473, %v1374, 0.0
    %v1602 = vsel %vm1474, %v1373, 0.0
    %v1603 = vsel %vm1475, %v1372, 0.0
    %v1604 = vsel %vm1476, %v1371, 0.0
    %v1605 = vsel %vm1477, %v1370, 0.0
    %v1606 = vsel %vm1478, %v1369, 0.0
    %v1607 = vsel %vm1479, %v1368, 0.0
    %v1608 = vsel %vm1480, %v1367, 0.0
    %v1609 = vsel %vm1481, %v1366, 0.0
    %v1610 = vsel %vm1482, %v1365, 0.0
    %v1611 = vsel %vm1483, %v1364, 0.0
    %v1612 = vsel %vm1484, %v1363, 0.0
    %v1613 = vsel %vm1485, %v1362, 0.0
    %v1614 = vsel %vm1486, %v1361, 0.0
    %v1615 = vsel %vm1487, %v1360, 0.0
    %v1616 = vsel %vm1488, %v1359, 0.0
    %v1617 = vsel %vm1489, %v1358, 0.0
    %v1618 = vsel %vm1490, %v1357, 0.0
    %v1619 = vsel %vm1491, %v1356, 0.0
    %v1620 = vsel %vm1492, %v1355, 0.0
    %v1621 = vsel %vm1493, %v1354, 0.0
    %v1622 = vsel %vm1494, %v1353, 0.0
    %v1623 = vsel %vm1495, %v1352, 0.0
    %v1624 = vsel %vm1496, %v1351, 0.0
    %v1625 = vsel %vm1497, %v1350, 0.0
    %v1626 = vsel %vm1498, %v1349, 0.0
    %v1627 = vsel %vm1499, %v1348, 0.0
    %v1628 = vsel %vm1500, %v1347, 0.0
    %v1629 = vsel %vm1501, %v1346, 0.0
    %v1630 = vsel %vm1502, %v1345, 0.0
    %v1631 = vsel %vm1503, %v1344, 0.0
    %v1632 = vsel %vm1504, %v1343, 0.0
    %v1633 = vsel %vm1505, %v1342, 0.0
    %v1634 = vsel %vm1506, %v1341, 0.0
    %v1635 = vsel %vm1507, %v1340, 0.0
    %v1636 = vsel %vm1508, %v1339, 0.0
    %v1637 = vsel %vm1509, %v1338, 0.0
    %v1638 = vsel %vm1510, %v1337, 0.0
    %v1639 = vsel %vm1511, %v1336, 0.0
    %v1640 = vsel %vm1512, %v1335, 0.0
    %v1641 = vsel %vm1513, %v1334, 0.0
    %v1642 = vsel %vm1514, %v1333, 0.0
    %v1643 = vsel %vm1515, %v1332, 0.0
    %v1644 = vsel %vm1516, %v1331, 0.0
    %v1645 = vsel %vm1517, %v1330, 0.0
    %v1646 = vsel %vm1518, %v1329, 0.0
    %v1647 = vsel %vm1519, %v1328, 0.0
    %v1648 = vsel %vm1520, %v1327, 0.0
    %v1649 = vsel %vm1521, %v1326, 0.0
    %v1650 = vsel %vm1522, %v1325, 0.0
    %v1651 = vsel %vm1523, %v1324, 0.0
    %v1652 = vsel %vm1524, %v1323, 0.0
    %v1653 = vsel %vm1525, %v1322, 0.0
    %v1654 = vsel %vm1526, %v1321, 0.0
    %v1655 = vsel %vm1527, %v1320, 0.0
    %v1656 = vsel %vm1528, %v1319, 0.0
    %v1657 = vsel %vm1529, %v1318, 0.0
    %v1658 = vsel %vm1530, %v1317, 0.0
    %v1659 = vsel %vm1531, %v1316, 0.0
    %v1660 = vsel %vm1532, %v1315, 0.0
    %v1661 = vsel %vm1533, %v1314, 0.0
    %v1662 = vsel %vm1534, %v1313, 0.0
    %v1663 = vsel %vm1535, %v1312, 0.0
    %v1664 = vsel %vm1536, %v1311, 0.0
    %v1665 = vsel %vm1537, %v1310, 0.0
    %v1666 = vsel %vm1538, %v1309, 0.0
    %v1667 = vsel %vm1539, %v1308, 0.0
    %v1668 = vsel %vm1540, %v1307, 0.0
    %v1669 = vsel %vm1541, %v1306, 0.0
    %v1670 = vsel %vm1542, %v1305, 0.0
    %v1671 = vsel %vm1543, %v1304, 0.0
    %v1672 = vsel %vm1544, %v1303, 0.0
    %v1673 = vsel %vm1545, %v1302, 0.0
    %v1674 = vsel %vm1546, %v1301, 0.0
    %v1675 = vsel %vm1547, %v1300, 0.0
    %v1676 = vsel %vm1548, %v1299, 0.0
    %v1677 = vsel %vm1549, %v1298, 0.0
    %v1678 = vsel %vm1550, %v1297, 0.0
    %v1679 = vpack.c.bf16 %v1552, %v1551
    %v1680 = vpack.c.bf16 %v1554, %v1553
    %v1681 = vpack.c.bf16 %v1556, %v1555
    %v1682 = vpack.c.bf16 %v1558, %v1557
    %v1683 = vpack.c.bf16 %v1560, %v1559
    %v1684 = vpack.c.bf16 %v1562, %v1561
    %v1685 = vpack.c.bf16 %v1564, %v1563
    %v1686 = vpack.c.bf16 %v1566, %v1565
    %v1687 = vpack.c.bf16 %v1568, %v1567
    %v1688 = vpack.c.bf16 %v1570, %v1569
    %v1689 = vpack.c.bf16 %v1572, %v1571
    %v1690 = vpack.c.bf16 %v1574, %v1573
    %v1691 = vpack.c.bf16 %v1576, %v1575
    %v1692 = vpack.c.bf16 %v1578, %v1577
    %v1693 = vpack.c.bf16 %v1580, %v1579
    %v1694 = vpack.c.bf16 %v1582, %v1581
    %v1695 = vpack.c.bf16 %v1584, %v1583
    %v1696 = vpack.c.bf16 %v1586, %v1585
    %v1697 = vpack.c.bf16 %v1588, %v1587
    %v1698 = vpack.c.bf16 %v1590, %v1589
    %v1699 = vpack.c.bf16 %v1592, %v1591
    %v1700 = vpack.c.bf16 %v1594, %v1593
    %v1701 = vpack.c.bf16 %v1596, %v1595
    %v1702 = vpack.c.bf16 %v1598, %v1597
    %v1703 = vpack.c.bf16 %v1600, %v1599
    %v1704 = vpack.c.bf16 %v1602, %v1601
    %v1705 = vpack.c.bf16 %v1604, %v1603
    %v1706 = vpack.c.bf16 %v1606, %v1605
    %v1707 = vpack.c.bf16 %v1608, %v1607
    %v1708 = vpack.c.bf16 %v1610, %v1609
    %v1709 = vpack.c.bf16 %v1612, %v1611
    %v1710 = vpack.c.bf16 %v1614, %v1613
    %v1711 = vpack.c.bf16 %v1616, %v1615
    %v1712 = vpack.c.bf16 %v1618, %v1617
    %v1713 = vpack.c.bf16 %v1620, %v1619
    %v1714 = vpack.c.bf16 %v1622, %v1621
    %v1715 = vpack.c.bf16 %v1624, %v1623
    %v1716 = vpack.c.bf16 %v1626, %v1625
    %v1717 = vpack.c.bf16 %v1628, %v1627
    %v1718 = vpack.c.bf16 %v1630, %v1629
    %v1719 = vpack.c.bf16 %v1632, %v1631
    %v1720 = vpack.c.bf16 %v1634, %v1633
    %v1721 = vpack.c.bf16 %v1636, %v1635
    %v1722 = vpack.c.bf16 %v1638, %v1637
    %v1723 = vpack.c.bf16 %v1640, %v1639
    %v1724 = vpack.c.bf16 %v1642, %v1641
    %v1725 = vpack.c.bf16 %v1644, %v1643
    %v1726 = vpack.c.bf16 %v1646, %v1645
    %v1727 = vpack.c.bf16 %v1648, %v1647
    %v1728 = vpack.c.bf16 %v1650, %v1649
    %v1729 = vpack.c.bf16 %v1652, %v1651
    %v1730 = vpack.c.bf16 %v1654, %v1653
    %v1731 = vpack.c.bf16 %v1656, %v1655
    %v1732 = vpack.c.bf16 %v1658, %v1657
    %v1733 = vpack.c.bf16 %v1660, %v1659
    %v1734 = vpack.c.bf16 %v1662, %v1661
    %v1735 = vpack.c.bf16 %v1664, %v1663
    %v1736 = vpack.c.bf16 %v1666, %v1665
    %v1737 = vpack.c.bf16 %v1668, %v1667
    %v1738 = vpack.c.bf16 %v1670, %v1669
    %v1739 = vpack.c.bf16 %v1672, %v1671
    %v1740 = vpack.c.bf16 %v1674, %v1673
    %v1741 = vpack.c.bf16 %v1676, %v1675
    %v1742 = vpack.c.bf16 %v1678, %v1677
    %v1743 = vld [vmem:[%s1] sm:$0xf]
    %v1744 = vld [vmem:[%s1 + $0x4] sm:$0xf]
    %v1745 = vld [vmem:[%s1 + $0x8] sm:$0xf]
    %v1746 = vld [vmem:[%s1 + $0xc] sm:$0xf]
    %v1747 = vld [vmem:[%s1 + $0x10] sm:$0xf]
    %v1748 = vld [vmem:[%s1 + $0x14] sm:$0xf]
    %v1749 = vld [vmem:[%s1 + $0x18] sm:$0xf]
    %v1750 = vld [vmem:[%s1 + $0x1c] sm:$0xf]
    %v1759 = vunpack.c.l.b16 %v1743
    %v1760 = vunpack.c.l.b16 %v1744
    %v1761 = vunpack.c.l.b16 %v1745
    %v1762 = vunpack.c.l.b16 %v1746
    %v1763 = vunpack.c.l.b16 %v1747
    %v1764 = vunpack.c.l.b16 %v1748
    %v1765 = vunpack.c.l.b16 %v1749
    %v1766 = vunpack.c.l.b16 %v1750
    %v1767 = vpack.c.b16 %v1760, %v1759
    %v1768 = vpack.c.b16 %v1762, %v1761
    %v1769 = vpack.c.b16 %v1764, %v1763
    %v1770 = vpack.c.b16 %v1766, %v1765
    %vm1775 = vcmask 523264
    %v1777 = vsel %vm1775, %v1679, 0
    %v1780 = vsel %vm1775, %v1680, 0
    %v1783 = vsel %vm1775, %v1681, 0
    %v1786 = vsel %vm1775, %v1682, 0
    %v1789 = vsel %vm1775, %v1683, 0
    %v1792 = vsel %vm1775, %v1684, 0
    %v1795 = vsel %vm1775, %v1685, 0
    %v1798 = vsel %vm1775, %v1686, 0
    %v1801 = vsel %vm1775, %v1687, 0
    %v1804 = vsel %vm1775, %v1688, 0
    %v1807 = vsel %vm1775, %v1689, 0
    %v1810 = vsel %vm1775, %v1690, 0
    %v1813 = vsel %vm1775, %v1691, 0
    %v1816 = vsel %vm1775, %v1692, 0
    %v1819 = vsel %vm1775, %v1693, 0
    %v1822 = vsel %vm1775, %v1694, 0
    %v1825 = vsel %vm1775, %v1695, 0
    %v1828 = vsel %vm1775, %v1696, 0
    %v1831 = vsel %vm1775, %v1697, 0
    %v1834 = vsel %vm1775, %v1698, 0
    %v1837 = vsel %vm1775, %v1699, 0
    %v1840 = vsel %vm1775, %v1700, 0
    %v1843 = vsel %vm1775, %v1701, 0
    %v1846 = vsel %vm1775, %v1702, 0
    %v1849 = vsel %vm1775, %v1703, 0
    %v1852 = vsel %vm1775, %v1704, 0
    %v1855 = vsel %vm1775, %v1705, 0
    %v1858 = vsel %vm1775, %v1706, 0
    %v1861 = vsel %vm1775, %v1707, 0
    %v1864 = vsel %vm1775, %v1708, 0
    %v1867 = vsel %vm1775, %v1709, 0
    %v1870 = vsel %vm1775, %v1710, 0
    %v1873 = vsel %vm1775, %v1711, 0
    %v1876 = vsel %vm1775, %v1712, 0
    %v1879 = vsel %vm1775, %v1713, 0
    %v1882 = vsel %vm1775, %v1714, 0
    %v1885 = vsel %vm1775, %v1715, 0
    %v1888 = vsel %vm1775, %v1716, 0
    %v1891 = vsel %vm1775, %v1717, 0
    %v1894 = vsel %vm1775, %v1718, 0
    %v1897 = vsel %vm1775, %v1719, 0
    %v1900 = vsel %vm1775, %v1720, 0
    %v1903 = vsel %vm1775, %v1721, 0
    %v1906 = vsel %vm1775, %v1722, 0
    %v1909 = vsel %vm1775, %v1723, 0
    %v1912 = vsel %vm1775, %v1724, 0
    %v1915 = vsel %vm1775, %v1725, 0
    %v1918 = vsel %vm1775, %v1726, 0
    %v1921 = vsel %vm1775, %v1727, 0
    %v1924 = vsel %vm1775, %v1728, 0
    %v1927 = vsel %vm1775, %v1729, 0
    %v1930 = vsel %vm1775, %v1730, 0
    %v1933 = vsel %vm1775, %v1731, 0
    %v1936 = vsel %vm1775, %v1732, 0
    %v1939 = vsel %vm1775, %v1733, 0
    %v1942 = vsel %vm1775, %v1734, 0
    %v1945 = vsel %vm1775, %v1735, 0
    %v1948 = vsel %vm1775, %v1736, 0
    %v1951 = vsel %vm1775, %v1737, 0
    %v1954 = vsel %vm1775, %v1738, 0
    %v1957 = vsel %vm1775, %v1739, 0
    %v1960 = vsel %vm1775, %v1740, 0
    %v1963 = vsel %vm1775, %v1741, 0
    %v1966 = vsel %vm1775, %v1742, 0
    %1968 = vmatpush.bf16.msra.mxu0 0
    %1969 = vmatpush.bf16.msra.mxu0 0
    %1970 = vmatpush.bf16.msra.mxu0 0
    %1971 = vmatpush.bf16.msra.mxu0 0
    %1972 = vmatpush.bf16.msra.mxu0 %v1770
    %1973 = vmatpush.bf16.msra.mxu0 %v1769
    %1974 = vmatpush.bf16.msra.mxu0 %v1768
    %1975 = vmatpush.bf16.msra.mxu0 %v1767
    %1976 = vmatmul.bf16.gmra.mxu0 %v1777
    %v1977 = vpop.f32.mrf.mxu0
    %v1978 = vadd.f32 0.0, %v1977
    %v1979 = vpop.f32.mrf.mxu0
    %v1980 = vadd.f32 0.0, %v1979
    %1981 = vmatmul.bf16.gmra.mxu0 %v1780
    %v1982 = vpop.f32.mrf.mxu0
    %v1983 = vadd.f32 0.0, %v1982
    %v1984 = vpop.f32.mrf.mxu0
    %v1985 = vadd.f32 0.0, %v1984
    %1986 = vmatmul.bf16.gmra.mxu0 %v1783
    %v1987 = vpop.f32.mrf.mxu0
    %v1988 = vadd.f32 0.0, %v1987
    %v1989 = vpop.f32.mrf.mxu0
    %v1990 = vadd.f32 0.0, %v1989
    %1991 = vmatmul.bf16.gmra.mxu0 %v1786
    %v1992 = vpop.f32.mrf.mxu0
    %v1993 = vadd.f32 0.0, %v1992
    %v1994 = vpop.f32.mrf.mxu0
    %v1995 = vadd.f32 0.0, %v1994
    %1996 = vmatmul.bf16.gmra.mxu0 %v1789
    %v1997 = vpop.f32.mrf.mxu0
    %v1998 = vadd.f32 0.0, %v1997
    %v1999 = vpop.f32.mrf.mxu0
    %v2000 = vadd.f32 0.0, %v1999
    %2001 = vmatmul.bf16.gmra.mxu0 %v1792
    %v2002 = vpop.f32.mrf.mxu0
    %v2003 = vadd.f32 0.0, %v2002
    %v2004 = vpop.f32.mrf.mxu0
    %v2005 = vadd.f32 0.0, %v2004
    %2006 = vmatmul.bf16.gmra.mxu0 %v1795
    %v2007 = vpop.f32.mrf.mxu0
    %v2008 = vadd.f32 0.0, %v2007
    %v2009 = vpop.f32.mrf.mxu0
    %v2010 = vadd.f32 0.0, %v2009
    %2011 = vmatmul.bf16.gmra.mxu0 %v1798
    %v2012 = vpop.f32.mrf.mxu0
    %v2013 = vadd.f32 0.0, %v2012
    %v2014 = vpop.f32.mrf.mxu0
    %v2015 = vadd.f32 0.0, %v2014
    %2016 = vmatmul.bf16.gmra.mxu0 %v1801
    %v2017 = vpop.f32.mrf.mxu0
    %v2018 = vadd.f32 0.0, %v2017
    %v2019 = vpop.f32.mrf.mxu0
    %v2020 = vadd.f32 0.0, %v2019
    %2021 = vmatmul.bf16.gmra.mxu0 %v1804
    %v2022 = vpop.f32.mrf.mxu0
    %v2023 = vadd.f32 0.0, %v2022
    %v2024 = vpop.f32.mrf.mxu0
    %v2025 = vadd.f32 0.0, %v2024
    %2026 = vmatmul.bf16.gmra.mxu0 %v1807
    %v2027 = vpop.f32.mrf.mxu0
    %v2028 = vadd.f32 0.0, %v2027
    %v2029 = vpop.f32.mrf.mxu0
    %v2030 = vadd.f32 0.0, %v2029
    %2031 = vmatmul.bf16.gmra.mxu0 %v1810
    %v2032 = vpop.f32.mrf.mxu0
    %v2033 = vadd.f32 0.0, %v2032
    %v2034 = vpop.f32.mrf.mxu0
    %v2035 = vadd.f32 0.0, %v2034
    %2036 = vmatmul.bf16.gmra.mxu0 %v1813
    %v2037 = vpop.f32.mrf.mxu0
    %v2038 = vadd.f32 0.0, %v2037
    %v2039 = vpop.f32.mrf.mxu0
    %v2040 = vadd.f32 0.0, %v2039
    %2041 = vmatmul.bf16.gmra.mxu0 %v1816
    %v2042 = vpop.f32.mrf.mxu0
    %v2043 = vadd.f32 0.0, %v2042
    %v2044 = vpop.f32.mrf.mxu0
    %v2045 = vadd.f32 0.0, %v2044
    %2046 = vmatmul.bf16.gmra.mxu0 %v1819
    %v2047 = vpop.f32.mrf.mxu0
    %v2048 = vadd.f32 0.0, %v2047
    %v2049 = vpop.f32.mrf.mxu0
    %v2050 = vadd.f32 0.0, %v2049
    %2051 = vmatmul.bf16.gmra.mxu0 %v1822
    %v2052 = vpop.f32.mrf.mxu0
    %v2053 = vadd.f32 0.0, %v2052
    %v2054 = vpop.f32.mrf.mxu0
    %v2055 = vadd.f32 0.0, %v2054
    %2056 = vmatmul.bf16.gmra.mxu0 %v1825
    %v2057 = vpop.f32.mrf.mxu0
    %v2058 = vadd.f32 0.0, %v2057
    %v2059 = vpop.f32.mrf.mxu0
    %v2060 = vadd.f32 0.0, %v2059
    %2061 = vmatmul.bf16.gmra.mxu0 %v1828
    %v2062 = vpop.f32.mrf.mxu0
    %v2063 = vadd.f32 0.0, %v2062
    %v2064 = vpop.f32.mrf.mxu0
    %v2065 = vadd.f32 0.0, %v2064
    %2066 = vmatmul.bf16.gmra.mxu0 %v1831
    %v2067 = vpop.f32.mrf.mxu0
    %v2068 = vadd.f32 0.0, %v2067
    %v2069 = vpop.f32.mrf.mxu0
    %v2070 = vadd.f32 0.0, %v2069
    %2071 = vmatmul.bf16.gmra.mxu0 %v1834
    %v2072 = vpop.f32.mrf.mxu0
    %v2073 = vadd.f32 0.0, %v2072
    %v2074 = vpop.f32.mrf.mxu0
    %v2075 = vadd.f32 0.0, %v2074
    %2076 = vmatmul.bf16.gmra.mxu0 %v1837
    %v2077 = vpop.f32.mrf.mxu0
    %v2078 = vadd.f32 0.0, %v2077
    %v2079 = vpop.f32.mrf.mxu0
    %v2080 = vadd.f32 0.0, %v2079
    %2081 = vmatmul.bf16.gmra.mxu0 %v1840
    %v2082 = vpop.f32.mrf.mxu0
    %v2083 = vadd.f32 0.0, %v2082
    %v2084 = vpop.f32.mrf.mxu0
    %v2085 = vadd.f32 0.0, %v2084
    %2086 = vmatmul.bf16.gmra.mxu0 %v1843
    %v2087 = vpop.f32.mrf.mxu0
    %v2088 = vadd.f32 0.0, %v2087
    %v2089 = vpop.f32.mrf.mxu0
    %v2090 = vadd.f32 0.0, %v2089
    %2091 = vmatmul.bf16.gmra.mxu0 %v1846
    %v2092 = vpop.f32.mrf.mxu0
    %v2093 = vadd.f32 0.0, %v2092
    %v2094 = vpop.f32.mrf.mxu0
    %v2095 = vadd.f32 0.0, %v2094
    %2096 = vmatmul.bf16.gmra.mxu0 %v1849
    %v2097 = vpop.f32.mrf.mxu0
    %v2098 = vadd.f32 0.0, %v2097
    %v2099 = vpop.f32.mrf.mxu0
    %v2100 = vadd.f32 0.0, %v2099
    %2101 = vmatmul.bf16.gmra.mxu0 %v1852
    %v2102 = vpop.f32.mrf.mxu0
    %v2103 = vadd.f32 0.0, %v2102
    %v2104 = vpop.f32.mrf.mxu0
    %v2105 = vadd.f32 0.0, %v2104
    %2106 = vmatmul.bf16.gmra.mxu0 %v1855
    %v2107 = vpop.f32.mrf.mxu0
    %v2108 = vadd.f32 0.0, %v2107
    %v2109 = vpop.f32.mrf.mxu0
    %v2110 = vadd.f32 0.0, %v2109
    %2111 = vmatmul.bf16.gmra.mxu0 %v1858
    %v2112 = vpop.f32.mrf.mxu0
    %v2113 = vadd.f32 0.0, %v2112
    %v2114 = vpop.f32.mrf.mxu0
    %v2115 = vadd.f32 0.0, %v2114
    %2116 = vmatmul.bf16.gmra.mxu0 %v1861
    %v2117 = vpop.f32.mrf.mxu0
    %v2118 = vadd.f32 0.0, %v2117
    %v2119 = vpop.f32.mrf.mxu0
    %v2120 = vadd.f32 0.0, %v2119
    %2121 = vmatmul.bf16.gmra.mxu0 %v1864
    %v2122 = vpop.f32.mrf.mxu0
    %v2123 = vadd.f32 0.0, %v2122
    %v2124 = vpop.f32.mrf.mxu0
    %v2125 = vadd.f32 0.0, %v2124
    %2126 = vmatmul.bf16.gmra.mxu0 %v1867
    %v2127 = vpop.f32.mrf.mxu0
    %v2128 = vadd.f32 0.0, %v2127
    %v2129 = vpop.f32.mrf.mxu0
    %v2130 = vadd.f32 0.0, %v2129
    %2131 = vmatmul.bf16.gmra.mxu0 %v1870
    %v2132 = vpop.f32.mrf.mxu0
    %v2133 = vadd.f32 0.0, %v2132
    %v2134 = vpop.f32.mrf.mxu0
    %v2135 = vadd.f32 0.0, %v2134
    %2136 = vmatmul.bf16.gmra.mxu0 %v1873
    %v2137 = vpop.f32.mrf.mxu0
    %v2138 = vadd.f32 0.0, %v2137
    %v2139 = vpop.f32.mrf.mxu0
    %v2140 = vadd.f32 0.0, %v2139
    %2141 = vmatmul.bf16.gmra.mxu0 %v1876
    %v2142 = vpop.f32.mrf.mxu0
    %v2143 = vadd.f32 0.0, %v2142
    %v2144 = vpop.f32.mrf.mxu0
    %v2145 = vadd.f32 0.0, %v2144
    %2146 = vmatmul.bf16.gmra.mxu0 %v1879
    %v2147 = vpop.f32.mrf.mxu0
    %v2148 = vadd.f32 0.0, %v2147
    %v2149 = vpop.f32.mrf.mxu0
    %v2150 = vadd.f32 0.0, %v2149
    %2151 = vmatmul.bf16.gmra.mxu0 %v1882
    %v2152 = vpop.f32.mrf.mxu0
    %v2153 = vadd.f32 0.0, %v2152
    %v2154 = vpop.f32.mrf.mxu0
    %v2155 = vadd.f32 0.0, %v2154
    %2156 = vmatmul.bf16.gmra.mxu0 %v1885
    %v2157 = vpop.f32.mrf.mxu0
    %v2158 = vadd.f32 0.0, %v2157
    %v2159 = vpop.f32.mrf.mxu0
    %v2160 = vadd.f32 0.0, %v2159
    %2161 = vmatmul.bf16.gmra.mxu0 %v1888
    %v2162 = vpop.f32.mrf.mxu0
    %v2163 = vadd.f32 0.0, %v2162
    %v2164 = vpop.f32.mrf.mxu0
    %v2165 = vadd.f32 0.0, %v2164
    %2166 = vmatmul.bf16.gmra.mxu0 %v1891
    %v2167 = vpop.f32.mrf.mxu0
    %v2168 = vadd.f32 0.0, %v2167
    %v2169 = vpop.f32.mrf.mxu0
    %v2170 = vadd.f32 0.0, %v2169
    %2171 = vmatmul.bf16.gmra.mxu0 %v1894
    %v2172 = vpop.f32.mrf.mxu0
    %v2173 = vadd.f32 0.0, %v2172
    %v2174 = vpop.f32.mrf.mxu0
    %v2175 = vadd.f32 0.0, %v2174
    %2176 = vmatmul.bf16.gmra.mxu0 %v1897
    %v2177 = vpop.f32.mrf.mxu0
    %v2178 = vadd.f32 0.0, %v2177
    %v2179 = vpop.f32.mrf.mxu0
    %v2180 = vadd.f32 0.0, %v2179
    %2181 = vmatmul.bf16.gmra.mxu0 %v1900
    %v2182 = vpop.f32.mrf.mxu0
    %v2183 = vadd.f32 0.0, %v2182
    %v2184 = vpop.f32.mrf.mxu0
    %v2185 = vadd.f32 0.0, %v2184
    %2186 = vmatmul.bf16.gmra.mxu0 %v1903
    %v2187 = vpop.f32.mrf.mxu0
    %v2188 = vadd.f32 0.0, %v2187
    %v2189 = vpop.f32.mrf.mxu0
    %v2190 = vadd.f32 0.0, %v2189
    %2191 = vmatmul.bf16.gmra.mxu0 %v1906
    %v2192 = vpop.f32.mrf.mxu0
    %v2193 = vadd.f32 0.0, %v2192
    %v2194 = vpop.f32.mrf.mxu0
    %v2195 = vadd.f32 0.0, %v2194
    %2196 = vmatmul.bf16.gmra.mxu0 %v1909
    %v2197 = vpop.f32.mrf.mxu0
    %v2198 = vadd.f32 0.0, %v2197
    %v2199 = vpop.f32.mrf.mxu0
    %v2200 = vadd.f32 0.0, %v2199
    %2201 = vmatmul.bf16.gmra.mxu0 %v1912
    %v2202 = vpop.f32.mrf.mxu0
    %v2203 = vadd.f32 0.0, %v2202
    %v2204 = vpop.f32.mrf.mxu0
    %v2205 = vadd.f32 0.0, %v2204
    %2206 = vmatmul.bf16.gmra.mxu0 %v1915
    %v2207 = vpop.f32.mrf.mxu0
    %v2208 = vadd.f32 0.0, %v2207
    %v2209 = vpop.f32.mrf.mxu0
    %v2210 = vadd.f32 0.0, %v2209
    %2211 = vmatmul.bf16.gmra.mxu0 %v1918
    %v2212 = vpop.f32.mrf.mxu0
    %v2213 = vadd.f32 0.0, %v2212
    %v2214 = vpop.f32.mrf.mxu0
    %v2215 = vadd.f32 0.0, %v2214
    %2216 = vmatmul.bf16.gmra.mxu0 %v1921
    %v2217 = vpop.f32.mrf.mxu0
    %v2218 = vadd.f32 0.0, %v2217
    %v2219 = vpop.f32.mrf.mxu0
    %v2220 = vadd.f32 0.0, %v2219
    %2221 = vmatmul.bf16.gmra.mxu0 %v1924
    %v2222 = vpop.f32.mrf.mxu0
    %v2223 = vadd.f32 0.0, %v2222
    %v2224 = vpop.f32.mrf.mxu0
    %v2225 = vadd.f32 0.0, %v2224
    %2226 = vmatmul.bf16.gmra.mxu0 %v1927
    %v2227 = vpop.f32.mrf.mxu0
    %v2228 = vadd.f32 0.0, %v2227
    %v2229 = vpop.f32.mrf.mxu0
    %v2230 = vadd.f32 0.0, %v2229
    %2231 = vmatmul.bf16.gmra.mxu0 %v1930
    %v2232 = vpop.f32.mrf.mxu0
    %v2233 = vadd.f32 0.0, %v2232
    %v2234 = vpop.f32.mrf.mxu0
    %v2235 = vadd.f32 0.0, %v2234
    %2236 = vmatmul.bf16.gmra.mxu0 %v1933
    %v2237 = vpop.f32.mrf.mxu0
    %v2238 = vadd.f32 0.0, %v2237
    %v2239 = vpop.f32.mrf.mxu0
    %v2240 = vadd.f32 0.0, %v2239
    %2241 = vmatmul.bf16.gmra.mxu0 %v1936
    %v2242 = vpop.f32.mrf.mxu0
    %v2243 = vadd.f32 0.0, %v2242
    %v2244 = vpop.f32.mrf.mxu0
    %v2245 = vadd.f32 0.0, %v2244
    %2246 = vmatmul.bf16.gmra.mxu0 %v1939
    %v2247 = vpop.f32.mrf.mxu0
    %v2248 = vadd.f32 0.0, %v2247
    %v2249 = vpop.f32.mrf.mxu0
    %v2250 = vadd.f32 0.0, %v2249
    %2251 = vmatmul.bf16.gmra.mxu0 %v1942
    %v2252 = vpop.f32.mrf.mxu0
    %v2253 = vadd.f32 0.0, %v2252
    %v2254 = vpop.f32.mrf.mxu0
    %v2255 = vadd.f32 0.0, %v2254
    %2256 = vmatmul.bf16.gmra.mxu0 %v1945
    %v2257 = vpop.f32.mrf.mxu0
    %v2258 = vadd.f32 0.0, %v2257
    %v2259 = vpop.f32.mrf.mxu0
    %v2260 = vadd.f32 0.0, %v2259
    %2261 = vmatmul.bf16.gmra.mxu0 %v1948
    %v2262 = vpop.f32.mrf.mxu0
    %v2263 = vadd.f32 0.0, %v2262
    %v2264 = vpop.f32.mrf.mxu0
    %v2265 = vadd.f32 0.0, %v2264
    %2266 = vmatmul.bf16.gmra.mxu0 %v1951
    %v2267 = vpop.f32.mrf.mxu0
    %v2268 = vadd.f32 0.0, %v2267
    %v2269 = vpop.f32.mrf.mxu0
    %v2270 = vadd.f32 0.0, %v2269
    %2271 = vmatmul.bf16.gmra.mxu0 %v1954
    %v2272 = vpop.f32.mrf.mxu0
    %v2273 = vadd.f32 0.0, %v2272
    %v2274 = vpop.f32.mrf.mxu0
    %v2275 = vadd.f32 0.0, %v2274
    %2276 = vmatmul.bf16.gmra.mxu0 %v1957
    %v2277 = vpop.f32.mrf.mxu0
    %v2278 = vadd.f32 0.0, %v2277
    %v2279 = vpop.f32.mrf.mxu0
    %v2280 = vadd.f32 0.0, %v2279
    %2281 = vmatmul.bf16.gmra.mxu0 %v1960
    %v2282 = vpop.f32.mrf.mxu0
    %v2283 = vadd.f32 0.0, %v2282
    %v2284 = vpop.f32.mrf.mxu0
    %v2285 = vadd.f32 0.0, %v2284
    %2286 = vmatmul.bf16.gmra.mxu0 %v1963
    %v2287 = vpop.f32.mrf.mxu0
    %v2288 = vadd.f32 0.0, %v2287
    %v2289 = vpop.f32.mrf.mxu0
    %v2290 = vadd.f32 0.0, %v2289
    %2291 = vmatmul.bf16.gmra.mxu0 %v1966
    %v2292 = vpop.f32.mrf.mxu0
    %v2293 = vadd.f32 0.0, %v2292
    %v2294 = vpop.f32.mrf.mxu0
    %v2295 = vadd.f32 0.0, %v2294
    %2296 = vdwg.mxu0
    %v2297 = vadd.f32 %v13, %v1978
    %v2298 = vadd.f32 %v14, %v1980
    %v2299 = vadd.f32 %v15, %v1983
    %v2300 = vadd.f32 %v16, %v1985
    %v2301 = vadd.f32 %v17, %v1988
    %v2302 = vadd.f32 %v18, %v1990
    %v2303 = vadd.f32 %v19, %v1993
    %v2304 = vadd.f32 %v20, %v1995
    %v2305 = vadd.f32 %v21, %v1998
    %v2306 = vadd.f32 %v22, %v2000
    %v2307 = vadd.f32 %v23, %v2003
    %v2308 = vadd.f32 %v24, %v2005
    %v2309 = vadd.f32 %v25, %v2008
    %v2310 = vadd.f32 %v26, %v2010
    %v2311 = vadd.f32 %v27, %v2013
    %v2312 = vadd.f32 %v28, %v2015
    %v2313 = vadd.f32 %v29, %v2018
    %v2314 = vadd.f32 %v30, %v2020
    %v2315 = vadd.f32 %v31, %v2023
    %v2316 = vadd.f32 %v32, %v2025
    %v2317 = vadd.f32 %v33, %v2028
    %v2318 = vadd.f32 %v34, %v2030
    %v2319 = vadd.f32 %v35, %v2033
    %v2320 = vadd.f32 %v36, %v2035
    %v2321 = vadd.f32 %v37, %v2038
    %v2322 = vadd.f32 %v38, %v2040
    %v2323 = vadd.f32 %v39, %v2043
    %v2324 = vadd.f32 %v40, %v2045
    %v2325 = vadd.f32 %v41, %v2048
    %v2326 = vadd.f32 %v42, %v2050
    %v2327 = vadd.f32 %v43, %v2053
    %v2328 = vadd.f32 %v44, %v2055
    %v2329 = vadd.f32 %v45, %v2058
    %v2330 = vadd.f32 %v46, %v2060
    %v2331 = vadd.f32 %v47, %v2063
    %v2332 = vadd.f32 %v48, %v2065
    %v2333 = vadd.f32 %v49, %v2068
    %v2334 = vadd.f32 %v50, %v2070
    %v2335 = vadd.f32 %v51, %v2073
    %v2336 = vadd.f32 %v52, %v2075
    %v2337 = vadd.f32 %v53, %v2078
    %v2338 = vadd.f32 %v54, %v2080
    %v2339 = vadd.f32 %v55, %v2083
    %v2340 = vadd.f32 %v56, %v2085
    %v2341 = vadd.f32 %v57, %v2088
    %v2342 = vadd.f32 %v58, %v2090
    %v2343 = vadd.f32 %v59, %v2093
    %v2344 = vadd.f32 %v60, %v2095
    %v2345 = vadd.f32 %v61, %v2098
    %v2346 = vadd.f32 %v62, %v2100
    %v2347 = vadd.f32 %v63, %v2103
    %v2348 = vadd.f32 %v64, %v2105
    %v2349 = vadd.f32 %v65, %v2108
    %v2350 = vadd.f32 %v66, %v2110
    %v2351 = vadd.f32 %v67, %v2113
    %v2352 = vadd.f32 %v68, %v2115
    %v2353 = vadd.f32 %v69, %v2118
    %v2354 = vadd.f32 %v70, %v2120
    %v2355 = vadd.f32 %v71, %v2123
    %v2356 = vadd.f32 %v72, %v2125
    %v2357 = vadd.f32 %v73, %v2128
    %v2358 = vadd.f32 %v74, %v2130
    %v2359 = vadd.f32 %v75, %v2133
    %v2360 = vadd.f32 %v76, %v2135
    %v2361 = vadd.f32 %v77, %v2138
    %v2362 = vadd.f32 %v78, %v2140
    %v2363 = vadd.f32 %v79, %v2143
    %v2364 = vadd.f32 %v80, %v2145
    %v2365 = vadd.f32 %v81, %v2148
    %v2366 = vadd.f32 %v82, %v2150
    %v2367 = vadd.f32 %v83, %v2153
    %v2368 = vadd.f32 %v84, %v2155
    %v2369 = vadd.f32 %v85, %v2158
    %v2370 = vadd.f32 %v86, %v2160
    %v2371 = vadd.f32 %v87, %v2163
    %v2372 = vadd.f32 %v88, %v2165
    %v2373 = vadd.f32 %v89, %v2168
    %v2374 = vadd.f32 %v90, %v2170
    %v2375 = vadd.f32 %v91, %v2173
    %v2376 = vadd.f32 %v92, %v2175
    %v2377 = vadd.f32 %v93, %v2178
    %v2378 = vadd.f32 %v94, %v2180
    %v2379 = vadd.f32 %v95, %v2183
    %v2380 = vadd.f32 %v96, %v2185
    %v2381 = vadd.f32 %v97, %v2188
    %v2382 = vadd.f32 %v98, %v2190
    %v2383 = vadd.f32 %v99, %v2193
    %v2384 = vadd.f32 %v100, %v2195
    %v2385 = vadd.f32 %v101, %v2198
    %v2386 = vadd.f32 %v102, %v2200
    %v2387 = vadd.f32 %v103, %v2203
    %v2388 = vadd.f32 %v104, %v2205
    %v2389 = vadd.f32 %v105, %v2208
    %v2390 = vadd.f32 %v106, %v2210
    %v2391 = vadd.f32 %v107, %v2213
    %v2392 = vadd.f32 %v108, %v2215
    %v2393 = vadd.f32 %v109, %v2218
    %v2394 = vadd.f32 %v110, %v2220
    %v2395 = vadd.f32 %v111, %v2223
    %v2396 = vadd.f32 %v112, %v2225
    %v2397 = vadd.f32 %v113, %v2228
    %v2398 = vadd.f32 %v114, %v2230
    %v2399 = vadd.f32 %v115, %v2233
    %v2400 = vadd.f32 %v116, %v2235
    %v2401 = vadd.f32 %v117, %v2238
    %v2402 = vadd.f32 %v118, %v2240
    %v2403 = vadd.f32 %v119, %v2243
    %v2404 = vadd.f32 %v120, %v2245
    %v2405 = vadd.f32 %v121, %v2248
    %v2406 = vadd.f32 %v122, %v2250
    %v2407 = vadd.f32 %v123, %v2253
    %v2408 = vadd.f32 %v124, %v2255
    %v2409 = vadd.f32 %v125, %v2258
    %v2410 = vadd.f32 %v126, %v2260
    %v2411 = vadd.f32 %v127, %v2263
    %v2412 = vadd.f32 %v128, %v2265
    %v2413 = vadd.f32 %v129, %v2268
    %v2414 = vadd.f32 %v130, %v2270
    %v2415 = vadd.f32 %v131, %v2273
    %v2416 = vadd.f32 %v132, %v2275
    %v2417 = vadd.f32 %v133, %v2278
    %v2418 = vadd.f32 %v134, %v2280
    %v2419 = vadd.f32 %v135, %v2283
    %v2420 = vadd.f32 %v136, %v2285
    %v2421 = vadd.f32 %v137, %v2288
    %v2422 = vadd.f32 %v138, %v2290
    %v2423 = vadd.f32 %v139, %v2293
    %v2424 = vadd.f32 %v140, %v2295
    %v2425 = vsel %vm654, %v139, 0.0
    %v2426 = vsel %vm655, %v140, 0.0
    %v2427 = vsel %vm656, %v13, 0.0
    %v2428 = vsel %vm657, %v14, 0.0
    %v2429 = vsel %vm658, %v15, 0.0
    %v2430 = vsel %vm659, %v16, 0.0
    %v2431 = vsel %vm660, %v17, 0.0
    %v2432 = vsel %vm661, %v18, 0.0
    %v2433 = vsel %vm662, %v19, 0.0
    %v2434 = vsel %vm663, %v20, 0.0
    %v2435 = vsel %vm664, %v21, 0.0
    %v2436 = vsel %vm665, %v22, 0.0
    %v2437 = vsel %vm666, %v23, 0.0
    %v2438 = vsel %vm667, %v24, 0.0
    %v2439 = vsel %vm668, %v25, 0.0
    %v2440 = vsel %vm669, %v26, 0.0
    %v2441 = vsel %vm670, %v27, 0.0
    %v2442 = vsel %vm671, %v28, 0.0
    %v2443 = vsel %vm672, %v29, 0.0
    %v2444 = vsel %vm673, %v30, 0.0
    %v2445 = vsel %vm674, %v31, 0.0
    %v2446 = vsel %vm675, %v32, 0.0
    %v2447 = vsel %vm676, %v33, 0.0
    %v2448 = vsel %vm677, %v34, 0.0
    %v2449 = vsel %vm678, %v35, 0.0
    %v2450 = vsel %vm679, %v36, 0.0
    %v2451 = vsel %vm680, %v37, 0.0
    %v2452 = vsel %vm681, %v38, 0.0
    %v2453 = vsel %vm682, %v39, 0.0
    %v2454 = vsel %vm683, %v40, 0.0
    %v2455 = vsel %vm684, %v41, 0.0
    %v2456 = vsel %vm685, %v42, 0.0
    %v2457 = vsel %vm686, %v43, 0.0
    %v2458 = vsel %vm687, %v44, 0.0
    %v2459 = vsel %vm688, %v45, 0.0
    %v2460 = vsel %vm689, %v46, 0.0
    %v2461 = vsel %vm690, %v47, 0.0
    %v2462 = vsel %vm691, %v48, 0.0
    %v2463 = vsel %vm692, %v49, 0.0
    %v2464 = vsel %vm693, %v50, 0.0
    %v2465 = vsel %vm694, %v51, 0.0
    %v2466 = vsel %vm695, %v52, 0.0
    %v2467 = vsel %vm696, %v53, 0.0
    %v2468 = vsel %vm697, %v54, 0.0
    %v2469 = vsel %vm698, %v55, 0.0
    %v2470 = vsel %vm699, %v56, 0.0
    %v2471 = vsel %vm700, %v57, 0.0
    %v2472 = vsel %vm701, %v58, 0.0
    %v2473 = vsel %vm702, %v59, 0.0
    %v2474 = vsel %vm703, %v60, 0.0
    %v2475 = vsel %vm704, %v61, 0.0
    %v2476 = vsel %vm705, %v62, 0.0
    %v2477 = vsel %vm706, %v63, 0.0
    %v2478 = vsel %vm707, %v64, 0.0
    %v2479 = vsel %vm708, %v65, 0.0
    %v2480 = vsel %vm709, %v66, 0.0
    %v2481 = vsel %vm710, %v67, 0.0
    %v2482 = vsel %vm711, %v68, 0.0
    %v2483 = vsel %vm712, %v69, 0.0
    %v2484 = vsel %vm713, %v70, 0.0
    %v2485 = vsel %vm714, %v71, 0.0
    %v2486 = vsel %vm715, %v72, 0.0
    %v2487 = vsel %vm716, %v73, 0.0
    %v2488 = vsel %vm717, %v74, 0.0
    %v2489 = vsel %vm718, %v75, 0.0
    %v2490 = vsel %vm719, %v76, 0.0
    %v2491 = vsel %vm720, %v77, 0.0
    %v2492 = vsel %vm721, %v78, 0.0
    %v2493 = vsel %vm722, %v79, 0.0
    %v2494 = vsel %vm723, %v80, 0.0
    %v2495 = vsel %vm724, %v81, 0.0
    %v2496 = vsel %vm725, %v82, 0.0
    %v2497 = vsel %vm726, %v83, 0.0
    %v2498 = vsel %vm727, %v84, 0.0
    %v2499 = vsel %vm728, %v85, 0.0
    %v2500 = vsel %vm729, %v86, 0.0
    %v2501 = vsel %vm730, %v87, 0.0
    %v2502 = vsel %vm731, %v88, 0.0
    %v2503 = vsel %vm732, %v89, 0.0
    %v2504 = vsel %vm733, %v90, 0.0
    %v2505 = vsel %vm734, %v91, 0.0
    %v2506 = vsel %vm735, %v92, 0.0
    %v2507 = vsel %vm736, %v93, 0.0
    %v2508 = vsel %vm737, %v94, 0.0
    %v2509 = vsel %vm738, %v95, 0.0
    %v2510 = vsel %vm739, %v96, 0.0
    %v2511 = vsel %vm740, %v97, 0.0
    %v2512 = vsel %vm741, %v98, 0.0
    %v2513 = vsel %vm742, %v99, 0.0
    %v2514 = vsel %vm743, %v100, 0.0
    %v2515 = vsel %vm744, %v101, 0.0
    %v2516 = vsel %vm745, %v102, 0.0
    %v2517 = vsel %vm746, %v103, 0.0
    %v2518 = vsel %vm747, %v104, 0.0
    %v2519 = vsel %vm748, %v105, 0.0
    %v2520 = vsel %vm749, %v106, 0.0
    %v2521 = vsel %vm750, %v107, 0.0
    %v2522 = vsel %vm751, %v108, 0.0
    %v2523 = vsel %vm752, %v109, 0.0
    %v2524 = vsel %vm753, %v110, 0.0
    %v2525 = vsel %vm754, %v111, 0.0
    %v2526 = vsel %vm755, %v112, 0.0
    %v2527 = vsel %vm756, %v113, 0.0
    %v2528 = vsel %vm757, %v114, 0.0
    %v2529 = vsel %vm758, %v115, 0.0
    %v2530 = vsel %vm759, %v116, 0.0
    %v2531 = vsel %vm760, %v117, 0.0
    %v2532 = vsel %vm761, %v118, 0.0
    %v2533 = vsel %vm762, %v119, 0.0
    %v2534 = vsel %vm763, %v120, 0.0
    %v2535 = vsel %vm764, %v121, 0.0
    %v2536 = vsel %vm765, %v122, 0.0
    %v2537 = vsel %vm766, %v123, 0.0
    %v2538 = vsel %vm767, %v124, 0.0
    %v2539 = vsel %vm768, %v125, 0.0
    %v2540 = vsel %vm769, %v126, 0.0
    %v2541 = vsel %vm770, %v127, 0.0
    %v2542 = vsel %vm771, %v128, 0.0
    %v2543 = vsel %vm772, %v129, 0.0
    %v2544 = vsel %vm773, %v130, 0.0
    %v2545 = vsel %vm774, %v131, 0.0
    %v2546 = vsel %vm775, %v132, 0.0
    %v2547 = vsel %vm776, %v133, 0.0
    %v2548 = vsel %vm777, %v134, 0.0
    %v2549 = vsel %vm778, %v135, 0.0
    %v2550 = vsel %vm779, %v136, 0.0
    %v2551 = vsel %vm780, %v137, 0.0
    %v2552 = vsel %vm781, %v138, 0.0
    %v2553 = vpack.c.bf16 %v2426, %v2425
    %v2554 = vpack.c.bf16 %v2428, %v2427
    %v2555 = vpack.c.bf16 %v2430, %v2429
    %v2556 = vpack.c.bf16 %v2432, %v2431
    %v2557 = vpack.c.bf16 %v2434, %v2433
    %v2558 = vpack.c.bf16 %v2436, %v2435
    %v2559 = vpack.c.bf16 %v2438, %v2437
    %v2560 = vpack.c.bf16 %v2440, %v2439
    %v2561 = vpack.c.bf16 %v2442, %v2441
    %v2562 = vpack.c.bf16 %v2444, %v2443
    %v2563 = vpack.c.bf16 %v2446, %v2445
    %v2564 = vpack.c.bf16 %v2448, %v2447
    %v2565 = vpack.c.bf16 %v2450, %v2449
    %v2566 = vpack.c.bf16 %v2452, %v2451
    %v2567 = vpack.c.bf16 %v2454, %v2453
    %v2568 = vpack.c.bf16 %v2456, %v2455
    %v2569 = vpack.c.bf16 %v2458, %v2457
    %v2570 = vpack.c.bf16 %v2460, %v2459
    %v2571 = vpack.c.bf16 %v2462, %v2461
    %v2572 = vpack.c.bf16 %v2464, %v2463
    %v2573 = vpack.c.bf16 %v2466, %v2465
    %v2574 = vpack.c.bf16 %v2468, %v2467
    %v2575 = vpack.c.bf16 %v2470, %v2469
    %v2576 = vpack.c.bf16 %v2472, %v2471
    %v2577 = vpack.c.bf16 %v2474, %v2473
    %v2578 = vpack.c.bf16 %v2476, %v2475
    %v2579 = vpack.c.bf16 %v2478, %v2477
    %v2580 = vpack.c.bf16 %v2480, %v2479
    %v2581 = vpack.c.bf16 %v2482, %v2481
    %v2582 = vpack.c.bf16 %v2484, %v2483
    %v2583 = vpack.c.bf16 %v2486, %v2485
    %v2584 = vpack.c.bf16 %v2488, %v2487
    %v2585 = vpack.c.bf16 %v2490, %v2489
    %v2586 = vpack.c.bf16 %v2492, %v2491
    %v2587 = vpack.c.bf16 %v2494, %v2493
    %v2588 = vpack.c.bf16 %v2496, %v2495
    %v2589 = vpack.c.bf16 %v2498, %v2497
    %v2590 = vpack.c.bf16 %v2500, %v2499
    %v2591 = vpack.c.bf16 %v2502, %v2501
    %v2592 = vpack.c.bf16 %v2504, %v2503
    %v2593 = vpack.c.bf16 %v2506, %v2505
    %v2594 = vpack.c.bf16 %v2508, %v2507
    %v2595 = vpack.c.bf16 %v2510, %v2509
    %v2596 = vpack.c.bf16 %v2512, %v2511
    %v2597 = vpack.c.bf16 %v2514, %v2513
    %v2598 = vpack.c.bf16 %v2516, %v2515
    %v2599 = vpack.c.bf16 %v2518, %v2517
    %v2600 = vpack.c.bf16 %v2520, %v2519
    %v2601 = vpack.c.bf16 %v2522, %v2521
    %v2602 = vpack.c.bf16 %v2524, %v2523
    %v2603 = vpack.c.bf16 %v2526, %v2525
    %v2604 = vpack.c.bf16 %v2528, %v2527
    %v2605 = vpack.c.bf16 %v2530, %v2529
    %v2606 = vpack.c.bf16 %v2532, %v2531
    %v2607 = vpack.c.bf16 %v2534, %v2533
    %v2608 = vpack.c.bf16 %v2536, %v2535
    %v2609 = vpack.c.bf16 %v2538, %v2537
    %v2610 = vpack.c.bf16 %v2540, %v2539
    %v2611 = vpack.c.bf16 %v2542, %v2541
    %v2612 = vpack.c.bf16 %v2544, %v2543
    %v2613 = vpack.c.bf16 %v2546, %v2545
    %v2614 = vpack.c.bf16 %v2548, %v2547
    %v2615 = vpack.c.bf16 %v2550, %v2549
    %v2616 = vpack.c.bf16 %v2552, %v2551
    %s2617 = scalar_lea.vmem %s1, 32
    %v2618 = vld [vmem:[%s2617] sm:$0xf]
    %v2619 = vld [vmem:[%s2617 + $0x4] sm:$0xf]
    %v2620 = vld [vmem:[%s2617 + $0x8] sm:$0xf]
    %v2621 = vld [vmem:[%s2617 + $0xc] sm:$0xf]
    %v2622 = vld [vmem:[%s2617 + $0x10] sm:$0xf]
    %v2623 = vld [vmem:[%s2617 + $0x14] sm:$0xf]
    %v2624 = vld [vmem:[%s2617 + $0x18] sm:$0xf]
    %v2625 = vld [vmem:[%s2617 + $0x1c] sm:$0xf]
    %v2634 = vunpack.c.l.b16 %v2618
    %v2635 = vunpack.c.l.b16 %v2619
    %v2636 = vunpack.c.l.b16 %v2620
    %v2637 = vunpack.c.l.b16 %v2621
    %v2638 = vunpack.c.l.b16 %v2622
    %v2639 = vunpack.c.l.b16 %v2623
    %v2640 = vunpack.c.l.b16 %v2624
    %v2641 = vunpack.c.l.b16 %v2625
    %v2642 = vpack.c.b16 %v2635, %v2634
    %v2643 = vpack.c.b16 %v2637, %v2636
    %v2644 = vpack.c.b16 %v2639, %v2638
    %v2645 = vpack.c.b16 %v2641, %v2640
    %v2651 = vsel %vm1775, %v2553, 0
    %v2654 = vsel %vm1775, %v2554, 0
    %v2657 = vsel %vm1775, %v2555, 0
    %v2660 = vsel %vm1775, %v2556, 0
    %v2663 = vsel %vm1775, %v2557, 0
    %v2666 = vsel %vm1775, %v2558, 0
    %v2669 = vsel %vm1775, %v2559, 0
    %v2672 = vsel %vm1775, %v2560, 0
    %v2675 = vsel %vm1775, %v2561, 0
    %v2678 = vsel %vm1775, %v2562, 0
    %v2681 = vsel %vm1775, %v2563, 0
    %v2684 = vsel %vm1775, %v2564, 0
    %v2687 = vsel %vm1775, %v2565, 0
    %v2690 = vsel %vm1775, %v2566, 0
    %v2693 = vsel %vm1775, %v2567, 0
    %v2696 = vsel %vm1775, %v2568, 0
    %v2699 = vsel %vm1775, %v2569, 0
    %v2702 = vsel %vm1775, %v2570, 0
    %v2705 = vsel %vm1775, %v2571, 0
    %v2708 = vsel %vm1775, %v2572, 0
    %v2711 = vsel %vm1775, %v2573, 0
    %v2714 = vsel %vm1775, %v2574, 0
    %v2717 = vsel %vm1775, %v2575, 0
    %v2720 = vsel %vm1775, %v2576, 0
    %v2723 = vsel %vm1775, %v2577, 0
    %v2726 = vsel %vm1775, %v2578, 0
    %v2729 = vsel %vm1775, %v2579, 0
    %v2732 = vsel %vm1775, %v2580, 0
    %v2735 = vsel %vm1775, %v2581, 0
    %v2738 = vsel %vm1775, %v2582, 0
    %v2741 = vsel %vm1775, %v2583, 0
    %v2744 = vsel %vm1775, %v2584, 0
    %v2747 = vsel %vm1775, %v2585, 0
    %v2750 = vsel %vm1775, %v2586, 0
    %v2753 = vsel %vm1775, %v2587, 0
    %v2756 = vsel %vm1775, %v2588, 0
    %v2759 = vsel %vm1775, %v2589, 0
    %v2762 = vsel %vm1775, %v2590, 0
    %v2765 = vsel %vm1775, %v2591, 0
    %v2768 = vsel %vm1775, %v2592, 0
    %v2771 = vsel %vm1775, %v2593, 0
    %v2774 = vsel %vm1775, %v2594, 0
    %v2777 = vsel %vm1775, %v2595, 0
    %v2780 = vsel %vm1775, %v2596, 0
    %v2783 = vsel %vm1775, %v2597, 0
    %v2786 = vsel %vm1775, %v2598, 0
    %v2789 = vsel %vm1775, %v2599, 0
    %v2792 = vsel %vm1775, %v2600, 0
    %v2795 = vsel %vm1775, %v2601, 0
    %v2798 = vsel %vm1775, %v2602, 0
    %v2801 = vsel %vm1775, %v2603, 0
    %v2804 = vsel %vm1775, %v2604, 0
    %v2807 = vsel %vm1775, %v2605, 0
    %v2810 = vsel %vm1775, %v2606, 0
    %v2813 = vsel %vm1775, %v2607, 0
    %v2816 = vsel %vm1775, %v2608, 0
    %v2819 = vsel %vm1775, %v2609, 0
    %v2822 = vsel %vm1775, %v2610, 0
    %v2825 = vsel %vm1775, %v2611, 0
    %v2828 = vsel %vm1775, %v2612, 0
    %v2831 = vsel %vm1775, %v2613, 0
    %v2834 = vsel %vm1775, %v2614, 0
    %v2837 = vsel %vm1775, %v2615, 0
    %v2840 = vsel %vm1775, %v2616, 0
    %2842 = vmatpush.bf16.msra.mxu0 0
    %2843 = vmatpush.bf16.msra.mxu0 0
    %2844 = vmatpush.bf16.msra.mxu0 0
    %2845 = vmatpush.bf16.msra.mxu0 0
    %2846 = vmatpush.bf16.msra.mxu0 %v2645
    %2847 = vmatpush.bf16.msra.mxu0 %v2644
    %2848 = vmatpush.bf16.msra.mxu0 %v2643
    %2849 = vmatpush.bf16.msra.mxu0 %v2642
    %2850 = vmatmul.bf16.gmra.mxu0 %v2651
    %v2851 = vpop.f32.mrf.mxu0
    %v2852 = vadd.f32 0.0, %v2851
    %v2853 = vpop.f32.mrf.mxu0
    %v2854 = vadd.f32 0.0, %v2853
    %2855 = vmatmul.bf16.gmra.mxu0 %v2654
    %v2856 = vpop.f32.mrf.mxu0
    %v2857 = vadd.f32 0.0, %v2856
    %v2858 = vpop.f32.mrf.mxu0
    %v2859 = vadd.f32 0.0, %v2858
    %2860 = vmatmul.bf16.gmra.mxu0 %v2657
    %v2861 = vpop.f32.mrf.mxu0
    %v2862 = vadd.f32 0.0, %v2861
    %v2863 = vpop.f32.mrf.mxu0
    %v2864 = vadd.f32 0.0, %v2863
    %2865 = vmatmul.bf16.gmra.mxu0 %v2660
    %v2866 = vpop.f32.mrf.mxu0
    %v2867 = vadd.f32 0.0, %v2866
    %v2868 = vpop.f32.mrf.mxu0
    %v2869 = vadd.f32 0.0, %v2868
    %2870 = vmatmul.bf16.gmra.mxu0 %v2663
    %v2871 = vpop.f32.mrf.mxu0
    %v2872 = vadd.f32 0.0, %v2871
    %v2873 = vpop.f32.mrf.mxu0
    %v2874 = vadd.f32 0.0, %v2873
    %2875 = vmatmul.bf16.gmra.mxu0 %v2666
    %v2876 = vpop.f32.mrf.mxu0
    %v2877 = vadd.f32 0.0, %v2876
    %v2878 = vpop.f32.mrf.mxu0
    %v2879 = vadd.f32 0.0, %v2878
    %2880 = vmatmul.bf16.gmra.mxu0 %v2669
    %v2881 = vpop.f32.mrf.mxu0
    %v2882 = vadd.f32 0.0, %v2881
    %v2883 = vpop.f32.mrf.mxu0
    %v2884 = vadd.f32 0.0, %v2883
    %2885 = vmatmul.bf16.gmra.mxu0 %v2672
    %v2886 = vpop.f32.mrf.mxu0
    %v2887 = vadd.f32 0.0, %v2886
    %v2888 = vpop.f32.mrf.mxu0
    %v2889 = vadd.f32 0.0, %v2888
    %2890 = vmatmul.bf16.gmra.mxu0 %v2675
    %v2891 = vpop.f32.mrf.mxu0
    %v2892 = vadd.f32 0.0, %v2891
    %v2893 = vpop.f32.mrf.mxu0
    %v2894 = vadd.f32 0.0, %v2893
    %2895 = vmatmul.bf16.gmra.mxu0 %v2678
    %v2896 = vpop.f32.mrf.mxu0
    %v2897 = vadd.f32 0.0, %v2896
    %v2898 = vpop.f32.mrf.mxu0
    %v2899 = vadd.f32 0.0, %v2898
    %2900 = vmatmul.bf16.gmra.mxu0 %v2681
    %v2901 = vpop.f32.mrf.mxu0
    %v2902 = vadd.f32 0.0, %v2901
    %v2903 = vpop.f32.mrf.mxu0
    %v2904 = vadd.f32 0.0, %v2903
    %2905 = vmatmul.bf16.gmra.mxu0 %v2684
    %v2906 = vpop.f32.mrf.mxu0
    %v2907 = vadd.f32 0.0, %v2906
    %v2908 = vpop.f32.mrf.mxu0
    %v2909 = vadd.f32 0.0, %v2908
    %2910 = vmatmul.bf16.gmra.mxu0 %v2687
    %v2911 = vpop.f32.mrf.mxu0
    %v2912 = vadd.f32 0.0, %v2911
    %v2913 = vpop.f32.mrf.mxu0
    %v2914 = vadd.f32 0.0, %v2913
    %2915 = vmatmul.bf16.gmra.mxu0 %v2690
    %v2916 = vpop.f32.mrf.mxu0
    %v2917 = vadd.f32 0.0, %v2916
    %v2918 = vpop.f32.mrf.mxu0
    %v2919 = vadd.f32 0.0, %v2918
    %2920 = vmatmul.bf16.gmra.mxu0 %v2693
    %v2921 = vpop.f32.mrf.mxu0
    %v2922 = vadd.f32 0.0, %v2921
    %v2923 = vpop.f32.mrf.mxu0
    %v2924 = vadd.f32 0.0, %v2923
    %2925 = vmatmul.bf16.gmra.mxu0 %v2696
    %v2926 = vpop.f32.mrf.mxu0
    %v2927 = vadd.f32 0.0, %v2926
    %v2928 = vpop.f32.mrf.mxu0
    %v2929 = vadd.f32 0.0, %v2928
    %2930 = vmatmul.bf16.gmra.mxu0 %v2699
    %v2931 = vpop.f32.mrf.mxu0
    %v2932 = vadd.f32 0.0, %v2931
    %v2933 = vpop.f32.mrf.mxu0
    %v2934 = vadd.f32 0.0, %v2933
    %2935 = vmatmul.bf16.gmra.mxu0 %v2702
    %v2936 = vpop.f32.mrf.mxu0
    %v2937 = vadd.f32 0.0, %v2936
    %v2938 = vpop.f32.mrf.mxu0
    %v2939 = vadd.f32 0.0, %v2938
    %2940 = vmatmul.bf16.gmra.mxu0 %v2705
    %v2941 = vpop.f32.mrf.mxu0
    %v2942 = vadd.f32 0.0, %v2941
    %v2943 = vpop.f32.mrf.mxu0
    %v2944 = vadd.f32 0.0, %v2943
    %2945 = vmatmul.bf16.gmra.mxu0 %v2708
    %v2946 = vpop.f32.mrf.mxu0
    %v2947 = vadd.f32 0.0, %v2946
    %v2948 = vpop.f32.mrf.mxu0
    %v2949 = vadd.f32 0.0, %v2948
    %2950 = vmatmul.bf16.gmra.mxu0 %v2711
    %v2951 = vpop.f32.mrf.mxu0
    %v2952 = vadd.f32 0.0, %v2951
    %v2953 = vpop.f32.mrf.mxu0
    %v2954 = vadd.f32 0.0, %v2953
    %2955 = vmatmul.bf16.gmra.mxu0 %v2714
    %v2956 = vpop.f32.mrf.mxu0
    %v2957 = vadd.f32 0.0, %v2956
    %v2958 = vpop.f32.mrf.mxu0
    %v2959 = vadd.f32 0.0, %v2958
    %2960 = vmatmul.bf16.gmra.mxu0 %v2717
    %v2961 = vpop.f32.mrf.mxu0
    %v2962 = vadd.f32 0.0, %v2961
    %v2963 = vpop.f32.mrf.mxu0
    %v2964 = vadd.f32 0.0, %v2963
    %2965 = vmatmul.bf16.gmra.mxu0 %v2720
    %v2966 = vpop.f32.mrf.mxu0
    %v2967 = vadd.f32 0.0, %v2966
    %v2968 = vpop.f32.mrf.mxu0
    %v2969 = vadd.f32 0.0, %v2968
    %2970 = vmatmul.bf16.gmra.mxu0 %v2723
    %v2971 = vpop.f32.mrf.mxu0
    %v2972 = vadd.f32 0.0, %v2971
    %v2973 = vpop.f32.mrf.mxu0
    %v2974 = vadd.f32 0.0, %v2973
    %2975 = vmatmul.bf16.gmra.mxu0 %v2726
    %v2976 = vpop.f32.mrf.mxu0
    %v2977 = vadd.f32 0.0, %v2976
    %v2978 = vpop.f32.mrf.mxu0
    %v2979 = vadd.f32 0.0, %v2978
    %2980 = vmatmul.bf16.gmra.mxu0 %v2729
    %v2981 = vpop.f32.mrf.mxu0
    %v2982 = vadd.f32 0.0, %v2981
    %v2983 = vpop.f32.mrf.mxu0
    %v2984 = vadd.f32 0.0, %v2983
    %2985 = vmatmul.bf16.gmra.mxu0 %v2732
    %v2986 = vpop.f32.mrf.mxu0
    %v2987 = vadd.f32 0.0, %v2986
    %v2988 = vpop.f32.mrf.mxu0
    %v2989 = vadd.f32 0.0, %v2988
    %2990 = vmatmul.bf16.gmra.mxu0 %v2735
    %v2991 = vpop.f32.mrf.mxu0
    %v2992 = vadd.f32 0.0, %v2991
    %v2993 = vpop.f32.mrf.mxu0
    %v2994 = vadd.f32 0.0, %v2993
    %2995 = vmatmul.bf16.gmra.mxu0 %v2738
    %v2996 = vpop.f32.mrf.mxu0
    %v2997 = vadd.f32 0.0, %v2996
    %v2998 = vpop.f32.mrf.mxu0
    %v2999 = vadd.f32 0.0, %v2998
    %3000 = vmatmul.bf16.gmra.mxu0 %v2741
    %v3001 = vpop.f32.mrf.mxu0
    %v3002 = vadd.f32 0.0, %v3001
    %v3003 = vpop.f32.mrf.mxu0
    %v3004 = vadd.f32 0.0, %v3003
    %3005 = vmatmul.bf16.gmra.mxu0 %v2744
    %v3006 = vpop.f32.mrf.mxu0
    %v3007 = vadd.f32 0.0, %v3006
    %v3008 = vpop.f32.mrf.mxu0
    %v3009 = vadd.f32 0.0, %v3008
    %3010 = vmatmul.bf16.gmra.mxu0 %v2747
    %v3011 = vpop.f32.mrf.mxu0
    %v3012 = vadd.f32 0.0, %v3011
    %v3013 = vpop.f32.mrf.mxu0
    %v3014 = vadd.f32 0.0, %v3013
    %3015 = vmatmul.bf16.gmra.mxu0 %v2750
    %v3016 = vpop.f32.mrf.mxu0
    %v3017 = vadd.f32 0.0, %v3016
    %v3018 = vpop.f32.mrf.mxu0
    %v3019 = vadd.f32 0.0, %v3018
    %3020 = vmatmul.bf16.gmra.mxu0 %v2753
    %v3021 = vpop.f32.mrf.mxu0
    %v3022 = vadd.f32 0.0, %v3021
    %v3023 = vpop.f32.mrf.mxu0
    %v3024 = vadd.f32 0.0, %v3023
    %3025 = vmatmul.bf16.gmra.mxu0 %v2756
    %v3026 = vpop.f32.mrf.mxu0
    %v3027 = vadd.f32 0.0, %v3026
    %v3028 = vpop.f32.mrf.mxu0
    %v3029 = vadd.f32 0.0, %v3028
    %3030 = vmatmul.bf16.gmra.mxu0 %v2759
    %v3031 = vpop.f32.mrf.mxu0
    %v3032 = vadd.f32 0.0, %v3031
    %v3033 = vpop.f32.mrf.mxu0
    %v3034 = vadd.f32 0.0, %v3033
    %3035 = vmatmul.bf16.gmra.mxu0 %v2762
    %v3036 = vpop.f32.mrf.mxu0
    %v3037 = vadd.f32 0.0, %v3036
    %v3038 = vpop.f32.mrf.mxu0
    %v3039 = vadd.f32 0.0, %v3038
    %3040 = vmatmul.bf16.gmra.mxu0 %v2765
    %v3041 = vpop.f32.mrf.mxu0
    %v3042 = vadd.f32 0.0, %v3041
    %v3043 = vpop.f32.mrf.mxu0
    %v3044 = vadd.f32 0.0, %v3043
    %3045 = vmatmul.bf16.gmra.mxu0 %v2768
    %v3046 = vpop.f32.mrf.mxu0
    %v3047 = vadd.f32 0.0, %v3046
    %v3048 = vpop.f32.mrf.mxu0
    %v3049 = vadd.f32 0.0, %v3048
    %3050 = vmatmul.bf16.gmra.mxu0 %v2771
    %v3051 = vpop.f32.mrf.mxu0
    %v3052 = vadd.f32 0.0, %v3051
    %v3053 = vpop.f32.mrf.mxu0
    %v3054 = vadd.f32 0.0, %v3053
    %3055 = vmatmul.bf16.gmra.mxu0 %v2774
    %v3056 = vpop.f32.mrf.mxu0
    %v3057 = vadd.f32 0.0, %v3056
    %v3058 = vpop.f32.mrf.mxu0
    %v3059 = vadd.f32 0.0, %v3058
    %3060 = vmatmul.bf16.gmra.mxu0 %v2777
    %v3061 = vpop.f32.mrf.mxu0
    %v3062 = vadd.f32 0.0, %v3061
    %v3063 = vpop.f32.mrf.mxu0
    %v3064 = vadd.f32 0.0, %v3063
    %3065 = vmatmul.bf16.gmra.mxu0 %v2780
    %v3066 = vpop.f32.mrf.mxu0
    %v3067 = vadd.f32 0.0, %v3066
    %v3068 = vpop.f32.mrf.mxu0
    %v3069 = vadd.f32 0.0, %v3068
    %3070 = vmatmul.bf16.gmra.mxu0 %v2783
    %v3071 = vpop.f32.mrf.mxu0
    %v3072 = vadd.f32 0.0, %v3071
    %v3073 = vpop.f32.mrf.mxu0
    %v3074 = vadd.f32 0.0, %v3073
    %3075 = vmatmul.bf16.gmra.mxu0 %v2786
    %v3076 = vpop.f32.mrf.mxu0
    %v3077 = vadd.f32 0.0, %v3076
    %v3078 = vpop.f32.mrf.mxu0
    %v3079 = vadd.f32 0.0, %v3078
    %3080 = vmatmul.bf16.gmra.mxu0 %v2789
    %v3081 = vpop.f32.mrf.mxu0
    %v3082 = vadd.f32 0.0, %v3081
    %v3083 = vpop.f32.mrf.mxu0
    %v3084 = vadd.f32 0.0, %v3083
    %3085 = vmatmul.bf16.gmra.mxu0 %v2792
    %v3086 = vpop.f32.mrf.mxu0
    %v3087 = vadd.f32 0.0, %v3086
    %v3088 = vpop.f32.mrf.mxu0
    %v3089 = vadd.f32 0.0, %v3088
    %3090 = vmatmul.bf16.gmra.mxu0 %v2795
    %v3091 = vpop.f32.mrf.mxu0
    %v3092 = vadd.f32 0.0, %v3091
    %v3093 = vpop.f32.mrf.mxu0
    %v3094 = vadd.f32 0.0, %v3093
    %3095 = vmatmul.bf16.gmra.mxu0 %v2798
    %v3096 = vpop.f32.mrf.mxu0
    %v3097 = vadd.f32 0.0, %v3096
    %v3098 = vpop.f32.mrf.mxu0
    %v3099 = vadd.f32 0.0, %v3098
    %3100 = vmatmul.bf16.gmra.mxu0 %v2801
    %v3101 = vpop.f32.mrf.mxu0
    %v3102 = vadd.f32 0.0, %v3101
    %v3103 = vpop.f32.mrf.mxu0
    %v3104 = vadd.f32 0.0, %v3103
    %3105 = vmatmul.bf16.gmra.mxu0 %v2804
    %v3106 = vpop.f32.mrf.mxu0
    %v3107 = vadd.f32 0.0, %v3106
    %v3108 = vpop.f32.mrf.mxu0
    %v3109 = vadd.f32 0.0, %v3108
    %3110 = vmatmul.bf16.gmra.mxu0 %v2807
    %v3111 = vpop.f32.mrf.mxu0
    %v3112 = vadd.f32 0.0, %v3111
    %v3113 = vpop.f32.mrf.mxu0
    %v3114 = vadd.f32 0.0, %v3113
    %3115 = vmatmul.bf16.gmra.mxu0 %v2810
    %v3116 = vpop.f32.mrf.mxu0
    %v3117 = vadd.f32 0.0, %v3116
    %v3118 = vpop.f32.mrf.mxu0
    %v3119 = vadd.f32 0.0, %v3118
    %3120 = vmatmul.bf16.gmra.mxu0 %v2813
    %v3121 = vpop.f32.mrf.mxu0
    %v3122 = vadd.f32 0.0, %v3121
    %v3123 = vpop.f32.mrf.mxu0
    %v3124 = vadd.f32 0.0, %v3123
    %3125 = vmatmul.bf16.gmra.mxu0 %v2816
    %v3126 = vpop.f32.mrf.mxu0
    %v3127 = vadd.f32 0.0, %v3126
    %v3128 = vpop.f32.mrf.mxu0
    %v3129 = vadd.f32 0.0, %v3128
    %3130 = vmatmul.bf16.gmra.mxu0 %v2819
    %v3131 = vpop.f32.mrf.mxu0
    %v3132 = vadd.f32 0.0, %v3131
    %v3133 = vpop.f32.mrf.mxu0
    %v3134 = vadd.f32 0.0, %v3133
    %3135 = vmatmul.bf16.gmra.mxu0 %v2822
    %v3136 = vpop.f32.mrf.mxu0
    %v3137 = vadd.f32 0.0, %v3136
    %v3138 = vpop.f32.mrf.mxu0
    %v3139 = vadd.f32 0.0, %v3138
    %3140 = vmatmul.bf16.gmra.mxu0 %v2825
    %v3141 = vpop.f32.mrf.mxu0
    %v3142 = vadd.f32 0.0, %v3141
    %v3143 = vpop.f32.mrf.mxu0
    %v3144 = vadd.f32 0.0, %v3143
    %3145 = vmatmul.bf16.gmra.mxu0 %v2828
    %v3146 = vpop.f32.mrf.mxu0
    %v3147 = vadd.f32 0.0, %v3146
    %v3148 = vpop.f32.mrf.mxu0
    %v3149 = vadd.f32 0.0, %v3148
    %3150 = vmatmul.bf16.gmra.mxu0 %v2831
    %v3151 = vpop.f32.mrf.mxu0
    %v3152 = vadd.f32 0.0, %v3151
    %v3153 = vpop.f32.mrf.mxu0
    %v3154 = vadd.f32 0.0, %v3153
    %3155 = vmatmul.bf16.gmra.mxu0 %v2834
    %v3156 = vpop.f32.mrf.mxu0
    %v3157 = vadd.f32 0.0, %v3156
    %v3158 = vpop.f32.mrf.mxu0
    %v3159 = vadd.f32 0.0, %v3158
    %3160 = vmatmul.bf16.gmra.mxu0 %v2837
    %v3161 = vpop.f32.mrf.mxu0
    %v3162 = vadd.f32 0.0, %v3161
    %v3163 = vpop.f32.mrf.mxu0
    %v3164 = vadd.f32 0.0, %v3163
    %3165 = vmatmul.bf16.gmra.mxu0 %v2840
    %v3166 = vpop.f32.mrf.mxu0
    %v3167 = vadd.f32 0.0, %v3166
    %v3168 = vpop.f32.mrf.mxu0
    %v3169 = vadd.f32 0.0, %v3168
    %3170 = vdwg.mxu0
    %v3171 = vadd.f32 %v2297, %v2852
    %v3172 = vadd.f32 %v2298, %v2854
    %v3173 = vadd.f32 %v2299, %v2857
    %v3174 = vadd.f32 %v2300, %v2859
    %v3175 = vadd.f32 %v2301, %v2862
    %v3176 = vadd.f32 %v2302, %v2864
    %v3177 = vadd.f32 %v2303, %v2867
    %v3178 = vadd.f32 %v2304, %v2869
    %v3179 = vadd.f32 %v2305, %v2872
    %v3180 = vadd.f32 %v2306, %v2874
    %v3181 = vadd.f32 %v2307, %v2877
    %v3182 = vadd.f32 %v2308, %v2879
    %v3183 = vadd.f32 %v2309, %v2882
    %v3184 = vadd.f32 %v2310, %v2884
    %v3185 = vadd.f32 %v2311, %v2887
    %v3186 = vadd.f32 %v2312, %v2889
    %v3187 = vadd.f32 %v2313, %v2892
    %v3188 = vadd.f32 %v2314, %v2894
    %v3189 = vadd.f32 %v2315, %v2897
    %v3190 = vadd.f32 %v2316, %v2899
    %v3191 = vadd.f32 %v2317, %v2902
    %v3192 = vadd.f32 %v2318, %v2904
    %v3193 = vadd.f32 %v2319, %v2907
    %v3194 = vadd.f32 %v2320, %v2909
    %v3195 = vadd.f32 %v2321, %v2912
    %v3196 = vadd.f32 %v2322, %v2914
    %v3197 = vadd.f32 %v2323, %v2917
    %v3198 = vadd.f32 %v2324, %v2919
    %v3199 = vadd.f32 %v2325, %v2922
    %v3200 = vadd.f32 %v2326, %v2924
    %v3201 = vadd.f32 %v2327, %v2927
    %v3202 = vadd.f32 %v2328, %v2929
    %v3203 = vadd.f32 %v2329, %v2932
    %v3204 = vadd.f32 %v2330, %v2934
    %v3205 = vadd.f32 %v2331, %v2937
    %v3206 = vadd.f32 %v2332, %v2939
    %v3207 = vadd.f32 %v2333, %v2942
    %v3208 = vadd.f32 %v2334, %v2944
    %v3209 = vadd.f32 %v2335, %v2947
    %v3210 = vadd.f32 %v2336, %v2949
    %v3211 = vadd.f32 %v2337, %v2952
    %v3212 = vadd.f32 %v2338, %v2954
    %v3213 = vadd.f32 %v2339, %v2957
    %v3214 = vadd.f32 %v2340, %v2959
    %v3215 = vadd.f32 %v2341, %v2962
    %v3216 = vadd.f32 %v2342, %v2964
    %v3217 = vadd.f32 %v2343, %v2967
    %v3218 = vadd.f32 %v2344, %v2969
    %v3219 = vadd.f32 %v2345, %v2972
    %v3220 = vadd.f32 %v2346, %v2974
    %v3221 = vadd.f32 %v2347, %v2977
    %v3222 = vadd.f32 %v2348, %v2979
    %v3223 = vadd.f32 %v2349, %v2982
    %v3224 = vadd.f32 %v2350, %v2984
    %v3225 = vadd.f32 %v2351, %v2987
    %v3226 = vadd.f32 %v2352, %v2989
    %v3227 = vadd.f32 %v2353, %v2992
    %v3228 = vadd.f32 %v2354, %v2994
    %v3229 = vadd.f32 %v2355, %v2997
    %v3230 = vadd.f32 %v2356, %v2999
    %v3231 = vadd.f32 %v2357, %v3002
    %v3232 = vadd.f32 %v2358, %v3004
    %v3233 = vadd.f32 %v2359, %v3007
    %v3234 = vadd.f32 %v2360, %v3009
    %v3235 = vadd.f32 %v2361, %v3012
    %v3236 = vadd.f32 %v2362, %v3014
    %v3237 = vadd.f32 %v2363, %v3017
    %v3238 = vadd.f32 %v2364, %v3019
    %v3239 = vadd.f32 %v2365, %v3022
    %v3240 = vadd.f32 %v2366, %v3024
    %v3241 = vadd.f32 %v2367, %v3027
    %v3242 = vadd.f32 %v2368, %v3029
    %v3243 = vadd.f32 %v2369, %v3032
    %v3244 = vadd.f32 %v2370, %v3034
    %v3245 = vadd.f32 %v2371, %v3037
    %v3246 = vadd.f32 %v2372, %v3039
    %v3247 = vadd.f32 %v2373, %v3042
    %v3248 = vadd.f32 %v2374, %v3044
    %v3249 = vadd.f32 %v2375, %v3047
    %v3250 = vadd.f32 %v2376, %v3049
    %v3251 = vadd.f32 %v2377, %v3052
    %v3252 = vadd.f32 %v2378, %v3054
    %v3253 = vadd.f32 %v2379, %v3057
    %v3254 = vadd.f32 %v2380, %v3059
    %v3255 = vadd.f32 %v2381, %v3062
    %v3256 = vadd.f32 %v2382, %v3064
    %v3257 = vadd.f32 %v2383, %v3067
    %v3258 = vadd.f32 %v2384, %v3069
    %v3259 = vadd.f32 %v2385, %v3072
    %v3260 = vadd.f32 %v2386, %v3074
    %v3261 = vadd.f32 %v2387, %v3077
    %v3262 = vadd.f32 %v2388, %v3079
    %v3263 = vadd.f32 %v2389, %v3082
    %v3264 = vadd.f32 %v2390, %v3084
    %v3265 = vadd.f32 %v2391, %v3087
    %v3266 = vadd.f32 %v2392, %v3089
    %v3267 = vadd.f32 %v2393, %v3092
    %v3268 = vadd.f32 %v2394, %v3094
    %v3269 = vadd.f32 %v2395, %v3097
    %v3270 = vadd.f32 %v2396, %v3099
    %v3271 = vadd.f32 %v2397, %v3102
    %v3272 = vadd.f32 %v2398, %v3104
    %v3273 = vadd.f32 %v2399, %v3107
    %v3274 = vadd.f32 %v2400, %v3109
    %v3275 = vadd.f32 %v2401, %v3112
    %v3276 = vadd.f32 %v2402, %v3114
    %v3277 = vadd.f32 %v2403, %v3117
    %v3278 = vadd.f32 %v2404, %v3119
    %v3279 = vadd.f32 %v2405, %v3122
    %v3280 = vadd.f32 %v2406, %v3124
    %v3281 = vadd.f32 %v2407, %v3127
    %v3282 = vadd.f32 %v2408, %v3129
    %v3283 = vadd.f32 %v2409, %v3132
    %v3284 = vadd.f32 %v2410, %v3134
    %v3285 = vadd.f32 %v2411, %v3137
    %v3286 = vadd.f32 %v2412, %v3139
    %v3287 = vadd.f32 %v2413, %v3142
    %v3288 = vadd.f32 %v2414, %v3144
    %v3289 = vadd.f32 %v2415, %v3147
    %v3290 = vadd.f32 %v2416, %v3149
    %v3291 = vadd.f32 %v2417, %v3152
    %v3292 = vadd.f32 %v2418, %v3154
    %v3293 = vadd.f32 %v2419, %v3157
    %v3294 = vadd.f32 %v2420, %v3159
    %v3295 = vadd.f32 %v2421, %v3162
    %v3296 = vadd.f32 %v2422, %v3164
    %v3297 = vadd.f32 %v2423, %v3167
    %v3298 = vadd.f32 %v2424, %v3169
    %v3299 = vrot.slane %v13, 1
    %v3300 = vrot.slane %v14, 1
    %v3301 = vrot.slane %v15, 1
    %v3302 = vrot.slane %v16, 1
    %v3303 = vrot.slane %v17, 1
    %v3304 = vrot.slane %v18, 1
    %v3305 = vrot.slane %v19, 1
    %v3306 = vrot.slane %v20, 1
    %v3307 = vrot.slane %v21, 1
    %v3308 = vrot.slane %v22, 1
    %v3309 = vrot.slane %v23, 1
    %v3310 = vrot.slane %v24, 1
    %v3311 = vrot.slane %v25, 1
    %v3312 = vrot.slane %v26, 1
    %v3313 = vrot.slane %v27, 1
    %v3314 = vrot.slane %v28, 1
    %v3315 = vrot.slane %v29, 1
    %v3316 = vrot.slane %v30, 1
    %v3317 = vrot.slane %v31, 1
    %v3318 = vrot.slane %v32, 1
    %v3319 = vrot.slane %v33, 1
    %v3320 = vrot.slane %v34, 1
    %v3321 = vrot.slane %v35, 1
    %v3322 = vrot.slane %v36, 1
    %v3323 = vrot.slane %v37, 1
    %v3324 = vrot.slane %v38, 1
    %v3325 = vrot.slane %v39, 1
    %v3326 = vrot.slane %v40, 1
    %v3327 = vrot.slane %v41, 1
    %v3328 = vrot.slane %v42, 1
    %v3329 = vrot.slane %v43, 1
    %v3330 = vrot.slane %v44, 1
    %v3331 = vrot.slane %v45, 1
    %v3332 = vrot.slane %v46, 1
    %v3333 = vrot.slane %v47, 1
    %v3334 = vrot.slane %v48, 1
    %v3335 = vrot.slane %v49, 1
    %v3336 = vrot.slane %v50, 1
    %v3337 = vrot.slane %v51, 1
    %v3338 = vrot.slane %v52, 1
    %v3339 = vrot.slane %v53, 1
    %v3340 = vrot.slane %v54, 1
    %v3341 = vrot.slane %v55, 1
    %v3342 = vrot.slane %v56, 1
    %v3343 = vrot.slane %v57, 1
    %v3344 = vrot.slane %v58, 1
    %v3345 = vrot.slane %v59, 1
    %v3346 = vrot.slane %v60, 1
    %v3347 = vrot.slane %v61, 1
    %v3348 = vrot.slane %v62, 1
    %v3349 = vrot.slane %v63, 1
    %v3350 = vrot.slane %v64, 1
    %v3351 = vrot.slane %v65, 1
    %v3352 = vrot.slane %v66, 1
    %v3353 = vrot.slane %v67, 1
    %v3354 = vrot.slane %v68, 1
    %v3355 = vrot.slane %v69, 1
    %v3356 = vrot.slane %v70, 1
    %v3357 = vrot.slane %v71, 1
    %v3358 = vrot.slane %v72, 1
    %v3359 = vrot.slane %v73, 1
    %v3360 = vrot.slane %v74, 1
    %v3361 = vrot.slane %v75, 1
    %v3362 = vrot.slane %v76, 1
    %v3363 = vrot.slane %v77, 1
    %v3364 = vrot.slane %v78, 1
    %v3365 = vrot.slane %v79, 1
    %v3366 = vrot.slane %v80, 1
    %v3367 = vrot.slane %v81, 1
    %v3368 = vrot.slane %v82, 1
    %v3369 = vrot.slane %v83, 1
    %v3370 = vrot.slane %v84, 1
    %v3371 = vrot.slane %v85, 1
    %v3372 = vrot.slane %v86, 1
    %v3373 = vrot.slane %v87, 1
    %v3374 = vrot.slane %v88, 1
    %v3375 = vrot.slane %v89, 1
    %v3376 = vrot.slane %v90, 1
    %v3377 = vrot.slane %v91, 1
    %v3378 = vrot.slane %v92, 1
    %v3379 = vrot.slane %v93, 1
    %v3380 = vrot.slane %v94, 1
    %v3381 = vrot.slane %v95, 1
    %v3382 = vrot.slane %v96, 1
    %v3383 = vrot.slane %v97, 1
    %v3384 = vrot.slane %v98, 1
    %v3385 = vrot.slane %v99, 1
    %v3386 = vrot.slane %v100, 1
    %v3387 = vrot.slane %v101, 1
    %v3388 = vrot.slane %v102, 1
    %v3389 = vrot.slane %v103, 1
    %v3390 = vrot.slane %v104, 1
    %v3391 = vrot.slane %v105, 1
    %v3392 = vrot.slane %v106, 1
    %v3393 = vrot.slane %v107, 1
    %v3394 = vrot.slane %v108, 1
    %v3395 = vrot.slane %v109, 1
    %v3396 = vrot.slane %v110, 1
    %v3397 = vrot.slane %v111, 1
    %v3398 = vrot.slane %v112, 1
    %v3399 = vrot.slane %v113, 1
    %v3400 = vrot.slane %v114, 1
    %v3401 = vrot.slane %v115, 1
    %v3402 = vrot.slane %v116, 1
    %v3403 = vrot.slane %v117, 1
    %v3404 = vrot.slane %v118, 1
    %v3405 = vrot.slane %v119, 1
    %v3406 = vrot.slane %v120, 1
    %v3407 = vrot.slane %v121, 1
    %v3408 = vrot.slane %v122, 1
    %v3409 = vrot.slane %v123, 1
    %v3410 = vrot.slane %v124, 1
    %v3411 = vrot.slane %v125, 1
    %v3412 = vrot.slane %v126, 1
    %v3413 = vrot.slane %v127, 1
    %v3414 = vrot.slane %v128, 1
    %v3415 = vrot.slane %v129, 1
    %v3416 = vrot.slane %v130, 1
    %v3417 = vrot.slane %v131, 1
    %v3418 = vrot.slane %v132, 1
    %v3419 = vrot.slane %v133, 1
    %v3420 = vrot.slane %v134, 1
    %v3421 = vrot.slane %v135, 1
    %v3422 = vrot.slane %v136, 1
    %v3423 = vrot.slane %v137, 1
    %v3424 = vrot.slane %v138, 1
    %v3425 = vrot.slane %v139, 1
    %v3426 = vrot.slane %v140, 1
    %vm3427 = vcmp.lt.s32.totalorder %v142, 7
    %v3428 = vsel %vm3427, %v3425, %v3426
    %v3429 = vsel %vm3427, %v3424, %v3425
    %v3430 = vsel %vm3427, %v3423, %v3424
    %v3431 = vsel %vm3427, %v3422, %v3423
    %v3432 = vsel %vm3427, %v3421, %v3422
    %v3433 = vsel %vm3427, %v3420, %v3421
    %v3434 = vsel %vm3427, %v3419, %v3420
    %v3435 = vsel %vm3427, %v3418, %v3419
    %v3436 = vsel %vm3427, %v3417, %v3418
    %v3437 = vsel %vm3427, %v3416, %v3417
    %v3438 = vsel %vm3427, %v3415, %v3416
    %v3439 = vsel %vm3427, %v3414, %v3415
    %v3440 = vsel %vm3427, %v3413, %v3414
    %v3441 = vsel %vm3427, %v3412, %v3413
    %v3442 = vsel %vm3427, %v3411, %v3412
    %v3443 = vsel %vm3427, %v3410, %v3411
    %v3444 = vsel %vm3427, %v3409, %v3410
    %v3445 = vsel %vm3427, %v3408, %v3409
    %v3446 = vsel %vm3427, %v3407, %v3408
    %v3447 = vsel %vm3427, %v3406, %v3407
    %v3448 = vsel %vm3427, %v3405, %v3406
    %v3449 = vsel %vm3427, %v3404, %v3405
    %v3450 = vsel %vm3427, %v3403, %v3404
    %v3451 = vsel %vm3427, %v3402, %v3403
    %v3452 = vsel %vm3427, %v3401, %v3402
    %v3453 = vsel %vm3427, %v3400, %v3401
    %v3454 = vsel %vm3427, %v3399, %v3400
    %v3455 = vsel %vm3427, %v3398, %v3399
    %v3456 = vsel %vm3427, %v3397, %v3398
    %v3457 = vsel %vm3427, %v3396, %v3397
    %v3458 = vsel %vm3427, %v3395, %v3396
    %v3459 = vsel %vm3427, %v3394, %v3395
    %v3460 = vsel %vm3427, %v3393, %v3394
    %v3461 = vsel %vm3427, %v3392, %v3393
    %v3462 = vsel %vm3427, %v3391, %v3392
    %v3463 = vsel %vm3427, %v3390, %v3391
    %v3464 = vsel %vm3427, %v3389, %v3390
    %v3465 = vsel %vm3427, %v3388, %v3389
    %v3466 = vsel %vm3427, %v3387, %v3388
    %v3467 = vsel %vm3427, %v3386, %v3387
    %v3468 = vsel %vm3427, %v3385, %v3386
    %v3469 = vsel %vm3427, %v3384, %v3385
    %v3470 = vsel %vm3427, %v3383, %v3384
    %v3471 = vsel %vm3427, %v3382, %v3383
    %v3472 = vsel %vm3427, %v3381, %v3382
    %v3473 = vsel %vm3427, %v3380, %v3381
    %v3474 = vsel %vm3427, %v3379, %v3380
    %v3475 = vsel %vm3427, %v3378, %v3379
    %v3476 = vsel %vm3427, %v3377, %v3378
    %v3477 = vsel %vm3427, %v3376, %v3377
    %v3478 = vsel %vm3427, %v3375, %v3376
    %v3479 = vsel %vm3427, %v3374, %v3375
    %v3480 = vsel %vm3427, %v3373, %v3374
    %v3481 = vsel %vm3427, %v3372, %v3373
    %v3482 = vsel %vm3427, %v3371, %v3372
    %v3483 = vsel %vm3427, %v3370, %v3371
    %v3484 = vsel %vm3427, %v3369, %v3370
    %v3485 = vsel %vm3427, %v3368, %v3369
    %v3486 = vsel %vm3427, %v3367, %v3368
    %v3487 = vsel %vm3427, %v3366, %v3367
    %v3488 = vsel %vm3427, %v3365, %v3366
    %v3489 = vsel %vm3427, %v3364, %v3365
    %v3490 = vsel %vm3427, %v3363, %v3364
    %v3491 = vsel %vm3427, %v3362, %v3363
    %v3492 = vsel %vm3427, %v3361, %v3362
    %v3493 = vsel %vm3427, %v3360, %v3361
    %v3494 = vsel %vm3427, %v3359, %v3360
    %v3495 = vsel %vm3427, %v3358, %v3359
    %v3496 = vsel %vm3427, %v3357, %v3358
    %v3497 = vsel %vm3427, %v3356, %v3357
    %v3498 = vsel %vm3427, %v3355, %v3356
    %v3499 = vsel %vm3427, %v3354, %v3355
    %v3500 = vsel %vm3427, %v3353, %v3354
    %v3501 = vsel %vm3427, %v3352, %v3353
    %v3502 = vsel %vm3427, %v3351, %v3352
    %v3503 = vsel %vm3427, %v3350, %v3351
    %v3504 = vsel %vm3427, %v3349, %v3350
    %v3505 = vsel %vm3427, %v3348, %v3349
    %v3506 = vsel %vm3427, %v3347, %v3348
    %v3507 = vsel %vm3427, %v3346, %v3347
    %v3508 = vsel %vm3427, %v3345, %v3346
    %v3509 = vsel %vm3427, %v3344, %v3345
    %v3510 = vsel %vm3427, %v3343, %v3344
    %v3511 = vsel %vm3427, %v3342, %v3343
    %v3512 = vsel %vm3427, %v3341, %v3342
    %v3513 = vsel %vm3427, %v3340, %v3341
    %v3514 = vsel %vm3427, %v3339, %v3340
    %v3515 = vsel %vm3427, %v3338, %v3339
    %v3516 = vsel %vm3427, %v3337, %v3338
    %v3517 = vsel %vm3427, %v3336, %v3337
    %v3518 = vsel %vm3427, %v3335, %v3336
    %v3519 = vsel %vm3427, %v3334, %v3335
    %v3520 = vsel %vm3427, %v3333, %v3334
    %v3521 = vsel %vm3427, %v3332, %v3333
    %v3522 = vsel %vm3427, %v3331, %v3332
    %v3523 = vsel %vm3427, %v3330, %v3331
    %v3524 = vsel %vm3427, %v3329, %v3330
    %v3525 = vsel %vm3427, %v3328, %v3329
    %v3526 = vsel %vm3427, %v3327, %v3328
    %v3527 = vsel %vm3427, %v3326, %v3327
    %v3528 = vsel %vm3427, %v3325, %v3326
    %v3529 = vsel %vm3427, %v3324, %v3325
    %v3530 = vsel %vm3427, %v3323, %v3324
    %v3531 = vsel %vm3427, %v3322, %v3323
    %v3532 = vsel %vm3427, %v3321, %v3322
    %v3533 = vsel %vm3427, %v3320, %v3321
    %v3534 = vsel %vm3427, %v3319, %v3320
    %v3535 = vsel %vm3427, %v3318, %v3319
    %v3536 = vsel %vm3427, %v3317, %v3318
    %v3537 = vsel %vm3427, %v3316, %v3317
    %v3538 = vsel %vm3427, %v3315, %v3316
    %v3539 = vsel %vm3427, %v3314, %v3315
    %v3540 = vsel %vm3427, %v3313, %v3314
    %v3541 = vsel %vm3427, %v3312, %v3313
    %v3542 = vsel %vm3427, %v3311, %v3312
    %v3543 = vsel %vm3427, %v3310, %v3311
    %v3544 = vsel %vm3427, %v3309, %v3310
    %v3545 = vsel %vm3427, %v3308, %v3309
    %v3546 = vsel %vm3427, %v3307, %v3308
    %v3547 = vsel %vm3427, %v3306, %v3307
    %v3548 = vsel %vm3427, %v3305, %v3306
    %v3549 = vsel %vm3427, %v3304, %v3305
    %v3550 = vsel %vm3427, %v3303, %v3304
    %v3551 = vsel %vm3427, %v3302, %v3303
    %v3552 = vsel %vm3427, %v3301, %v3302
    %v3553 = vsel %vm3427, %v3300, %v3301
    %v3554 = vsel %vm3427, %v3299, %v3300
    %v3555 = vsel %vm3427, %v3426, %v3299
    %vm3556 = vmand %vm654, %vm1038
    %vm3557 = vmand %vm655, %vm1039
    %vm3558 = vmand %vm656, %vm1040
    %vm3559 = vmand %vm657, %vm1041
    %vm3560 = vmand %vm658, %vm1042
    %vm3561 = vmand %vm659, %vm1043
    %vm3562 = vmand %vm660, %vm1044
    %vm3563 = vmand %vm661, %vm1045
    %vm3564 = vmand %vm662, %vm1046
    %vm3565 = vmand %vm663, %vm1047
    %vm3566 = vmand %vm664, %vm1048
    %vm3567 = vmand %vm665, %vm1049
    %vm3568 = vmand %vm666, %vm1050
    %vm3569 = vmand %vm667, %vm1051
    %vm3570 = vmand %vm668, %vm1052
    %vm3571 = vmand %vm669, %vm1053
    %vm3572 = vmand %vm670, %vm1054
    %vm3573 = vmand %vm671, %vm1055
    %vm3574 = vmand %vm672, %vm1056
    %vm3575 = vmand %vm673, %vm1057
    %vm3576 = vmand %vm674, %vm1058
    %vm3577 = vmand %vm675, %vm1059
    %vm3578 = vmand %vm676, %vm1060
    %vm3579 = vmand %vm677, %vm1061
    %vm3580 = vmand %vm678, %vm1062
    %vm3581 = vmand %vm679, %vm1063
    %vm3582 = vmand %vm680, %vm1064
    %vm3583 = vmand %vm681, %vm1065
    %vm3584 = vmand %vm682, %vm1066
    %vm3585 = vmand %vm683, %vm1067
    %vm3586 = vmand %vm684, %vm1068
    %vm3587 = vmand %vm685, %vm1069
    %vm3588 = vmand %vm686, %vm1070
    %vm3589 = vmand %vm687, %vm1071
    %vm3590 = vmand %vm688, %vm1072
    %vm3591 = vmand %vm689, %vm1073
    %vm3592 = vmand %vm690, %vm1074
    %vm3593 = vmand %vm691, %vm1075
    %vm3594 = vmand %vm692, %vm1076
    %vm3595 = vmand %vm693, %vm1077
    %vm3596 = vmand %vm694, %vm1078
    %vm3597 = vmand %vm695, %vm1079
    %vm3598 = vmand %vm696, %vm1080
    %vm3599 = vmand %vm697, %vm1081
    %vm3600 = vmand %vm698, %vm1082
    %vm3601 = vmand %vm699, %vm1083
    %vm3602 = vmand %vm700, %vm1084
    %vm3603 = vmand %vm701, %vm1085
    %vm3604 = vmand %vm702, %vm1086
    %vm3605 = vmand %vm703, %vm1087
    %vm3606 = vmand %vm704, %vm1088
    %vm3607 = vmand %vm705, %vm1089
    %vm3608 = vmand %vm706, %vm1090
    %vm3609 = vmand %vm707, %vm1091
    %vm3610 = vmand %vm708, %vm1092
    %vm3611 = vmand %vm709, %vm1093
    %vm3612 = vmand %vm710, %vm1094
    %vm3613 = vmand %vm711, %vm1095
    %vm3614 = vmand %vm712, %vm1096
    %vm3615 = vmand %vm713, %vm1097
    %vm3616 = vmand %vm714, %vm1098
    %vm3617 = vmand %vm715, %vm1099
    %vm3618 = vmand %vm716, %vm1100
    %vm3619 = vmand %vm717, %vm1101
    %vm3620 = vmand %vm718, %vm1102
    %vm3621 = vmand %vm719, %vm1103
    %vm3622 = vmand %vm720, %vm1104
    %vm3623 = vmand %vm721, %vm1105
    %vm3624 = vmand %vm722, %vm1106
    %vm3625 = vmand %vm723, %vm1107
    %vm3626 = vmand %vm724, %vm1108
    %vm3627 = vmand %vm725, %vm1109
    %vm3628 = vmand %vm726, %vm1110
    %vm3629 = vmand %vm727, %vm1111
    %vm3630 = vmand %vm728, %vm1112
    %vm3631 = vmand %vm729, %vm1113
    %vm3632 = vmand %vm730, %vm1114
    %vm3633 = vmand %vm731, %vm1115
    %vm3634 = vmand %vm732, %vm1116
    %vm3635 = vmand %vm733, %vm1117
    %vm3636 = vmand %vm734, %vm1118
    %vm3637 = vmand %vm735, %vm1119
    %vm3638 = vmand %vm736, %vm1120
    %vm3639 = vmand %vm737, %vm1121
    %vm3640 = vmand %vm738, %vm1122
    %vm3641 = vmand %vm739, %vm1123
    %vm3642 = vmand %vm740, %vm1124
    %vm3643 = vmand %vm741, %vm1125
    %vm3644 = vmand %vm742, %vm1126
    %vm3645 = vmand %vm743, %vm1127
    %vm3646 = vmand %vm744, %vm1128
    %vm3647 = vmand %vm745, %vm1129
    %vm3648 = vmand %vm746, %vm1130
    %vm3649 = vmand %vm747, %vm1131
    %vm3650 = vmand %vm748, %vm1132
    %vm3651 = vmand %vm749, %vm1133
    %vm3652 = vmand %vm750, %vm1134
    %vm3653 = vmand %vm751, %vm1135
    %vm3654 = vmand %vm752, %vm1136
    %vm3655 = vmand %vm753, %vm1137
    %vm3656 = vmand %vm754, %vm1138
    %vm3657 = vmand %vm755, %vm1139
    %vm3658 = vmand %vm756, %vm1140
    %vm3659 = vmand %vm757, %vm1141
    %vm3660 = vmand %vm758, %vm1142
    %vm3661 = vmand %vm759, %vm1143
    %vm3662 = vmand %vm760, %vm1144
    %vm3663 = vmand %vm761, %vm1145
    %vm3664 = vmand %vm762, %vm1146
    %vm3665 = vmand %vm763, %vm1147
    %vm3666 = vmand %vm764, %vm1148
    %vm3667 = vmand %vm765, %vm1149
    %vm3668 = vmand %vm766, %vm1150
    %vm3669 = vmand %vm767, %vm1151
    %vm3670 = vmand %vm768, %vm1152
    %vm3671 = vmand %vm769, %vm1153
    %vm3672 = vmand %vm770, %vm1154
    %vm3673 = vmand %vm771, %vm1155
    %vm3674 = vmand %vm772, %vm1156
    %vm3675 = vmand %vm773, %vm1157
    %vm3676 = vmand %vm774, %vm1158
    %vm3677 = vmand %vm775, %vm1159
    %vm3678 = vmand %vm776, %vm1160
    %vm3679 = vmand %vm777, %vm1161
    %vm3680 = vmand %vm778, %vm1162
    %vm3681 = vmand %vm779, %vm1163
    %vm3682 = vmand %vm780, %vm1164
    %vm3683 = vmand %vm781, %vm1165
    %v3684 = vsel %vm3556, %v3428, 0.0
    %v3685 = vsel %vm3557, %v3555, 0.0
    %v3686 = vsel %vm3558, %v3554, 0.0
    %v3687 = vsel %vm3559, %v3553, 0.0
    %v3688 = vsel %vm3560, %v3552, 0.0
    %v3689 = vsel %vm3561, %v3551, 0.0
    %v3690 = vsel %vm3562, %v3550, 0.0
    %v3691 = vsel %vm3563, %v3549, 0.0
    %v3692 = vsel %vm3564, %v3548, 0.0
    %v3693 = vsel %vm3565, %v3547, 0.0
    %v3694 = vsel %vm3566, %v3546, 0.0
    %v3695 = vsel %vm3567, %v3545, 0.0
    %v3696 = vsel %vm3568, %v3544, 0.0
    %v3697 = vsel %vm3569, %v3543, 0.0
    %v3698 = vsel %vm3570, %v3542, 0.0
    %v3699 = vsel %vm3571, %v3541, 0.0
    %v3700 = vsel %vm3572, %v3540, 0.0
    %v3701 = vsel %vm3573, %v3539, 0.0
    %v3702 = vsel %vm3574, %v3538, 0.0
    %v3703 = vsel %vm3575, %v3537, 0.0
    %v3704 = vsel %vm3576, %v3536, 0.0
    %v3705 = vsel %vm3577, %v3535, 0.0
    %v3706 = vsel %vm3578, %v3534, 0.0
    %v3707 = vsel %vm3579, %v3533, 0.0
    %v3708 = vsel %vm3580, %v3532, 0.0
    %v3709 = vsel %vm3581, %v3531, 0.0
    %v3710 = vsel %vm3582, %v3530, 0.0
    %v3711 = vsel %vm3583, %v3529, 0.0
    %v3712 = vsel %vm3584, %v3528, 0.0
    %v3713 = vsel %vm3585, %v3527, 0.0
    %v3714 = vsel %vm3586, %v3526, 0.0
    %v3715 = vsel %vm3587, %v3525, 0.0
    %v3716 = vsel %vm3588, %v3524, 0.0
    %v3717 = vsel %vm3589, %v3523, 0.0
    %v3718 = vsel %vm3590, %v3522, 0.0
    %v3719 = vsel %vm3591, %v3521, 0.0
    %v3720 = vsel %vm3592, %v3520, 0.0
    %v3721 = vsel %vm3593, %v3519, 0.0
    %v3722 = vsel %vm3594, %v3518, 0.0
    %v3723 = vsel %vm3595, %v3517, 0.0
    %v3724 = vsel %vm3596, %v3516, 0.0
    %v3725 = vsel %vm3597, %v3515, 0.0
    %v3726 = vsel %vm3598, %v3514, 0.0
    %v3727 = vsel %vm3599, %v3513, 0.0
    %v3728 = vsel %vm3600, %v3512, 0.0
    %v3729 = vsel %vm3601, %v3511, 0.0
    %v3730 = vsel %vm3602, %v3510, 0.0
    %v3731 = vsel %vm3603, %v3509, 0.0
    %v3732 = vsel %vm3604, %v3508, 0.0
    %v3733 = vsel %vm3605, %v3507, 0.0
    %v3734 = vsel %vm3606, %v3506, 0.0
    %v3735 = vsel %vm3607, %v3505, 0.0
    %v3736 = vsel %vm3608, %v3504, 0.0
    %v3737 = vsel %vm3609, %v3503, 0.0
    %v3738 = vsel %vm3610, %v3502, 0.0
    %v3739 = vsel %vm3611, %v3501, 0.0
    %v3740 = vsel %vm3612, %v3500, 0.0
    %v3741 = vsel %vm3613, %v3499, 0.0
    %v3742 = vsel %vm3614, %v3498, 0.0
    %v3743 = vsel %vm3615, %v3497, 0.0
    %v3744 = vsel %vm3616, %v3496, 0.0
    %v3745 = vsel %vm3617, %v3495, 0.0
    %v3746 = vsel %vm3618, %v3494, 0.0
    %v3747 = vsel %vm3619, %v3493, 0.0
    %v3748 = vsel %vm3620, %v3492, 0.0
    %v3749 = vsel %vm3621, %v3491, 0.0
    %v3750 = vsel %vm3622, %v3490, 0.0
    %v3751 = vsel %vm3623, %v3489, 0.0
    %v3752 = vsel %vm3624, %v3488, 0.0
    %v3753 = vsel %vm3625, %v3487, 0.0
    %v3754 = vsel %vm3626, %v3486, 0.0
    %v3755 = vsel %vm3627, %v3485, 0.0
    %v3756 = vsel %vm3628, %v3484, 0.0
    %v3757 = vsel %vm3629, %v3483, 0.0
    %v3758 = vsel %vm3630, %v3482, 0.0
    %v3759 = vsel %vm3631, %v3481, 0.0
    %v3760 = vsel %vm3632, %v3480, 0.0
    %v3761 = vsel %vm3633, %v3479, 0.0
    %v3762 = vsel %vm3634, %v3478, 0.0
    %v3763 = vsel %vm3635, %v3477, 0.0
    %v3764 = vsel %vm3636, %v3476, 0.0
    %v3765 = vsel %vm3637, %v3475, 0.0
    %v3766 = vsel %vm3638, %v3474, 0.0
    %v3767 = vsel %vm3639, %v3473, 0.0
    %v3768 = vsel %vm3640, %v3472, 0.0
    %v3769 = vsel %vm3641, %v3471, 0.0
    %v3770 = vsel %vm3642, %v3470, 0.0
    %v3771 = vsel %vm3643, %v3469, 0.0
    %v3772 = vsel %vm3644, %v3468, 0.0
    %v3773 = vsel %vm3645, %v3467, 0.0
    %v3774 = vsel %vm3646, %v3466, 0.0
    %v3775 = vsel %vm3647, %v3465, 0.0
    %v3776 = vsel %vm3648, %v3464, 0.0
    %v3777 = vsel %vm3649, %v3463, 0.0
    %v3778 = vsel %vm3650, %v3462, 0.0
    %v3779 = vsel %vm3651, %v3461, 0.0
    %v3780 = vsel %vm3652, %v3460, 0.0
    %v3781 = vsel %vm3653, %v3459, 0.0
    %v3782 = vsel %vm3654, %v3458, 0.0
    %v3783 = vsel %vm3655, %v3457, 0.0
    %v3784 = vsel %vm3656, %v3456, 0.0
    %v3785 = vsel %vm3657, %v3455, 0.0
    %v3786 = vsel %vm3658, %v3454, 0.0
    %v3787 = vsel %vm3659, %v3453, 0.0
    %v3788 = vsel %vm3660, %v3452, 0.0
    %v3789 = vsel %vm3661, %v3451, 0.0
    %v3790 = vsel %vm3662, %v3450, 0.0
    %v3791 = vsel %vm3663, %v3449, 0.0
    %v3792 = vsel %vm3664, %v3448, 0.0
    %v3793 = vsel %vm3665, %v3447, 0.0
    %v3794 = vsel %vm3666, %v3446, 0.0
    %v3795 = vsel %vm3667, %v3445, 0.0
    %v3796 = vsel %vm3668, %v3444, 0.0
    %v3797 = vsel %vm3669, %v3443, 0.0
    %v3798 = vsel %vm3670, %v3442, 0.0
    %v3799 = vsel %vm3671, %v3441, 0.0
    %v3800 = vsel %vm3672, %v3440, 0.0
    %v3801 = vsel %vm3673, %v3439, 0.0
    %v3802 = vsel %vm3674, %v3438, 0.0
    %v3803 = vsel %vm3675, %v3437, 0.0
    %v3804 = vsel %vm3676, %v3436, 0.0
    %v3805 = vsel %vm3677, %v3435, 0.0
    %v3806 = vsel %vm3678, %v3434, 0.0
    %v3807 = vsel %vm3679, %v3433, 0.0
    %v3808 = vsel %vm3680, %v3432, 0.0
    %v3809 = vsel %vm3681, %v3431, 0.0
    %v3810 = vsel %vm3682, %v3430, 0.0
    %v3811 = vsel %vm3683, %v3429, 0.0
    %v3812 = vpack.c.bf16 %v3685, %v3684
    %v3813 = vpack.c.bf16 %v3687, %v3686
    %v3814 = vpack.c.bf16 %v3689, %v3688
    %v3815 = vpack.c.bf16 %v3691, %v3690
    %v3816 = vpack.c.bf16 %v3693, %v3692
    %v3817 = vpack.c.bf16 %v3695, %v3694
    %v3818 = vpack.c.bf16 %v3697, %v3696
    %v3819 = vpack.c.bf16 %v3699, %v3698
    %v3820 = vpack.c.bf16 %v3701, %v3700
    %v3821 = vpack.c.bf16 %v3703, %v3702
    %v3822 = vpack.c.bf16 %v3705, %v3704
    %v3823 = vpack.c.bf16 %v3707, %v3706
    %v3824 = vpack.c.bf16 %v3709, %v3708
    %v3825 = vpack.c.bf16 %v3711, %v3710
    %v3826 = vpack.c.bf16 %v3713, %v3712
    %v3827 = vpack.c.bf16 %v3715, %v3714
    %v3828 = vpack.c.bf16 %v3717, %v3716
    %v3829 = vpack.c.bf16 %v3719, %v3718
    %v3830 = vpack.c.bf16 %v3721, %v3720
    %v3831 = vpack.c.bf16 %v3723, %v3722
    %v3832 = vpack.c.bf16 %v3725, %v3724
    %v3833 = vpack.c.bf16 %v3727, %v3726
    %v3834 = vpack.c.bf16 %v3729, %v3728
    %v3835 = vpack.c.bf16 %v3731, %v3730
    %v3836 = vpack.c.bf16 %v3733, %v3732
    %v3837 = vpack.c.bf16 %v3735, %v3734
    %v3838 = vpack.c.bf16 %v3737, %v3736
    %v3839 = vpack.c.bf16 %v3739, %v3738
    %v3840 = vpack.c.bf16 %v3741, %v3740
    %v3841 = vpack.c.bf16 %v3743, %v3742
    %v3842 = vpack.c.bf16 %v3745, %v3744
    %v3843 = vpack.c.bf16 %v3747, %v3746
    %v3844 = vpack.c.bf16 %v3749, %v3748
    %v3845 = vpack.c.bf16 %v3751, %v3750
    %v3846 = vpack.c.bf16 %v3753, %v3752
    %v3847 = vpack.c.bf16 %v3755, %v3754
    %v3848 = vpack.c.bf16 %v3757, %v3756
    %v3849 = vpack.c.bf16 %v3759, %v3758
    %v3850 = vpack.c.bf16 %v3761, %v3760
    %v3851 = vpack.c.bf16 %v3763, %v3762
    %v3852 = vpack.c.bf16 %v3765, %v3764
    %v3853 = vpack.c.bf16 %v3767, %v3766
    %v3854 = vpack.c.bf16 %v3769, %v3768
    %v3855 = vpack.c.bf16 %v3771, %v3770
    %v3856 = vpack.c.bf16 %v3773, %v3772
    %v3857 = vpack.c.bf16 %v3775, %v3774
    %v3858 = vpack.c.bf16 %v3777, %v3776
    %v3859 = vpack.c.bf16 %v3779, %v3778
    %v3860 = vpack.c.bf16 %v3781, %v3780
    %v3861 = vpack.c.bf16 %v3783, %v3782
    %v3862 = vpack.c.bf16 %v3785, %v3784
    %v3863 = vpack.c.bf16 %v3787, %v3786
    %v3864 = vpack.c.bf16 %v3789, %v3788
    %v3865 = vpack.c.bf16 %v3791, %v3790
    %v3866 = vpack.c.bf16 %v3793, %v3792
    %v3867 = vpack.c.bf16 %v3795, %v3794
    %v3868 = vpack.c.bf16 %v3797, %v3796
    %v3869 = vpack.c.bf16 %v3799, %v3798
    %v3870 = vpack.c.bf16 %v3801, %v3800
    %v3871 = vpack.c.bf16 %v3803, %v3802
    %v3872 = vpack.c.bf16 %v3805, %v3804
    %v3873 = vpack.c.bf16 %v3807, %v3806
    %v3874 = vpack.c.bf16 %v3809, %v3808
    %v3875 = vpack.c.bf16 %v3811, %v3810
    %s3876 = scalar_lea.vmem %s1, 64
    %v3877 = vld [vmem:[%s3876] sm:$0xf]
    %v3878 = vld [vmem:[%s3876 + $0x4] sm:$0xf]
    %v3879 = vld [vmem:[%s3876 + $0x8] sm:$0xf]
    %v3880 = vld [vmem:[%s3876 + $0xc] sm:$0xf]
    %v3881 = vld [vmem:[%s3876 + $0x10] sm:$0xf]
    %v3882 = vld [vmem:[%s3876 + $0x14] sm:$0xf]
    %v3883 = vld [vmem:[%s3876 + $0x18] sm:$0xf]
    %v3884 = vld [vmem:[%s3876 + $0x1c] sm:$0xf]
    %v3893 = vunpack.c.l.b16 %v3877
    %v3894 = vunpack.c.l.b16 %v3878
    %v3895 = vunpack.c.l.b16 %v3879
    %v3896 = vunpack.c.l.b16 %v3880
    %v3897 = vunpack.c.l.b16 %v3881
    %v3898 = vunpack.c.l.b16 %v3882
    %v3899 = vunpack.c.l.b16 %v3883
    %v3900 = vunpack.c.l.b16 %v3884
    %v3901 = vpack.c.b16 %v3894, %v3893
    %v3902 = vpack.c.b16 %v3896, %v3895
    %v3903 = vpack.c.b16 %v3898, %v3897
    %v3904 = vpack.c.b16 %v3900, %v3899
    %v3910 = vsel %vm1775, %v3812, 0
    %v3913 = vsel %vm1775, %v3813, 0
    %v3916 = vsel %vm1775, %v3814, 0
    %v3919 = vsel %vm1775, %v3815, 0
    %v3922 = vsel %vm1775, %v3816, 0
    %v3925 = vsel %vm1775, %v3817, 0
    %v3928 = vsel %vm1775, %v3818, 0
    %v3931 = vsel %vm1775, %v3819, 0
    %v3934 = vsel %vm1775, %v3820, 0
    %v3937 = vsel %vm1775, %v3821, 0
    %v3940 = vsel %vm1775, %v3822, 0
    %v3943 = vsel %vm1775, %v3823, 0
    %v3946 = vsel %vm1775, %v3824, 0
    %v3949 = vsel %vm1775, %v3825, 0
    %v3952 = vsel %vm1775, %v3826, 0
    %v3955 = vsel %vm1775, %v3827, 0
    %v3958 = vsel %vm1775, %v3828, 0
    %v3961 = vsel %vm1775, %v3829, 0
    %v3964 = vsel %vm1775, %v3830, 0
    %v3967 = vsel %vm1775, %v3831, 0
    %v3970 = vsel %vm1775, %v3832, 0
    %v3973 = vsel %vm1775, %v3833, 0
    %v3976 = vsel %vm1775, %v3834, 0
    %v3979 = vsel %vm1775, %v3835, 0
    %v3982 = vsel %vm1775, %v3836, 0
    %v3985 = vsel %vm1775, %v3837, 0
    %v3988 = vsel %vm1775, %v3838, 0
    %v3991 = vsel %vm1775, %v3839, 0
    %v3994 = vsel %vm1775, %v3840, 0
    %v3997 = vsel %vm1775, %v3841, 0
    %v4000 = vsel %vm1775, %v3842, 0
    %v4003 = vsel %vm1775, %v3843, 0
    %v4006 = vsel %vm1775, %v3844, 0
    %v4009 = vsel %vm1775, %v3845, 0
    %v4012 = vsel %vm1775, %v3846, 0
    %v4015 = vsel %vm1775, %v3847, 0
    %v4018 = vsel %vm1775, %v3848, 0
    %v4021 = vsel %vm1775, %v3849, 0
    %v4024 = vsel %vm1775, %v3850, 0
    %v4027 = vsel %vm1775, %v3851, 0
    %v4030 = vsel %vm1775, %v3852, 0
    %v4033 = vsel %vm1775, %v3853, 0
    %v4036 = vsel %vm1775, %v3854, 0
    %v4039 = vsel %vm1775, %v3855, 0
    %v4042 = vsel %vm1775, %v3856, 0
    %v4045 = vsel %vm1775, %v3857, 0
    %v4048 = vsel %vm1775, %v3858, 0
    %v4051 = vsel %vm1775, %v3859, 0
    %v4054 = vsel %vm1775, %v3860, 0
    %v4057 = vsel %vm1775, %v3861, 0
    %v4060 = vsel %vm1775, %v3862, 0
    %v4063 = vsel %vm1775, %v3863, 0
    %v4066 = vsel %vm1775, %v3864, 0
    %v4069 = vsel %vm1775, %v3865, 0
    %v4072 = vsel %vm1775, %v3866, 0
    %v4075 = vsel %vm1775, %v3867, 0
    %v4078 = vsel %vm1775, %v3868, 0
    %v4081 = vsel %vm1775, %v3869, 0
    %v4084 = vsel %vm1775, %v3870, 0
    %v4087 = vsel %vm1775, %v3871, 0
    %v4090 = vsel %vm1775, %v3872, 0
    %v4093 = vsel %vm1775, %v3873, 0
    %v4096 = vsel %vm1775, %v3874, 0
    %v4099 = vsel %vm1775, %v3875, 0
    %4101 = vmatpush.bf16.msra.mxu0 0
    %4102 = vmatpush.bf16.msra.mxu0 0
    %4103 = vmatpush.bf16.msra.mxu0 0
    %4104 = vmatpush.bf16.msra.mxu0 0
    %4105 = vmatpush.bf16.msra.mxu0 %v3904
    %4106 = vmatpush.bf16.msra.mxu0 %v3903
    %4107 = vmatpush.bf16.msra.mxu0 %v3902
    %4108 = vmatpush.bf16.msra.mxu0 %v3901
    %4109 = vmatmul.bf16.gmra.mxu0 %v3910
    %v4110 = vpop.f32.mrf.mxu0
    %v4111 = vadd.f32 0.0, %v4110
    %v4112 = vpop.f32.mrf.mxu0
    %v4113 = vadd.f32 0.0, %v4112
    %4114 = vmatmul.bf16.gmra.mxu0 %v3913
    %v4115 = vpop.f32.mrf.mxu0
    %v4116 = vadd.f32 0.0, %v4115
    %v4117 = vpop.f32.mrf.mxu0
    %v4118 = vadd.f32 0.0, %v4117
    %4119 = vmatmul.bf16.gmra.mxu0 %v3916
    %v4120 = vpop.f32.mrf.mxu0
    %v4121 = vadd.f32 0.0, %v4120
    %v4122 = vpop.f32.mrf.mxu0
    %v4123 = vadd.f32 0.0, %v4122
    %4124 = vmatmul.bf16.gmra.mxu0 %v3919
    %v4125 = vpop.f32.mrf.mxu0
    %v4126 = vadd.f32 0.0, %v4125
    %v4127 = vpop.f32.mrf.mxu0
    %v4128 = vadd.f32 0.0, %v4127
    %4129 = vmatmul.bf16.gmra.mxu0 %v3922
    %v4130 = vpop.f32.mrf.mxu0
    %v4131 = vadd.f32 0.0, %v4130
    %v4132 = vpop.f32.mrf.mxu0
    %v4133 = vadd.f32 0.0, %v4132
    %4134 = vmatmul.bf16.gmra.mxu0 %v3925
    %v4135 = vpop.f32.mrf.mxu0
    %v4136 = vadd.f32 0.0, %v4135
    %v4137 = vpop.f32.mrf.mxu0
    %v4138 = vadd.f32 0.0, %v4137
    %4139 = vmatmul.bf16.gmra.mxu0 %v3928
    %v4140 = vpop.f32.mrf.mxu0
    %v4141 = vadd.f32 0.0, %v4140
    %v4142 = vpop.f32.mrf.mxu0
    %v4143 = vadd.f32 0.0, %v4142
    %4144 = vmatmul.bf16.gmra.mxu0 %v3931
    %v4145 = vpop.f32.mrf.mxu0
    %v4146 = vadd.f32 0.0, %v4145
    %v4147 = vpop.f32.mrf.mxu0
    %v4148 = vadd.f32 0.0, %v4147
    %4149 = vmatmul.bf16.gmra.mxu0 %v3934
    %v4150 = vpop.f32.mrf.mxu0
    %v4151 = vadd.f32 0.0, %v4150
    %v4152 = vpop.f32.mrf.mxu0
    %v4153 = vadd.f32 0.0, %v4152
    %4154 = vmatmul.bf16.gmra.mxu0 %v3937
    %v4155 = vpop.f32.mrf.mxu0
    %v4156 = vadd.f32 0.0, %v4155
    %v4157 = vpop.f32.mrf.mxu0
    %v4158 = vadd.f32 0.0, %v4157
    %4159 = vmatmul.bf16.gmra.mxu0 %v3940
    %v4160 = vpop.f32.mrf.mxu0
    %v4161 = vadd.f32 0.0, %v4160
    %v4162 = vpop.f32.mrf.mxu0
    %v4163 = vadd.f32 0.0, %v4162
    %4164 = vmatmul.bf16.gmra.mxu0 %v3943
    %v4165 = vpop.f32.mrf.mxu0
    %v4166 = vadd.f32 0.0, %v4165
    %v4167 = vpop.f32.mrf.mxu0
    %v4168 = vadd.f32 0.0, %v4167
    %4169 = vmatmul.bf16.gmra.mxu0 %v3946
    %v4170 = vpop.f32.mrf.mxu0
    %v4171 = vadd.f32 0.0, %v4170
    %v4172 = vpop.f32.mrf.mxu0
    %v4173 = vadd.f32 0.0, %v4172
    %4174 = vmatmul.bf16.gmra.mxu0 %v3949
    %v4175 = vpop.f32.mrf.mxu0
    %v4176 = vadd.f32 0.0, %v4175
    %v4177 = vpop.f32.mrf.mxu0
    %v4178 = vadd.f32 0.0, %v4177
    %4179 = vmatmul.bf16.gmra.mxu0 %v3952
    %v4180 = vpop.f32.mrf.mxu0
    %v4181 = vadd.f32 0.0, %v4180
    %v4182 = vpop.f32.mrf.mxu0
    %v4183 = vadd.f32 0.0, %v4182
    %4184 = vmatmul.bf16.gmra.mxu0 %v3955
    %v4185 = vpop.f32.mrf.mxu0
    %v4186 = vadd.f32 0.0, %v4185
    %v4187 = vpop.f32.mrf.mxu0
    %v4188 = vadd.f32 0.0, %v4187
    %4189 = vmatmul.bf16.gmra.mxu0 %v3958
    %v4190 = vpop.f32.mrf.mxu0
    %v4191 = vadd.f32 0.0, %v4190
    %v4192 = vpop.f32.mrf.mxu0
    %v4193 = vadd.f32 0.0, %v4192
    %4194 = vmatmul.bf16.gmra.mxu0 %v3961
    %v4195 = vpop.f32.mrf.mxu0
    %v4196 = vadd.f32 0.0, %v4195
    %v4197 = vpop.f32.mrf.mxu0
    %v4198 = vadd.f32 0.0, %v4197
    %4199 = vmatmul.bf16.gmra.mxu0 %v3964
    %v4200 = vpop.f32.mrf.mxu0
    %v4201 = vadd.f32 0.0, %v4200
    %v4202 = vpop.f32.mrf.mxu0
    %v4203 = vadd.f32 0.0, %v4202
    %4204 = vmatmul.bf16.gmra.mxu0 %v3967
    %v4205 = vpop.f32.mrf.mxu0
    %v4206 = vadd.f32 0.0, %v4205
    %v4207 = vpop.f32.mrf.mxu0
    %v4208 = vadd.f32 0.0, %v4207
    %4209 = vmatmul.bf16.gmra.mxu0 %v3970
    %v4210 = vpop.f32.mrf.mxu0
    %v4211 = vadd.f32 0.0, %v4210
    %v4212 = vpop.f32.mrf.mxu0
    %v4213 = vadd.f32 0.0, %v4212
    %4214 = vmatmul.bf16.gmra.mxu0 %v3973
    %v4215 = vpop.f32.mrf.mxu0
    %v4216 = vadd.f32 0.0, %v4215
    %v4217 = vpop.f32.mrf.mxu0
    %v4218 = vadd.f32 0.0, %v4217
    %4219 = vmatmul.bf16.gmra.mxu0 %v3976
    %v4220 = vpop.f32.mrf.mxu0
    %v4221 = vadd.f32 0.0, %v4220
    %v4222 = vpop.f32.mrf.mxu0
    %v4223 = vadd.f32 0.0, %v4222
    %4224 = vmatmul.bf16.gmra.mxu0 %v3979
    %v4225 = vpop.f32.mrf.mxu0
    %v4226 = vadd.f32 0.0, %v4225
    %v4227 = vpop.f32.mrf.mxu0
    %v4228 = vadd.f32 0.0, %v4227
    %4229 = vmatmul.bf16.gmra.mxu0 %v3982
    %v4230 = vpop.f32.mrf.mxu0
    %v4231 = vadd.f32 0.0, %v4230
    %v4232 = vpop.f32.mrf.mxu0
    %v4233 = vadd.f32 0.0, %v4232
    %4234 = vmatmul.bf16.gmra.mxu0 %v3985
    %v4235 = vpop.f32.mrf.mxu0
    %v4236 = vadd.f32 0.0, %v4235
    %v4237 = vpop.f32.mrf.mxu0
    %v4238 = vadd.f32 0.0, %v4237
    %4239 = vmatmul.bf16.gmra.mxu0 %v3988
    %v4240 = vpop.f32.mrf.mxu0
    %v4241 = vadd.f32 0.0, %v4240
    %v4242 = vpop.f32.mrf.mxu0
    %v4243 = vadd.f32 0.0, %v4242
    %4244 = vmatmul.bf16.gmra.mxu0 %v3991
    %v4245 = vpop.f32.mrf.mxu0
    %v4246 = vadd.f32 0.0, %v4245
    %v4247 = vpop.f32.mrf.mxu0
    %v4248 = vadd.f32 0.0, %v4247
    %4249 = vmatmul.bf16.gmra.mxu0 %v3994
    %v4250 = vpop.f32.mrf.mxu0
    %v4251 = vadd.f32 0.0, %v4250
    %v4252 = vpop.f32.mrf.mxu0
    %v4253 = vadd.f32 0.0, %v4252
    %4254 = vmatmul.bf16.gmra.mxu0 %v3997
    %v4255 = vpop.f32.mrf.mxu0
    %v4256 = vadd.f32 0.0, %v4255
    %v4257 = vpop.f32.mrf.mxu0
    %v4258 = vadd.f32 0.0, %v4257
    %4259 = vmatmul.bf16.gmra.mxu0 %v4000
    %v4260 = vpop.f32.mrf.mxu0
    %v4261 = vadd.f32 0.0, %v4260
    %v4262 = vpop.f32.mrf.mxu0
    %v4263 = vadd.f32 0.0, %v4262
    %4264 = vmatmul.bf16.gmra.mxu0 %v4003
    %v4265 = vpop.f32.mrf.mxu0
    %v4266 = vadd.f32 0.0, %v4265
    %v4267 = vpop.f32.mrf.mxu0
    %v4268 = vadd.f32 0.0, %v4267
    %4269 = vmatmul.bf16.gmra.mxu0 %v4006
    %v4270 = vpop.f32.mrf.mxu0
    %v4271 = vadd.f32 0.0, %v4270
    %v4272 = vpop.f32.mrf.mxu0
    %v4273 = vadd.f32 0.0, %v4272
    %4274 = vmatmul.bf16.gmra.mxu0 %v4009
    %v4275 = vpop.f32.mrf.mxu0
    %v4276 = vadd.f32 0.0, %v4275
    %v4277 = vpop.f32.mrf.mxu0
    %v4278 = vadd.f32 0.0, %v4277
    %4279 = vmatmul.bf16.gmra.mxu0 %v4012
    %v4280 = vpop.f32.mrf.mxu0
    %v4281 = vadd.f32 0.0, %v4280
    %v4282 = vpop.f32.mrf.mxu0
    %v4283 = vadd.f32 0.0, %v4282
    %4284 = vmatmul.bf16.gmra.mxu0 %v4015
    %v4285 = vpop.f32.mrf.mxu0
    %v4286 = vadd.f32 0.0, %v4285
    %v4287 = vpop.f32.mrf.mxu0
    %v4288 = vadd.f32 0.0, %v4287
    %4289 = vmatmul.bf16.gmra.mxu0 %v4018
    %v4290 = vpop.f32.mrf.mxu0
    %v4291 = vadd.f32 0.0, %v4290
    %v4292 = vpop.f32.mrf.mxu0
    %v4293 = vadd.f32 0.0, %v4292
    %4294 = vmatmul.bf16.gmra.mxu0 %v4021
    %v4295 = vpop.f32.mrf.mxu0
    %v4296 = vadd.f32 0.0, %v4295
    %v4297 = vpop.f32.mrf.mxu0
    %v4298 = vadd.f32 0.0, %v4297
    %4299 = vmatmul.bf16.gmra.mxu0 %v4024
    %v4300 = vpop.f32.mrf.mxu0
    %v4301 = vadd.f32 0.0, %v4300
    %v4302 = vpop.f32.mrf.mxu0
    %v4303 = vadd.f32 0.0, %v4302
    %4304 = vmatmul.bf16.gmra.mxu0 %v4027
    %v4305 = vpop.f32.mrf.mxu0
    %v4306 = vadd.f32 0.0, %v4305
    %v4307 = vpop.f32.mrf.mxu0
    %v4308 = vadd.f32 0.0, %v4307
    %4309 = vmatmul.bf16.gmra.mxu0 %v4030
    %v4310 = vpop.f32.mrf.mxu0
    %v4311 = vadd.f32 0.0, %v4310
    %v4312 = vpop.f32.mrf.mxu0
    %v4313 = vadd.f32 0.0, %v4312
    %4314 = vmatmul.bf16.gmra.mxu0 %v4033
    %v4315 = vpop.f32.mrf.mxu0
    %v4316 = vadd.f32 0.0, %v4315
    %v4317 = vpop.f32.mrf.mxu0
    %v4318 = vadd.f32 0.0, %v4317
    %4319 = vmatmul.bf16.gmra.mxu0 %v4036
    %v4320 = vpop.f32.mrf.mxu0
    %v4321 = vadd.f32 0.0, %v4320
    %v4322 = vpop.f32.mrf.mxu0
    %v4323 = vadd.f32 0.0, %v4322
    %4324 = vmatmul.bf16.gmra.mxu0 %v4039
    %v4325 = vpop.f32.mrf.mxu0
    %v4326 = vadd.f32 0.0, %v4325
    %v4327 = vpop.f32.mrf.mxu0
    %v4328 = vadd.f32 0.0, %v4327
    %4329 = vmatmul.bf16.gmra.mxu0 %v4042
    %v4330 = vpop.f32.mrf.mxu0
    %v4331 = vadd.f32 0.0, %v4330
    %v4332 = vpop.f32.mrf.mxu0
    %v4333 = vadd.f32 0.0, %v4332
    %4334 = vmatmul.bf16.gmra.mxu0 %v4045
    %v4335 = vpop.f32.mrf.mxu0
    %v4336 = vadd.f32 0.0, %v4335
    %v4337 = vpop.f32.mrf.mxu0
    %v4338 = vadd.f32 0.0, %v4337
    %4339 = vmatmul.bf16.gmra.mxu0 %v4048
    %v4340 = vpop.f32.mrf.mxu0
    %v4341 = vadd.f32 0.0, %v4340
    %v4342 = vpop.f32.mrf.mxu0
    %v4343 = vadd.f32 0.0, %v4342
    %4344 = vmatmul.bf16.gmra.mxu0 %v4051
    %v4345 = vpop.f32.mrf.mxu0
    %v4346 = vadd.f32 0.0, %v4345
    %v4347 = vpop.f32.mrf.mxu0
    %v4348 = vadd.f32 0.0, %v4347
    %4349 = vmatmul.bf16.gmra.mxu0 %v4054
    %v4350 = vpop.f32.mrf.mxu0
    %v4351 = vadd.f32 0.0, %v4350
    %v4352 = vpop.f32.mrf.mxu0
    %v4353 = vadd.f32 0.0, %v4352
    %4354 = vmatmul.bf16.gmra.mxu0 %v4057
    %v4355 = vpop.f32.mrf.mxu0
    %v4356 = vadd.f32 0.0, %v4355
    %v4357 = vpop.f32.mrf.mxu0
    %v4358 = vadd.f32 0.0, %v4357
    %4359 = vmatmul.bf16.gmra.mxu0 %v4060
    %v4360 = vpop.f32.mrf.mxu0
    %v4361 = vadd.f32 0.0, %v4360
    %v4362 = vpop.f32.mrf.mxu0
    %v4363 = vadd.f32 0.0, %v4362
    %4364 = vmatmul.bf16.gmra.mxu0 %v4063
    %v4365 = vpop.f32.mrf.mxu0
    %v4366 = vadd.f32 0.0, %v4365
    %v4367 = vpop.f32.mrf.mxu0
    %v4368 = vadd.f32 0.0, %v4367
    %4369 = vmatmul.bf16.gmra.mxu0 %v4066
    %v4370 = vpop.f32.mrf.mxu0
    %v4371 = vadd.f32 0.0, %v4370
    %v4372 = vpop.f32.mrf.mxu0
    %v4373 = vadd.f32 0.0, %v4372
    %4374 = vmatmul.bf16.gmra.mxu0 %v4069
    %v4375 = vpop.f32.mrf.mxu0
    %v4376 = vadd.f32 0.0, %v4375
    %v4377 = vpop.f32.mrf.mxu0
    %v4378 = vadd.f32 0.0, %v4377
    %4379 = vmatmul.bf16.gmra.mxu0 %v4072
    %v4380 = vpop.f32.mrf.mxu0
    %v4381 = vadd.f32 0.0, %v4380
    %v4382 = vpop.f32.mrf.mxu0
    %v4383 = vadd.f32 0.0, %v4382
    %4384 = vmatmul.bf16.gmra.mxu0 %v4075
    %v4385 = vpop.f32.mrf.mxu0
    %v4386 = vadd.f32 0.0, %v4385
    %v4387 = vpop.f32.mrf.mxu0
    %v4388 = vadd.f32 0.0, %v4387
    %4389 = vmatmul.bf16.gmra.mxu0 %v4078
    %v4390 = vpop.f32.mrf.mxu0
    %v4391 = vadd.f32 0.0, %v4390
    %v4392 = vpop.f32.mrf.mxu0
    %v4393 = vadd.f32 0.0, %v4392
    %4394 = vmatmul.bf16.gmra.mxu0 %v4081
    %v4395 = vpop.f32.mrf.mxu0
    %v4396 = vadd.f32 0.0, %v4395
    %v4397 = vpop.f32.mrf.mxu0
    %v4398 = vadd.f32 0.0, %v4397
    %4399 = vmatmul.bf16.gmra.mxu0 %v4084
    %v4400 = vpop.f32.mrf.mxu0
    %v4401 = vadd.f32 0.0, %v4400
    %v4402 = vpop.f32.mrf.mxu0
    %v4403 = vadd.f32 0.0, %v4402
    %4404 = vmatmul.bf16.gmra.mxu0 %v4087
    %v4405 = vpop.f32.mrf.mxu0
    %v4406 = vadd.f32 0.0, %v4405
    %v4407 = vpop.f32.mrf.mxu0
    %v4408 = vadd.f32 0.0, %v4407
    %4409 = vmatmul.bf16.gmra.mxu0 %v4090
    %v4410 = vpop.f32.mrf.mxu0
    %v4411 = vadd.f32 0.0, %v4410
    %v4412 = vpop.f32.mrf.mxu0
    %v4413 = vadd.f32 0.0, %v4412
    %4414 = vmatmul.bf16.gmra.mxu0 %v4093
    %v4415 = vpop.f32.mrf.mxu0
    %v4416 = vadd.f32 0.0, %v4415
    %v4417 = vpop.f32.mrf.mxu0
    %v4418 = vadd.f32 0.0, %v4417
    %4419 = vmatmul.bf16.gmra.mxu0 %v4096
    %v4420 = vpop.f32.mrf.mxu0
    %v4421 = vadd.f32 0.0, %v4420
    %v4422 = vpop.f32.mrf.mxu0
    %v4423 = vadd.f32 0.0, %v4422
    %4424 = vmatmul.bf16.gmra.mxu0 %v4099
    %v4425 = vpop.f32.mrf.mxu0
    %v4426 = vadd.f32 0.0, %v4425
    %v4427 = vpop.f32.mrf.mxu0
    %v4428 = vadd.f32 0.0, %v4427
    %4429 = vdwg.mxu0
    %v4430 = vadd.f32 %v3171, %v4111
    %v4431 = vadd.f32 %v3172, %v4113
    %v4432 = vadd.f32 %v3173, %v4116
    %v4433 = vadd.f32 %v3174, %v4118
    %v4434 = vadd.f32 %v3175, %v4121
    %v4435 = vadd.f32 %v3176, %v4123
    %v4436 = vadd.f32 %v3177, %v4126
    %v4437 = vadd.f32 %v3178, %v4128
    %v4438 = vadd.f32 %v3179, %v4131
    %v4439 = vadd.f32 %v3180, %v4133
    %v4440 = vadd.f32 %v3181, %v4136
    %v4441 = vadd.f32 %v3182, %v4138
    %v4442 = vadd.f32 %v3183, %v4141
    %v4443 = vadd.f32 %v3184, %v4143
    %v4444 = vadd.f32 %v3185, %v4146
    %v4445 = vadd.f32 %v3186, %v4148
    %v4446 = vadd.f32 %v3187, %v4151
    %v4447 = vadd.f32 %v3188, %v4153
    %v4448 = vadd.f32 %v3189, %v4156
    %v4449 = vadd.f32 %v3190, %v4158
    %v4450 = vadd.f32 %v3191, %v4161
    %v4451 = vadd.f32 %v3192, %v4163
    %v4452 = vadd.f32 %v3193, %v4166
    %v4453 = vadd.f32 %v3194, %v4168
    %v4454 = vadd.f32 %v3195, %v4171
    %v4455 = vadd.f32 %v3196, %v4173
    %v4456 = vadd.f32 %v3197, %v4176
    %v4457 = vadd.f32 %v3198, %v4178
    %v4458 = vadd.f32 %v3199, %v4181
    %v4459 = vadd.f32 %v3200, %v4183
    %v4460 = vadd.f32 %v3201, %v4186
    %v4461 = vadd.f32 %v3202, %v4188
    %v4462 = vadd.f32 %v3203, %v4191
    %v4463 = vadd.f32 %v3204, %v4193
    %v4464 = vadd.f32 %v3205, %v4196
    %v4465 = vadd.f32 %v3206, %v4198
    %v4466 = vadd.f32 %v3207, %v4201
    %v4467 = vadd.f32 %v3208, %v4203
    %v4468 = vadd.f32 %v3209, %v4206
    %v4469 = vadd.f32 %v3210, %v4208
    %v4470 = vadd.f32 %v3211, %v4211
    %v4471 = vadd.f32 %v3212, %v4213
    %v4472 = vadd.f32 %v3213, %v4216
    %v4473 = vadd.f32 %v3214, %v4218
    %v4474 = vadd.f32 %v3215, %v4221
    %v4475 = vadd.f32 %v3216, %v4223
    %v4476 = vadd.f32 %v3217, %v4226
    %v4477 = vadd.f32 %v3218, %v4228
    %v4478 = vadd.f32 %v3219, %v4231
    %v4479 = vadd.f32 %v3220, %v4233
    %v4480 = vadd.f32 %v3221, %v4236
    %v4481 = vadd.f32 %v3222, %v4238
    %v4482 = vadd.f32 %v3223, %v4241
    %v4483 = vadd.f32 %v3224, %v4243
    %v4484 = vadd.f32 %v3225, %v4246
    %v4485 = vadd.f32 %v3226, %v4248
    %v4486 = vadd.f32 %v3227, %v4251
    %v4487 = vadd.f32 %v3228, %v4253
    %v4488 = vadd.f32 %v3229, %v4256
    %v4489 = vadd.f32 %v3230, %v4258
    %v4490 = vadd.f32 %v3231, %v4261
    %v4491 = vadd.f32 %v3232, %v4263
    %v4492 = vadd.f32 %v3233, %v4266
    %v4493 = vadd.f32 %v3234, %v4268
    %v4494 = vadd.f32 %v3235, %v4271
    %v4495 = vadd.f32 %v3236, %v4273
    %v4496 = vadd.f32 %v3237, %v4276
    %v4497 = vadd.f32 %v3238, %v4278
    %v4498 = vadd.f32 %v3239, %v4281
    %v4499 = vadd.f32 %v3240, %v4283
    %v4500 = vadd.f32 %v3241, %v4286
    %v4501 = vadd.f32 %v3242, %v4288
    %v4502 = vadd.f32 %v3243, %v4291
    %v4503 = vadd.f32 %v3244, %v4293
    %v4504 = vadd.f32 %v3245, %v4296
    %v4505 = vadd.f32 %v3246, %v4298
    %v4506 = vadd.f32 %v3247, %v4301
    %v4507 = vadd.f32 %v3248, %v4303
    %v4508 = vadd.f32 %v3249, %v4306
    %v4509 = vadd.f32 %v3250, %v4308
    %v4510 = vadd.f32 %v3251, %v4311
    %v4511 = vadd.f32 %v3252, %v4313
    %v4512 = vadd.f32 %v3253, %v4316
    %v4513 = vadd.f32 %v3254, %v4318
    %v4514 = vadd.f32 %v3255, %v4321
    %v4515 = vadd.f32 %v3256, %v4323
    %v4516 = vadd.f32 %v3257, %v4326
    %v4517 = vadd.f32 %v3258, %v4328
    %v4518 = vadd.f32 %v3259, %v4331
    %v4519 = vadd.f32 %v3260, %v4333
    %v4520 = vadd.f32 %v3261, %v4336
    %v4521 = vadd.f32 %v3262, %v4338
    %v4522 = vadd.f32 %v3263, %v4341
    %v4523 = vadd.f32 %v3264, %v4343
    %v4524 = vadd.f32 %v3265, %v4346
    %v4525 = vadd.f32 %v3266, %v4348
    %v4526 = vadd.f32 %v3267, %v4351
    %v4527 = vadd.f32 %v3268, %v4353
    %v4528 = vadd.f32 %v3269, %v4356
    %v4529 = vadd.f32 %v3270, %v4358
    %v4530 = vadd.f32 %v3271, %v4361
    %v4531 = vadd.f32 %v3272, %v4363
    %v4532 = vadd.f32 %v3273, %v4366
    %v4533 = vadd.f32 %v3274, %v4368
    %v4534 = vadd.f32 %v3275, %v4371
    %v4535 = vadd.f32 %v3276, %v4373
    %v4536 = vadd.f32 %v3277, %v4376
    %v4537 = vadd.f32 %v3278, %v4378
    %v4538 = vadd.f32 %v3279, %v4381
    %v4539 = vadd.f32 %v3280, %v4383
    %v4540 = vadd.f32 %v3281, %v4386
    %v4541 = vadd.f32 %v3282, %v4388
    %v4542 = vadd.f32 %v3283, %v4391
    %v4543 = vadd.f32 %v3284, %v4393
    %v4544 = vadd.f32 %v3285, %v4396
    %v4545 = vadd.f32 %v3286, %v4398
    %v4546 = vadd.f32 %v3287, %v4401
    %v4547 = vadd.f32 %v3288, %v4403
    %v4548 = vadd.f32 %v3289, %v4406
    %v4549 = vadd.f32 %v3290, %v4408
    %v4550 = vadd.f32 %v3291, %v4411
    %v4551 = vadd.f32 %v3292, %v4413
    %v4552 = vadd.f32 %v3293, %v4416
    %v4553 = vadd.f32 %v3294, %v4418
    %v4554 = vadd.f32 %v3295, %v4421
    %v4555 = vadd.f32 %v3296, %v4423
    %v4556 = vadd.f32 %v3297, %v4426
    %v4557 = vadd.f32 %v3298, %v4428
    %v4558 = vsel %vm910, %v1422, 0.0
    %v4559 = vsel %vm911, %v1421, 0.0
    %v4560 = vsel %vm912, %v1420, 0.0
    %v4561 = vsel %vm913, %v1419, 0.0
    %v4562 = vsel %vm914, %v1418, 0.0
    %v4563 = vsel %vm915, %v1417, 0.0
    %v4564 = vsel %vm916, %v1416, 0.0
    %v4565 = vsel %vm917, %v1415, 0.0
    %v4566 = vsel %vm918, %v1414, 0.0
    %v4567 = vsel %vm919, %v1413, 0.0
    %v4568 = vsel %vm920, %v1412, 0.0
    %v4569 = vsel %vm921, %v1411, 0.0
    %v4570 = vsel %vm922, %v1410, 0.0
    %v4571 = vsel %vm923, %v1409, 0.0
    %v4572 = vsel %vm924, %v1408, 0.0
    %v4573 = vsel %vm925, %v1407, 0.0
    %v4574 = vsel %vm926, %v1406, 0.0
    %v4575 = vsel %vm927, %v1405, 0.0
    %v4576 = vsel %vm928, %v1404, 0.0
    %v4577 = vsel %vm929, %v1403, 0.0
    %v4578 = vsel %vm930, %v1402, 0.0
    %v4579 = vsel %vm931, %v1401, 0.0
    %v4580 = vsel %vm932, %v1400, 0.0
    %v4581 = vsel %vm933, %v1399, 0.0
    %v4582 = vsel %vm934, %v1398, 0.0
    %v4583 = vsel %vm935, %v1397, 0.0
    %v4584 = vsel %vm936, %v1396, 0.0
    %v4585 = vsel %vm937, %v1395, 0.0
    %v4586 = vsel %vm938, %v1394, 0.0
    %v4587 = vsel %vm939, %v1393, 0.0
    %v4588 = vsel %vm940, %v1392, 0.0
    %v4589 = vsel %vm941, %v1391, 0.0
    %v4590 = vsel %vm942, %v1390, 0.0
    %v4591 = vsel %vm943, %v1389, 0.0
    %v4592 = vsel %vm944, %v1388, 0.0
    %v4593 = vsel %vm945, %v1387, 0.0
    %v4594 = vsel %vm946, %v1386, 0.0
    %v4595 = vsel %vm947, %v1385, 0.0
    %v4596 = vsel %vm948, %v1384, 0.0
    %v4597 = vsel %vm949, %v1383, 0.0
    %v4598 = vsel %vm950, %v1382, 0.0
    %v4599 = vsel %vm951, %v1381, 0.0
    %v4600 = vsel %vm952, %v1380, 0.0
    %v4601 = vsel %vm953, %v1379, 0.0
    %v4602 = vsel %vm954, %v1378, 0.0
    %v4603 = vsel %vm955, %v1377, 0.0
    %v4604 = vsel %vm956, %v1376, 0.0
    %v4605 = vsel %vm957, %v1375, 0.0
    %v4606 = vsel %vm958, %v1374, 0.0
    %v4607 = vsel %vm959, %v1373, 0.0
    %v4608 = vsel %vm960, %v1372, 0.0
    %v4609 = vsel %vm961, %v1371, 0.0
    %v4610 = vsel %vm962, %v1370, 0.0
    %v4611 = vsel %vm963, %v1369, 0.0
    %v4612 = vsel %vm964, %v1368, 0.0
    %v4613 = vsel %vm965, %v1367, 0.0
    %v4614 = vsel %vm966, %v1366, 0.0
    %v4615 = vsel %vm967, %v1365, 0.0
    %v4616 = vsel %vm968, %v1364, 0.0
    %v4617 = vsel %vm969, %v1363, 0.0
    %v4618 = vsel %vm970, %v1362, 0.0
    %v4619 = vsel %vm971, %v1361, 0.0
    %v4620 = vsel %vm972, %v1360, 0.0
    %v4621 = vsel %vm973, %v1359, 0.0
    %v4622 = vsel %vm974, %v1358, 0.0
    %v4623 = vsel %vm975, %v1357, 0.0
    %v4624 = vsel %vm976, %v1356, 0.0
    %v4625 = vsel %vm977, %v1355, 0.0
    %v4626 = vsel %vm978, %v1354, 0.0
    %v4627 = vsel %vm979, %v1353, 0.0
    %v4628 = vsel %vm980, %v1352, 0.0
    %v4629 = vsel %vm981, %v1351, 0.0
    %v4630 = vsel %vm982, %v1350, 0.0
    %v4631 = vsel %vm983, %v1349, 0.0
    %v4632 = vsel %vm984, %v1348, 0.0
    %v4633 = vsel %vm985, %v1347, 0.0
    %v4634 = vsel %vm986, %v1346, 0.0
    %v4635 = vsel %vm987, %v1345, 0.0
    %v4636 = vsel %vm988, %v1344, 0.0
    %v4637 = vsel %vm989, %v1343, 0.0
    %v4638 = vsel %vm990, %v1342, 0.0
    %v4639 = vsel %vm991, %v1341, 0.0
    %v4640 = vsel %vm992, %v1340, 0.0
    %v4641 = vsel %vm993, %v1339, 0.0
    %v4642 = vsel %vm994, %v1338, 0.0
    %v4643 = vsel %vm995, %v1337, 0.0
    %v4644 = vsel %vm996, %v1336, 0.0
    %v4645 = vsel %vm997, %v1335, 0.0
    %v4646 = vsel %vm998, %v1334, 0.0
    %v4647 = vsel %vm999, %v1333, 0.0
    %v4648 = vsel %vm1000, %v1332, 0.0
    %v4649 = vsel %vm1001, %v1331, 0.0
    %v4650 = vsel %vm1002, %v1330, 0.0
    %v4651 = vsel %vm1003, %v1329, 0.0
    %v4652 = vsel %vm1004, %v1328, 0.0
    %v4653 = vsel %vm1005, %v1327, 0.0
    %v4654 = vsel %vm1006, %v1326, 0.0
    %v4655 = vsel %vm1007, %v1325, 0.0
    %v4656 = vsel %vm1008, %v1324, 0.0
    %v4657 = vsel %vm1009, %v1323, 0.0
    %v4658 = vsel %vm1010, %v1322, 0.0
    %v4659 = vsel %vm1011, %v1321, 0.0
    %v4660 = vsel %vm1012, %v1320, 0.0
    %v4661 = vsel %vm1013, %v1319, 0.0
    %v4662 = vsel %vm1014, %v1318, 0.0
    %v4663 = vsel %vm1015, %v1317, 0.0
    %v4664 = vsel %vm1016, %v1316, 0.0
    %v4665 = vsel %vm1017, %v1315, 0.0
    %v4666 = vsel %vm1018, %v1314, 0.0
    %v4667 = vsel %vm1019, %v1313, 0.0
    %v4668 = vsel %vm1020, %v1312, 0.0
    %v4669 = vsel %vm1021, %v1311, 0.0
    %v4670 = vsel %vm1022, %v1310, 0.0
    %v4671 = vsel %vm1023, %v1309, 0.0
    %v4672 = vsel %vm1024, %v1308, 0.0
    %v4673 = vsel %vm1025, %v1307, 0.0
    %v4674 = vsel %vm1026, %v1306, 0.0
    %v4675 = vsel %vm1027, %v1305, 0.0
    %v4676 = vsel %vm1028, %v1304, 0.0
    %v4677 = vsel %vm1029, %v1303, 0.0
    %v4678 = vsel %vm1030, %v1302, 0.0
    %v4679 = vsel %vm1031, %v1301, 0.0
    %v4680 = vsel %vm1032, %v1300, 0.0
    %v4681 = vsel %vm1033, %v1299, 0.0
    %v4682 = vsel %vm1034, %v1298, 0.0
    %v4683 = vsel %vm1035, %v1297, 0.0
    %v4684 = vsel %vm1036, %v1296, 0.0
    %v4685 = vsel %vm1037, %v1295, 0.0
    %v4686 = vpack.c.bf16 %v4559, %v4558
    %v4687 = vpack.c.bf16 %v4561, %v4560
    %v4688 = vpack.c.bf16 %v4563, %v4562
    %v4689 = vpack.c.bf16 %v4565, %v4564
    %v4690 = vpack.c.bf16 %v4567, %v4566
    %v4691 = vpack.c.bf16 %v4569, %v4568
    %v4692 = vpack.c.bf16 %v4571, %v4570
    %v4693 = vpack.c.bf16 %v4573, %v4572
    %v4694 = vpack.c.bf16 %v4575, %v4574
    %v4695 = vpack.c.bf16 %v4577, %v4576
    %v4696 = vpack.c.bf16 %v4579, %v4578
    %v4697 = vpack.c.bf16 %v4581, %v4580
    %v4698 = vpack.c.bf16 %v4583, %v4582
    %v4699 = vpack.c.bf16 %v4585, %v4584
    %v4700 = vpack.c.bf16 %v4587, %v4586
    %v4701 = vpack.c.bf16 %v4589, %v4588
    %v4702 = vpack.c.bf16 %v4591, %v4590
    %v4703 = vpack.c.bf16 %v4593, %v4592
    %v4704 = vpack.c.bf16 %v4595, %v4594
    %v4705 = vpack.c.bf16 %v4597, %v4596
    %v4706 = vpack.c.bf16 %v4599, %v4598
    %v4707 = vpack.c.bf16 %v4601, %v4600
    %v4708 = vpack.c.bf16 %v4603, %v4602
    %v4709 = vpack.c.bf16 %v4605, %v4604
    %v4710 = vpack.c.bf16 %v4607, %v4606
    %v4711 = vpack.c.bf16 %v4609, %v4608
    %v4712 = vpack.c.bf16 %v4611, %v4610
    %v4713 = vpack.c.bf16 %v4613, %v4612
    %v4714 = vpack.c.bf16 %v4615, %v4614
    %v4715 = vpack.c.bf16 %v4617, %v4616
    %v4716 = vpack.c.bf16 %v4619, %v4618
    %v4717 = vpack.c.bf16 %v4621, %v4620
    %v4718 = vpack.c.bf16 %v4623, %v4622
    %v4719 = vpack.c.bf16 %v4625, %v4624
    %v4720 = vpack.c.bf16 %v4627, %v4626
    %v4721 = vpack.c.bf16 %v4629, %v4628
    %v4722 = vpack.c.bf16 %v4631, %v4630
    %v4723 = vpack.c.bf16 %v4633, %v4632
    %v4724 = vpack.c.bf16 %v4635, %v4634
    %v4725 = vpack.c.bf16 %v4637, %v4636
    %v4726 = vpack.c.bf16 %v4639, %v4638
    %v4727 = vpack.c.bf16 %v4641, %v4640
    %v4728 = vpack.c.bf16 %v4643, %v4642
    %v4729 = vpack.c.bf16 %v4645, %v4644
    %v4730 = vpack.c.bf16 %v4647, %v4646
    %v4731 = vpack.c.bf16 %v4649, %v4648
    %v4732 = vpack.c.bf16 %v4651, %v4650
    %v4733 = vpack.c.bf16 %v4653, %v4652
    %v4734 = vpack.c.bf16 %v4655, %v4654
    %v4735 = vpack.c.bf16 %v4657, %v4656
    %v4736 = vpack.c.bf16 %v4659, %v4658
    %v4737 = vpack.c.bf16 %v4661, %v4660
    %v4738 = vpack.c.bf16 %v4663, %v4662
    %v4739 = vpack.c.bf16 %v4665, %v4664
    %v4740 = vpack.c.bf16 %v4667, %v4666
    %v4741 = vpack.c.bf16 %v4669, %v4668
    %v4742 = vpack.c.bf16 %v4671, %v4670
    %v4743 = vpack.c.bf16 %v4673, %v4672
    %v4744 = vpack.c.bf16 %v4675, %v4674
    %v4745 = vpack.c.bf16 %v4677, %v4676
    %v4746 = vpack.c.bf16 %v4679, %v4678
    %v4747 = vpack.c.bf16 %v4681, %v4680
    %v4748 = vpack.c.bf16 %v4683, %v4682
    %v4749 = vpack.c.bf16 %v4685, %v4684
    %s4750 = scalar_lea.vmem %s1, 96
    %v4751 = vld [vmem:[%s4750] sm:$0xf]
    %v4752 = vld [vmem:[%s4750 + $0x4] sm:$0xf]
    %v4753 = vld [vmem:[%s4750 + $0x8] sm:$0xf]
    %v4754 = vld [vmem:[%s4750 + $0xc] sm:$0xf]
    %v4755 = vld [vmem:[%s4750 + $0x10] sm:$0xf]
    %v4756 = vld [vmem:[%s4750 + $0x14] sm:$0xf]
    %v4757 = vld [vmem:[%s4750 + $0x18] sm:$0xf]
    %v4758 = vld [vmem:[%s4750 + $0x1c] sm:$0xf]
    %v4767 = vunpack.c.l.b16 %v4751
    %v4768 = vunpack.c.l.b16 %v4752
    %v4769 = vunpack.c.l.b16 %v4753
    %v4770 = vunpack.c.l.b16 %v4754
    %v4771 = vunpack.c.l.b16 %v4755
    %v4772 = vunpack.c.l.b16 %v4756
    %v4773 = vunpack.c.l.b16 %v4757
    %v4774 = vunpack.c.l.b16 %v4758
    %v4775 = vpack.c.b16 %v4768, %v4767
    %v4776 = vpack.c.b16 %v4770, %v4769
    %v4777 = vpack.c.b16 %v4772, %v4771
    %v4778 = vpack.c.b16 %v4774, %v4773
    %v4784 = vsel %vm1775, %v4686, 0
    %v4787 = vsel %vm1775, %v4687, 0
    %v4790 = vsel %vm1775, %v4688, 0
    %v4793 = vsel %vm1775, %v4689, 0
    %v4796 = vsel %vm1775, %v4690, 0
    %v4799 = vsel %vm1775, %v4691, 0
    %v4802 = vsel %vm1775, %v4692, 0
    %v4805 = vsel %vm1775, %v4693, 0
    %v4808 = vsel %vm1775, %v4694, 0
    %v4811 = vsel %vm1775, %v4695, 0
    %v4814 = vsel %vm1775, %v4696, 0
    %v4817 = vsel %vm1775, %v4697, 0
    %v4820 = vsel %vm1775, %v4698, 0
    %v4823 = vsel %vm1775, %v4699, 0
    %v4826 = vsel %vm1775, %v4700, 0
    %v4829 = vsel %vm1775, %v4701, 0
    %v4832 = vsel %vm1775, %v4702, 0
    %v4835 = vsel %vm1775, %v4703, 0
    %v4838 = vsel %vm1775, %v4704, 0
    %v4841 = vsel %vm1775, %v4705, 0
    %v4844 = vsel %vm1775, %v4706, 0
    %v4847 = vsel %vm1775, %v4707, 0
    %v4850 = vsel %vm1775, %v4708, 0
    %v4853 = vsel %vm1775, %v4709, 0
    %v4856 = vsel %vm1775, %v4710, 0
    %v4859 = vsel %vm1775, %v4711, 0
    %v4862 = vsel %vm1775, %v4712, 0
    %v4865 = vsel %vm1775, %v4713, 0
    %v4868 = vsel %vm1775, %v4714, 0
    %v4871 = vsel %vm1775, %v4715, 0
    %v4874 = vsel %vm1775, %v4716, 0
    %v4877 = vsel %vm1775, %v4717, 0
    %v4880 = vsel %vm1775, %v4718, 0
    %v4883 = vsel %vm1775, %v4719, 0
    %v4886 = vsel %vm1775, %v4720, 0
    %v4889 = vsel %vm1775, %v4721, 0
    %v4892 = vsel %vm1775, %v4722, 0
    %v4895 = vsel %vm1775, %v4723, 0
    %v4898 = vsel %vm1775, %v4724, 0
    %v4901 = vsel %vm1775, %v4725, 0
    %v4904 = vsel %vm1775, %v4726, 0
    %v4907 = vsel %vm1775, %v4727, 0
    %v4910 = vsel %vm1775, %v4728, 0
    %v4913 = vsel %vm1775, %v4729, 0
    %v4916 = vsel %vm1775, %v4730, 0
    %v4919 = vsel %vm1775, %v4731, 0
    %v4922 = vsel %vm1775, %v4732, 0
    %v4925 = vsel %vm1775, %v4733, 0
    %v4928 = vsel %vm1775, %v4734, 0
    %v4931 = vsel %vm1775, %v4735, 0
    %v4934 = vsel %vm1775, %v4736, 0
    %v4937 = vsel %vm1775, %v4737, 0
    %v4940 = vsel %vm1775, %v4738, 0
    %v4943 = vsel %vm1775, %v4739, 0
    %v4946 = vsel %vm1775, %v4740, 0
    %v4949 = vsel %vm1775, %v4741, 0
    %v4952 = vsel %vm1775, %v4742, 0
    %v4955 = vsel %vm1775, %v4743, 0
    %v4958 = vsel %vm1775, %v4744, 0
    %v4961 = vsel %vm1775, %v4745, 0
    %v4964 = vsel %vm1775, %v4746, 0
    %v4967 = vsel %vm1775, %v4747, 0
    %v4970 = vsel %vm1775, %v4748, 0
    %v4973 = vsel %vm1775, %v4749, 0
    %4975 = vmatpush.bf16.msra.mxu0 0
    %4976 = vmatpush.bf16.msra.mxu0 0
    %4977 = vmatpush.bf16.msra.mxu0 0
    %4978 = vmatpush.bf16.msra.mxu0 0
    %4979 = vmatpush.bf16.msra.mxu0 %v4778
    %4980 = vmatpush.bf16.msra.mxu0 %v4777
    %4981 = vmatpush.bf16.msra.mxu0 %v4776
    %4982 = vmatpush.bf16.msra.mxu0 %v4775
    %4983 = vmatmul.bf16.gmra.mxu0 %v4784
    %v4984 = vpop.f32.mrf.mxu0
    %v4985 = vadd.f32 0.0, %v4984
    %v4986 = vpop.f32.mrf.mxu0
    %v4987 = vadd.f32 0.0, %v4986
    %4988 = vmatmul.bf16.gmra.mxu0 %v4787
    %v4989 = vpop.f32.mrf.mxu0
    %v4990 = vadd.f32 0.0, %v4989
    %v4991 = vpop.f32.mrf.mxu0
    %v4992 = vadd.f32 0.0, %v4991
    %4993 = vmatmul.bf16.gmra.mxu0 %v4790
    %v4994 = vpop.f32.mrf.mxu0
    %v4995 = vadd.f32 0.0, %v4994
    %v4996 = vpop.f32.mrf.mxu0
    %v4997 = vadd.f32 0.0, %v4996
    %4998 = vmatmul.bf16.gmra.mxu0 %v4793
    %v4999 = vpop.f32.mrf.mxu0
    %v5000 = vadd.f32 0.0, %v4999
    %v5001 = vpop.f32.mrf.mxu0
    %v5002 = vadd.f32 0.0, %v5001
    %5003 = vmatmul.bf16.gmra.mxu0 %v4796
    %v5004 = vpop.f32.mrf.mxu0
    %v5005 = vadd.f32 0.0, %v5004
    %v5006 = vpop.f32.mrf.mxu0
    %v5007 = vadd.f32 0.0, %v5006
    %5008 = vmatmul.bf16.gmra.mxu0 %v4799
    %v5009 = vpop.f32.mrf.mxu0
    %v5010 = vadd.f32 0.0, %v5009
    %v5011 = vpop.f32.mrf.mxu0
    %v5012 = vadd.f32 0.0, %v5011
    %5013 = vmatmul.bf16.gmra.mxu0 %v4802
    %v5014 = vpop.f32.mrf.mxu0
    %v5015 = vadd.f32 0.0, %v5014
    %v5016 = vpop.f32.mrf.mxu0
    %v5017 = vadd.f32 0.0, %v5016
    %5018 = vmatmul.bf16.gmra.mxu0 %v4805
    %v5019 = vpop.f32.mrf.mxu0
    %v5020 = vadd.f32 0.0, %v5019
    %v5021 = vpop.f32.mrf.mxu0
    %v5022 = vadd.f32 0.0, %v5021
    %5023 = vmatmul.bf16.gmra.mxu0 %v4808
    %v5024 = vpop.f32.mrf.mxu0
    %v5025 = vadd.f32 0.0, %v5024
    %v5026 = vpop.f32.mrf.mxu0
    %v5027 = vadd.f32 0.0, %v5026
    %5028 = vmatmul.bf16.gmra.mxu0 %v4811
    %v5029 = vpop.f32.mrf.mxu0
    %v5030 = vadd.f32 0.0, %v5029
    %v5031 = vpop.f32.mrf.mxu0
    %v5032 = vadd.f32 0.0, %v5031
    %5033 = vmatmul.bf16.gmra.mxu0 %v4814
    %v5034 = vpop.f32.mrf.mxu0
    %v5035 = vadd.f32 0.0, %v5034
    %v5036 = vpop.f32.mrf.mxu0
    %v5037 = vadd.f32 0.0, %v5036
    %5038 = vmatmul.bf16.gmra.mxu0 %v4817
    %v5039 = vpop.f32.mrf.mxu0
    %v5040 = vadd.f32 0.0, %v5039
    %v5041 = vpop.f32.mrf.mxu0
    %v5042 = vadd.f32 0.0, %v5041
    %5043 = vmatmul.bf16.gmra.mxu0 %v4820
    %v5044 = vpop.f32.mrf.mxu0
    %v5045 = vadd.f32 0.0, %v5044
    %v5046 = vpop.f32.mrf.mxu0
    %v5047 = vadd.f32 0.0, %v5046
    %5048 = vmatmul.bf16.gmra.mxu0 %v4823
    %v5049 = vpop.f32.mrf.mxu0
    %v5050 = vadd.f32 0.0, %v5049
    %v5051 = vpop.f32.mrf.mxu0
    %v5052 = vadd.f32 0.0, %v5051
    %5053 = vmatmul.bf16.gmra.mxu0 %v4826
    %v5054 = vpop.f32.mrf.mxu0
    %v5055 = vadd.f32 0.0, %v5054
    %v5056 = vpop.f32.mrf.mxu0
    %v5057 = vadd.f32 0.0, %v5056
    %5058 = vmatmul.bf16.gmra.mxu0 %v4829
    %v5059 = vpop.f32.mrf.mxu0
    %v5060 = vadd.f32 0.0, %v5059
    %v5061 = vpop.f32.mrf.mxu0
    %v5062 = vadd.f32 0.0, %v5061
    %5063 = vmatmul.bf16.gmra.mxu0 %v4832
    %v5064 = vpop.f32.mrf.mxu0
    %v5065 = vadd.f32 0.0, %v5064
    %v5066 = vpop.f32.mrf.mxu0
    %v5067 = vadd.f32 0.0, %v5066
    %5068 = vmatmul.bf16.gmra.mxu0 %v4835
    %v5069 = vpop.f32.mrf.mxu0
    %v5070 = vadd.f32 0.0, %v5069
    %v5071 = vpop.f32.mrf.mxu0
    %v5072 = vadd.f32 0.0, %v5071
    %5073 = vmatmul.bf16.gmra.mxu0 %v4838
    %v5074 = vpop.f32.mrf.mxu0
    %v5075 = vadd.f32 0.0, %v5074
    %v5076 = vpop.f32.mrf.mxu0
    %v5077 = vadd.f32 0.0, %v5076
    %5078 = vmatmul.bf16.gmra.mxu0 %v4841
    %v5079 = vpop.f32.mrf.mxu0
    %v5080 = vadd.f32 0.0, %v5079
    %v5081 = vpop.f32.mrf.mxu0
    %v5082 = vadd.f32 0.0, %v5081
    %5083 = vmatmul.bf16.gmra.mxu0 %v4844
    %v5084 = vpop.f32.mrf.mxu0
    %v5085 = vadd.f32 0.0, %v5084
    %v5086 = vpop.f32.mrf.mxu0
    %v5087 = vadd.f32 0.0, %v5086
    %5088 = vmatmul.bf16.gmra.mxu0 %v4847
    %v5089 = vpop.f32.mrf.mxu0
    %v5090 = vadd.f32 0.0, %v5089
    %v5091 = vpop.f32.mrf.mxu0
    %v5092 = vadd.f32 0.0, %v5091
    %5093 = vmatmul.bf16.gmra.mxu0 %v4850
    %v5094 = vpop.f32.mrf.mxu0
    %v5095 = vadd.f32 0.0, %v5094
    %v5096 = vpop.f32.mrf.mxu0
    %v5097 = vadd.f32 0.0, %v5096
    %5098 = vmatmul.bf16.gmra.mxu0 %v4853
    %v5099 = vpop.f32.mrf.mxu0
    %v5100 = vadd.f32 0.0, %v5099
    %v5101 = vpop.f32.mrf.mxu0
    %v5102 = vadd.f32 0.0, %v5101
    %5103 = vmatmul.bf16.gmra.mxu0 %v4856
    %v5104 = vpop.f32.mrf.mxu0
    %v5105 = vadd.f32 0.0, %v5104
    %v5106 = vpop.f32.mrf.mxu0
    %v5107 = vadd.f32 0.0, %v5106
    %5108 = vmatmul.bf16.gmra.mxu0 %v4859
    %v5109 = vpop.f32.mrf.mxu0
    %v5110 = vadd.f32 0.0, %v5109
    %v5111 = vpop.f32.mrf.mxu0
    %v5112 = vadd.f32 0.0, %v5111
    %5113 = vmatmul.bf16.gmra.mxu0 %v4862
    %v5114 = vpop.f32.mrf.mxu0
    %v5115 = vadd.f32 0.0, %v5114
    %v5116 = vpop.f32.mrf.mxu0
    %v5117 = vadd.f32 0.0, %v5116
    %5118 = vmatmul.bf16.gmra.mxu0 %v4865
    %v5119 = vpop.f32.mrf.mxu0
    %v5120 = vadd.f32 0.0, %v5119
    %v5121 = vpop.f32.mrf.mxu0
    %v5122 = vadd.f32 0.0, %v5121
    %5123 = vmatmul.bf16.gmra.mxu0 %v4868
    %v5124 = vpop.f32.mrf.mxu0
    %v5125 = vadd.f32 0.0, %v5124
    %v5126 = vpop.f32.mrf.mxu0
    %v5127 = vadd.f32 0.0, %v5126
    %5128 = vmatmul.bf16.gmra.mxu0 %v4871
    %v5129 = vpop.f32.mrf.mxu0
    %v5130 = vadd.f32 0.0, %v5129
    %v5131 = vpop.f32.mrf.mxu0
    %v5132 = vadd.f32 0.0, %v5131
    %5133 = vmatmul.bf16.gmra.mxu0 %v4874
    %v5134 = vpop.f32.mrf.mxu0
    %v5135 = vadd.f32 0.0, %v5134
    %v5136 = vpop.f32.mrf.mxu0
    %v5137 = vadd.f32 0.0, %v5136
    %5138 = vmatmul.bf16.gmra.mxu0 %v4877
    %v5139 = vpop.f32.mrf.mxu0
    %v5140 = vadd.f32 0.0, %v5139
    %v5141 = vpop.f32.mrf.mxu0
    %v5142 = vadd.f32 0.0, %v5141
    %5143 = vmatmul.bf16.gmra.mxu0 %v4880
    %v5144 = vpop.f32.mrf.mxu0
    %v5145 = vadd.f32 0.0, %v5144
    %v5146 = vpop.f32.mrf.mxu0
    %v5147 = vadd.f32 0.0, %v5146
    %5148 = vmatmul.bf16.gmra.mxu0 %v4883
    %v5149 = vpop.f32.mrf.mxu0
    %v5150 = vadd.f32 0.0, %v5149
    %v5151 = vpop.f32.mrf.mxu0
    %v5152 = vadd.f32 0.0, %v5151
    %5153 = vmatmul.bf16.gmra.mxu0 %v4886
    %v5154 = vpop.f32.mrf.mxu0
    %v5155 = vadd.f32 0.0, %v5154
    %v5156 = vpop.f32.mrf.mxu0
    %v5157 = vadd.f32 0.0, %v5156
    %5158 = vmatmul.bf16.gmra.mxu0 %v4889
    %v5159 = vpop.f32.mrf.mxu0
    %v5160 = vadd.f32 0.0, %v5159
    %v5161 = vpop.f32.mrf.mxu0
    %v5162 = vadd.f32 0.0, %v5161
    %5163 = vmatmul.bf16.gmra.mxu0 %v4892
    %v5164 = vpop.f32.mrf.mxu0
    %v5165 = vadd.f32 0.0, %v5164
    %v5166 = vpop.f32.mrf.mxu0
    %v5167 = vadd.f32 0.0, %v5166
    %5168 = vmatmul.bf16.gmra.mxu0 %v4895
    %v5169 = vpop.f32.mrf.mxu0
    %v5170 = vadd.f32 0.0, %v5169
    %v5171 = vpop.f32.mrf.mxu0
    %v5172 = vadd.f32 0.0, %v5171
    %5173 = vmatmul.bf16.gmra.mxu0 %v4898
    %v5174 = vpop.f32.mrf.mxu0
    %v5175 = vadd.f32 0.0, %v5174
    %v5176 = vpop.f32.mrf.mxu0
    %v5177 = vadd.f32 0.0, %v5176
    %5178 = vmatmul.bf16.gmra.mxu0 %v4901
    %v5179 = vpop.f32.mrf.mxu0
    %v5180 = vadd.f32 0.0, %v5179
    %v5181 = vpop.f32.mrf.mxu0
    %v5182 = vadd.f32 0.0, %v5181
    %5183 = vmatmul.bf16.gmra.mxu0 %v4904
    %v5184 = vpop.f32.mrf.mxu0
    %v5185 = vadd.f32 0.0, %v5184
    %v5186 = vpop.f32.mrf.mxu0
    %v5187 = vadd.f32 0.0, %v5186
    %5188 = vmatmul.bf16.gmra.mxu0 %v4907
    %v5189 = vpop.f32.mrf.mxu0
    %v5190 = vadd.f32 0.0, %v5189
    %v5191 = vpop.f32.mrf.mxu0
    %v5192 = vadd.f32 0.0, %v5191
    %5193 = vmatmul.bf16.gmra.mxu0 %v4910
    %v5194 = vpop.f32.mrf.mxu0
    %v5195 = vadd.f32 0.0, %v5194
    %v5196 = vpop.f32.mrf.mxu0
    %v5197 = vadd.f32 0.0, %v5196
    %5198 = vmatmul.bf16.gmra.mxu0 %v4913
    %v5199 = vpop.f32.mrf.mxu0
    %v5200 = vadd.f32 0.0, %v5199
    %v5201 = vpop.f32.mrf.mxu0
    %v5202 = vadd.f32 0.0, %v5201
    %5203 = vmatmul.bf16.gmra.mxu0 %v4916
    %v5204 = vpop.f32.mrf.mxu0
    %v5205 = vadd.f32 0.0, %v5204
    %v5206 = vpop.f32.mrf.mxu0
    %v5207 = vadd.f32 0.0, %v5206
    %5208 = vmatmul.bf16.gmra.mxu0 %v4919
    %v5209 = vpop.f32.mrf.mxu0
    %v5210 = vadd.f32 0.0, %v5209
    %v5211 = vpop.f32.mrf.mxu0
    %v5212 = vadd.f32 0.0, %v5211
    %5213 = vmatmul.bf16.gmra.mxu0 %v4922
    %v5214 = vpop.f32.mrf.mxu0
    %v5215 = vadd.f32 0.0, %v5214
    %v5216 = vpop.f32.mrf.mxu0
    %v5217 = vadd.f32 0.0, %v5216
    %5218 = vmatmul.bf16.gmra.mxu0 %v4925
    %v5219 = vpop.f32.mrf.mxu0
    %v5220 = vadd.f32 0.0, %v5219
    %v5221 = vpop.f32.mrf.mxu0
    %v5222 = vadd.f32 0.0, %v5221
    %5223 = vmatmul.bf16.gmra.mxu0 %v4928
    %v5224 = vpop.f32.mrf.mxu0
    %v5225 = vadd.f32 0.0, %v5224
    %v5226 = vpop.f32.mrf.mxu0
    %v5227 = vadd.f32 0.0, %v5226
    %5228 = vmatmul.bf16.gmra.mxu0 %v4931
    %v5229 = vpop.f32.mrf.mxu0
    %v5230 = vadd.f32 0.0, %v5229
    %v5231 = vpop.f32.mrf.mxu0
    %v5232 = vadd.f32 0.0, %v5231
    %5233 = vmatmul.bf16.gmra.mxu0 %v4934
    %v5234 = vpop.f32.mrf.mxu0
    %v5235 = vadd.f32 0.0, %v5234
    %v5236 = vpop.f32.mrf.mxu0
    %v5237 = vadd.f32 0.0, %v5236
    %5238 = vmatmul.bf16.gmra.mxu0 %v4937
    %v5239 = vpop.f32.mrf.mxu0
    %v5240 = vadd.f32 0.0, %v5239
    %v5241 = vpop.f32.mrf.mxu0
    %v5242 = vadd.f32 0.0, %v5241
    %5243 = vmatmul.bf16.gmra.mxu0 %v4940
    %v5244 = vpop.f32.mrf.mxu0
    %v5245 = vadd.f32 0.0, %v5244
    %v5246 = vpop.f32.mrf.mxu0
    %v5247 = vadd.f32 0.0, %v5246
    %5248 = vmatmul.bf16.gmra.mxu0 %v4943
    %v5249 = vpop.f32.mrf.mxu0
    %v5250 = vadd.f32 0.0, %v5249
    %v5251 = vpop.f32.mrf.mxu0
    %v5252 = vadd.f32 0.0, %v5251
    %5253 = vmatmul.bf16.gmra.mxu0 %v4946
    %v5254 = vpop.f32.mrf.mxu0
    %v5255 = vadd.f32 0.0, %v5254
    %v5256 = vpop.f32.mrf.mxu0
    %v5257 = vadd.f32 0.0, %v5256
    %5258 = vmatmul.bf16.gmra.mxu0 %v4949
    %v5259 = vpop.f32.mrf.mxu0
    %v5260 = vadd.f32 0.0, %v5259
    %v5261 = vpop.f32.mrf.mxu0
    %v5262 = vadd.f32 0.0, %v5261
    %5263 = vmatmul.bf16.gmra.mxu0 %v4952
    %v5264 = vpop.f32.mrf.mxu0
    %v5265 = vadd.f32 0.0, %v5264
    %v5266 = vpop.f32.mrf.mxu0
    %v5267 = vadd.f32 0.0, %v5266
    %5268 = vmatmul.bf16.gmra.mxu0 %v4955
    %v5269 = vpop.f32.mrf.mxu0
    %v5270 = vadd.f32 0.0, %v5269
    %v5271 = vpop.f32.mrf.mxu0
    %v5272 = vadd.f32 0.0, %v5271
    %5273 = vmatmul.bf16.gmra.mxu0 %v4958
    %v5274 = vpop.f32.mrf.mxu0
    %v5275 = vadd.f32 0.0, %v5274
    %v5276 = vpop.f32.mrf.mxu0
    %v5277 = vadd.f32 0.0, %v5276
    %5278 = vmatmul.bf16.gmra.mxu0 %v4961
    %v5279 = vpop.f32.mrf.mxu0
    %v5280 = vadd.f32 0.0, %v5279
    %v5281 = vpop.f32.mrf.mxu0
    %v5282 = vadd.f32 0.0, %v5281
    %5283 = vmatmul.bf16.gmra.mxu0 %v4964
    %v5284 = vpop.f32.mrf.mxu0
    %v5285 = vadd.f32 0.0, %v5284
    %v5286 = vpop.f32.mrf.mxu0
    %v5287 = vadd.f32 0.0, %v5286
    %5288 = vmatmul.bf16.gmra.mxu0 %v4967
    %v5289 = vpop.f32.mrf.mxu0
    %v5290 = vadd.f32 0.0, %v5289
    %v5291 = vpop.f32.mrf.mxu0
    %v5292 = vadd.f32 0.0, %v5291
    %5293 = vmatmul.bf16.gmra.mxu0 %v4970
    %v5294 = vpop.f32.mrf.mxu0
    %v5295 = vadd.f32 0.0, %v5294
    %v5296 = vpop.f32.mrf.mxu0
    %v5297 = vadd.f32 0.0, %v5296
    %5298 = vmatmul.bf16.gmra.mxu0 %v4973
    %v5299 = vpop.f32.mrf.mxu0
    %v5300 = vadd.f32 0.0, %v5299
    %v5301 = vpop.f32.mrf.mxu0
    %v5302 = vadd.f32 0.0, %v5301
    %5303 = vdwg.mxu0
    %v5304 = vadd.f32 %v4430, %v4985
    %v5305 = vadd.f32 %v4431, %v4987
    %v5306 = vadd.f32 %v4432, %v4990
    %v5307 = vadd.f32 %v4433, %v4992
    %v5308 = vadd.f32 %v4434, %v4995
    %v5309 = vadd.f32 %v4435, %v4997
    %v5310 = vadd.f32 %v4436, %v5000
    %v5311 = vadd.f32 %v4437, %v5002
    %v5312 = vadd.f32 %v4438, %v5005
    %v5313 = vadd.f32 %v4439, %v5007
    %v5314 = vadd.f32 %v4440, %v5010
    %v5315 = vadd.f32 %v4441, %v5012
    %v5316 = vadd.f32 %v4442, %v5015
    %v5317 = vadd.f32 %v4443, %v5017
    %v5318 = vadd.f32 %v4444, %v5020
    %v5319 = vadd.f32 %v4445, %v5022
    %v5320 = vadd.f32 %v4446, %v5025
    %v5321 = vadd.f32 %v4447, %v5027
    %v5322 = vadd.f32 %v4448, %v5030
    %v5323 = vadd.f32 %v4449, %v5032
    %v5324 = vadd.f32 %v4450, %v5035
    %v5325 = vadd.f32 %v4451, %v5037
    %v5326 = vadd.f32 %v4452, %v5040
    %v5327 = vadd.f32 %v4453, %v5042
    %v5328 = vadd.f32 %v4454, %v5045
    %v5329 = vadd.f32 %v4455, %v5047
    %v5330 = vadd.f32 %v4456, %v5050
    %v5331 = vadd.f32 %v4457, %v5052
    %v5332 = vadd.f32 %v4458, %v5055
    %v5333 = vadd.f32 %v4459, %v5057
    %v5334 = vadd.f32 %v4460, %v5060
    %v5335 = vadd.f32 %v4461, %v5062
    %v5336 = vadd.f32 %v4462, %v5065
    %v5337 = vadd.f32 %v4463, %v5067
    %v5338 = vadd.f32 %v4464, %v5070
    %v5339 = vadd.f32 %v4465, %v5072
    %v5340 = vadd.f32 %v4466, %v5075
    %v5341 = vadd.f32 %v4467, %v5077
    %v5342 = vadd.f32 %v4468, %v5080
    %v5343 = vadd.f32 %v4469, %v5082
    %v5344 = vadd.f32 %v4470, %v5085
    %v5345 = vadd.f32 %v4471, %v5087
    %v5346 = vadd.f32 %v4472, %v5090
    %v5347 = vadd.f32 %v4473, %v5092
    %v5348 = vadd.f32 %v4474, %v5095
    %v5349 = vadd.f32 %v4475, %v5097
    %v5350 = vadd.f32 %v4476, %v5100
    %v5351 = vadd.f32 %v4477, %v5102
    %v5352 = vadd.f32 %v4478, %v5105
    %v5353 = vadd.f32 %v4479, %v5107
    %v5354 = vadd.f32 %v4480, %v5110
    %v5355 = vadd.f32 %v4481, %v5112
    %v5356 = vadd.f32 %v4482, %v5115
    %v5357 = vadd.f32 %v4483, %v5117
    %v5358 = vadd.f32 %v4484, %v5120
    %v5359 = vadd.f32 %v4485, %v5122
    %v5360 = vadd.f32 %v4486, %v5125
    %v5361 = vadd.f32 %v4487, %v5127
    %v5362 = vadd.f32 %v4488, %v5130
    %v5363 = vadd.f32 %v4489, %v5132
    %v5364 = vadd.f32 %v4490, %v5135
    %v5365 = vadd.f32 %v4491, %v5137
    %v5366 = vadd.f32 %v4492, %v5140
    %v5367 = vadd.f32 %v4493, %v5142
    %v5368 = vadd.f32 %v4494, %v5145
    %v5369 = vadd.f32 %v4495, %v5147
    %v5370 = vadd.f32 %v4496, %v5150
    %v5371 = vadd.f32 %v4497, %v5152
    %v5372 = vadd.f32 %v4498, %v5155
    %v5373 = vadd.f32 %v4499, %v5157
    %v5374 = vadd.f32 %v4500, %v5160
    %v5375 = vadd.f32 %v4501, %v5162
    %v5376 = vadd.f32 %v4502, %v5165
    %v5377 = vadd.f32 %v4503, %v5167
    %v5378 = vadd.f32 %v4504, %v5170
    %v5379 = vadd.f32 %v4505, %v5172
    %v5380 = vadd.f32 %v4506, %v5175
    %v5381 = vadd.f32 %v4507, %v5177
    %v5382 = vadd.f32 %v4508, %v5180
    %v5383 = vadd.f32 %v4509, %v5182
    %v5384 = vadd.f32 %v4510, %v5185
    %v5385 = vadd.f32 %v4511, %v5187
    %v5386 = vadd.f32 %v4512, %v5190
    %v5387 = vadd.f32 %v4513, %v5192
    %v5388 = vadd.f32 %v4514, %v5195
    %v5389 = vadd.f32 %v4515, %v5197
    %v5390 = vadd.f32 %v4516, %v5200
    %v5391 = vadd.f32 %v4517, %v5202
    %v5392 = vadd.f32 %v4518, %v5205
    %v5393 = vadd.f32 %v4519, %v5207
    %v5394 = vadd.f32 %v4520, %v5210
    %v5395 = vadd.f32 %v4521, %v5212
    %v5396 = vadd.f32 %v4522, %v5215
    %v5397 = vadd.f32 %v4523, %v5217
    %v5398 = vadd.f32 %v4524, %v5220
    %v5399 = vadd.f32 %v4525, %v5222
    %v5400 = vadd.f32 %v4526, %v5225
    %v5401 = vadd.f32 %v4527, %v5227
    %v5402 = vadd.f32 %v4528, %v5230
    %v5403 = vadd.f32 %v4529, %v5232
    %v5404 = vadd.f32 %v4530, %v5235
    %v5405 = vadd.f32 %v4531, %v5237
    %v5406 = vadd.f32 %v4532, %v5240
    %v5407 = vadd.f32 %v4533, %v5242
    %v5408 = vadd.f32 %v4534, %v5245
    %v5409 = vadd.f32 %v4535, %v5247
    %v5410 = vadd.f32 %v4536, %v5250
    %v5411 = vadd.f32 %v4537, %v5252
    %v5412 = vadd.f32 %v4538, %v5255
    %v5413 = vadd.f32 %v4539, %v5257
    %v5414 = vadd.f32 %v4540, %v5260
    %v5415 = vadd.f32 %v4541, %v5262
    %v5416 = vadd.f32 %v4542, %v5265
    %v5417 = vadd.f32 %v4543, %v5267
    %v5418 = vadd.f32 %v4544, %v5270
    %v5419 = vadd.f32 %v4545, %v5272
    %v5420 = vadd.f32 %v4546, %v5275
    %v5421 = vadd.f32 %v4547, %v5277
    %v5422 = vadd.f32 %v4548, %v5280
    %v5423 = vadd.f32 %v4549, %v5282
    %v5424 = vadd.f32 %v4550, %v5285
    %v5425 = vadd.f32 %v4551, %v5287
    %v5426 = vadd.f32 %v4552, %v5290
    %v5427 = vadd.f32 %v4553, %v5292
    %v5428 = vadd.f32 %v4554, %v5295
    %v5429 = vadd.f32 %v4555, %v5297
    %v5430 = vadd.f32 %v4556, %v5300
    %v5431 = vadd.f32 %v4557, %v5302
    %v5432 = vpack.c.bf16 %v14, %v13
    %v5433 = vpack.c.bf16 %v16, %v15
    %v5434 = vpack.c.bf16 %v18, %v17
    %v5435 = vpack.c.bf16 %v20, %v19
    %v5436 = vpack.c.bf16 %v22, %v21
    %v5437 = vpack.c.bf16 %v24, %v23
    %v5438 = vpack.c.bf16 %v26, %v25
    %v5439 = vpack.c.bf16 %v28, %v27
    %v5440 = vpack.c.bf16 %v30, %v29
    %v5441 = vpack.c.bf16 %v32, %v31
    %v5442 = vpack.c.bf16 %v34, %v33
    %v5443 = vpack.c.bf16 %v36, %v35
    %v5444 = vpack.c.bf16 %v38, %v37
    %v5445 = vpack.c.bf16 %v40, %v39
    %v5446 = vpack.c.bf16 %v42, %v41
    %v5447 = vpack.c.bf16 %v44, %v43
    %v5448 = vpack.c.bf16 %v46, %v45
    %v5449 = vpack.c.bf16 %v48, %v47
    %v5450 = vpack.c.bf16 %v50, %v49
    %v5451 = vpack.c.bf16 %v52, %v51
    %v5452 = vpack.c.bf16 %v54, %v53
    %v5453 = vpack.c.bf16 %v56, %v55
    %v5454 = vpack.c.bf16 %v58, %v57
    %v5455 = vpack.c.bf16 %v60, %v59
    %v5456 = vpack.c.bf16 %v62, %v61
    %v5457 = vpack.c.bf16 %v64, %v63
    %v5458 = vpack.c.bf16 %v66, %v65
    %v5459 = vpack.c.bf16 %v68, %v67
    %v5460 = vpack.c.bf16 %v70, %v69
    %v5461 = vpack.c.bf16 %v72, %v71
    %v5462 = vpack.c.bf16 %v74, %v73
    %v5463 = vpack.c.bf16 %v76, %v75
    %v5464 = vpack.c.bf16 %v78, %v77
    %v5465 = vpack.c.bf16 %v80, %v79
    %v5466 = vpack.c.bf16 %v82, %v81
    %v5467 = vpack.c.bf16 %v84, %v83
    %v5468 = vpack.c.bf16 %v86, %v85
    %v5469 = vpack.c.bf16 %v88, %v87
    %v5470 = vpack.c.bf16 %v90, %v89
    %v5471 = vpack.c.bf16 %v92, %v91
    %v5472 = vpack.c.bf16 %v94, %v93
    %v5473 = vpack.c.bf16 %v96, %v95
    %v5474 = vpack.c.bf16 %v98, %v97
    %v5475 = vpack.c.bf16 %v100, %v99
    %v5476 = vpack.c.bf16 %v102, %v101
    %v5477 = vpack.c.bf16 %v104, %v103
    %v5478 = vpack.c.bf16 %v106, %v105
    %v5479 = vpack.c.bf16 %v108, %v107
    %v5480 = vpack.c.bf16 %v110, %v109
    %v5481 = vpack.c.bf16 %v112, %v111
    %v5482 = vpack.c.bf16 %v114, %v113
    %v5483 = vpack.c.bf16 %v116, %v115
    %v5484 = vpack.c.bf16 %v118, %v117
    %v5485 = vpack.c.bf16 %v120, %v119
    %v5486 = vpack.c.bf16 %v122, %v121
    %v5487 = vpack.c.bf16 %v124, %v123
    %v5488 = vpack.c.bf16 %v126, %v125
    %v5489 = vpack.c.bf16 %v128, %v127
    %v5490 = vpack.c.bf16 %v130, %v129
    %v5491 = vpack.c.bf16 %v132, %v131
    %v5492 = vpack.c.bf16 %v134, %v133
    %v5493 = vpack.c.bf16 %v136, %v135
    %v5494 = vpack.c.bf16 %v138, %v137
    %v5495 = vpack.c.bf16 %v140, %v139
    %s5496 = scalar_lea.vmem %s1, 128
    %v5497 = vld [vmem:[%s5496] sm:$0xf]
    %v5498 = vld [vmem:[%s5496 + $0x4] sm:$0xf]
    %v5499 = vld [vmem:[%s5496 + $0x8] sm:$0xf]
    %v5500 = vld [vmem:[%s5496 + $0xc] sm:$0xf]
    %v5501 = vld [vmem:[%s5496 + $0x10] sm:$0xf]
    %v5502 = vld [vmem:[%s5496 + $0x14] sm:$0xf]
    %v5503 = vld [vmem:[%s5496 + $0x18] sm:$0xf]
    %v5504 = vld [vmem:[%s5496 + $0x1c] sm:$0xf]
    %v5513 = vunpack.c.l.b16 %v5497
    %v5514 = vunpack.c.l.b16 %v5498
    %v5515 = vunpack.c.l.b16 %v5499
    %v5516 = vunpack.c.l.b16 %v5500
    %v5517 = vunpack.c.l.b16 %v5501
    %v5518 = vunpack.c.l.b16 %v5502
    %v5519 = vunpack.c.l.b16 %v5503
    %v5520 = vunpack.c.l.b16 %v5504
    %v5521 = vpack.c.b16 %v5514, %v5513
    %v5522 = vpack.c.b16 %v5516, %v5515
    %v5523 = vpack.c.b16 %v5518, %v5517
    %v5524 = vpack.c.b16 %v5520, %v5519
    %v5530 = vsel %vm1775, %v5432, 0
    %v5533 = vsel %vm1775, %v5433, 0
    %v5536 = vsel %vm1775, %v5434, 0
    %v5539 = vsel %vm1775, %v5435, 0
    %v5542 = vsel %vm1775, %v5436, 0
    %v5545 = vsel %vm1775, %v5437, 0
    %v5548 = vsel %vm1775, %v5438, 0
    %v5551 = vsel %vm1775, %v5439, 0
    %v5554 = vsel %vm1775, %v5440, 0
    %v5557 = vsel %vm1775, %v5441, 0
    %v5560 = vsel %vm1775, %v5442, 0
    %v5563 = vsel %vm1775, %v5443, 0
    %v5566 = vsel %vm1775, %v5444, 0
    %v5569 = vsel %vm1775, %v5445, 0
    %v5572 = vsel %vm1775, %v5446, 0
    %v5575 = vsel %vm1775, %v5447, 0
    %v5578 = vsel %vm1775, %v5448, 0
    %v5581 = vsel %vm1775, %v5449, 0
    %v5584 = vsel %vm1775, %v5450, 0
    %v5587 = vsel %vm1775, %v5451, 0
    %v5590 = vsel %vm1775, %v5452, 0
    %v5593 = vsel %vm1775, %v5453, 0
    %v5596 = vsel %vm1775, %v5454, 0
    %v5599 = vsel %vm1775, %v5455, 0
    %v5602 = vsel %vm1775, %v5456, 0
    %v5605 = vsel %vm1775, %v5457, 0
    %v5608 = vsel %vm1775, %v5458, 0
    %v5611 = vsel %vm1775, %v5459, 0
    %v5614 = vsel %vm1775, %v5460, 0
    %v5617 = vsel %vm1775, %v5461, 0
    %v5620 = vsel %vm1775, %v5462, 0
    %v5623 = vsel %vm1775, %v5463, 0
    %v5626 = vsel %vm1775, %v5464, 0
    %v5629 = vsel %vm1775, %v5465, 0
    %v5632 = vsel %vm1775, %v5466, 0
    %v5635 = vsel %vm1775, %v5467, 0
    %v5638 = vsel %vm1775, %v5468, 0
    %v5641 = vsel %vm1775, %v5469, 0
    %v5644 = vsel %vm1775, %v5470, 0
    %v5647 = vsel %vm1775, %v5471, 0
    %v5650 = vsel %vm1775, %v5472, 0
    %v5653 = vsel %vm1775, %v5473, 0
    %v5656 = vsel %vm1775, %v5474, 0
    %v5659 = vsel %vm1775, %v5475, 0
    %v5662 = vsel %vm1775, %v5476, 0
    %v5665 = vsel %vm1775, %v5477, 0
    %v5668 = vsel %vm1775, %v5478, 0
    %v5671 = vsel %vm1775, %v5479, 0
    %v5674 = vsel %vm1775, %v5480, 0
    %v5677 = vsel %vm1775, %v5481, 0
    %v5680 = vsel %vm1775, %v5482, 0
    %v5683 = vsel %vm1775, %v5483, 0
    %v5686 = vsel %vm1775, %v5484, 0
    %v5689 = vsel %vm1775, %v5485, 0
    %v5692 = vsel %vm1775, %v5486, 0
    %v5695 = vsel %vm1775, %v5487, 0
    %v5698 = vsel %vm1775, %v5488, 0
    %v5701 = vsel %vm1775, %v5489, 0
    %v5704 = vsel %vm1775, %v5490, 0
    %v5707 = vsel %vm1775, %v5491, 0
    %v5710 = vsel %vm1775, %v5492, 0
    %v5713 = vsel %vm1775, %v5493, 0
    %v5716 = vsel %vm1775, %v5494, 0
    %v5719 = vsel %vm1775, %v5495, 0
    %5721 = vmatpush.bf16.msra.mxu0 0
    %5722 = vmatpush.bf16.msra.mxu0 0
    %5723 = vmatpush.bf16.msra.mxu0 0
    %5724 = vmatpush.bf16.msra.mxu0 0
    %5725 = vmatpush.bf16.msra.mxu0 %v5524
    %5726 = vmatpush.bf16.msra.mxu0 %v5523
    %5727 = vmatpush.bf16.msra.mxu0 %v5522
    %5728 = vmatpush.bf16.msra.mxu0 %v5521
    %5729 = vmatmul.bf16.gmra.mxu0 %v5530
    %v5730 = vpop.f32.mrf.mxu0
    %v5731 = vadd.f32 0.0, %v5730
    %v5732 = vpop.f32.mrf.mxu0
    %v5733 = vadd.f32 0.0, %v5732
    %5734 = vmatmul.bf16.gmra.mxu0 %v5533
    %v5735 = vpop.f32.mrf.mxu0
    %v5736 = vadd.f32 0.0, %v5735
    %v5737 = vpop.f32.mrf.mxu0
    %v5738 = vadd.f32 0.0, %v5737
    %5739 = vmatmul.bf16.gmra.mxu0 %v5536
    %v5740 = vpop.f32.mrf.mxu0
    %v5741 = vadd.f32 0.0, %v5740
    %v5742 = vpop.f32.mrf.mxu0
    %v5743 = vadd.f32 0.0, %v5742
    %5744 = vmatmul.bf16.gmra.mxu0 %v5539
    %v5745 = vpop.f32.mrf.mxu0
    %v5746 = vadd.f32 0.0, %v5745
    %v5747 = vpop.f32.mrf.mxu0
    %v5748 = vadd.f32 0.0, %v5747
    %5749 = vmatmul.bf16.gmra.mxu0 %v5542
    %v5750 = vpop.f32.mrf.mxu0
    %v5751 = vadd.f32 0.0, %v5750
    %v5752 = vpop.f32.mrf.mxu0
    %v5753 = vadd.f32 0.0, %v5752
    %5754 = vmatmul.bf16.gmra.mxu0 %v5545
    %v5755 = vpop.f32.mrf.mxu0
    %v5756 = vadd.f32 0.0, %v5755
    %v5757 = vpop.f32.mrf.mxu0
    %v5758 = vadd.f32 0.0, %v5757
    %5759 = vmatmul.bf16.gmra.mxu0 %v5548
    %v5760 = vpop.f32.mrf.mxu0
    %v5761 = vadd.f32 0.0, %v5760
    %v5762 = vpop.f32.mrf.mxu0
    %v5763 = vadd.f32 0.0, %v5762
    %5764 = vmatmul.bf16.gmra.mxu0 %v5551
    %v5765 = vpop.f32.mrf.mxu0
    %v5766 = vadd.f32 0.0, %v5765
    %v5767 = vpop.f32.mrf.mxu0
    %v5768 = vadd.f32 0.0, %v5767
    %5769 = vmatmul.bf16.gmra.mxu0 %v5554
    %v5770 = vpop.f32.mrf.mxu0
    %v5771 = vadd.f32 0.0, %v5770
    %v5772 = vpop.f32.mrf.mxu0
    %v5773 = vadd.f32 0.0, %v5772
    %5774 = vmatmul.bf16.gmra.mxu0 %v5557
    %v5775 = vpop.f32.mrf.mxu0
    %v5776 = vadd.f32 0.0, %v5775
    %v5777 = vpop.f32.mrf.mxu0
    %v5778 = vadd.f32 0.0, %v5777
    %5779 = vmatmul.bf16.gmra.mxu0 %v5560
    %v5780 = vpop.f32.mrf.mxu0
    %v5781 = vadd.f32 0.0, %v5780
    %v5782 = vpop.f32.mrf.mxu0
    %v5783 = vadd.f32 0.0, %v5782
    %5784 = vmatmul.bf16.gmra.mxu0 %v5563
    %v5785 = vpop.f32.mrf.mxu0
    %v5786 = vadd.f32 0.0, %v5785
    %v5787 = vpop.f32.mrf.mxu0
    %v5788 = vadd.f32 0.0, %v5787
    %5789 = vmatmul.bf16.gmra.mxu0 %v5566
    %v5790 = vpop.f32.mrf.mxu0
    %v5791 = vadd.f32 0.0, %v5790
    %v5792 = vpop.f32.mrf.mxu0
    %v5793 = vadd.f32 0.0, %v5792
    %5794 = vmatmul.bf16.gmra.mxu0 %v5569
    %v5795 = vpop.f32.mrf.mxu0
    %v5796 = vadd.f32 0.0, %v5795
    %v5797 = vpop.f32.mrf.mxu0
    %v5798 = vadd.f32 0.0, %v5797
    %5799 = vmatmul.bf16.gmra.mxu0 %v5572
    %v5800 = vpop.f32.mrf.mxu0
    %v5801 = vadd.f32 0.0, %v5800
    %v5802 = vpop.f32.mrf.mxu0
    %v5803 = vadd.f32 0.0, %v5802
    %5804 = vmatmul.bf16.gmra.mxu0 %v5575
    %v5805 = vpop.f32.mrf.mxu0
    %v5806 = vadd.f32 0.0, %v5805
    %v5807 = vpop.f32.mrf.mxu0
    %v5808 = vadd.f32 0.0, %v5807
    %5809 = vmatmul.bf16.gmra.mxu0 %v5578
    %v5810 = vpop.f32.mrf.mxu0
    %v5811 = vadd.f32 0.0, %v5810
    %v5812 = vpop.f32.mrf.mxu0
    %v5813 = vadd.f32 0.0, %v5812
    %5814 = vmatmul.bf16.gmra.mxu0 %v5581
    %v5815 = vpop.f32.mrf.mxu0
    %v5816 = vadd.f32 0.0, %v5815
    %v5817 = vpop.f32.mrf.mxu0
    %v5818 = vadd.f32 0.0, %v5817
    %5819 = vmatmul.bf16.gmra.mxu0 %v5584
    %v5820 = vpop.f32.mrf.mxu0
    %v5821 = vadd.f32 0.0, %v5820
    %v5822 = vpop.f32.mrf.mxu0
    %v5823 = vadd.f32 0.0, %v5822
    %5824 = vmatmul.bf16.gmra.mxu0 %v5587
    %v5825 = vpop.f32.mrf.mxu0
    %v5826 = vadd.f32 0.0, %v5825
    %v5827 = vpop.f32.mrf.mxu0
    %v5828 = vadd.f32 0.0, %v5827
    %5829 = vmatmul.bf16.gmra.mxu0 %v5590
    %v5830 = vpop.f32.mrf.mxu0
    %v5831 = vadd.f32 0.0, %v5830
    %v5832 = vpop.f32.mrf.mxu0
    %v5833 = vadd.f32 0.0, %v5832
    %5834 = vmatmul.bf16.gmra.mxu0 %v5593
    %v5835 = vpop.f32.mrf.mxu0
    %v5836 = vadd.f32 0.0, %v5835
    %v5837 = vpop.f32.mrf.mxu0
    %v5838 = vadd.f32 0.0, %v5837
    %5839 = vmatmul.bf16.gmra.mxu0 %v5596
    %v5840 = vpop.f32.mrf.mxu0
    %v5841 = vadd.f32 0.0, %v5840
    %v5842 = vpop.f32.mrf.mxu0
    %v5843 = vadd.f32 0.0, %v5842
    %5844 = vmatmul.bf16.gmra.mxu0 %v5599
    %v5845 = vpop.f32.mrf.mxu0
    %v5846 = vadd.f32 0.0, %v5845
    %v5847 = vpop.f32.mrf.mxu0
    %v5848 = vadd.f32 0.0, %v5847
    %5849 = vmatmul.bf16.gmra.mxu0 %v5602
    %v5850 = vpop.f32.mrf.mxu0
    %v5851 = vadd.f32 0.0, %v5850
    %v5852 = vpop.f32.mrf.mxu0
    %v5853 = vadd.f32 0.0, %v5852
    %5854 = vmatmul.bf16.gmra.mxu0 %v5605
    %v5855 = vpop.f32.mrf.mxu0
    %v5856 = vadd.f32 0.0, %v5855
    %v5857 = vpop.f32.mrf.mxu0
    %v5858 = vadd.f32 0.0, %v5857
    %5859 = vmatmul.bf16.gmra.mxu0 %v5608
    %v5860 = vpop.f32.mrf.mxu0
    %v5861 = vadd.f32 0.0, %v5860
    %v5862 = vpop.f32.mrf.mxu0
    %v5863 = vadd.f32 0.0, %v5862
    %5864 = vmatmul.bf16.gmra.mxu0 %v5611
    %v5865 = vpop.f32.mrf.mxu0
    %v5866 = vadd.f32 0.0, %v5865
    %v5867 = vpop.f32.mrf.mxu0
    %v5868 = vadd.f32 0.0, %v5867
    %5869 = vmatmul.bf16.gmra.mxu0 %v5614
    %v5870 = vpop.f32.mrf.mxu0
    %v5871 = vadd.f32 0.0, %v5870
    %v5872 = vpop.f32.mrf.mxu0
    %v5873 = vadd.f32 0.0, %v5872
    %5874 = vmatmul.bf16.gmra.mxu0 %v5617
    %v5875 = vpop.f32.mrf.mxu0
    %v5876 = vadd.f32 0.0, %v5875
    %v5877 = vpop.f32.mrf.mxu0
    %v5878 = vadd.f32 0.0, %v5877
    %5879 = vmatmul.bf16.gmra.mxu0 %v5620
    %v5880 = vpop.f32.mrf.mxu0
    %v5881 = vadd.f32 0.0, %v5880
    %v5882 = vpop.f32.mrf.mxu0
    %v5883 = vadd.f32 0.0, %v5882
    %5884 = vmatmul.bf16.gmra.mxu0 %v5623
    %v5885 = vpop.f32.mrf.mxu0
    %v5886 = vadd.f32 0.0, %v5885
    %v5887 = vpop.f32.mrf.mxu0
    %v5888 = vadd.f32 0.0, %v5887
    %5889 = vmatmul.bf16.gmra.mxu0 %v5626
    %v5890 = vpop.f32.mrf.mxu0
    %v5891 = vadd.f32 0.0, %v5890
    %v5892 = vpop.f32.mrf.mxu0
    %v5893 = vadd.f32 0.0, %v5892
    %5894 = vmatmul.bf16.gmra.mxu0 %v5629
    %v5895 = vpop.f32.mrf.mxu0
    %v5896 = vadd.f32 0.0, %v5895
    %v5897 = vpop.f32.mrf.mxu0
    %v5898 = vadd.f32 0.0, %v5897
    %5899 = vmatmul.bf16.gmra.mxu0 %v5632
    %v5900 = vpop.f32.mrf.mxu0
    %v5901 = vadd.f32 0.0, %v5900
    %v5902 = vpop.f32.mrf.mxu0
    %v5903 = vadd.f32 0.0, %v5902
    %5904 = vmatmul.bf16.gmra.mxu0 %v5635
    %v5905 = vpop.f32.mrf.mxu0
    %v5906 = vadd.f32 0.0, %v5905
    %v5907 = vpop.f32.mrf.mxu0
    %v5908 = vadd.f32 0.0, %v5907
    %5909 = vmatmul.bf16.gmra.mxu0 %v5638
    %v5910 = vpop.f32.mrf.mxu0
    %v5911 = vadd.f32 0.0, %v5910
    %v5912 = vpop.f32.mrf.mxu0
    %v5913 = vadd.f32 0.0, %v5912
    %5914 = vmatmul.bf16.gmra.mxu0 %v5641
    %v5915 = vpop.f32.mrf.mxu0
    %v5916 = vadd.f32 0.0, %v5915
    %v5917 = vpop.f32.mrf.mxu0
    %v5918 = vadd.f32 0.0, %v5917
    %5919 = vmatmul.bf16.gmra.mxu0 %v5644
    %v5920 = vpop.f32.mrf.mxu0
    %v5921 = vadd.f32 0.0, %v5920
    %v5922 = vpop.f32.mrf.mxu0
    %v5923 = vadd.f32 0.0, %v5922
    %5924 = vmatmul.bf16.gmra.mxu0 %v5647
    %v5925 = vpop.f32.mrf.mxu0
    %v5926 = vadd.f32 0.0, %v5925
    %v5927 = vpop.f32.mrf.mxu0
    %v5928 = vadd.f32 0.0, %v5927
    %5929 = vmatmul.bf16.gmra.mxu0 %v5650
    %v5930 = vpop.f32.mrf.mxu0
    %v5931 = vadd.f32 0.0, %v5930
    %v5932 = vpop.f32.mrf.mxu0
    %v5933 = vadd.f32 0.0, %v5932
    %5934 = vmatmul.bf16.gmra.mxu0 %v5653
    %v5935 = vpop.f32.mrf.mxu0
    %v5936 = vadd.f32 0.0, %v5935
    %v5937 = vpop.f32.mrf.mxu0
    %v5938 = vadd.f32 0.0, %v5937
    %5939 = vmatmul.bf16.gmra.mxu0 %v5656
    %v5940 = vpop.f32.mrf.mxu0
    %v5941 = vadd.f32 0.0, %v5940
    %v5942 = vpop.f32.mrf.mxu0
    %v5943 = vadd.f32 0.0, %v5942
    %5944 = vmatmul.bf16.gmra.mxu0 %v5659
    %v5945 = vpop.f32.mrf.mxu0
    %v5946 = vadd.f32 0.0, %v5945
    %v5947 = vpop.f32.mrf.mxu0
    %v5948 = vadd.f32 0.0, %v5947
    %5949 = vmatmul.bf16.gmra.mxu0 %v5662
    %v5950 = vpop.f32.mrf.mxu0
    %v5951 = vadd.f32 0.0, %v5950
    %v5952 = vpop.f32.mrf.mxu0
    %v5953 = vadd.f32 0.0, %v5952
    %5954 = vmatmul.bf16.gmra.mxu0 %v5665
    %v5955 = vpop.f32.mrf.mxu0
    %v5956 = vadd.f32 0.0, %v5955
    %v5957 = vpop.f32.mrf.mxu0
    %v5958 = vadd.f32 0.0, %v5957
    %5959 = vmatmul.bf16.gmra.mxu0 %v5668
    %v5960 = vpop.f32.mrf.mxu0
    %v5961 = vadd.f32 0.0, %v5960
    %v5962 = vpop.f32.mrf.mxu0
    %v5963 = vadd.f32 0.0, %v5962
    %5964 = vmatmul.bf16.gmra.mxu0 %v5671
    %v5965 = vpop.f32.mrf.mxu0
    %v5966 = vadd.f32 0.0, %v5965
    %v5967 = vpop.f32.mrf.mxu0
    %v5968 = vadd.f32 0.0, %v5967
    %5969 = vmatmul.bf16.gmra.mxu0 %v5674
    %v5970 = vpop.f32.mrf.mxu0
    %v5971 = vadd.f32 0.0, %v5970
    %v5972 = vpop.f32.mrf.mxu0
    %v5973 = vadd.f32 0.0, %v5972
    %5974 = vmatmul.bf16.gmra.mxu0 %v5677
    %v5975 = vpop.f32.mrf.mxu0
    %v5976 = vadd.f32 0.0, %v5975
    %v5977 = vpop.f32.mrf.mxu0
    %v5978 = vadd.f32 0.0, %v5977
    %5979 = vmatmul.bf16.gmra.mxu0 %v5680
    %v5980 = vpop.f32.mrf.mxu0
    %v5981 = vadd.f32 0.0, %v5980
    %v5982 = vpop.f32.mrf.mxu0
    %v5983 = vadd.f32 0.0, %v5982
    %5984 = vmatmul.bf16.gmra.mxu0 %v5683
    %v5985 = vpop.f32.mrf.mxu0
    %v5986 = vadd.f32 0.0, %v5985
    %v5987 = vpop.f32.mrf.mxu0
    %v5988 = vadd.f32 0.0, %v5987
    %5989 = vmatmul.bf16.gmra.mxu0 %v5686
    %v5990 = vpop.f32.mrf.mxu0
    %v5991 = vadd.f32 0.0, %v5990
    %v5992 = vpop.f32.mrf.mxu0
    %v5993 = vadd.f32 0.0, %v5992
    %5994 = vmatmul.bf16.gmra.mxu0 %v5689
    %v5995 = vpop.f32.mrf.mxu0
    %v5996 = vadd.f32 0.0, %v5995
    %v5997 = vpop.f32.mrf.mxu0
    %v5998 = vadd.f32 0.0, %v5997
    %5999 = vmatmul.bf16.gmra.mxu0 %v5692
    %v6000 = vpop.f32.mrf.mxu0
    %v6001 = vadd.f32 0.0, %v6000
    %v6002 = vpop.f32.mrf.mxu0
    %v6003 = vadd.f32 0.0, %v6002
    %6004 = vmatmul.bf16.gmra.mxu0 %v5695
    %v6005 = vpop.f32.mrf.mxu0
    %v6006 = vadd.f32 0.0, %v6005
    %v6007 = vpop.f32.mrf.mxu0
    %v6008 = vadd.f32 0.0, %v6007
    %6009 = vmatmul.bf16.gmra.mxu0 %v5698
    %v6010 = vpop.f32.mrf.mxu0
    %v6011 = vadd.f32 0.0, %v6010
    %v6012 = vpop.f32.mrf.mxu0
    %v6013 = vadd.f32 0.0, %v6012
    %6014 = vmatmul.bf16.gmra.mxu0 %v5701
    %v6015 = vpop.f32.mrf.mxu0
    %v6016 = vadd.f32 0.0, %v6015
    %v6017 = vpop.f32.mrf.mxu0
    %v6018 = vadd.f32 0.0, %v6017
    %6019 = vmatmul.bf16.gmra.mxu0 %v5704
    %v6020 = vpop.f32.mrf.mxu0
    %v6021 = vadd.f32 0.0, %v6020
    %v6022 = vpop.f32.mrf.mxu0
    %v6023 = vadd.f32 0.0, %v6022
    %6024 = vmatmul.bf16.gmra.mxu0 %v5707
    %v6025 = vpop.f32.mrf.mxu0
    %v6026 = vadd.f32 0.0, %v6025
    %v6027 = vpop.f32.mrf.mxu0
    %v6028 = vadd.f32 0.0, %v6027
    %6029 = vmatmul.bf16.gmra.mxu0 %v5710
    %v6030 = vpop.f32.mrf.mxu0
    %v6031 = vadd.f32 0.0, %v6030
    %v6032 = vpop.f32.mrf.mxu0
    %v6033 = vadd.f32 0.0, %v6032
    %6034 = vmatmul.bf16.gmra.mxu0 %v5713
    %v6035 = vpop.f32.mrf.mxu0
    %v6036 = vadd.f32 0.0, %v6035
    %v6037 = vpop.f32.mrf.mxu0
    %v6038 = vadd.f32 0.0, %v6037
    %6039 = vmatmul.bf16.gmra.mxu0 %v5716
    %v6040 = vpop.f32.mrf.mxu0
    %v6041 = vadd.f32 0.0, %v6040
    %v6042 = vpop.f32.mrf.mxu0
    %v6043 = vadd.f32 0.0, %v6042
    %6044 = vmatmul.bf16.gmra.mxu0 %v5719
    %v6045 = vpop.f32.mrf.mxu0
    %v6046 = vadd.f32 0.0, %v6045
    %v6047 = vpop.f32.mrf.mxu0
    %v6048 = vadd.f32 0.0, %v6047
    %6049 = vdwg.mxu0
    %v6050 = vadd.f32 %v5304, %v5731
    %v6051 = vadd.f32 %v5305, %v5733
    %v6052 = vadd.f32 %v5306, %v5736
    %v6053 = vadd.f32 %v5307, %v5738
    %v6054 = vadd.f32 %v5308, %v5741
    %v6055 = vadd.f32 %v5309, %v5743
    %v6056 = vadd.f32 %v5310, %v5746
    %v6057 = vadd.f32 %v5311, %v5748
    %v6058 = vadd.f32 %v5312, %v5751
    %v6059 = vadd.f32 %v5313, %v5753
    %v6060 = vadd.f32 %v5314, %v5756
    %v6061 = vadd.f32 %v5315, %v5758
    %v6062 = vadd.f32 %v5316, %v5761
    %v6063 = vadd.f32 %v5317, %v5763
    %v6064 = vadd.f32 %v5318, %v5766
    %v6065 = vadd.f32 %v5319, %v5768
    %v6066 = vadd.f32 %v5320, %v5771
    %v6067 = vadd.f32 %v5321, %v5773
    %v6068 = vadd.f32 %v5322, %v5776
    %v6069 = vadd.f32 %v5323, %v5778
    %v6070 = vadd.f32 %v5324, %v5781
    %v6071 = vadd.f32 %v5325, %v5783
    %v6072 = vadd.f32 %v5326, %v5786
    %v6073 = vadd.f32 %v5327, %v5788
    %v6074 = vadd.f32 %v5328, %v5791
    %v6075 = vadd.f32 %v5329, %v5793
    %v6076 = vadd.f32 %v5330, %v5796
    %v6077 = vadd.f32 %v5331, %v5798
    %v6078 = vadd.f32 %v5332, %v5801
    %v6079 = vadd.f32 %v5333, %v5803
    %v6080 = vadd.f32 %v5334, %v5806
    %v6081 = vadd.f32 %v5335, %v5808
    %v6082 = vadd.f32 %v5336, %v5811
    %v6083 = vadd.f32 %v5337, %v5813
    %v6084 = vadd.f32 %v5338, %v5816
    %v6085 = vadd.f32 %v5339, %v5818
    %v6086 = vadd.f32 %v5340, %v5821
    %v6087 = vadd.f32 %v5341, %v5823
    %v6088 = vadd.f32 %v5342, %v5826
    %v6089 = vadd.f32 %v5343, %v5828
    %v6090 = vadd.f32 %v5344, %v5831
    %v6091 = vadd.f32 %v5345, %v5833
    %v6092 = vadd.f32 %v5346, %v5836
    %v6093 = vadd.f32 %v5347, %v5838
    %v6094 = vadd.f32 %v5348, %v5841
    %v6095 = vadd.f32 %v5349, %v5843
    %v6096 = vadd.f32 %v5350, %v5846
    %v6097 = vadd.f32 %v5351, %v5848
    %v6098 = vadd.f32 %v5352, %v5851
    %v6099 = vadd.f32 %v5353, %v5853
    %v6100 = vadd.f32 %v5354, %v5856
    %v6101 = vadd.f32 %v5355, %v5858
    %v6102 = vadd.f32 %v5356, %v5861
    %v6103 = vadd.f32 %v5357, %v5863
    %v6104 = vadd.f32 %v5358, %v5866
    %v6105 = vadd.f32 %v5359, %v5868
    %v6106 = vadd.f32 %v5360, %v5871
    %v6107 = vadd.f32 %v5361, %v5873
    %v6108 = vadd.f32 %v5362, %v5876
    %v6109 = vadd.f32 %v5363, %v5878
    %v6110 = vadd.f32 %v5364, %v5881
    %v6111 = vadd.f32 %v5365, %v5883
    %v6112 = vadd.f32 %v5366, %v5886
    %v6113 = vadd.f32 %v5367, %v5888
    %v6114 = vadd.f32 %v5368, %v5891
    %v6115 = vadd.f32 %v5369, %v5893
    %v6116 = vadd.f32 %v5370, %v5896
    %v6117 = vadd.f32 %v5371, %v5898
    %v6118 = vadd.f32 %v5372, %v5901
    %v6119 = vadd.f32 %v5373, %v5903
    %v6120 = vadd.f32 %v5374, %v5906
    %v6121 = vadd.f32 %v5375, %v5908
    %v6122 = vadd.f32 %v5376, %v5911
    %v6123 = vadd.f32 %v5377, %v5913
    %v6124 = vadd.f32 %v5378, %v5916
    %v6125 = vadd.f32 %v5379, %v5918
    %v6126 = vadd.f32 %v5380, %v5921
    %v6127 = vadd.f32 %v5381, %v5923
    %v6128 = vadd.f32 %v5382, %v5926
    %v6129 = vadd.f32 %v5383, %v5928
    %v6130 = vadd.f32 %v5384, %v5931
    %v6131 = vadd.f32 %v5385, %v5933
    %v6132 = vadd.f32 %v5386, %v5936
    %v6133 = vadd.f32 %v5387, %v5938
    %v6134 = vadd.f32 %v5388, %v5941
    %v6135 = vadd.f32 %v5389, %v5943
    %v6136 = vadd.f32 %v5390, %v5946
    %v6137 = vadd.f32 %v5391, %v5948
    %v6138 = vadd.f32 %v5392, %v5951
    %v6139 = vadd.f32 %v5393, %v5953
    %v6140 = vadd.f32 %v5394, %v5956
    %v6141 = vadd.f32 %v5395, %v5958
    %v6142 = vadd.f32 %v5396, %v5961
    %v6143 = vadd.f32 %v5397, %v5963
    %v6144 = vadd.f32 %v5398, %v5966
    %v6145 = vadd.f32 %v5399, %v5968
    %v6146 = vadd.f32 %v5400, %v5971
    %v6147 = vadd.f32 %v5401, %v5973
    %v6148 = vadd.f32 %v5402, %v5976
    %v6149 = vadd.f32 %v5403, %v5978
    %v6150 = vadd.f32 %v5404, %v5981
    %v6151 = vadd.f32 %v5405, %v5983
    %v6152 = vadd.f32 %v5406, %v5986
    %v6153 = vadd.f32 %v5407, %v5988
    %v6154 = vadd.f32 %v5408, %v5991
    %v6155 = vadd.f32 %v5409, %v5993
    %v6156 = vadd.f32 %v5410, %v5996
    %v6157 = vadd.f32 %v5411, %v5998
    %v6158 = vadd.f32 %v5412, %v6001
    %v6159 = vadd.f32 %v5413, %v6003
    %v6160 = vadd.f32 %v5414, %v6006
    %v6161 = vadd.f32 %v5415, %v6008
    %v6162 = vadd.f32 %v5416, %v6011
    %v6163 = vadd.f32 %v5417, %v6013
    %v6164 = vadd.f32 %v5418, %v6016
    %v6165 = vadd.f32 %v5419, %v6018
    %v6166 = vadd.f32 %v5420, %v6021
    %v6167 = vadd.f32 %v5421, %v6023
    %v6168 = vadd.f32 %v5422, %v6026
    %v6169 = vadd.f32 %v5423, %v6028
    %v6170 = vadd.f32 %v5424, %v6031
    %v6171 = vadd.f32 %v5425, %v6033
    %v6172 = vadd.f32 %v5426, %v6036
    %v6173 = vadd.f32 %v5427, %v6038
    %v6174 = vadd.f32 %v5428, %v6041
    %v6175 = vadd.f32 %v5429, %v6043
    %v6176 = vadd.f32 %v5430, %v6046
    %v6177 = vadd.f32 %v5431, %v6048
    %v6178 = vsel %vm1038, %v3554, 0.0
    %v6179 = vsel %vm1039, %v3553, 0.0
    %v6180 = vsel %vm1040, %v3552, 0.0
    %v6181 = vsel %vm1041, %v3551, 0.0
    %v6182 = vsel %vm1042, %v3550, 0.0
    %v6183 = vsel %vm1043, %v3549, 0.0
    %v6184 = vsel %vm1044, %v3548, 0.0
    %v6185 = vsel %vm1045, %v3547, 0.0
    %v6186 = vsel %vm1046, %v3546, 0.0
    %v6187 = vsel %vm1047, %v3545, 0.0
    %v6188 = vsel %vm1048, %v3544, 0.0
    %v6189 = vsel %vm1049, %v3543, 0.0
    %v6190 = vsel %vm1050, %v3542, 0.0
    %v6191 = vsel %vm1051, %v3541, 0.0
    %v6192 = vsel %vm1052, %v3540, 0.0
    %v6193 = vsel %vm1053, %v3539, 0.0
    %v6194 = vsel %vm1054, %v3538, 0.0
    %v6195 = vsel %vm1055, %v3537, 0.0
    %v6196 = vsel %vm1056, %v3536, 0.0
    %v6197 = vsel %vm1057, %v3535, 0.0
    %v6198 = vsel %vm1058, %v3534, 0.0
    %v6199 = vsel %vm1059, %v3533, 0.0
    %v6200 = vsel %vm1060, %v3532, 0.0
    %v6201 = vsel %vm1061, %v3531, 0.0
    %v6202 = vsel %vm1062, %v3530, 0.0
    %v6203 = vsel %vm1063, %v3529, 0.0
    %v6204 = vsel %vm1064, %v3528, 0.0
    %v6205 = vsel %vm1065, %v3527, 0.0
    %v6206 = vsel %vm1066, %v3526, 0.0
    %v6207 = vsel %vm1067, %v3525, 0.0
    %v6208 = vsel %vm1068, %v3524, 0.0
    %v6209 = vsel %vm1069, %v3523, 0.0
    %v6210 = vsel %vm1070, %v3522, 0.0
    %v6211 = vsel %vm1071, %v3521, 0.0
    %v6212 = vsel %vm1072, %v3520, 0.0
    %v6213 = vsel %vm1073, %v3519, 0.0
    %v6214 = vsel %vm1074, %v3518, 0.0
    %v6215 = vsel %vm1075, %v3517, 0.0
    %v6216 = vsel %vm1076, %v3516, 0.0
    %v6217 = vsel %vm1077, %v3515, 0.0
    %v6218 = vsel %vm1078, %v3514, 0.0
    %v6219 = vsel %vm1079, %v3513, 0.0
    %v6220 = vsel %vm1080, %v3512, 0.0
    %v6221 = vsel %vm1081, %v3511, 0.0
    %v6222 = vsel %vm1082, %v3510, 0.0
    %v6223 = vsel %vm1083, %v3509, 0.0
    %v6224 = vsel %vm1084, %v3508, 0.0
    %v6225 = vsel %vm1085, %v3507, 0.0
    %v6226 = vsel %vm1086, %v3506, 0.0
    %v6227 = vsel %vm1087, %v3505, 0.0
    %v6228 = vsel %vm1088, %v3504, 0.0
    %v6229 = vsel %vm1089, %v3503, 0.0
    %v6230 = vsel %vm1090, %v3502, 0.0
    %v6231 = vsel %vm1091, %v3501, 0.0
    %v6232 = vsel %vm1092, %v3500, 0.0
    %v6233 = vsel %vm1093, %v3499, 0.0
    %v6234 = vsel %vm1094, %v3498, 0.0
    %v6235 = vsel %vm1095, %v3497, 0.0
    %v6236 = vsel %vm1096, %v3496, 0.0
    %v6237 = vsel %vm1097, %v3495, 0.0
    %v6238 = vsel %vm1098, %v3494, 0.0
    %v6239 = vsel %vm1099, %v3493, 0.0
    %v6240 = vsel %vm1100, %v3492, 0.0
    %v6241 = vsel %vm1101, %v3491, 0.0
    %v6242 = vsel %vm1102, %v3490, 0.0
    %v6243 = vsel %vm1103, %v3489, 0.0
    %v6244 = vsel %vm1104, %v3488, 0.0
    %v6245 = vsel %vm1105, %v3487, 0.0
    %v6246 = vsel %vm1106, %v3486, 0.0
    %v6247 = vsel %vm1107, %v3485, 0.0
    %v6248 = vsel %vm1108, %v3484, 0.0
    %v6249 = vsel %vm1109, %v3483, 0.0
    %v6250 = vsel %vm1110, %v3482, 0.0
    %v6251 = vsel %vm1111, %v3481, 0.0
    %v6252 = vsel %vm1112, %v3480, 0.0
    %v6253 = vsel %vm1113, %v3479, 0.0
    %v6254 = vsel %vm1114, %v3478, 0.0
    %v6255 = vsel %vm1115, %v3477, 0.0
    %v6256 = vsel %vm1116, %v3476, 0.0
    %v6257 = vsel %vm1117, %v3475, 0.0
    %v6258 = vsel %vm1118, %v3474, 0.0
    %v6259 = vsel %vm1119, %v3473, 0.0
    %v6260 = vsel %vm1120, %v3472, 0.0
    %v6261 = vsel %vm1121, %v3471, 0.0
    %v6262 = vsel %vm1122, %v3470, 0.0
    %v6263 = vsel %vm1123, %v3469, 0.0
    %v6264 = vsel %vm1124, %v3468, 0.0
    %v6265 = vsel %vm1125, %v3467, 0.0
    %v6266 = vsel %vm1126, %v3466, 0.0
    %v6267 = vsel %vm1127, %v3465, 0.0
    %v6268 = vsel %vm1128, %v3464, 0.0
    %v6269 = vsel %vm1129, %v3463, 0.0
    %v6270 = vsel %vm1130, %v3462, 0.0
    %v6271 = vsel %vm1131, %v3461, 0.0
    %v6272 = vsel %vm1132, %v3460, 0.0
    %v6273 = vsel %vm1133, %v3459, 0.0
    %v6274 = vsel %vm1134, %v3458, 0.0
    %v6275 = vsel %vm1135, %v3457, 0.0
    %v6276 = vsel %vm1136, %v3456, 0.0
    %v6277 = vsel %vm1137, %v3455, 0.0
    %v6278 = vsel %vm1138, %v3454, 0.0
    %v6279 = vsel %vm1139, %v3453, 0.0
    %v6280 = vsel %vm1140, %v3452, 0.0
    %v6281 = vsel %vm1141, %v3451, 0.0
    %v6282 = vsel %vm1142, %v3450, 0.0
    %v6283 = vsel %vm1143, %v3449, 0.0
    %v6284 = vsel %vm1144, %v3448, 0.0
    %v6285 = vsel %vm1145, %v3447, 0.0
    %v6286 = vsel %vm1146, %v3446, 0.0
    %v6287 = vsel %vm1147, %v3445, 0.0
    %v6288 = vsel %vm1148, %v3444, 0.0
    %v6289 = vsel %vm1149, %v3443, 0.0
    %v6290 = vsel %vm1150, %v3442, 0.0
    %v6291 = vsel %vm1151, %v3441, 0.0
    %v6292 = vsel %vm1152, %v3440, 0.0
    %v6293 = vsel %vm1153, %v3439, 0.0
    %v6294 = vsel %vm1154, %v3438, 0.0
    %v6295 = vsel %vm1155, %v3437, 0.0
    %v6296 = vsel %vm1156, %v3436, 0.0
    %v6297 = vsel %vm1157, %v3435, 0.0
    %v6298 = vsel %vm1158, %v3434, 0.0
    %v6299 = vsel %vm1159, %v3433, 0.0
    %v6300 = vsel %vm1160, %v3432, 0.0
    %v6301 = vsel %vm1161, %v3431, 0.0
    %v6302 = vsel %vm1162, %v3430, 0.0
    %v6303 = vsel %vm1163, %v3429, 0.0
    %v6304 = vsel %vm1164, %v3428, 0.0
    %v6305 = vsel %vm1165, %v3555, 0.0
    %v6306 = vpack.c.bf16 %v6179, %v6178
    %v6307 = vpack.c.bf16 %v6181, %v6180
    %v6308 = vpack.c.bf16 %v6183, %v6182
    %v6309 = vpack.c.bf16 %v6185, %v6184
    %v6310 = vpack.c.bf16 %v6187, %v6186
    %v6311 = vpack.c.bf16 %v6189, %v6188
    %v6312 = vpack.c.bf16 %v6191, %v6190
    %v6313 = vpack.c.bf16 %v6193, %v6192
    %v6314 = vpack.c.bf16 %v6195, %v6194
    %v6315 = vpack.c.bf16 %v6197, %v6196
    %v6316 = vpack.c.bf16 %v6199, %v6198
    %v6317 = vpack.c.bf16 %v6201, %v6200
    %v6318 = vpack.c.bf16 %v6203, %v6202
    %v6319 = vpack.c.bf16 %v6205, %v6204
    %v6320 = vpack.c.bf16 %v6207, %v6206
    %v6321 = vpack.c.bf16 %v6209, %v6208
    %v6322 = vpack.c.bf16 %v6211, %v6210
    %v6323 = vpack.c.bf16 %v6213, %v6212
    %v6324 = vpack.c.bf16 %v6215, %v6214
    %v6325 = vpack.c.bf16 %v6217, %v6216
    %v6326 = vpack.c.bf16 %v6219, %v6218
    %v6327 = vpack.c.bf16 %v6221, %v6220
    %v6328 = vpack.c.bf16 %v6223, %v6222
    %v6329 = vpack.c.bf16 %v6225, %v6224
    %v6330 = vpack.c.bf16 %v6227, %v6226
    %v6331 = vpack.c.bf16 %v6229, %v6228
    %v6332 = vpack.c.bf16 %v6231, %v6230
    %v6333 = vpack.c.bf16 %v6233, %v6232
    %v6334 = vpack.c.bf16 %v6235, %v6234
    %v6335 = vpack.c.bf16 %v6237, %v6236
    %v6336 = vpack.c.bf16 %v6239, %v6238
    %v6337 = vpack.c.bf16 %v6241, %v6240
    %v6338 = vpack.c.bf16 %v6243, %v6242
    %v6339 = vpack.c.bf16 %v6245, %v6244
    %v6340 = vpack.c.bf16 %v6247, %v6246
    %v6341 = vpack.c.bf16 %v6249, %v6248
    %v6342 = vpack.c.bf16 %v6251, %v6250
    %v6343 = vpack.c.bf16 %v6253, %v6252
    %v6344 = vpack.c.bf16 %v6255, %v6254
    %v6345 = vpack.c.bf16 %v6257, %v6256
    %v6346 = vpack.c.bf16 %v6259, %v6258
    %v6347 = vpack.c.bf16 %v6261, %v6260
    %v6348 = vpack.c.bf16 %v6263, %v6262
    %v6349 = vpack.c.bf16 %v6265, %v6264
    %v6350 = vpack.c.bf16 %v6267, %v6266
    %v6351 = vpack.c.bf16 %v6269, %v6268
    %v6352 = vpack.c.bf16 %v6271, %v6270
    %v6353 = vpack.c.bf16 %v6273, %v6272
    %v6354 = vpack.c.bf16 %v6275, %v6274
    %v6355 = vpack.c.bf16 %v6277, %v6276
    %v6356 = vpack.c.bf16 %v6279, %v6278
    %v6357 = vpack.c.bf16 %v6281, %v6280
    %v6358 = vpack.c.bf16 %v6283, %v6282
    %v6359 = vpack.c.bf16 %v6285, %v6284
    %v6360 = vpack.c.bf16 %v6287, %v6286
    %v6361 = vpack.c.bf16 %v6289, %v6288
    %v6362 = vpack.c.bf16 %v6291, %v6290
    %v6363 = vpack.c.bf16 %v6293, %v6292
    %v6364 = vpack.c.bf16 %v6295, %v6294
    %v6365 = vpack.c.bf16 %v6297, %v6296
    %v6366 = vpack.c.bf16 %v6299, %v6298
    %v6367 = vpack.c.bf16 %v6301, %v6300
    %v6368 = vpack.c.bf16 %v6303, %v6302
    %v6369 = vpack.c.bf16 %v6305, %v6304
    %s6370 = scalar_lea.vmem %s1, 160
    %v6371 = vld [vmem:[%s6370] sm:$0xf]
    %v6372 = vld [vmem:[%s6370 + $0x4] sm:$0xf]
    %v6373 = vld [vmem:[%s6370 + $0x8] sm:$0xf]
    %v6374 = vld [vmem:[%s6370 + $0xc] sm:$0xf]
    %v6375 = vld [vmem:[%s6370 + $0x10] sm:$0xf]
    %v6376 = vld [vmem:[%s6370 + $0x14] sm:$0xf]
    %v6377 = vld [vmem:[%s6370 + $0x18] sm:$0xf]
    %v6378 = vld [vmem:[%s6370 + $0x1c] sm:$0xf]
    %v6387 = vunpack.c.l.b16 %v6371
    %v6388 = vunpack.c.l.b16 %v6372
    %v6389 = vunpack.c.l.b16 %v6373
    %v6390 = vunpack.c.l.b16 %v6374
    %v6391 = vunpack.c.l.b16 %v6375
    %v6392 = vunpack.c.l.b16 %v6376
    %v6393 = vunpack.c.l.b16 %v6377
    %v6394 = vunpack.c.l.b16 %v6378
    %v6395 = vpack.c.b16 %v6388, %v6387
    %v6396 = vpack.c.b16 %v6390, %v6389
    %v6397 = vpack.c.b16 %v6392, %v6391
    %v6398 = vpack.c.b16 %v6394, %v6393
    %v6404 = vsel %vm1775, %v6306, 0
    %v6407 = vsel %vm1775, %v6307, 0
    %v6410 = vsel %vm1775, %v6308, 0
    %v6413 = vsel %vm1775, %v6309, 0
    %v6416 = vsel %vm1775, %v6310, 0
    %v6419 = vsel %vm1775, %v6311, 0
    %v6422 = vsel %vm1775, %v6312, 0
    %v6425 = vsel %vm1775, %v6313, 0
    %v6428 = vsel %vm1775, %v6314, 0
    %v6431 = vsel %vm1775, %v6315, 0
    %v6434 = vsel %vm1775, %v6316, 0
    %v6437 = vsel %vm1775, %v6317, 0
    %v6440 = vsel %vm1775, %v6318, 0
    %v6443 = vsel %vm1775, %v6319, 0
    %v6446 = vsel %vm1775, %v6320, 0
    %v6449 = vsel %vm1775, %v6321, 0
    %v6452 = vsel %vm1775, %v6322, 0
    %v6455 = vsel %vm1775, %v6323, 0
    %v6458 = vsel %vm1775, %v6324, 0
    %v6461 = vsel %vm1775, %v6325, 0
    %v6464 = vsel %vm1775, %v6326, 0
    %v6467 = vsel %vm1775, %v6327, 0
    %v6470 = vsel %vm1775, %v6328, 0
    %v6473 = vsel %vm1775, %v6329, 0
    %v6476 = vsel %vm1775, %v6330, 0
    %v6479 = vsel %vm1775, %v6331, 0
    %v6482 = vsel %vm1775, %v6332, 0
    %v6485 = vsel %vm1775, %v6333, 0
    %v6488 = vsel %vm1775, %v6334, 0
    %v6491 = vsel %vm1775, %v6335, 0
    %v6494 = vsel %vm1775, %v6336, 0
    %v6497 = vsel %vm1775, %v6337, 0
    %v6500 = vsel %vm1775, %v6338, 0
    %v6503 = vsel %vm1775, %v6339, 0
    %v6506 = vsel %vm1775, %v6340, 0
    %v6509 = vsel %vm1775, %v6341, 0
    %v6512 = vsel %vm1775, %v6342, 0
    %v6515 = vsel %vm1775, %v6343, 0
    %v6518 = vsel %vm1775, %v6344, 0
    %v6521 = vsel %vm1775, %v6345, 0
    %v6524 = vsel %vm1775, %v6346, 0
    %v6527 = vsel %vm1775, %v6347, 0
    %v6530 = vsel %vm1775, %v6348, 0
    %v6533 = vsel %vm1775, %v6349, 0
    %v6536 = vsel %vm1775, %v6350, 0
    %v6539 = vsel %vm1775, %v6351, 0
    %v6542 = vsel %vm1775, %v6352, 0
    %v6545 = vsel %vm1775, %v6353, 0
    %v6548 = vsel %vm1775, %v6354, 0
    %v6551 = vsel %vm1775, %v6355, 0
    %v6554 = vsel %vm1775, %v6356, 0
    %v6557 = vsel %vm1775, %v6357, 0
    %v6560 = vsel %vm1775, %v6358, 0
    %v6563 = vsel %vm1775, %v6359, 0
    %v6566 = vsel %vm1775, %v6360, 0
    %v6569 = vsel %vm1775, %v6361, 0
    %v6572 = vsel %vm1775, %v6362, 0
    %v6575 = vsel %vm1775, %v6363, 0
    %v6578 = vsel %vm1775, %v6364, 0
    %v6581 = vsel %vm1775, %v6365, 0
    %v6584 = vsel %vm1775, %v6366, 0
    %v6587 = vsel %vm1775, %v6367, 0
    %v6590 = vsel %vm1775, %v6368, 0
    %v6593 = vsel %vm1775, %v6369, 0
    %6595 = vmatpush.bf16.msra.mxu0 0
    %6596 = vmatpush.bf16.msra.mxu0 0
    %6597 = vmatpush.bf16.msra.mxu0 0
    %6598 = vmatpush.bf16.msra.mxu0 0
    %6599 = vmatpush.bf16.msra.mxu0 %v6398
    %6600 = vmatpush.bf16.msra.mxu0 %v6397
    %6601 = vmatpush.bf16.msra.mxu0 %v6396
    %6602 = vmatpush.bf16.msra.mxu0 %v6395
    %6603 = vmatmul.bf16.gmra.mxu0 %v6404
    %v6604 = vpop.f32.mrf.mxu0
    %v6605 = vadd.f32 0.0, %v6604
    %v6606 = vpop.f32.mrf.mxu0
    %v6607 = vadd.f32 0.0, %v6606
    %6608 = vmatmul.bf16.gmra.mxu0 %v6407
    %v6609 = vpop.f32.mrf.mxu0
    %v6610 = vadd.f32 0.0, %v6609
    %v6611 = vpop.f32.mrf.mxu0
    %v6612 = vadd.f32 0.0, %v6611
    %6613 = vmatmul.bf16.gmra.mxu0 %v6410
    %v6614 = vpop.f32.mrf.mxu0
    %v6615 = vadd.f32 0.0, %v6614
    %v6616 = vpop.f32.mrf.mxu0
    %v6617 = vadd.f32 0.0, %v6616
    %6618 = vmatmul.bf16.gmra.mxu0 %v6413
    %v6619 = vpop.f32.mrf.mxu0
    %v6620 = vadd.f32 0.0, %v6619
    %v6621 = vpop.f32.mrf.mxu0
    %v6622 = vadd.f32 0.0, %v6621
    %6623 = vmatmul.bf16.gmra.mxu0 %v6416
    %v6624 = vpop.f32.mrf.mxu0
    %v6625 = vadd.f32 0.0, %v6624
    %v6626 = vpop.f32.mrf.mxu0
    %v6627 = vadd.f32 0.0, %v6626
    %6628 = vmatmul.bf16.gmra.mxu0 %v6419
    %v6629 = vpop.f32.mrf.mxu0
    %v6630 = vadd.f32 0.0, %v6629
    %v6631 = vpop.f32.mrf.mxu0
    %v6632 = vadd.f32 0.0, %v6631
    %6633 = vmatmul.bf16.gmra.mxu0 %v6422
    %v6634 = vpop.f32.mrf.mxu0
    %v6635 = vadd.f32 0.0, %v6634
    %v6636 = vpop.f32.mrf.mxu0
    %v6637 = vadd.f32 0.0, %v6636
    %6638 = vmatmul.bf16.gmra.mxu0 %v6425
    %v6639 = vpop.f32.mrf.mxu0
    %v6640 = vadd.f32 0.0, %v6639
    %v6641 = vpop.f32.mrf.mxu0
    %v6642 = vadd.f32 0.0, %v6641
    %6643 = vmatmul.bf16.gmra.mxu0 %v6428
    %v6644 = vpop.f32.mrf.mxu0
    %v6645 = vadd.f32 0.0, %v6644
    %v6646 = vpop.f32.mrf.mxu0
    %v6647 = vadd.f32 0.0, %v6646
    %6648 = vmatmul.bf16.gmra.mxu0 %v6431
    %v6649 = vpop.f32.mrf.mxu0
    %v6650 = vadd.f32 0.0, %v6649
    %v6651 = vpop.f32.mrf.mxu0
    %v6652 = vadd.f32 0.0, %v6651
    %6653 = vmatmul.bf16.gmra.mxu0 %v6434
    %v6654 = vpop.f32.mrf.mxu0
    %v6655 = vadd.f32 0.0, %v6654
    %v6656 = vpop.f32.mrf.mxu0
    %v6657 = vadd.f32 0.0, %v6656
    %6658 = vmatmul.bf16.gmra.mxu0 %v6437
    %v6659 = vpop.f32.mrf.mxu0
    %v6660 = vadd.f32 0.0, %v6659
    %v6661 = vpop.f32.mrf.mxu0
    %v6662 = vadd.f32 0.0, %v6661
    %6663 = vmatmul.bf16.gmra.mxu0 %v6440
    %v6664 = vpop.f32.mrf.mxu0
    %v6665 = vadd.f32 0.0, %v6664
    %v6666 = vpop.f32.mrf.mxu0
    %v6667 = vadd.f32 0.0, %v6666
    %6668 = vmatmul.bf16.gmra.mxu0 %v6443
    %v6669 = vpop.f32.mrf.mxu0
    %v6670 = vadd.f32 0.0, %v6669
    %v6671 = vpop.f32.mrf.mxu0
    %v6672 = vadd.f32 0.0, %v6671
    %6673 = vmatmul.bf16.gmra.mxu0 %v6446
    %v6674 = vpop.f32.mrf.mxu0
    %v6675 = vadd.f32 0.0, %v6674
    %v6676 = vpop.f32.mrf.mxu0
    %v6677 = vadd.f32 0.0, %v6676
    %6678 = vmatmul.bf16.gmra.mxu0 %v6449
    %v6679 = vpop.f32.mrf.mxu0
    %v6680 = vadd.f32 0.0, %v6679
    %v6681 = vpop.f32.mrf.mxu0
    %v6682 = vadd.f32 0.0, %v6681
    %6683 = vmatmul.bf16.gmra.mxu0 %v6452
    %v6684 = vpop.f32.mrf.mxu0
    %v6685 = vadd.f32 0.0, %v6684
    %v6686 = vpop.f32.mrf.mxu0
    %v6687 = vadd.f32 0.0, %v6686
    %6688 = vmatmul.bf16.gmra.mxu0 %v6455
    %v6689 = vpop.f32.mrf.mxu0
    %v6690 = vadd.f32 0.0, %v6689
    %v6691 = vpop.f32.mrf.mxu0
    %v6692 = vadd.f32 0.0, %v6691
    %6693 = vmatmul.bf16.gmra.mxu0 %v6458
    %v6694 = vpop.f32.mrf.mxu0
    %v6695 = vadd.f32 0.0, %v6694
    %v6696 = vpop.f32.mrf.mxu0
    %v6697 = vadd.f32 0.0, %v6696
    %6698 = vmatmul.bf16.gmra.mxu0 %v6461
    %v6699 = vpop.f32.mrf.mxu0
    %v6700 = vadd.f32 0.0, %v6699
    %v6701 = vpop.f32.mrf.mxu0
    %v6702 = vadd.f32 0.0, %v6701
    %6703 = vmatmul.bf16.gmra.mxu0 %v6464
    %v6704 = vpop.f32.mrf.mxu0
    %v6705 = vadd.f32 0.0, %v6704
    %v6706 = vpop.f32.mrf.mxu0
    %v6707 = vadd.f32 0.0, %v6706
    %6708 = vmatmul.bf16.gmra.mxu0 %v6467
    %v6709 = vpop.f32.mrf.mxu0
    %v6710 = vadd.f32 0.0, %v6709
    %v6711 = vpop.f32.mrf.mxu0
    %v6712 = vadd.f32 0.0, %v6711
    %6713 = vmatmul.bf16.gmra.mxu0 %v6470
    %v6714 = vpop.f32.mrf.mxu0
    %v6715 = vadd.f32 0.0, %v6714
    %v6716 = vpop.f32.mrf.mxu0
    %v6717 = vadd.f32 0.0, %v6716
    %6718 = vmatmul.bf16.gmra.mxu0 %v6473
    %v6719 = vpop.f32.mrf.mxu0
    %v6720 = vadd.f32 0.0, %v6719
    %v6721 = vpop.f32.mrf.mxu0
    %v6722 = vadd.f32 0.0, %v6721
    %6723 = vmatmul.bf16.gmra.mxu0 %v6476
    %v6724 = vpop.f32.mrf.mxu0
    %v6725 = vadd.f32 0.0, %v6724
    %v6726 = vpop.f32.mrf.mxu0
    %v6727 = vadd.f32 0.0, %v6726
    %6728 = vmatmul.bf16.gmra.mxu0 %v6479
    %v6729 = vpop.f32.mrf.mxu0
    %v6730 = vadd.f32 0.0, %v6729
    %v6731 = vpop.f32.mrf.mxu0
    %v6732 = vadd.f32 0.0, %v6731
    %6733 = vmatmul.bf16.gmra.mxu0 %v6482
    %v6734 = vpop.f32.mrf.mxu0
    %v6735 = vadd.f32 0.0, %v6734
    %v6736 = vpop.f32.mrf.mxu0
    %v6737 = vadd.f32 0.0, %v6736
    %6738 = vmatmul.bf16.gmra.mxu0 %v6485
    %v6739 = vpop.f32.mrf.mxu0
    %v6740 = vadd.f32 0.0, %v6739
    %v6741 = vpop.f32.mrf.mxu0
    %v6742 = vadd.f32 0.0, %v6741
    %6743 = vmatmul.bf16.gmra.mxu0 %v6488
    %v6744 = vpop.f32.mrf.mxu0
    %v6745 = vadd.f32 0.0, %v6744
    %v6746 = vpop.f32.mrf.mxu0
    %v6747 = vadd.f32 0.0, %v6746
    %6748 = vmatmul.bf16.gmra.mxu0 %v6491
    %v6749 = vpop.f32.mrf.mxu0
    %v6750 = vadd.f32 0.0, %v6749
    %v6751 = vpop.f32.mrf.mxu0
    %v6752 = vadd.f32 0.0, %v6751
    %6753 = vmatmul.bf16.gmra.mxu0 %v6494
    %v6754 = vpop.f32.mrf.mxu0
    %v6755 = vadd.f32 0.0, %v6754
    %v6756 = vpop.f32.mrf.mxu0
    %v6757 = vadd.f32 0.0, %v6756
    %6758 = vmatmul.bf16.gmra.mxu0 %v6497
    %v6759 = vpop.f32.mrf.mxu0
    %v6760 = vadd.f32 0.0, %v6759
    %v6761 = vpop.f32.mrf.mxu0
    %v6762 = vadd.f32 0.0, %v6761
    %6763 = vmatmul.bf16.gmra.mxu0 %v6500
    %v6764 = vpop.f32.mrf.mxu0
    %v6765 = vadd.f32 0.0, %v6764
    %v6766 = vpop.f32.mrf.mxu0
    %v6767 = vadd.f32 0.0, %v6766
    %6768 = vmatmul.bf16.gmra.mxu0 %v6503
    %v6769 = vpop.f32.mrf.mxu0
    %v6770 = vadd.f32 0.0, %v6769
    %v6771 = vpop.f32.mrf.mxu0
    %v6772 = vadd.f32 0.0, %v6771
    %6773 = vmatmul.bf16.gmra.mxu0 %v6506
    %v6774 = vpop.f32.mrf.mxu0
    %v6775 = vadd.f32 0.0, %v6774
    %v6776 = vpop.f32.mrf.mxu0
    %v6777 = vadd.f32 0.0, %v6776
    %6778 = vmatmul.bf16.gmra.mxu0 %v6509
    %v6779 = vpop.f32.mrf.mxu0
    %v6780 = vadd.f32 0.0, %v6779
    %v6781 = vpop.f32.mrf.mxu0
    %v6782 = vadd.f32 0.0, %v6781
    %6783 = vmatmul.bf16.gmra.mxu0 %v6512
    %v6784 = vpop.f32.mrf.mxu0
    %v6785 = vadd.f32 0.0, %v6784
    %v6786 = vpop.f32.mrf.mxu0
    %v6787 = vadd.f32 0.0, %v6786
    %6788 = vmatmul.bf16.gmra.mxu0 %v6515
    %v6789 = vpop.f32.mrf.mxu0
    %v6790 = vadd.f32 0.0, %v6789
    %v6791 = vpop.f32.mrf.mxu0
    %v6792 = vadd.f32 0.0, %v6791
    %6793 = vmatmul.bf16.gmra.mxu0 %v6518
    %v6794 = vpop.f32.mrf.mxu0
    %v6795 = vadd.f32 0.0, %v6794
    %v6796 = vpop.f32.mrf.mxu0
    %v6797 = vadd.f32 0.0, %v6796
    %6798 = vmatmul.bf16.gmra.mxu0 %v6521
    %v6799 = vpop.f32.mrf.mxu0
    %v6800 = vadd.f32 0.0, %v6799
    %v6801 = vpop.f32.mrf.mxu0
    %v6802 = vadd.f32 0.0, %v6801
    %6803 = vmatmul.bf16.gmra.mxu0 %v6524
    %v6804 = vpop.f32.mrf.mxu0
    %v6805 = vadd.f32 0.0, %v6804
    %v6806 = vpop.f32.mrf.mxu0
    %v6807 = vadd.f32 0.0, %v6806
    %6808 = vmatmul.bf16.gmra.mxu0 %v6527
    %v6809 = vpop.f32.mrf.mxu0
    %v6810 = vadd.f32 0.0, %v6809
    %v6811 = vpop.f32.mrf.mxu0
    %v6812 = vadd.f32 0.0, %v6811
    %6813 = vmatmul.bf16.gmra.mxu0 %v6530
    %v6814 = vpop.f32.mrf.mxu0
    %v6815 = vadd.f32 0.0, %v6814
    %v6816 = vpop.f32.mrf.mxu0
    %v6817 = vadd.f32 0.0, %v6816
    %6818 = vmatmul.bf16.gmra.mxu0 %v6533
    %v6819 = vpop.f32.mrf.mxu0
    %v6820 = vadd.f32 0.0, %v6819
    %v6821 = vpop.f32.mrf.mxu0
    %v6822 = vadd.f32 0.0, %v6821
    %6823 = vmatmul.bf16.gmra.mxu0 %v6536
    %v6824 = vpop.f32.mrf.mxu0
    %v6825 = vadd.f32 0.0, %v6824
    %v6826 = vpop.f32.mrf.mxu0
    %v6827 = vadd.f32 0.0, %v6826
    %6828 = vmatmul.bf16.gmra.mxu0 %v6539
    %v6829 = vpop.f32.mrf.mxu0
    %v6830 = vadd.f32 0.0, %v6829
    %v6831 = vpop.f32.mrf.mxu0
    %v6832 = vadd.f32 0.0, %v6831
    %6833 = vmatmul.bf16.gmra.mxu0 %v6542
    %v6834 = vpop.f32.mrf.mxu0
    %v6835 = vadd.f32 0.0, %v6834
    %v6836 = vpop.f32.mrf.mxu0
    %v6837 = vadd.f32 0.0, %v6836
    %6838 = vmatmul.bf16.gmra.mxu0 %v6545
    %v6839 = vpop.f32.mrf.mxu0
    %v6840 = vadd.f32 0.0, %v6839
    %v6841 = vpop.f32.mrf.mxu0
    %v6842 = vadd.f32 0.0, %v6841
    %6843 = vmatmul.bf16.gmra.mxu0 %v6548
    %v6844 = vpop.f32.mrf.mxu0
    %v6845 = vadd.f32 0.0, %v6844
    %v6846 = vpop.f32.mrf.mxu0
    %v6847 = vadd.f32 0.0, %v6846
    %6848 = vmatmul.bf16.gmra.mxu0 %v6551
    %v6849 = vpop.f32.mrf.mxu0
    %v6850 = vadd.f32 0.0, %v6849
    %v6851 = vpop.f32.mrf.mxu0
    %v6852 = vadd.f32 0.0, %v6851
    %6853 = vmatmul.bf16.gmra.mxu0 %v6554
    %v6854 = vpop.f32.mrf.mxu0
    %v6855 = vadd.f32 0.0, %v6854
    %v6856 = vpop.f32.mrf.mxu0
    %v6857 = vadd.f32 0.0, %v6856
    %6858 = vmatmul.bf16.gmra.mxu0 %v6557
    %v6859 = vpop.f32.mrf.mxu0
    %v6860 = vadd.f32 0.0, %v6859
    %v6861 = vpop.f32.mrf.mxu0
    %v6862 = vadd.f32 0.0, %v6861
    %6863 = vmatmul.bf16.gmra.mxu0 %v6560
    %v6864 = vpop.f32.mrf.mxu0
    %v6865 = vadd.f32 0.0, %v6864
    %v6866 = vpop.f32.mrf.mxu0
    %v6867 = vadd.f32 0.0, %v6866
    %6868 = vmatmul.bf16.gmra.mxu0 %v6563
    %v6869 = vpop.f32.mrf.mxu0
    %v6870 = vadd.f32 0.0, %v6869
    %v6871 = vpop.f32.mrf.mxu0
    %v6872 = vadd.f32 0.0, %v6871
    %6873 = vmatmul.bf16.gmra.mxu0 %v6566
    %v6874 = vpop.f32.mrf.mxu0
    %v6875 = vadd.f32 0.0, %v6874
    %v6876 = vpop.f32.mrf.mxu0
    %v6877 = vadd.f32 0.0, %v6876
    %6878 = vmatmul.bf16.gmra.mxu0 %v6569
    %v6879 = vpop.f32.mrf.mxu0
    %v6880 = vadd.f32 0.0, %v6879
    %v6881 = vpop.f32.mrf.mxu0
    %v6882 = vadd.f32 0.0, %v6881
    %6883 = vmatmul.bf16.gmra.mxu0 %v6572
    %v6884 = vpop.f32.mrf.mxu0
    %v6885 = vadd.f32 0.0, %v6884
    %v6886 = vpop.f32.mrf.mxu0
    %v6887 = vadd.f32 0.0, %v6886
    %6888 = vmatmul.bf16.gmra.mxu0 %v6575
    %v6889 = vpop.f32.mrf.mxu0
    %v6890 = vadd.f32 0.0, %v6889
    %v6891 = vpop.f32.mrf.mxu0
    %v6892 = vadd.f32 0.0, %v6891
    %6893 = vmatmul.bf16.gmra.mxu0 %v6578
    %v6894 = vpop.f32.mrf.mxu0
    %v6895 = vadd.f32 0.0, %v6894
    %v6896 = vpop.f32.mrf.mxu0
    %v6897 = vadd.f32 0.0, %v6896
    %6898 = vmatmul.bf16.gmra.mxu0 %v6581
    %v6899 = vpop.f32.mrf.mxu0
    %v6900 = vadd.f32 0.0, %v6899
    %v6901 = vpop.f32.mrf.mxu0
    %v6902 = vadd.f32 0.0, %v6901
    %6903 = vmatmul.bf16.gmra.mxu0 %v6584
    %v6904 = vpop.f32.mrf.mxu0
    %v6905 = vadd.f32 0.0, %v6904
    %v6906 = vpop.f32.mrf.mxu0
    %v6907 = vadd.f32 0.0, %v6906
    %6908 = vmatmul.bf16.gmra.mxu0 %v6587
    %v6909 = vpop.f32.mrf.mxu0
    %v6910 = vadd.f32 0.0, %v6909
    %v6911 = vpop.f32.mrf.mxu0
    %v6912 = vadd.f32 0.0, %v6911
    %6913 = vmatmul.bf16.gmra.mxu0 %v6590
    %v6914 = vpop.f32.mrf.mxu0
    %v6915 = vadd.f32 0.0, %v6914
    %v6916 = vpop.f32.mrf.mxu0
    %v6917 = vadd.f32 0.0, %v6916
    %6918 = vmatmul.bf16.gmra.mxu0 %v6593
    %v6919 = vpop.f32.mrf.mxu0
    %v6920 = vadd.f32 0.0, %v6919
    %v6921 = vpop.f32.mrf.mxu0
    %v6922 = vadd.f32 0.0, %v6921
    %6923 = vdwg.mxu0
    %v6924 = vadd.f32 %v6050, %v6605
    %v6925 = vadd.f32 %v6051, %v6607
    %v6926 = vadd.f32 %v6052, %v6610
    %v6927 = vadd.f32 %v6053, %v6612
    %v6928 = vadd.f32 %v6054, %v6615
    %v6929 = vadd.f32 %v6055, %v6617
    %v6930 = vadd.f32 %v6056, %v6620
    %v6931 = vadd.f32 %v6057, %v6622
    %v6932 = vadd.f32 %v6058, %v6625
    %v6933 = vadd.f32 %v6059, %v6627
    %v6934 = vadd.f32 %v6060, %v6630
    %v6935 = vadd.f32 %v6061, %v6632
    %v6936 = vadd.f32 %v6062, %v6635
    %v6937 = vadd.f32 %v6063, %v6637
    %v6938 = vadd.f32 %v6064, %v6640
    %v6939 = vadd.f32 %v6065, %v6642
    %v6940 = vadd.f32 %v6066, %v6645
    %v6941 = vadd.f32 %v6067, %v6647
    %v6942 = vadd.f32 %v6068, %v6650
    %v6943 = vadd.f32 %v6069, %v6652
    %v6944 = vadd.f32 %v6070, %v6655
    %v6945 = vadd.f32 %v6071, %v6657
    %v6946 = vadd.f32 %v6072, %v6660
    %v6947 = vadd.f32 %v6073, %v6662
    %v6948 = vadd.f32 %v6074, %v6665
    %v6949 = vadd.f32 %v6075, %v6667
    %v6950 = vadd.f32 %v6076, %v6670
    %v6951 = vadd.f32 %v6077, %v6672
    %v6952 = vadd.f32 %v6078, %v6675
    %v6953 = vadd.f32 %v6079, %v6677
    %v6954 = vadd.f32 %v6080, %v6680
    %v6955 = vadd.f32 %v6081, %v6682
    %v6956 = vadd.f32 %v6082, %v6685
    %v6957 = vadd.f32 %v6083, %v6687
    %v6958 = vadd.f32 %v6084, %v6690
    %v6959 = vadd.f32 %v6085, %v6692
    %v6960 = vadd.f32 %v6086, %v6695
    %v6961 = vadd.f32 %v6087, %v6697
    %v6962 = vadd.f32 %v6088, %v6700
    %v6963 = vadd.f32 %v6089, %v6702
    %v6964 = vadd.f32 %v6090, %v6705
    %v6965 = vadd.f32 %v6091, %v6707
    %v6966 = vadd.f32 %v6092, %v6710
    %v6967 = vadd.f32 %v6093, %v6712
    %v6968 = vadd.f32 %v6094, %v6715
    %v6969 = vadd.f32 %v6095, %v6717
    %v6970 = vadd.f32 %v6096, %v6720
    %v6971 = vadd.f32 %v6097, %v6722
    %v6972 = vadd.f32 %v6098, %v6725
    %v6973 = vadd.f32 %v6099, %v6727
    %v6974 = vadd.f32 %v6100, %v6730
    %v6975 = vadd.f32 %v6101, %v6732
    %v6976 = vadd.f32 %v6102, %v6735
    %v6977 = vadd.f32 %v6103, %v6737
    %v6978 = vadd.f32 %v6104, %v6740
    %v6979 = vadd.f32 %v6105, %v6742
    %v6980 = vadd.f32 %v6106, %v6745
    %v6981 = vadd.f32 %v6107, %v6747
    %v6982 = vadd.f32 %v6108, %v6750
    %v6983 = vadd.f32 %v6109, %v6752
    %v6984 = vadd.f32 %v6110, %v6755
    %v6985 = vadd.f32 %v6111, %v6757
    %v6986 = vadd.f32 %v6112, %v6760
    %v6987 = vadd.f32 %v6113, %v6762
    %v6988 = vadd.f32 %v6114, %v6765
    %v6989 = vadd.f32 %v6115, %v6767
    %v6990 = vadd.f32 %v6116, %v6770
    %v6991 = vadd.f32 %v6117, %v6772
    %v6992 = vadd.f32 %v6118, %v6775
    %v6993 = vadd.f32 %v6119, %v6777
    %v6994 = vadd.f32 %v6120, %v6780
    %v6995 = vadd.f32 %v6121, %v6782
    %v6996 = vadd.f32 %v6122, %v6785
    %v6997 = vadd.f32 %v6123, %v6787
    %v6998 = vadd.f32 %v6124, %v6790
    %v6999 = vadd.f32 %v6125, %v6792
    %v7000 = vadd.f32 %v6126, %v6795
    %v7001 = vadd.f32 %v6127, %v6797
    %v7002 = vadd.f32 %v6128, %v6800
    %v7003 = vadd.f32 %v6129, %v6802
    %v7004 = vadd.f32 %v6130, %v6805
    %v7005 = vadd.f32 %v6131, %v6807
    %v7006 = vadd.f32 %v6132, %v6810
    %v7007 = vadd.f32 %v6133, %v6812
    %v7008 = vadd.f32 %v6134, %v6815
    %v7009 = vadd.f32 %v6135, %v6817
    %v7010 = vadd.f32 %v6136, %v6820
    %v7011 = vadd.f32 %v6137, %v6822
    %v7012 = vadd.f32 %v6138, %v6825
    %v7013 = vadd.f32 %v6139, %v6827
    %v7014 = vadd.f32 %v6140, %v6830
    %v7015 = vadd.f32 %v6141, %v6832
    %v7016 = vadd.f32 %v6142, %v6835
    %v7017 = vadd.f32 %v6143, %v6837
    %v7018 = vadd.f32 %v6144, %v6840
    %v7019 = vadd.f32 %v6145, %v6842
    %v7020 = vadd.f32 %v6146, %v6845
    %v7021 = vadd.f32 %v6147, %v6847
    %v7022 = vadd.f32 %v6148, %v6850
    %v7023 = vadd.f32 %v6149, %v6852
    %v7024 = vadd.f32 %v6150, %v6855
    %v7025 = vadd.f32 %v6151, %v6857
    %v7026 = vadd.f32 %v6152, %v6860
    %v7027 = vadd.f32 %v6153, %v6862
    %v7028 = vadd.f32 %v6154, %v6865
    %v7029 = vadd.f32 %v6155, %v6867
    %v7030 = vadd.f32 %v6156, %v6870
    %v7031 = vadd.f32 %v6157, %v6872
    %v7032 = vadd.f32 %v6158, %v6875
    %v7033 = vadd.f32 %v6159, %v6877
    %v7034 = vadd.f32 %v6160, %v6880
    %v7035 = vadd.f32 %v6161, %v6882
    %v7036 = vadd.f32 %v6162, %v6885
    %v7037 = vadd.f32 %v6163, %v6887
    %v7038 = vadd.f32 %v6164, %v6890
    %v7039 = vadd.f32 %v6165, %v6892
    %v7040 = vadd.f32 %v6166, %v6895
    %v7041 = vadd.f32 %v6167, %v6897
    %v7042 = vadd.f32 %v6168, %v6900
    %v7043 = vadd.f32 %v6169, %v6902
    %v7044 = vadd.f32 %v6170, %v6905
    %v7045 = vadd.f32 %v6171, %v6907
    %v7046 = vadd.f32 %v6172, %v6910
    %v7047 = vadd.f32 %v6173, %v6912
    %v7048 = vadd.f32 %v6174, %v6915
    %v7049 = vadd.f32 %v6175, %v6917
    %v7050 = vadd.f32 %v6176, %v6920
    %v7051 = vadd.f32 %v6177, %v6922
    %vm7052 = vmand %vm782, %vm910
    %vm7053 = vmand %vm783, %vm911
    %vm7054 = vmand %vm784, %vm912
    %vm7055 = vmand %vm785, %vm913
    %vm7056 = vmand %vm786, %vm914
    %vm7057 = vmand %vm787, %vm915
    %vm7058 = vmand %vm788, %vm916
    %vm7059 = vmand %vm789, %vm917
    %vm7060 = vmand %vm790, %vm918
    %vm7061 = vmand %vm791, %vm919
    %vm7062 = vmand %vm792, %vm920
    %vm7063 = vmand %vm793, %vm921
    %vm7064 = vmand %vm794, %vm922
    %vm7065 = vmand %vm795, %vm923
    %vm7066 = vmand %vm796, %vm924
    %vm7067 = vmand %vm797, %vm925
    %vm7068 = vmand %vm798, %vm926
    %vm7069 = vmand %vm799, %vm927
    %vm7070 = vmand %vm800, %vm928
    %vm7071 = vmand %vm801, %vm929
    %vm7072 = vmand %vm802, %vm930
    %vm7073 = vmand %vm803, %vm931
    %vm7074 = vmand %vm804, %vm932
    %vm7075 = vmand %vm805, %vm933
    %vm7076 = vmand %vm806, %vm934
    %vm7077 = vmand %vm807, %vm935
    %vm7078 = vmand %vm808, %vm936
    %vm7079 = vmand %vm809, %vm937
    %vm7080 = vmand %vm810, %vm938
    %vm7081 = vmand %vm811, %vm939
    %vm7082 = vmand %vm812, %vm940
    %vm7083 = vmand %vm813, %vm941
    %vm7084 = vmand %vm814, %vm942
    %vm7085 = vmand %vm815, %vm943
    %vm7086 = vmand %vm816, %vm944
    %vm7087 = vmand %vm817, %vm945
    %vm7088 = vmand %vm818, %vm946
    %vm7089 = vmand %vm819, %vm947
    %vm7090 = vmand %vm820, %vm948
    %vm7091 = vmand %vm821, %vm949
    %vm7092 = vmand %vm822, %vm950
    %vm7093 = vmand %vm823, %vm951
    %vm7094 = vmand %vm824, %vm952
    %vm7095 = vmand %vm825, %vm953
    %vm7096 = vmand %vm826, %vm954
    %vm7097 = vmand %vm827, %vm955
    %vm7098 = vmand %vm828, %vm956
    %vm7099 = vmand %vm829, %vm957
    %vm7100 = vmand %vm830, %vm958
    %vm7101 = vmand %vm831, %vm959
    %vm7102 = vmand %vm832, %vm960
    %vm7103 = vmand %vm833, %vm961
    %vm7104 = vmand %vm834, %vm962
    %vm7105 = vmand %vm835, %vm963
    %vm7106 = vmand %vm836, %vm964
    %vm7107 = vmand %vm837, %vm965
    %vm7108 = vmand %vm838, %vm966
    %vm7109 = vmand %vm839, %vm967
    %vm7110 = vmand %vm840, %vm968
    %vm7111 = vmand %vm841, %vm969
    %vm7112 = vmand %vm842, %vm970
    %vm7113 = vmand %vm843, %vm971
    %vm7114 = vmand %vm844, %vm972
    %vm7115 = vmand %vm845, %vm973
    %vm7116 = vmand %vm846, %vm974
    %vm7117 = vmand %vm847, %vm975
    %vm7118 = vmand %vm848, %vm976
    %vm7119 = vmand %vm849, %vm977
    %vm7120 = vmand %vm850, %vm978
    %vm7121 = vmand %vm851, %vm979
    %vm7122 = vmand %vm852, %vm980
    %vm7123 = vmand %vm853, %vm981
    %vm7124 = vmand %vm854, %vm982
    %vm7125 = vmand %vm855, %vm983
    %vm7126 = vmand %vm856, %vm984
    %vm7127 = vmand %vm857, %vm985
    %vm7128 = vmand %vm858, %vm986
    %vm7129 = vmand %vm859, %vm987
    %vm7130 = vmand %vm860, %vm988
    %vm7131 = vmand %vm861, %vm989
    %vm7132 = vmand %vm862, %vm990
    %vm7133 = vmand %vm863, %vm991
    %vm7134 = vmand %vm864, %vm992
    %vm7135 = vmand %vm865, %vm993
    %vm7136 = vmand %vm866, %vm994
    %vm7137 = vmand %vm867, %vm995
    %vm7138 = vmand %vm868, %vm996
    %vm7139 = vmand %vm869, %vm997
    %vm7140 = vmand %vm870, %vm998
    %vm7141 = vmand %vm871, %vm999
    %vm7142 = vmand %vm872, %vm1000
    %vm7143 = vmand %vm873, %vm1001
    %vm7144 = vmand %vm874, %vm1002
    %vm7145 = vmand %vm875, %vm1003
    %vm7146 = vmand %vm876, %vm1004
    %vm7147 = vmand %vm877, %vm1005
    %vm7148 = vmand %vm878, %vm1006
    %vm7149 = vmand %vm879, %vm1007
    %vm7150 = vmand %vm880, %vm1008
    %vm7151 = vmand %vm881, %vm1009
    %vm7152 = vmand %vm882, %vm1010
    %vm7153 = vmand %vm883, %vm1011
    %vm7154 = vmand %vm884, %vm1012
    %vm7155 = vmand %vm885, %vm1013
    %vm7156 = vmand %vm886, %vm1014
    %vm7157 = vmand %vm887, %vm1015
    %vm7158 = vmand %vm888, %vm1016
    %vm7159 = vmand %vm889, %vm1017
    %vm7160 = vmand %vm890, %vm1018
    %vm7161 = vmand %vm891, %vm1019
    %vm7162 = vmand %vm892, %vm1020
    %vm7163 = vmand %vm893, %vm1021
    %vm7164 = vmand %vm894, %vm1022
    %vm7165 = vmand %vm895, %vm1023
    %vm7166 = vmand %vm896, %vm1024
    %vm7167 = vmand %vm897, %vm1025
    %vm7168 = vmand %vm898, %vm1026
    %vm7169 = vmand %vm899, %vm1027
    %vm7170 = vmand %vm900, %vm1028
    %vm7171 = vmand %vm901, %vm1029
    %vm7172 = vmand %vm902, %vm1030
    %vm7173 = vmand %vm903, %vm1031
    %vm7174 = vmand %vm904, %vm1032
    %vm7175 = vmand %vm905, %vm1033
    %vm7176 = vmand %vm906, %vm1034
    %vm7177 = vmand %vm907, %vm1035
    %vm7178 = vmand %vm908, %vm1036
    %vm7179 = vmand %vm909, %vm1037
    %v7180 = vsel %vm7052, %v1420, 0.0
    %v7181 = vsel %vm7053, %v1419, 0.0
    %v7182 = vsel %vm7054, %v1418, 0.0
    %v7183 = vsel %vm7055, %v1417, 0.0
    %v7184 = vsel %vm7056, %v1416, 0.0
    %v7185 = vsel %vm7057, %v1415, 0.0
    %v7186 = vsel %vm7058, %v1414, 0.0
    %v7187 = vsel %vm7059, %v1413, 0.0
    %v7188 = vsel %vm7060, %v1412, 0.0
    %v7189 = vsel %vm7061, %v1411, 0.0
    %v7190 = vsel %vm7062, %v1410, 0.0
    %v7191 = vsel %vm7063, %v1409, 0.0
    %v7192 = vsel %vm7064, %v1408, 0.0
    %v7193 = vsel %vm7065, %v1407, 0.0
    %v7194 = vsel %vm7066, %v1406, 0.0
    %v7195 = vsel %vm7067, %v1405, 0.0
    %v7196 = vsel %vm7068, %v1404, 0.0
    %v7197 = vsel %vm7069, %v1403, 0.0
    %v7198 = vsel %vm7070, %v1402, 0.0
    %v7199 = vsel %vm7071, %v1401, 0.0
    %v7200 = vsel %vm7072, %v1400, 0.0
    %v7201 = vsel %vm7073, %v1399, 0.0
    %v7202 = vsel %vm7074, %v1398, 0.0
    %v7203 = vsel %vm7075, %v1397, 0.0
    %v7204 = vsel %vm7076, %v1396, 0.0
    %v7205 = vsel %vm7077, %v1395, 0.0
    %v7206 = vsel %vm7078, %v1394, 0.0
    %v7207 = vsel %vm7079, %v1393, 0.0
    %v7208 = vsel %vm7080, %v1392, 0.0
    %v7209 = vsel %vm7081, %v1391, 0.0
    %v7210 = vsel %vm7082, %v1390, 0.0
    %v7211 = vsel %vm7083, %v1389, 0.0
    %v7212 = vsel %vm7084, %v1388, 0.0
    %v7213 = vsel %vm7085, %v1387, 0.0
    %v7214 = vsel %vm7086, %v1386, 0.0
    %v7215 = vsel %vm7087, %v1385, 0.0
    %v7216 = vsel %vm7088, %v1384, 0.0
    %v7217 = vsel %vm7089, %v1383, 0.0
    %v7218 = vsel %vm7090, %v1382, 0.0
    %v7219 = vsel %vm7091, %v1381, 0.0
    %v7220 = vsel %vm7092, %v1380, 0.0
    %v7221 = vsel %vm7093, %v1379, 0.0
    %v7222 = vsel %vm7094, %v1378, 0.0
    %v7223 = vsel %vm7095, %v1377, 0.0
    %v7224 = vsel %vm7096, %v1376, 0.0
    %v7225 = vsel %vm7097, %v1375, 0.0
    %v7226 = vsel %vm7098, %v1374, 0.0
    %v7227 = vsel %vm7099, %v1373, 0.0
    %v7228 = vsel %vm7100, %v1372, 0.0
    %v7229 = vsel %vm7101, %v1371, 0.0
    %v7230 = vsel %vm7102, %v1370, 0.0
    %v7231 = vsel %vm7103, %v1369, 0.0
    %v7232 = vsel %vm7104, %v1368, 0.0
    %v7233 = vsel %vm7105, %v1367, 0.0
    %v7234 = vsel %vm7106, %v1366, 0.0
    %v7235 = vsel %vm7107, %v1365, 0.0
    %v7236 = vsel %vm7108, %v1364, 0.0
    %v7237 = vsel %vm7109, %v1363, 0.0
    %v7238 = vsel %vm7110, %v1362, 0.0
    %v7239 = vsel %vm7111, %v1361, 0.0
    %v7240 = vsel %vm7112, %v1360, 0.0
    %v7241 = vsel %vm7113, %v1359, 0.0
    %v7242 = vsel %vm7114, %v1358, 0.0
    %v7243 = vsel %vm7115, %v1357, 0.0
    %v7244 = vsel %vm7116, %v1356, 0.0
    %v7245 = vsel %vm7117, %v1355, 0.0
    %v7246 = vsel %vm7118, %v1354, 0.0
    %v7247 = vsel %vm7119, %v1353, 0.0
    %v7248 = vsel %vm7120, %v1352, 0.0
    %v7249 = vsel %vm7121, %v1351, 0.0
    %v7250 = vsel %vm7122, %v1350, 0.0
    %v7251 = vsel %vm7123, %v1349, 0.0
    %v7252 = vsel %vm7124, %v1348, 0.0
    %v7253 = vsel %vm7125, %v1347, 0.0
    %v7254 = vsel %vm7126, %v1346, 0.0
    %v7255 = vsel %vm7127, %v1345, 0.0
    %v7256 = vsel %vm7128, %v1344, 0.0
    %v7257 = vsel %vm7129, %v1343, 0.0
    %v7258 = vsel %vm7130, %v1342, 0.0
    %v7259 = vsel %vm7131, %v1341, 0.0
    %v7260 = vsel %vm7132, %v1340, 0.0
    %v7261 = vsel %vm7133, %v1339, 0.0
    %v7262 = vsel %vm7134, %v1338, 0.0
    %v7263 = vsel %vm7135, %v1337, 0.0
    %v7264 = vsel %vm7136, %v1336, 0.0
    %v7265 = vsel %vm7137, %v1335, 0.0
    %v7266 = vsel %vm7138, %v1334, 0.0
    %v7267 = vsel %vm7139, %v1333, 0.0
    %v7268 = vsel %vm7140, %v1332, 0.0
    %v7269 = vsel %vm7141, %v1331, 0.0
    %v7270 = vsel %vm7142, %v1330, 0.0
    %v7271 = vsel %vm7143, %v1329, 0.0
    %v7272 = vsel %vm7144, %v1328, 0.0
    %v7273 = vsel %vm7145, %v1327, 0.0
    %v7274 = vsel %vm7146, %v1326, 0.0
    %v7275 = vsel %vm7147, %v1325, 0.0
    %v7276 = vsel %vm7148, %v1324, 0.0
    %v7277 = vsel %vm7149, %v1323, 0.0
    %v7278 = vsel %vm7150, %v1322, 0.0
    %v7279 = vsel %vm7151, %v1321, 0.0
    %v7280 = vsel %vm7152, %v1320, 0.0
    %v7281 = vsel %vm7153, %v1319, 0.0
    %v7282 = vsel %vm7154, %v1318, 0.0
    %v7283 = vsel %vm7155, %v1317, 0.0
    %v7284 = vsel %vm7156, %v1316, 0.0
    %v7285 = vsel %vm7157, %v1315, 0.0
    %v7286 = vsel %vm7158, %v1314, 0.0
    %v7287 = vsel %vm7159, %v1313, 0.0
    %v7288 = vsel %vm7160, %v1312, 0.0
    %v7289 = vsel %vm7161, %v1311, 0.0
    %v7290 = vsel %vm7162, %v1310, 0.0
    %v7291 = vsel %vm7163, %v1309, 0.0
    %v7292 = vsel %vm7164, %v1308, 0.0
    %v7293 = vsel %vm7165, %v1307, 0.0
    %v7294 = vsel %vm7166, %v1306, 0.0
    %v7295 = vsel %vm7167, %v1305, 0.0
    %v7296 = vsel %vm7168, %v1304, 0.0
    %v7297 = vsel %vm7169, %v1303, 0.0
    %v7298 = vsel %vm7170, %v1302, 0.0
    %v7299 = vsel %vm7171, %v1301, 0.0
    %v7300 = vsel %vm7172, %v1300, 0.0
    %v7301 = vsel %vm7173, %v1299, 0.0
    %v7302 = vsel %vm7174, %v1298, 0.0
    %v7303 = vsel %vm7175, %v1297, 0.0
    %v7304 = vsel %vm7176, %v1296, 0.0
    %v7305 = vsel %vm7177, %v1295, 0.0
    %v7306 = vsel %vm7178, %v1422, 0.0
    %v7307 = vsel %vm7179, %v1421, 0.0
    %v7308 = vpack.c.bf16 %v7181, %v7180
    %v7309 = vpack.c.bf16 %v7183, %v7182
    %v7310 = vpack.c.bf16 %v7185, %v7184
    %v7311 = vpack.c.bf16 %v7187, %v7186
    %v7312 = vpack.c.bf16 %v7189, %v7188
    %v7313 = vpack.c.bf16 %v7191, %v7190
    %v7314 = vpack.c.bf16 %v7193, %v7192
    %v7315 = vpack.c.bf16 %v7195, %v7194
    %v7316 = vpack.c.bf16 %v7197, %v7196
    %v7317 = vpack.c.bf16 %v7199, %v7198
    %v7318 = vpack.c.bf16 %v7201, %v7200
    %v7319 = vpack.c.bf16 %v7203, %v7202
    %v7320 = vpack.c.bf16 %v7205, %v7204
    %v7321 = vpack.c.bf16 %v7207, %v7206
    %v7322 = vpack.c.bf16 %v7209, %v7208
    %v7323 = vpack.c.bf16 %v7211, %v7210
    %v7324 = vpack.c.bf16 %v7213, %v7212
    %v7325 = vpack.c.bf16 %v7215, %v7214
    %v7326 = vpack.c.bf16 %v7217, %v7216
    %v7327 = vpack.c.bf16 %v7219, %v7218
    %v7328 = vpack.c.bf16 %v7221, %v7220
    %v7329 = vpack.c.bf16 %v7223, %v7222
    %v7330 = vpack.c.bf16 %v7225, %v7224
    %v7331 = vpack.c.bf16 %v7227, %v7226
    %v7332 = vpack.c.bf16 %v7229, %v7228
    %v7333 = vpack.c.bf16 %v7231, %v7230
    %v7334 = vpack.c.bf16 %v7233, %v7232
    %v7335 = vpack.c.bf16 %v7235, %v7234
    %v7336 = vpack.c.bf16 %v7237, %v7236
    %v7337 = vpack.c.bf16 %v7239, %v7238
    %v7338 = vpack.c.bf16 %v7241, %v7240
    %v7339 = vpack.c.bf16 %v7243, %v7242
    %v7340 = vpack.c.bf16 %v7245, %v7244
    %v7341 = vpack.c.bf16 %v7247, %v7246
    %v7342 = vpack.c.bf16 %v7249, %v7248
    %v7343 = vpack.c.bf16 %v7251, %v7250
    %v7344 = vpack.c.bf16 %v7253, %v7252
    %v7345 = vpack.c.bf16 %v7255, %v7254
    %v7346 = vpack.c.bf16 %v7257, %v7256
    %v7347 = vpack.c.bf16 %v7259, %v7258
    %v7348 = vpack.c.bf16 %v7261, %v7260
    %v7349 = vpack.c.bf16 %v7263, %v7262
    %v7350 = vpack.c.bf16 %v7265, %v7264
    %v7351 = vpack.c.bf16 %v7267, %v7266
    %v7352 = vpack.c.bf16 %v7269, %v7268
    %v7353 = vpack.c.bf16 %v7271, %v7270
    %v7354 = vpack.c.bf16 %v7273, %v7272
    %v7355 = vpack.c.bf16 %v7275, %v7274
    %v7356 = vpack.c.bf16 %v7277, %v7276
    %v7357 = vpack.c.bf16 %v7279, %v7278
    %v7358 = vpack.c.bf16 %v7281, %v7280
    %v7359 = vpack.c.bf16 %v7283, %v7282
    %v7360 = vpack.c.bf16 %v7285, %v7284
    %v7361 = vpack.c.bf16 %v7287, %v7286
    %v7362 = vpack.c.bf16 %v7289, %v7288
    %v7363 = vpack.c.bf16 %v7291, %v7290
    %v7364 = vpack.c.bf16 %v7293, %v7292
    %v7365 = vpack.c.bf16 %v7295, %v7294
    %v7366 = vpack.c.bf16 %v7297, %v7296
    %v7367 = vpack.c.bf16 %v7299, %v7298
    %v7368 = vpack.c.bf16 %v7301, %v7300
    %v7369 = vpack.c.bf16 %v7303, %v7302
    %v7370 = vpack.c.bf16 %v7305, %v7304
    %v7371 = vpack.c.bf16 %v7307, %v7306
    %s7372 = scalar_lea.vmem %s1, 192
    %v7373 = vld [vmem:[%s7372] sm:$0xf]
    %v7374 = vld [vmem:[%s7372 + $0x4] sm:$0xf]
    %v7375 = vld [vmem:[%s7372 + $0x8] sm:$0xf]
    %v7376 = vld [vmem:[%s7372 + $0xc] sm:$0xf]
    %v7377 = vld [vmem:[%s7372 + $0x10] sm:$0xf]
    %v7378 = vld [vmem:[%s7372 + $0x14] sm:$0xf]
    %v7379 = vld [vmem:[%s7372 + $0x18] sm:$0xf]
    %v7380 = vld [vmem:[%s7372 + $0x1c] sm:$0xf]
    %v7389 = vunpack.c.l.b16 %v7373
    %v7390 = vunpack.c.l.b16 %v7374
    %v7391 = vunpack.c.l.b16 %v7375
    %v7392 = vunpack.c.l.b16 %v7376
    %v7393 = vunpack.c.l.b16 %v7377
    %v7394 = vunpack.c.l.b16 %v7378
    %v7395 = vunpack.c.l.b16 %v7379
    %v7396 = vunpack.c.l.b16 %v7380
    %v7397 = vpack.c.b16 %v7390, %v7389
    %v7398 = vpack.c.b16 %v7392, %v7391
    %v7399 = vpack.c.b16 %v7394, %v7393
    %v7400 = vpack.c.b16 %v7396, %v7395
    %v7406 = vsel %vm1775, %v7308, 0
    %v7409 = vsel %vm1775, %v7309, 0
    %v7412 = vsel %vm1775, %v7310, 0
    %v7415 = vsel %vm1775, %v7311, 0
    %v7418 = vsel %vm1775, %v7312, 0
    %v7421 = vsel %vm1775, %v7313, 0
    %v7424 = vsel %vm1775, %v7314, 0
    %v7427 = vsel %vm1775, %v7315, 0
    %v7430 = vsel %vm1775, %v7316, 0
    %v7433 = vsel %vm1775, %v7317, 0
    %v7436 = vsel %vm1775, %v7318, 0
    %v7439 = vsel %vm1775, %v7319, 0
    %v7442 = vsel %vm1775, %v7320, 0
    %v7445 = vsel %vm1775, %v7321, 0
    %v7448 = vsel %vm1775, %v7322, 0
    %v7451 = vsel %vm1775, %v7323, 0
    %v7454 = vsel %vm1775, %v7324, 0
    %v7457 = vsel %vm1775, %v7325, 0
    %v7460 = vsel %vm1775, %v7326, 0
    %v7463 = vsel %vm1775, %v7327, 0
    %v7466 = vsel %vm1775, %v7328, 0
    %v7469 = vsel %vm1775, %v7329, 0
    %v7472 = vsel %vm1775, %v7330, 0
    %v7475 = vsel %vm1775, %v7331, 0
    %v7478 = vsel %vm1775, %v7332, 0
    %v7481 = vsel %vm1775, %v7333, 0
    %v7484 = vsel %vm1775, %v7334, 0
    %v7487 = vsel %vm1775, %v7335, 0
    %v7490 = vsel %vm1775, %v7336, 0
    %v7493 = vsel %vm1775, %v7337, 0
    %v7496 = vsel %vm1775, %v7338, 0
    %v7499 = vsel %vm1775, %v7339, 0
    %v7502 = vsel %vm1775, %v7340, 0
    %v7505 = vsel %vm1775, %v7341, 0
    %v7508 = vsel %vm1775, %v7342, 0
    %v7511 = vsel %vm1775, %v7343, 0
    %v7514 = vsel %vm1775, %v7344, 0
    %v7517 = vsel %vm1775, %v7345, 0
    %v7520 = vsel %vm1775, %v7346, 0
    %v7523 = vsel %vm1775, %v7347, 0
    %v7526 = vsel %vm1775, %v7348, 0
    %v7529 = vsel %vm1775, %v7349, 0
    %v7532 = vsel %vm1775, %v7350, 0
    %v7535 = vsel %vm1775, %v7351, 0
    %v7538 = vsel %vm1775, %v7352, 0
    %v7541 = vsel %vm1775, %v7353, 0
    %v7544 = vsel %vm1775, %v7354, 0
    %v7547 = vsel %vm1775, %v7355, 0
    %v7550 = vsel %vm1775, %v7356, 0
    %v7553 = vsel %vm1775, %v7357, 0
    %v7556 = vsel %vm1775, %v7358, 0
    %v7559 = vsel %vm1775, %v7359, 0
    %v7562 = vsel %vm1775, %v7360, 0
    %v7565 = vsel %vm1775, %v7361, 0
    %v7568 = vsel %vm1775, %v7362, 0
    %v7571 = vsel %vm1775, %v7363, 0
    %v7574 = vsel %vm1775, %v7364, 0
    %v7577 = vsel %vm1775, %v7365, 0
    %v7580 = vsel %vm1775, %v7366, 0
    %v7583 = vsel %vm1775, %v7367, 0
    %v7586 = vsel %vm1775, %v7368, 0
    %v7589 = vsel %vm1775, %v7369, 0
    %v7592 = vsel %vm1775, %v7370, 0
    %v7595 = vsel %vm1775, %v7371, 0
    %7597 = vmatpush.bf16.msra.mxu0 0
    %7598 = vmatpush.bf16.msra.mxu0 0
    %7599 = vmatpush.bf16.msra.mxu0 0
    %7600 = vmatpush.bf16.msra.mxu0 0
    %7601 = vmatpush.bf16.msra.mxu0 %v7400
    %7602 = vmatpush.bf16.msra.mxu0 %v7399
    %7603 = vmatpush.bf16.msra.mxu0 %v7398
    %7604 = vmatpush.bf16.msra.mxu0 %v7397
    %7605 = vmatmul.bf16.gmra.mxu0 %v7406
    %v7606 = vpop.f32.mrf.mxu0
    %v7607 = vadd.f32 0.0, %v7606
    %v7608 = vpop.f32.mrf.mxu0
    %v7609 = vadd.f32 0.0, %v7608
    %7610 = vmatmul.bf16.gmra.mxu0 %v7409
    %v7611 = vpop.f32.mrf.mxu0
    %v7612 = vadd.f32 0.0, %v7611
    %v7613 = vpop.f32.mrf.mxu0
    %v7614 = vadd.f32 0.0, %v7613
    %7615 = vmatmul.bf16.gmra.mxu0 %v7412
    %v7616 = vpop.f32.mrf.mxu0
    %v7617 = vadd.f32 0.0, %v7616
    %v7618 = vpop.f32.mrf.mxu0
    %v7619 = vadd.f32 0.0, %v7618
    %7620 = vmatmul.bf16.gmra.mxu0 %v7415
    %v7621 = vpop.f32.mrf.mxu0
    %v7622 = vadd.f32 0.0, %v7621
    %v7623 = vpop.f32.mrf.mxu0
    %v7624 = vadd.f32 0.0, %v7623
    %7625 = vmatmul.bf16.gmra.mxu0 %v7418
    %v7626 = vpop.f32.mrf.mxu0
    %v7627 = vadd.f32 0.0, %v7626
    %v7628 = vpop.f32.mrf.mxu0
    %v7629 = vadd.f32 0.0, %v7628
    %7630 = vmatmul.bf16.gmra.mxu0 %v7421
    %v7631 = vpop.f32.mrf.mxu0
    %v7632 = vadd.f32 0.0, %v7631
    %v7633 = vpop.f32.mrf.mxu0
    %v7634 = vadd.f32 0.0, %v7633
    %7635 = vmatmul.bf16.gmra.mxu0 %v7424
    %v7636 = vpop.f32.mrf.mxu0
    %v7637 = vadd.f32 0.0, %v7636
    %v7638 = vpop.f32.mrf.mxu0
    %v7639 = vadd.f32 0.0, %v7638
    %7640 = vmatmul.bf16.gmra.mxu0 %v7427
    %v7641 = vpop.f32.mrf.mxu0
    %v7642 = vadd.f32 0.0, %v7641
    %v7643 = vpop.f32.mrf.mxu0
    %v7644 = vadd.f32 0.0, %v7643
    %7645 = vmatmul.bf16.gmra.mxu0 %v7430
    %v7646 = vpop.f32.mrf.mxu0
    %v7647 = vadd.f32 0.0, %v7646
    %v7648 = vpop.f32.mrf.mxu0
    %v7649 = vadd.f32 0.0, %v7648
    %7650 = vmatmul.bf16.gmra.mxu0 %v7433
    %v7651 = vpop.f32.mrf.mxu0
    %v7652 = vadd.f32 0.0, %v7651
    %v7653 = vpop.f32.mrf.mxu0
    %v7654 = vadd.f32 0.0, %v7653
    %7655 = vmatmul.bf16.gmra.mxu0 %v7436
    %v7656 = vpop.f32.mrf.mxu0
    %v7657 = vadd.f32 0.0, %v7656
    %v7658 = vpop.f32.mrf.mxu0
    %v7659 = vadd.f32 0.0, %v7658
    %7660 = vmatmul.bf16.gmra.mxu0 %v7439
    %v7661 = vpop.f32.mrf.mxu0
    %v7662 = vadd.f32 0.0, %v7661
    %v7663 = vpop.f32.mrf.mxu0
    %v7664 = vadd.f32 0.0, %v7663
    %7665 = vmatmul.bf16.gmra.mxu0 %v7442
    %v7666 = vpop.f32.mrf.mxu0
    %v7667 = vadd.f32 0.0, %v7666
    %v7668 = vpop.f32.mrf.mxu0
    %v7669 = vadd.f32 0.0, %v7668
    %7670 = vmatmul.bf16.gmra.mxu0 %v7445
    %v7671 = vpop.f32.mrf.mxu0
    %v7672 = vadd.f32 0.0, %v7671
    %v7673 = vpop.f32.mrf.mxu0
    %v7674 = vadd.f32 0.0, %v7673
    %7675 = vmatmul.bf16.gmra.mxu0 %v7448
    %v7676 = vpop.f32.mrf.mxu0
    %v7677 = vadd.f32 0.0, %v7676
    %v7678 = vpop.f32.mrf.mxu0
    %v7679 = vadd.f32 0.0, %v7678
    %7680 = vmatmul.bf16.gmra.mxu0 %v7451
    %v7681 = vpop.f32.mrf.mxu0
    %v7682 = vadd.f32 0.0, %v7681
    %v7683 = vpop.f32.mrf.mxu0
    %v7684 = vadd.f32 0.0, %v7683
    %7685 = vmatmul.bf16.gmra.mxu0 %v7454
    %v7686 = vpop.f32.mrf.mxu0
    %v7687 = vadd.f32 0.0, %v7686
    %v7688 = vpop.f32.mrf.mxu0
    %v7689 = vadd.f32 0.0, %v7688
    %7690 = vmatmul.bf16.gmra.mxu0 %v7457
    %v7691 = vpop.f32.mrf.mxu0
    %v7692 = vadd.f32 0.0, %v7691
    %v7693 = vpop.f32.mrf.mxu0
    %v7694 = vadd.f32 0.0, %v7693
    %7695 = vmatmul.bf16.gmra.mxu0 %v7460
    %v7696 = vpop.f32.mrf.mxu0
    %v7697 = vadd.f32 0.0, %v7696
    %v7698 = vpop.f32.mrf.mxu0
    %v7699 = vadd.f32 0.0, %v7698
    %7700 = vmatmul.bf16.gmra.mxu0 %v7463
    %v7701 = vpop.f32.mrf.mxu0
    %v7702 = vadd.f32 0.0, %v7701
    %v7703 = vpop.f32.mrf.mxu0
    %v7704 = vadd.f32 0.0, %v7703
    %7705 = vmatmul.bf16.gmra.mxu0 %v7466
    %v7706 = vpop.f32.mrf.mxu0
    %v7707 = vadd.f32 0.0, %v7706
    %v7708 = vpop.f32.mrf.mxu0
    %v7709 = vadd.f32 0.0, %v7708
    %7710 = vmatmul.bf16.gmra.mxu0 %v7469
    %v7711 = vpop.f32.mrf.mxu0
    %v7712 = vadd.f32 0.0, %v7711
    %v7713 = vpop.f32.mrf.mxu0
    %v7714 = vadd.f32 0.0, %v7713
    %7715 = vmatmul.bf16.gmra.mxu0 %v7472
    %v7716 = vpop.f32.mrf.mxu0
    %v7717 = vadd.f32 0.0, %v7716
    %v7718 = vpop.f32.mrf.mxu0
    %v7719 = vadd.f32 0.0, %v7718
    %7720 = vmatmul.bf16.gmra.mxu0 %v7475
    %v7721 = vpop.f32.mrf.mxu0
    %v7722 = vadd.f32 0.0, %v7721
    %v7723 = vpop.f32.mrf.mxu0
    %v7724 = vadd.f32 0.0, %v7723
    %7725 = vmatmul.bf16.gmra.mxu0 %v7478
    %v7726 = vpop.f32.mrf.mxu0
    %v7727 = vadd.f32 0.0, %v7726
    %v7728 = vpop.f32.mrf.mxu0
    %v7729 = vadd.f32 0.0, %v7728
    %7730 = vmatmul.bf16.gmra.mxu0 %v7481
    %v7731 = vpop.f32.mrf.mxu0
    %v7732 = vadd.f32 0.0, %v7731
    %v7733 = vpop.f32.mrf.mxu0
    %v7734 = vadd.f32 0.0, %v7733
    %7735 = vmatmul.bf16.gmra.mxu0 %v7484
    %v7736 = vpop.f32.mrf.mxu0
    %v7737 = vadd.f32 0.0, %v7736
    %v7738 = vpop.f32.mrf.mxu0
    %v7739 = vadd.f32 0.0, %v7738
    %7740 = vmatmul.bf16.gmra.mxu0 %v7487
    %v7741 = vpop.f32.mrf.mxu0
    %v7742 = vadd.f32 0.0, %v7741
    %v7743 = vpop.f32.mrf.mxu0
    %v7744 = vadd.f32 0.0, %v7743
    %7745 = vmatmul.bf16.gmra.mxu0 %v7490
    %v7746 = vpop.f32.mrf.mxu0
    %v7747 = vadd.f32 0.0, %v7746
    %v7748 = vpop.f32.mrf.mxu0
    %v7749 = vadd.f32 0.0, %v7748
    %7750 = vmatmul.bf16.gmra.mxu0 %v7493
    %v7751 = vpop.f32.mrf.mxu0
    %v7752 = vadd.f32 0.0, %v7751
    %v7753 = vpop.f32.mrf.mxu0
    %v7754 = vadd.f32 0.0, %v7753
    %7755 = vmatmul.bf16.gmra.mxu0 %v7496
    %v7756 = vpop.f32.mrf.mxu0
    %v7757 = vadd.f32 0.0, %v7756
    %v7758 = vpop.f32.mrf.mxu0
    %v7759 = vadd.f32 0.0, %v7758
    %7760 = vmatmul.bf16.gmra.mxu0 %v7499
    %v7761 = vpop.f32.mrf.mxu0
    %v7762 = vadd.f32 0.0, %v7761
    %v7763 = vpop.f32.mrf.mxu0
    %v7764 = vadd.f32 0.0, %v7763
    %7765 = vmatmul.bf16.gmra.mxu0 %v7502
    %v7766 = vpop.f32.mrf.mxu0
    %v7767 = vadd.f32 0.0, %v7766
    %v7768 = vpop.f32.mrf.mxu0
    %v7769 = vadd.f32 0.0, %v7768
    %7770 = vmatmul.bf16.gmra.mxu0 %v7505
    %v7771 = vpop.f32.mrf.mxu0
    %v7772 = vadd.f32 0.0, %v7771
    %v7773 = vpop.f32.mrf.mxu0
    %v7774 = vadd.f32 0.0, %v7773
    %7775 = vmatmul.bf16.gmra.mxu0 %v7508
    %v7776 = vpop.f32.mrf.mxu0
    %v7777 = vadd.f32 0.0, %v7776
    %v7778 = vpop.f32.mrf.mxu0
    %v7779 = vadd.f32 0.0, %v7778
    %7780 = vmatmul.bf16.gmra.mxu0 %v7511
    %v7781 = vpop.f32.mrf.mxu0
    %v7782 = vadd.f32 0.0, %v7781
    %v7783 = vpop.f32.mrf.mxu0
    %v7784 = vadd.f32 0.0, %v7783
    %7785 = vmatmul.bf16.gmra.mxu0 %v7514
    %v7786 = vpop.f32.mrf.mxu0
    %v7787 = vadd.f32 0.0, %v7786
    %v7788 = vpop.f32.mrf.mxu0
    %v7789 = vadd.f32 0.0, %v7788
    %7790 = vmatmul.bf16.gmra.mxu0 %v7517
    %v7791 = vpop.f32.mrf.mxu0
    %v7792 = vadd.f32 0.0, %v7791
    %v7793 = vpop.f32.mrf.mxu0
    %v7794 = vadd.f32 0.0, %v7793
    %7795 = vmatmul.bf16.gmra.mxu0 %v7520
    %v7796 = vpop.f32.mrf.mxu0
    %v7797 = vadd.f32 0.0, %v7796
    %v7798 = vpop.f32.mrf.mxu0
    %v7799 = vadd.f32 0.0, %v7798
    %7800 = vmatmul.bf16.gmra.mxu0 %v7523
    %v7801 = vpop.f32.mrf.mxu0
    %v7802 = vadd.f32 0.0, %v7801
    %v7803 = vpop.f32.mrf.mxu0
    %v7804 = vadd.f32 0.0, %v7803
    %7805 = vmatmul.bf16.gmra.mxu0 %v7526
    %v7806 = vpop.f32.mrf.mxu0
    %v7807 = vadd.f32 0.0, %v7806
    %v7808 = vpop.f32.mrf.mxu0
    %v7809 = vadd.f32 0.0, %v7808
    %7810 = vmatmul.bf16.gmra.mxu0 %v7529
    %v7811 = vpop.f32.mrf.mxu0
    %v7812 = vadd.f32 0.0, %v7811
    %v7813 = vpop.f32.mrf.mxu0
    %v7814 = vadd.f32 0.0, %v7813
    %7815 = vmatmul.bf16.gmra.mxu0 %v7532
    %v7816 = vpop.f32.mrf.mxu0
    %v7817 = vadd.f32 0.0, %v7816
    %v7818 = vpop.f32.mrf.mxu0
    %v7819 = vadd.f32 0.0, %v7818
    %7820 = vmatmul.bf16.gmra.mxu0 %v7535
    %v7821 = vpop.f32.mrf.mxu0
    %v7822 = vadd.f32 0.0, %v7821
    %v7823 = vpop.f32.mrf.mxu0
    %v7824 = vadd.f32 0.0, %v7823
    %7825 = vmatmul.bf16.gmra.mxu0 %v7538
    %v7826 = vpop.f32.mrf.mxu0
    %v7827 = vadd.f32 0.0, %v7826
    %v7828 = vpop.f32.mrf.mxu0
    %v7829 = vadd.f32 0.0, %v7828
    %7830 = vmatmul.bf16.gmra.mxu0 %v7541
    %v7831 = vpop.f32.mrf.mxu0
    %v7832 = vadd.f32 0.0, %v7831
    %v7833 = vpop.f32.mrf.mxu0
    %v7834 = vadd.f32 0.0, %v7833
    %7835 = vmatmul.bf16.gmra.mxu0 %v7544
    %v7836 = vpop.f32.mrf.mxu0
    %v7837 = vadd.f32 0.0, %v7836
    %v7838 = vpop.f32.mrf.mxu0
    %v7839 = vadd.f32 0.0, %v7838
    %7840 = vmatmul.bf16.gmra.mxu0 %v7547
    %v7841 = vpop.f32.mrf.mxu0
    %v7842 = vadd.f32 0.0, %v7841
    %v7843 = vpop.f32.mrf.mxu0
    %v7844 = vadd.f32 0.0, %v7843
    %7845 = vmatmul.bf16.gmra.mxu0 %v7550
    %v7846 = vpop.f32.mrf.mxu0
    %v7847 = vadd.f32 0.0, %v7846
    %v7848 = vpop.f32.mrf.mxu0
    %v7849 = vadd.f32 0.0, %v7848
    %7850 = vmatmul.bf16.gmra.mxu0 %v7553
    %v7851 = vpop.f32.mrf.mxu0
    %v7852 = vadd.f32 0.0, %v7851
    %v7853 = vpop.f32.mrf.mxu0
    %v7854 = vadd.f32 0.0, %v7853
    %7855 = vmatmul.bf16.gmra.mxu0 %v7556
    %v7856 = vpop.f32.mrf.mxu0
    %v7857 = vadd.f32 0.0, %v7856
    %v7858 = vpop.f32.mrf.mxu0
    %v7859 = vadd.f32 0.0, %v7858
    %7860 = vmatmul.bf16.gmra.mxu0 %v7559
    %v7861 = vpop.f32.mrf.mxu0
    %v7862 = vadd.f32 0.0, %v7861
    %v7863 = vpop.f32.mrf.mxu0
    %v7864 = vadd.f32 0.0, %v7863
    %7865 = vmatmul.bf16.gmra.mxu0 %v7562
    %v7866 = vpop.f32.mrf.mxu0
    %v7867 = vadd.f32 0.0, %v7866
    %v7868 = vpop.f32.mrf.mxu0
    %v7869 = vadd.f32 0.0, %v7868
    %7870 = vmatmul.bf16.gmra.mxu0 %v7565
    %v7871 = vpop.f32.mrf.mxu0
    %v7872 = vadd.f32 0.0, %v7871
    %v7873 = vpop.f32.mrf.mxu0
    %v7874 = vadd.f32 0.0, %v7873
    %7875 = vmatmul.bf16.gmra.mxu0 %v7568
    %v7876 = vpop.f32.mrf.mxu0
    %v7877 = vadd.f32 0.0, %v7876
    %v7878 = vpop.f32.mrf.mxu0
    %v7879 = vadd.f32 0.0, %v7878
    %7880 = vmatmul.bf16.gmra.mxu0 %v7571
    %v7881 = vpop.f32.mrf.mxu0
    %v7882 = vadd.f32 0.0, %v7881
    %v7883 = vpop.f32.mrf.mxu0
    %v7884 = vadd.f32 0.0, %v7883
    %7885 = vmatmul.bf16.gmra.mxu0 %v7574
    %v7886 = vpop.f32.mrf.mxu0
    %v7887 = vadd.f32 0.0, %v7886
    %v7888 = vpop.f32.mrf.mxu0
    %v7889 = vadd.f32 0.0, %v7888
    %7890 = vmatmul.bf16.gmra.mxu0 %v7577
    %v7891 = vpop.f32.mrf.mxu0
    %v7892 = vadd.f32 0.0, %v7891
    %v7893 = vpop.f32.mrf.mxu0
    %v7894 = vadd.f32 0.0, %v7893
    %7895 = vmatmul.bf16.gmra.mxu0 %v7580
    %v7896 = vpop.f32.mrf.mxu0
    %v7897 = vadd.f32 0.0, %v7896
    %v7898 = vpop.f32.mrf.mxu0
    %v7899 = vadd.f32 0.0, %v7898
    %7900 = vmatmul.bf16.gmra.mxu0 %v7583
    %v7901 = vpop.f32.mrf.mxu0
    %v7902 = vadd.f32 0.0, %v7901
    %v7903 = vpop.f32.mrf.mxu0
    %v7904 = vadd.f32 0.0, %v7903
    %7905 = vmatmul.bf16.gmra.mxu0 %v7586
    %v7906 = vpop.f32.mrf.mxu0
    %v7907 = vadd.f32 0.0, %v7906
    %v7908 = vpop.f32.mrf.mxu0
    %v7909 = vadd.f32 0.0, %v7908
    %7910 = vmatmul.bf16.gmra.mxu0 %v7589
    %v7911 = vpop.f32.mrf.mxu0
    %v7912 = vadd.f32 0.0, %v7911
    %v7913 = vpop.f32.mrf.mxu0
    %v7914 = vadd.f32 0.0, %v7913
    %7915 = vmatmul.bf16.gmra.mxu0 %v7592
    %v7916 = vpop.f32.mrf.mxu0
    %v7917 = vadd.f32 0.0, %v7916
    %v7918 = vpop.f32.mrf.mxu0
    %v7919 = vadd.f32 0.0, %v7918
    %7920 = vmatmul.bf16.gmra.mxu0 %v7595
    %v7921 = vpop.f32.mrf.mxu0
    %v7922 = vadd.f32 0.0, %v7921
    %v7923 = vpop.f32.mrf.mxu0
    %v7924 = vadd.f32 0.0, %v7923
    %7925 = vdwg.mxu0
    %v7926 = vadd.f32 %v6924, %v7607
    %v7927 = vadd.f32 %v6925, %v7609
    %v7928 = vadd.f32 %v6926, %v7612
    %v7929 = vadd.f32 %v6927, %v7614
    %v7930 = vadd.f32 %v6928, %v7617
    %v7931 = vadd.f32 %v6929, %v7619
    %v7932 = vadd.f32 %v6930, %v7622
    %v7933 = vadd.f32 %v6931, %v7624
    %v7934 = vadd.f32 %v6932, %v7627
    %v7935 = vadd.f32 %v6933, %v7629
    %v7936 = vadd.f32 %v6934, %v7632
    %v7937 = vadd.f32 %v6935, %v7634
    %v7938 = vadd.f32 %v6936, %v7637
    %v7939 = vadd.f32 %v6937, %v7639
    %v7940 = vadd.f32 %v6938, %v7642
    %v7941 = vadd.f32 %v6939, %v7644
    %v7942 = vadd.f32 %v6940, %v7647
    %v7943 = vadd.f32 %v6941, %v7649
    %v7944 = vadd.f32 %v6942, %v7652
    %v7945 = vadd.f32 %v6943, %v7654
    %v7946 = vadd.f32 %v6944, %v7657
    %v7947 = vadd.f32 %v6945, %v7659
    %v7948 = vadd.f32 %v6946, %v7662
    %v7949 = vadd.f32 %v6947, %v7664
    %v7950 = vadd.f32 %v6948, %v7667
    %v7951 = vadd.f32 %v6949, %v7669
    %v7952 = vadd.f32 %v6950, %v7672
    %v7953 = vadd.f32 %v6951, %v7674
    %v7954 = vadd.f32 %v6952, %v7677
    %v7955 = vadd.f32 %v6953, %v7679
    %v7956 = vadd.f32 %v6954, %v7682
    %v7957 = vadd.f32 %v6955, %v7684
    %v7958 = vadd.f32 %v6956, %v7687
    %v7959 = vadd.f32 %v6957, %v7689
    %v7960 = vadd.f32 %v6958, %v7692
    %v7961 = vadd.f32 %v6959, %v7694
    %v7962 = vadd.f32 %v6960, %v7697
    %v7963 = vadd.f32 %v6961, %v7699
    %v7964 = vadd.f32 %v6962, %v7702
    %v7965 = vadd.f32 %v6963, %v7704
    %v7966 = vadd.f32 %v6964, %v7707
    %v7967 = vadd.f32 %v6965, %v7709
    %v7968 = vadd.f32 %v6966, %v7712
    %v7969 = vadd.f32 %v6967, %v7714
    %v7970 = vadd.f32 %v6968, %v7717
    %v7971 = vadd.f32 %v6969, %v7719
    %v7972 = vadd.f32 %v6970, %v7722
    %v7973 = vadd.f32 %v6971, %v7724
    %v7974 = vadd.f32 %v6972, %v7727
    %v7975 = vadd.f32 %v6973, %v7729
    %v7976 = vadd.f32 %v6974, %v7732
    %v7977 = vadd.f32 %v6975, %v7734
    %v7978 = vadd.f32 %v6976, %v7737
    %v7979 = vadd.f32 %v6977, %v7739
    %v7980 = vadd.f32 %v6978, %v7742
    %v7981 = vadd.f32 %v6979, %v7744
    %v7982 = vadd.f32 %v6980, %v7747
    %v7983 = vadd.f32 %v6981, %v7749
    %v7984 = vadd.f32 %v6982, %v7752
    %v7985 = vadd.f32 %v6983, %v7754
    %v7986 = vadd.f32 %v6984, %v7757
    %v7987 = vadd.f32 %v6985, %v7759
    %v7988 = vadd.f32 %v6986, %v7762
    %v7989 = vadd.f32 %v6987, %v7764
    %v7990 = vadd.f32 %v6988, %v7767
    %v7991 = vadd.f32 %v6989, %v7769
    %v7992 = vadd.f32 %v6990, %v7772
    %v7993 = vadd.f32 %v6991, %v7774
    %v7994 = vadd.f32 %v6992, %v7777
    %v7995 = vadd.f32 %v6993, %v7779
    %v7996 = vadd.f32 %v6994, %v7782
    %v7997 = vadd.f32 %v6995, %v7784
    %v7998 = vadd.f32 %v6996, %v7787
    %v7999 = vadd.f32 %v6997, %v7789
    %v8000 = vadd.f32 %v6998, %v7792
    %v8001 = vadd.f32 %v6999, %v7794
    %v8002 = vadd.f32 %v7000, %v7797
    %v8003 = vadd.f32 %v7001, %v7799
    %v8004 = vadd.f32 %v7002, %v7802
    %v8005 = vadd.f32 %v7003, %v7804
    %v8006 = vadd.f32 %v7004, %v7807
    %v8007 = vadd.f32 %v7005, %v7809
    %v8008 = vadd.f32 %v7006, %v7812
    %v8009 = vadd.f32 %v7007, %v7814
    %v8010 = vadd.f32 %v7008, %v7817
    %v8011 = vadd.f32 %v7009, %v7819
    %v8012 = vadd.f32 %v7010, %v7822
    %v8013 = vadd.f32 %v7011, %v7824
    %v8014 = vadd.f32 %v7012, %v7827
    %v8015 = vadd.f32 %v7013, %v7829
    %v8016 = vadd.f32 %v7014, %v7832
    %v8017 = vadd.f32 %v7015, %v7834
    %v8018 = vadd.f32 %v7016, %v7837
    %v8019 = vadd.f32 %v7017, %v7839
    %v8020 = vadd.f32 %v7018, %v7842
    %v8021 = vadd.f32 %v7019, %v7844
    %v8022 = vadd.f32 %v7020, %v7847
    %v8023 = vadd.f32 %v7021, %v7849
    %v8024 = vadd.f32 %v7022, %v7852
    %v8025 = vadd.f32 %v7023, %v7854
    %v8026 = vadd.f32 %v7024, %v7857
    %v8027 = vadd.f32 %v7025, %v7859
    %v8028 = vadd.f32 %v7026, %v7862
    %v8029 = vadd.f32 %v7027, %v7864
    %v8030 = vadd.f32 %v7028, %v7867
    %v8031 = vadd.f32 %v7029, %v7869
    %v8032 = vadd.f32 %v7030, %v7872
    %v8033 = vadd.f32 %v7031, %v7874
    %v8034 = vadd.f32 %v7032, %v7877
    %v8035 = vadd.f32 %v7033, %v7879
    %v8036 = vadd.f32 %v7034, %v7882
    %v8037 = vadd.f32 %v7035, %v7884
    %v8038 = vadd.f32 %v7036, %v7887
    %v8039 = vadd.f32 %v7037, %v7889
    %v8040 = vadd.f32 %v7038, %v7892
    %v8041 = vadd.f32 %v7039, %v7894
    %v8042 = vadd.f32 %v7040, %v7897
    %v8043 = vadd.f32 %v7041, %v7899
    %v8044 = vadd.f32 %v7042, %v7902
    %v8045 = vadd.f32 %v7043, %v7904
    %v8046 = vadd.f32 %v7044, %v7907
    %v8047 = vadd.f32 %v7045, %v7909
    %v8048 = vadd.f32 %v7046, %v7912
    %v8049 = vadd.f32 %v7047, %v7914
    %v8050 = vadd.f32 %v7048, %v7917
    %v8051 = vadd.f32 %v7049, %v7919
    %v8052 = vadd.f32 %v7050, %v7922
    %v8053 = vadd.f32 %v7051, %v7924
    %v8054 = vsel %vm782, %v15, 0.0
    %v8055 = vsel %vm783, %v16, 0.0
    %v8056 = vsel %vm784, %v17, 0.0
    %v8057 = vsel %vm785, %v18, 0.0
    %v8058 = vsel %vm786, %v19, 0.0
    %v8059 = vsel %vm787, %v20, 0.0
    %v8060 = vsel %vm788, %v21, 0.0
    %v8061 = vsel %vm789, %v22, 0.0
    %v8062 = vsel %vm790, %v23, 0.0
    %v8063 = vsel %vm791, %v24, 0.0
    %v8064 = vsel %vm792, %v25, 0.0
    %v8065 = vsel %vm793, %v26, 0.0
    %v8066 = vsel %vm794, %v27, 0.0
    %v8067 = vsel %vm795, %v28, 0.0
    %v8068 = vsel %vm796, %v29, 0.0
    %v8069 = vsel %vm797, %v30, 0.0
    %v8070 = vsel %vm798, %v31, 0.0
    %v8071 = vsel %vm799, %v32, 0.0
    %v8072 = vsel %vm800, %v33, 0.0
    %v8073 = vsel %vm801, %v34, 0.0
    %v8074 = vsel %vm802, %v35, 0.0
    %v8075 = vsel %vm803, %v36, 0.0
    %v8076 = vsel %vm804, %v37, 0.0
    %v8077 = vsel %vm805, %v38, 0.0
    %v8078 = vsel %vm806, %v39, 0.0
    %v8079 = vsel %vm807, %v40, 0.0
    %v8080 = vsel %vm808, %v41, 0.0
    %v8081 = vsel %vm809, %v42, 0.0
    %v8082 = vsel %vm810, %v43, 0.0
    %v8083 = vsel %vm811, %v44, 0.0
    %v8084 = vsel %vm812, %v45, 0.0
    %v8085 = vsel %vm813, %v46, 0.0
    %v8086 = vsel %vm814, %v47, 0.0
    %v8087 = vsel %vm815, %v48, 0.0
    %v8088 = vsel %vm816, %v49, 0.0
    %v8089 = vsel %vm817, %v50, 0.0
    %v8090 = vsel %vm818, %v51, 0.0
    %v8091 = vsel %vm819, %v52, 0.0
    %v8092 = vsel %vm820, %v53, 0.0
    %v8093 = vsel %vm821, %v54, 0.0
    %v8094 = vsel %vm822, %v55, 0.0
    %v8095 = vsel %vm823, %v56, 0.0
    %v8096 = vsel %vm824, %v57, 0.0
    %v8097 = vsel %vm825, %v58, 0.0
    %v8098 = vsel %vm826, %v59, 0.0
    %v8099 = vsel %vm827, %v60, 0.0
    %v8100 = vsel %vm828, %v61, 0.0
    %v8101 = vsel %vm829, %v62, 0.0
    %v8102 = vsel %vm830, %v63, 0.0
    %v8103 = vsel %vm831, %v64, 0.0
    %v8104 = vsel %vm832, %v65, 0.0
    %v8105 = vsel %vm833, %v66, 0.0
    %v8106 = vsel %vm834, %v67, 0.0
    %v8107 = vsel %vm835, %v68, 0.0
    %v8108 = vsel %vm836, %v69, 0.0
    %v8109 = vsel %vm837, %v70, 0.0
    %v8110 = vsel %vm838, %v71, 0.0
    %v8111 = vsel %vm839, %v72, 0.0
    %v8112 = vsel %vm840, %v73, 0.0
    %v8113 = vsel %vm841, %v74, 0.0
    %v8114 = vsel %vm842, %v75, 0.0
    %v8115 = vsel %vm843, %v76, 0.0
    %v8116 = vsel %vm844, %v77, 0.0
    %v8117 = vsel %vm845, %v78, 0.0
    %v8118 = vsel %vm846, %v79, 0.0
    %v8119 = vsel %vm847, %v80, 0.0
    %v8120 = vsel %vm848, %v81, 0.0
    %v8121 = vsel %vm849, %v82, 0.0
    %v8122 = vsel %vm850, %v83, 0.0
    %v8123 = vsel %vm851, %v84, 0.0
    %v8124 = vsel %vm852, %v85, 0.0
    %v8125 = vsel %vm853, %v86, 0.0
    %v8126 = vsel %vm854, %v87, 0.0
    %v8127 = vsel %vm855, %v88, 0.0
    %v8128 = vsel %vm856, %v89, 0.0
    %v8129 = vsel %vm857, %v90, 0.0
    %v8130 = vsel %vm858, %v91, 0.0
    %v8131 = vsel %vm859, %v92, 0.0
    %v8132 = vsel %vm860, %v93, 0.0
    %v8133 = vsel %vm861, %v94, 0.0
    %v8134 = vsel %vm862, %v95, 0.0
    %v8135 = vsel %vm863, %v96, 0.0
    %v8136 = vsel %vm864, %v97, 0.0
    %v8137 = vsel %vm865, %v98, 0.0
    %v8138 = vsel %vm866, %v99, 0.0
    %v8139 = vsel %vm867, %v100, 0.0
    %v8140 = vsel %vm868, %v101, 0.0
    %v8141 = vsel %vm869, %v102, 0.0
    %v8142 = vsel %vm870, %v103, 0.0
    %v8143 = vsel %vm871, %v104, 0.0
    %v8144 = vsel %vm872, %v105, 0.0
    %v8145 = vsel %vm873, %v106, 0.0
    %v8146 = vsel %vm874, %v107, 0.0
    %v8147 = vsel %vm875, %v108, 0.0
    %v8148 = vsel %vm876, %v109, 0.0
    %v8149 = vsel %vm877, %v110, 0.0
    %v8150 = vsel %vm878, %v111, 0.0
    %v8151 = vsel %vm879, %v112, 0.0
    %v8152 = vsel %vm880, %v113, 0.0
    %v8153 = vsel %vm881, %v114, 0.0
    %v8154 = vsel %vm882, %v115, 0.0
    %v8155 = vsel %vm883, %v116, 0.0
    %v8156 = vsel %vm884, %v117, 0.0
    %v8157 = vsel %vm885, %v118, 0.0
    %v8158 = vsel %vm886, %v119, 0.0
    %v8159 = vsel %vm887, %v120, 0.0
    %v8160 = vsel %vm888, %v121, 0.0
    %v8161 = vsel %vm889, %v122, 0.0
    %v8162 = vsel %vm890, %v123, 0.0
    %v8163 = vsel %vm891, %v124, 0.0
    %v8164 = vsel %vm892, %v125, 0.0
    %v8165 = vsel %vm893, %v126, 0.0
    %v8166 = vsel %vm894, %v127, 0.0
    %v8167 = vsel %vm895, %v128, 0.0
    %v8168 = vsel %vm896, %v129, 0.0
    %v8169 = vsel %vm897, %v130, 0.0
    %v8170 = vsel %vm898, %v131, 0.0
    %v8171 = vsel %vm899, %v132, 0.0
    %v8172 = vsel %vm900, %v133, 0.0
    %v8173 = vsel %vm901, %v134, 0.0
    %v8174 = vsel %vm902, %v135, 0.0
    %v8175 = vsel %vm903, %v136, 0.0
    %v8176 = vsel %vm904, %v137, 0.0
    %v8177 = vsel %vm905, %v138, 0.0
    %v8178 = vsel %vm906, %v139, 0.0
    %v8179 = vsel %vm907, %v140, 0.0
    %v8180 = vsel %vm908, %v13, 0.0
    %v8181 = vsel %vm909, %v14, 0.0
    %v8182 = vpack.c.bf16 %v8055, %v8054
    %v8183 = vpack.c.bf16 %v8057, %v8056
    %v8184 = vpack.c.bf16 %v8059, %v8058
    %v8185 = vpack.c.bf16 %v8061, %v8060
    %v8186 = vpack.c.bf16 %v8063, %v8062
    %v8187 = vpack.c.bf16 %v8065, %v8064
    %v8188 = vpack.c.bf16 %v8067, %v8066
    %v8189 = vpack.c.bf16 %v8069, %v8068
    %v8190 = vpack.c.bf16 %v8071, %v8070
    %v8191 = vpack.c.bf16 %v8073, %v8072
    %v8192 = vpack.c.bf16 %v8075, %v8074
    %v8193 = vpack.c.bf16 %v8077, %v8076
    %v8194 = vpack.c.bf16 %v8079, %v8078
    %v8195 = vpack.c.bf16 %v8081, %v8080
    %v8196 = vpack.c.bf16 %v8083, %v8082
    %v8197 = vpack.c.bf16 %v8085, %v8084
    %v8198 = vpack.c.bf16 %v8087, %v8086
    %v8199 = vpack.c.bf16 %v8089, %v8088
    %v8200 = vpack.c.bf16 %v8091, %v8090
    %v8201 = vpack.c.bf16 %v8093, %v8092
    %v8202 = vpack.c.bf16 %v8095, %v8094
    %v8203 = vpack.c.bf16 %v8097, %v8096
    %v8204 = vpack.c.bf16 %v8099, %v8098
    %v8205 = vpack.c.bf16 %v8101, %v8100
    %v8206 = vpack.c.bf16 %v8103, %v8102
    %v8207 = vpack.c.bf16 %v8105, %v8104
    %v8208 = vpack.c.bf16 %v8107, %v8106
    %v8209 = vpack.c.bf16 %v8109, %v8108
    %v8210 = vpack.c.bf16 %v8111, %v8110
    %v8211 = vpack.c.bf16 %v8113, %v8112
    %v8212 = vpack.c.bf16 %v8115, %v8114
    %v8213 = vpack.c.bf16 %v8117, %v8116
    %v8214 = vpack.c.bf16 %v8119, %v8118
    %v8215 = vpack.c.bf16 %v8121, %v8120
    %v8216 = vpack.c.bf16 %v8123, %v8122
    %v8217 = vpack.c.bf16 %v8125, %v8124
    %v8218 = vpack.c.bf16 %v8127, %v8126
    %v8219 = vpack.c.bf16 %v8129, %v8128
    %v8220 = vpack.c.bf16 %v8131, %v8130
    %v8221 = vpack.c.bf16 %v8133, %v8132
    %v8222 = vpack.c.bf16 %v8135, %v8134
    %v8223 = vpack.c.bf16 %v8137, %v8136
    %v8224 = vpack.c.bf16 %v8139, %v8138
    %v8225 = vpack.c.bf16 %v8141, %v8140
    %v8226 = vpack.c.bf16 %v8143, %v8142
    %v8227 = vpack.c.bf16 %v8145, %v8144
    %v8228 = vpack.c.bf16 %v8147, %v8146
    %v8229 = vpack.c.bf16 %v8149, %v8148
    %v8230 = vpack.c.bf16 %v8151, %v8150
    %v8231 = vpack.c.bf16 %v8153, %v8152
    %v8232 = vpack.c.bf16 %v8155, %v8154
    %v8233 = vpack.c.bf16 %v8157, %v8156
    %v8234 = vpack.c.bf16 %v8159, %v8158
    %v8235 = vpack.c.bf16 %v8161, %v8160
    %v8236 = vpack.c.bf16 %v8163, %v8162
    %v8237 = vpack.c.bf16 %v8165, %v8164
    %v8238 = vpack.c.bf16 %v8167, %v8166
    %v8239 = vpack.c.bf16 %v8169, %v8168
    %v8240 = vpack.c.bf16 %v8171, %v8170
    %v8241 = vpack.c.bf16 %v8173, %v8172
    %v8242 = vpack.c.bf16 %v8175, %v8174
    %v8243 = vpack.c.bf16 %v8177, %v8176
    %v8244 = vpack.c.bf16 %v8179, %v8178
    %v8245 = vpack.c.bf16 %v8181, %v8180
    %s8246 = scalar_lea.vmem %s1, 224
    %v8247 = vld [vmem:[%s8246] sm:$0xf]
    %v8248 = vld [vmem:[%s8246 + $0x4] sm:$0xf]
    %v8249 = vld [vmem:[%s8246 + $0x8] sm:$0xf]
    %v8250 = vld [vmem:[%s8246 + $0xc] sm:$0xf]
    %v8251 = vld [vmem:[%s8246 + $0x10] sm:$0xf]
    %v8252 = vld [vmem:[%s8246 + $0x14] sm:$0xf]
    %v8253 = vld [vmem:[%s8246 + $0x18] sm:$0xf]
    %v8254 = vld [vmem:[%s8246 + $0x1c] sm:$0xf]
    %v8263 = vunpack.c.l.b16 %v8247
    %v8264 = vunpack.c.l.b16 %v8248
    %v8265 = vunpack.c.l.b16 %v8249
    %v8266 = vunpack.c.l.b16 %v8250
    %v8267 = vunpack.c.l.b16 %v8251
    %v8268 = vunpack.c.l.b16 %v8252
    %v8269 = vunpack.c.l.b16 %v8253
    %v8270 = vunpack.c.l.b16 %v8254
    %v8271 = vpack.c.b16 %v8264, %v8263
    %v8272 = vpack.c.b16 %v8266, %v8265
    %v8273 = vpack.c.b16 %v8268, %v8267
    %v8274 = vpack.c.b16 %v8270, %v8269
    %v8280 = vsel %vm1775, %v8182, 0
    %v8283 = vsel %vm1775, %v8183, 0
    %v8286 = vsel %vm1775, %v8184, 0
    %v8289 = vsel %vm1775, %v8185, 0
    %v8292 = vsel %vm1775, %v8186, 0
    %v8295 = vsel %vm1775, %v8187, 0
    %v8298 = vsel %vm1775, %v8188, 0
    %v8301 = vsel %vm1775, %v8189, 0
    %v8304 = vsel %vm1775, %v8190, 0
    %v8307 = vsel %vm1775, %v8191, 0
    %v8310 = vsel %vm1775, %v8192, 0
    %v8313 = vsel %vm1775, %v8193, 0
    %v8316 = vsel %vm1775, %v8194, 0
    %v8319 = vsel %vm1775, %v8195, 0
    %v8322 = vsel %vm1775, %v8196, 0
    %v8325 = vsel %vm1775, %v8197, 0
    %v8328 = vsel %vm1775, %v8198, 0
    %v8331 = vsel %vm1775, %v8199, 0
    %v8334 = vsel %vm1775, %v8200, 0
    %v8337 = vsel %vm1775, %v8201, 0
    %v8340 = vsel %vm1775, %v8202, 0
    %v8343 = vsel %vm1775, %v8203, 0
    %v8346 = vsel %vm1775, %v8204, 0
    %v8349 = vsel %vm1775, %v8205, 0
    %v8352 = vsel %vm1775, %v8206, 0
    %v8355 = vsel %vm1775, %v8207, 0
    %v8358 = vsel %vm1775, %v8208, 0
    %v8361 = vsel %vm1775, %v8209, 0
    %v8364 = vsel %vm1775, %v8210, 0
    %v8367 = vsel %vm1775, %v8211, 0
    %v8370 = vsel %vm1775, %v8212, 0
    %v8373 = vsel %vm1775, %v8213, 0
    %v8376 = vsel %vm1775, %v8214, 0
    %v8379 = vsel %vm1775, %v8215, 0
    %v8382 = vsel %vm1775, %v8216, 0
    %v8385 = vsel %vm1775, %v8217, 0
    %v8388 = vsel %vm1775, %v8218, 0
    %v8391 = vsel %vm1775, %v8219, 0
    %v8394 = vsel %vm1775, %v8220, 0
    %v8397 = vsel %vm1775, %v8221, 0
    %v8400 = vsel %vm1775, %v8222, 0
    %v8403 = vsel %vm1775, %v8223, 0
    %v8406 = vsel %vm1775, %v8224, 0
    %v8409 = vsel %vm1775, %v8225, 0
    %v8412 = vsel %vm1775, %v8226, 0
    %v8415 = vsel %vm1775, %v8227, 0
    %v8418 = vsel %vm1775, %v8228, 0
    %v8421 = vsel %vm1775, %v8229, 0
    %v8424 = vsel %vm1775, %v8230, 0
    %v8427 = vsel %vm1775, %v8231, 0
    %v8430 = vsel %vm1775, %v8232, 0
    %v8433 = vsel %vm1775, %v8233, 0
    %v8436 = vsel %vm1775, %v8234, 0
    %v8439 = vsel %vm1775, %v8235, 0
    %v8442 = vsel %vm1775, %v8236, 0
    %v8445 = vsel %vm1775, %v8237, 0
    %v8448 = vsel %vm1775, %v8238, 0
    %v8451 = vsel %vm1775, %v8239, 0
    %v8454 = vsel %vm1775, %v8240, 0
    %v8457 = vsel %vm1775, %v8241, 0
    %v8460 = vsel %vm1775, %v8242, 0
    %v8463 = vsel %vm1775, %v8243, 0
    %v8466 = vsel %vm1775, %v8244, 0
    %v8469 = vsel %vm1775, %v8245, 0
    %8471 = vmatpush.bf16.msra.mxu0 0
    %8472 = vmatpush.bf16.msra.mxu0 0
    %8473 = vmatpush.bf16.msra.mxu0 0
    %8474 = vmatpush.bf16.msra.mxu0 0
    %8475 = vmatpush.bf16.msra.mxu0 %v8274
    %8476 = vmatpush.bf16.msra.mxu0 %v8273
    %8477 = vmatpush.bf16.msra.mxu0 %v8272
    %8478 = vmatpush.bf16.msra.mxu0 %v8271
    %8479 = vmatmul.bf16.gmra.mxu0 %v8280
    %v8480 = vpop.f32.mrf.mxu0
    %v8481 = vadd.f32 0.0, %v8480
    %v8482 = vpop.f32.mrf.mxu0
    %v8483 = vadd.f32 0.0, %v8482
    %8484 = vmatmul.bf16.gmra.mxu0 %v8283
    %v8485 = vpop.f32.mrf.mxu0
    %v8486 = vadd.f32 0.0, %v8485
    %v8487 = vpop.f32.mrf.mxu0
    %v8488 = vadd.f32 0.0, %v8487
    %8489 = vmatmul.bf16.gmra.mxu0 %v8286
    %v8490 = vpop.f32.mrf.mxu0
    %v8491 = vadd.f32 0.0, %v8490
    %v8492 = vpop.f32.mrf.mxu0
    %v8493 = vadd.f32 0.0, %v8492
    %8494 = vmatmul.bf16.gmra.mxu0 %v8289
    %v8495 = vpop.f32.mrf.mxu0
    %v8496 = vadd.f32 0.0, %v8495
    %v8497 = vpop.f32.mrf.mxu0
    %v8498 = vadd.f32 0.0, %v8497
    %8499 = vmatmul.bf16.gmra.mxu0 %v8292
    %v8500 = vpop.f32.mrf.mxu0
    %v8501 = vadd.f32 0.0, %v8500
    %v8502 = vpop.f32.mrf.mxu0
    %v8503 = vadd.f32 0.0, %v8502
    %8504 = vmatmul.bf16.gmra.mxu0 %v8295
    %v8505 = vpop.f32.mrf.mxu0
    %v8506 = vadd.f32 0.0, %v8505
    %v8507 = vpop.f32.mrf.mxu0
    %v8508 = vadd.f32 0.0, %v8507
    %8509 = vmatmul.bf16.gmra.mxu0 %v8298
    %v8510 = vpop.f32.mrf.mxu0
    %v8511 = vadd.f32 0.0, %v8510
    %v8512 = vpop.f32.mrf.mxu0
    %v8513 = vadd.f32 0.0, %v8512
    %8514 = vmatmul.bf16.gmra.mxu0 %v8301
    %v8515 = vpop.f32.mrf.mxu0
    %v8516 = vadd.f32 0.0, %v8515
    %v8517 = vpop.f32.mrf.mxu0
    %v8518 = vadd.f32 0.0, %v8517
    %8519 = vmatmul.bf16.gmra.mxu0 %v8304
    %v8520 = vpop.f32.mrf.mxu0
    %v8521 = vadd.f32 0.0, %v8520
    %v8522 = vpop.f32.mrf.mxu0
    %v8523 = vadd.f32 0.0, %v8522
    %8524 = vmatmul.bf16.gmra.mxu0 %v8307
    %v8525 = vpop.f32.mrf.mxu0
    %v8526 = vadd.f32 0.0, %v8525
    %v8527 = vpop.f32.mrf.mxu0
    %v8528 = vadd.f32 0.0, %v8527
    %8529 = vmatmul.bf16.gmra.mxu0 %v8310
    %v8530 = vpop.f32.mrf.mxu0
    %v8531 = vadd.f32 0.0, %v8530
    %v8532 = vpop.f32.mrf.mxu0
    %v8533 = vadd.f32 0.0, %v8532
    %8534 = vmatmul.bf16.gmra.mxu0 %v8313
    %v8535 = vpop.f32.mrf.mxu0
    %v8536 = vadd.f32 0.0, %v8535
    %v8537 = vpop.f32.mrf.mxu0
    %v8538 = vadd.f32 0.0, %v8537
    %8539 = vmatmul.bf16.gmra.mxu0 %v8316
    %v8540 = vpop.f32.mrf.mxu0
    %v8541 = vadd.f32 0.0, %v8540
    %v8542 = vpop.f32.mrf.mxu0
    %v8543 = vadd.f32 0.0, %v8542
    %8544 = vmatmul.bf16.gmra.mxu0 %v8319
    %v8545 = vpop.f32.mrf.mxu0
    %v8546 = vadd.f32 0.0, %v8545
    %v8547 = vpop.f32.mrf.mxu0
    %v8548 = vadd.f32 0.0, %v8547
    %8549 = vmatmul.bf16.gmra.mxu0 %v8322
    %v8550 = vpop.f32.mrf.mxu0
    %v8551 = vadd.f32 0.0, %v8550
    %v8552 = vpop.f32.mrf.mxu0
    %v8553 = vadd.f32 0.0, %v8552
    %8554 = vmatmul.bf16.gmra.mxu0 %v8325
    %v8555 = vpop.f32.mrf.mxu0
    %v8556 = vadd.f32 0.0, %v8555
    %v8557 = vpop.f32.mrf.mxu0
    %v8558 = vadd.f32 0.0, %v8557
    %8559 = vmatmul.bf16.gmra.mxu0 %v8328
    %v8560 = vpop.f32.mrf.mxu0
    %v8561 = vadd.f32 0.0, %v8560
    %v8562 = vpop.f32.mrf.mxu0
    %v8563 = vadd.f32 0.0, %v8562
    %8564 = vmatmul.bf16.gmra.mxu0 %v8331
    %v8565 = vpop.f32.mrf.mxu0
    %v8566 = vadd.f32 0.0, %v8565
    %v8567 = vpop.f32.mrf.mxu0
    %v8568 = vadd.f32 0.0, %v8567
    %8569 = vmatmul.bf16.gmra.mxu0 %v8334
    %v8570 = vpop.f32.mrf.mxu0
    %v8571 = vadd.f32 0.0, %v8570
    %v8572 = vpop.f32.mrf.mxu0
    %v8573 = vadd.f32 0.0, %v8572
    %8574 = vmatmul.bf16.gmra.mxu0 %v8337
    %v8575 = vpop.f32.mrf.mxu0
    %v8576 = vadd.f32 0.0, %v8575
    %v8577 = vpop.f32.mrf.mxu0
    %v8578 = vadd.f32 0.0, %v8577
    %8579 = vmatmul.bf16.gmra.mxu0 %v8340
    %v8580 = vpop.f32.mrf.mxu0
    %v8581 = vadd.f32 0.0, %v8580
    %v8582 = vpop.f32.mrf.mxu0
    %v8583 = vadd.f32 0.0, %v8582
    %8584 = vmatmul.bf16.gmra.mxu0 %v8343
    %v8585 = vpop.f32.mrf.mxu0
    %v8586 = vadd.f32 0.0, %v8585
    %v8587 = vpop.f32.mrf.mxu0
    %v8588 = vadd.f32 0.0, %v8587
    %8589 = vmatmul.bf16.gmra.mxu0 %v8346
    %v8590 = vpop.f32.mrf.mxu0
    %v8591 = vadd.f32 0.0, %v8590
    %v8592 = vpop.f32.mrf.mxu0
    %v8593 = vadd.f32 0.0, %v8592
    %8594 = vmatmul.bf16.gmra.mxu0 %v8349
    %v8595 = vpop.f32.mrf.mxu0
    %v8596 = vadd.f32 0.0, %v8595
    %v8597 = vpop.f32.mrf.mxu0
    %v8598 = vadd.f32 0.0, %v8597
    %8599 = vmatmul.bf16.gmra.mxu0 %v8352
    %v8600 = vpop.f32.mrf.mxu0
    %v8601 = vadd.f32 0.0, %v8600
    %v8602 = vpop.f32.mrf.mxu0
    %v8603 = vadd.f32 0.0, %v8602
    %8604 = vmatmul.bf16.gmra.mxu0 %v8355
    %v8605 = vpop.f32.mrf.mxu0
    %v8606 = vadd.f32 0.0, %v8605
    %v8607 = vpop.f32.mrf.mxu0
    %v8608 = vadd.f32 0.0, %v8607
    %8609 = vmatmul.bf16.gmra.mxu0 %v8358
    %v8610 = vpop.f32.mrf.mxu0
    %v8611 = vadd.f32 0.0, %v8610
    %v8612 = vpop.f32.mrf.mxu0
    %v8613 = vadd.f32 0.0, %v8612
    %8614 = vmatmul.bf16.gmra.mxu0 %v8361
    %v8615 = vpop.f32.mrf.mxu0
    %v8616 = vadd.f32 0.0, %v8615
    %v8617 = vpop.f32.mrf.mxu0
    %v8618 = vadd.f32 0.0, %v8617
    %8619 = vmatmul.bf16.gmra.mxu0 %v8364
    %v8620 = vpop.f32.mrf.mxu0
    %v8621 = vadd.f32 0.0, %v8620
    %v8622 = vpop.f32.mrf.mxu0
    %v8623 = vadd.f32 0.0, %v8622
    %8624 = vmatmul.bf16.gmra.mxu0 %v8367
    %v8625 = vpop.f32.mrf.mxu0
    %v8626 = vadd.f32 0.0, %v8625
    %v8627 = vpop.f32.mrf.mxu0
    %v8628 = vadd.f32 0.0, %v8627
    %8629 = vmatmul.bf16.gmra.mxu0 %v8370
    %v8630 = vpop.f32.mrf.mxu0
    %v8631 = vadd.f32 0.0, %v8630
    %v8632 = vpop.f32.mrf.mxu0
    %v8633 = vadd.f32 0.0, %v8632
    %8634 = vmatmul.bf16.gmra.mxu0 %v8373
    %v8635 = vpop.f32.mrf.mxu0
    %v8636 = vadd.f32 0.0, %v8635
    %v8637 = vpop.f32.mrf.mxu0
    %v8638 = vadd.f32 0.0, %v8637
    %8639 = vmatmul.bf16.gmra.mxu0 %v8376
    %v8640 = vpop.f32.mrf.mxu0
    %v8641 = vadd.f32 0.0, %v8640
    %v8642 = vpop.f32.mrf.mxu0
    %v8643 = vadd.f32 0.0, %v8642
    %8644 = vmatmul.bf16.gmra.mxu0 %v8379
    %v8645 = vpop.f32.mrf.mxu0
    %v8646 = vadd.f32 0.0, %v8645
    %v8647 = vpop.f32.mrf.mxu0
    %v8648 = vadd.f32 0.0, %v8647
    %8649 = vmatmul.bf16.gmra.mxu0 %v8382
    %v8650 = vpop.f32.mrf.mxu0
    %v8651 = vadd.f32 0.0, %v8650
    %v8652 = vpop.f32.mrf.mxu0
    %v8653 = vadd.f32 0.0, %v8652
    %8654 = vmatmul.bf16.gmra.mxu0 %v8385
    %v8655 = vpop.f32.mrf.mxu0
    %v8656 = vadd.f32 0.0, %v8655
    %v8657 = vpop.f32.mrf.mxu0
    %v8658 = vadd.f32 0.0, %v8657
    %8659 = vmatmul.bf16.gmra.mxu0 %v8388
    %v8660 = vpop.f32.mrf.mxu0
    %v8661 = vadd.f32 0.0, %v8660
    %v8662 = vpop.f32.mrf.mxu0
    %v8663 = vadd.f32 0.0, %v8662
    %8664 = vmatmul.bf16.gmra.mxu0 %v8391
    %v8665 = vpop.f32.mrf.mxu0
    %v8666 = vadd.f32 0.0, %v8665
    %v8667 = vpop.f32.mrf.mxu0
    %v8668 = vadd.f32 0.0, %v8667
    %8669 = vmatmul.bf16.gmra.mxu0 %v8394
    %v8670 = vpop.f32.mrf.mxu0
    %v8671 = vadd.f32 0.0, %v8670
    %v8672 = vpop.f32.mrf.mxu0
    %v8673 = vadd.f32 0.0, %v8672
    %8674 = vmatmul.bf16.gmra.mxu0 %v8397
    %v8675 = vpop.f32.mrf.mxu0
    %v8676 = vadd.f32 0.0, %v8675
    %v8677 = vpop.f32.mrf.mxu0
    %v8678 = vadd.f32 0.0, %v8677
    %8679 = vmatmul.bf16.gmra.mxu0 %v8400
    %v8680 = vpop.f32.mrf.mxu0
    %v8681 = vadd.f32 0.0, %v8680
    %v8682 = vpop.f32.mrf.mxu0
    %v8683 = vadd.f32 0.0, %v8682
    %8684 = vmatmul.bf16.gmra.mxu0 %v8403
    %v8685 = vpop.f32.mrf.mxu0
    %v8686 = vadd.f32 0.0, %v8685
    %v8687 = vpop.f32.mrf.mxu0
    %v8688 = vadd.f32 0.0, %v8687
    %8689 = vmatmul.bf16.gmra.mxu0 %v8406
    %v8690 = vpop.f32.mrf.mxu0
    %v8691 = vadd.f32 0.0, %v8690
    %v8692 = vpop.f32.mrf.mxu0
    %v8693 = vadd.f32 0.0, %v8692
    %8694 = vmatmul.bf16.gmra.mxu0 %v8409
    %v8695 = vpop.f32.mrf.mxu0
    %v8696 = vadd.f32 0.0, %v8695
    %v8697 = vpop.f32.mrf.mxu0
    %v8698 = vadd.f32 0.0, %v8697
    %8699 = vmatmul.bf16.gmra.mxu0 %v8412
    %v8700 = vpop.f32.mrf.mxu0
    %v8701 = vadd.f32 0.0, %v8700
    %v8702 = vpop.f32.mrf.mxu0
    %v8703 = vadd.f32 0.0, %v8702
    %8704 = vmatmul.bf16.gmra.mxu0 %v8415
    %v8705 = vpop.f32.mrf.mxu0
    %v8706 = vadd.f32 0.0, %v8705
    %v8707 = vpop.f32.mrf.mxu0
    %v8708 = vadd.f32 0.0, %v8707
    %8709 = vmatmul.bf16.gmra.mxu0 %v8418
    %v8710 = vpop.f32.mrf.mxu0
    %v8711 = vadd.f32 0.0, %v8710
    %v8712 = vpop.f32.mrf.mxu0
    %v8713 = vadd.f32 0.0, %v8712
    %8714 = vmatmul.bf16.gmra.mxu0 %v8421
    %v8715 = vpop.f32.mrf.mxu0
    %v8716 = vadd.f32 0.0, %v8715
    %v8717 = vpop.f32.mrf.mxu0
    %v8718 = vadd.f32 0.0, %v8717
    %8719 = vmatmul.bf16.gmra.mxu0 %v8424
    %v8720 = vpop.f32.mrf.mxu0
    %v8721 = vadd.f32 0.0, %v8720
    %v8722 = vpop.f32.mrf.mxu0
    %v8723 = vadd.f32 0.0, %v8722
    %8724 = vmatmul.bf16.gmra.mxu0 %v8427
    %v8725 = vpop.f32.mrf.mxu0
    %v8726 = vadd.f32 0.0, %v8725
    %v8727 = vpop.f32.mrf.mxu0
    %v8728 = vadd.f32 0.0, %v8727
    %8729 = vmatmul.bf16.gmra.mxu0 %v8430
    %v8730 = vpop.f32.mrf.mxu0
    %v8731 = vadd.f32 0.0, %v8730
    %v8732 = vpop.f32.mrf.mxu0
    %v8733 = vadd.f32 0.0, %v8732
    %8734 = vmatmul.bf16.gmra.mxu0 %v8433
    %v8735 = vpop.f32.mrf.mxu0
    %v8736 = vadd.f32 0.0, %v8735
    %v8737 = vpop.f32.mrf.mxu0
    %v8738 = vadd.f32 0.0, %v8737
    %8739 = vmatmul.bf16.gmra.mxu0 %v8436
    %v8740 = vpop.f32.mrf.mxu0
    %v8741 = vadd.f32 0.0, %v8740
    %v8742 = vpop.f32.mrf.mxu0
    %v8743 = vadd.f32 0.0, %v8742
    %8744 = vmatmul.bf16.gmra.mxu0 %v8439
    %v8745 = vpop.f32.mrf.mxu0
    %v8746 = vadd.f32 0.0, %v8745
    %v8747 = vpop.f32.mrf.mxu0
    %v8748 = vadd.f32 0.0, %v8747
    %8749 = vmatmul.bf16.gmra.mxu0 %v8442
    %v8750 = vpop.f32.mrf.mxu0
    %v8751 = vadd.f32 0.0, %v8750
    %v8752 = vpop.f32.mrf.mxu0
    %v8753 = vadd.f32 0.0, %v8752
    %8754 = vmatmul.bf16.gmra.mxu0 %v8445
    %v8755 = vpop.f32.mrf.mxu0
    %v8756 = vadd.f32 0.0, %v8755
    %v8757 = vpop.f32.mrf.mxu0
    %v8758 = vadd.f32 0.0, %v8757
    %8759 = vmatmul.bf16.gmra.mxu0 %v8448
    %v8760 = vpop.f32.mrf.mxu0
    %v8761 = vadd.f32 0.0, %v8760
    %v8762 = vpop.f32.mrf.mxu0
    %v8763 = vadd.f32 0.0, %v8762
    %8764 = vmatmul.bf16.gmra.mxu0 %v8451
    %v8765 = vpop.f32.mrf.mxu0
    %v8766 = vadd.f32 0.0, %v8765
    %v8767 = vpop.f32.mrf.mxu0
    %v8768 = vadd.f32 0.0, %v8767
    %8769 = vmatmul.bf16.gmra.mxu0 %v8454
    %v8770 = vpop.f32.mrf.mxu0
    %v8771 = vadd.f32 0.0, %v8770
    %v8772 = vpop.f32.mrf.mxu0
    %v8773 = vadd.f32 0.0, %v8772
    %8774 = vmatmul.bf16.gmra.mxu0 %v8457
    %v8775 = vpop.f32.mrf.mxu0
    %v8776 = vadd.f32 0.0, %v8775
    %v8777 = vpop.f32.mrf.mxu0
    %v8778 = vadd.f32 0.0, %v8777
    %8779 = vmatmul.bf16.gmra.mxu0 %v8460
    %v8780 = vpop.f32.mrf.mxu0
    %v8781 = vadd.f32 0.0, %v8780
    %v8782 = vpop.f32.mrf.mxu0
    %v8783 = vadd.f32 0.0, %v8782
    %8784 = vmatmul.bf16.gmra.mxu0 %v8463
    %v8785 = vpop.f32.mrf.mxu0
    %v8786 = vadd.f32 0.0, %v8785
    %v8787 = vpop.f32.mrf.mxu0
    %v8788 = vadd.f32 0.0, %v8787
    %8789 = vmatmul.bf16.gmra.mxu0 %v8466
    %v8790 = vpop.f32.mrf.mxu0
    %v8791 = vadd.f32 0.0, %v8790
    %v8792 = vpop.f32.mrf.mxu0
    %v8793 = vadd.f32 0.0, %v8792
    %8794 = vmatmul.bf16.gmra.mxu0 %v8469
    %v8795 = vpop.f32.mrf.mxu0
    %v8796 = vadd.f32 0.0, %v8795
    %v8797 = vpop.f32.mrf.mxu0
    %v8798 = vadd.f32 0.0, %v8797
    %8799 = vdwg.mxu0
    %v8800 = vadd.f32 %v7926, %v8481
    %v8801 = vadd.f32 %v7927, %v8483
    %v8802 = vadd.f32 %v7928, %v8486
    %v8803 = vadd.f32 %v7929, %v8488
    %v8804 = vadd.f32 %v7930, %v8491
    %v8805 = vadd.f32 %v7931, %v8493
    %v8806 = vadd.f32 %v7932, %v8496
    %v8807 = vadd.f32 %v7933, %v8498
    %v8808 = vadd.f32 %v7934, %v8501
    %v8809 = vadd.f32 %v7935, %v8503
    %v8810 = vadd.f32 %v7936, %v8506
    %v8811 = vadd.f32 %v7937, %v8508
    %v8812 = vadd.f32 %v7938, %v8511
    %v8813 = vadd.f32 %v7939, %v8513
    %v8814 = vadd.f32 %v7940, %v8516
    %v8815 = vadd.f32 %v7941, %v8518
    %v8816 = vadd.f32 %v7942, %v8521
    %v8817 = vadd.f32 %v7943, %v8523
    %v8818 = vadd.f32 %v7944, %v8526
    %v8819 = vadd.f32 %v7945, %v8528
    %v8820 = vadd.f32 %v7946, %v8531
    %v8821 = vadd.f32 %v7947, %v8533
    %v8822 = vadd.f32 %v7948, %v8536
    %v8823 = vadd.f32 %v7949, %v8538
    %v8824 = vadd.f32 %v7950, %v8541
    %v8825 = vadd.f32 %v7951, %v8543
    %v8826 = vadd.f32 %v7952, %v8546
    %v8827 = vadd.f32 %v7953, %v8548
    %v8828 = vadd.f32 %v7954, %v8551
    %v8829 = vadd.f32 %v7955, %v8553
    %v8830 = vadd.f32 %v7956, %v8556
    %v8831 = vadd.f32 %v7957, %v8558
    %v8832 = vadd.f32 %v7958, %v8561
    %v8833 = vadd.f32 %v7959, %v8563
    %v8834 = vadd.f32 %v7960, %v8566
    %v8835 = vadd.f32 %v7961, %v8568
    %v8836 = vadd.f32 %v7962, %v8571
    %v8837 = vadd.f32 %v7963, %v8573
    %v8838 = vadd.f32 %v7964, %v8576
    %v8839 = vadd.f32 %v7965, %v8578
    %v8840 = vadd.f32 %v7966, %v8581
    %v8841 = vadd.f32 %v7967, %v8583
    %v8842 = vadd.f32 %v7968, %v8586
    %v8843 = vadd.f32 %v7969, %v8588
    %v8844 = vadd.f32 %v7970, %v8591
    %v8845 = vadd.f32 %v7971, %v8593
    %v8846 = vadd.f32 %v7972, %v8596
    %v8847 = vadd.f32 %v7973, %v8598
    %v8848 = vadd.f32 %v7974, %v8601
    %v8849 = vadd.f32 %v7975, %v8603
    %v8850 = vadd.f32 %v7976, %v8606
    %v8851 = vadd.f32 %v7977, %v8608
    %v8852 = vadd.f32 %v7978, %v8611
    %v8853 = vadd.f32 %v7979, %v8613
    %v8854 = vadd.f32 %v7980, %v8616
    %v8855 = vadd.f32 %v7981, %v8618
    %v8856 = vadd.f32 %v7982, %v8621
    %v8857 = vadd.f32 %v7983, %v8623
    %v8858 = vadd.f32 %v7984, %v8626
    %v8859 = vadd.f32 %v7985, %v8628
    %v8860 = vadd.f32 %v7986, %v8631
    %v8861 = vadd.f32 %v7987, %v8633
    %v8862 = vadd.f32 %v7988, %v8636
    %v8863 = vadd.f32 %v7989, %v8638
    %v8864 = vadd.f32 %v7990, %v8641
    %v8865 = vadd.f32 %v7991, %v8643
    %v8866 = vadd.f32 %v7992, %v8646
    %v8867 = vadd.f32 %v7993, %v8648
    %v8868 = vadd.f32 %v7994, %v8651
    %v8869 = vadd.f32 %v7995, %v8653
    %v8870 = vadd.f32 %v7996, %v8656
    %v8871 = vadd.f32 %v7997, %v8658
    %v8872 = vadd.f32 %v7998, %v8661
    %v8873 = vadd.f32 %v7999, %v8663
    %v8874 = vadd.f32 %v8000, %v8666
    %v8875 = vadd.f32 %v8001, %v8668
    %v8876 = vadd.f32 %v8002, %v8671
    %v8877 = vadd.f32 %v8003, %v8673
    %v8878 = vadd.f32 %v8004, %v8676
    %v8879 = vadd.f32 %v8005, %v8678
    %v8880 = vadd.f32 %v8006, %v8681
    %v8881 = vadd.f32 %v8007, %v8683
    %v8882 = vadd.f32 %v8008, %v8686
    %v8883 = vadd.f32 %v8009, %v8688
    %v8884 = vadd.f32 %v8010, %v8691
    %v8885 = vadd.f32 %v8011, %v8693
    %v8886 = vadd.f32 %v8012, %v8696
    %v8887 = vadd.f32 %v8013, %v8698
    %v8888 = vadd.f32 %v8014, %v8701
    %v8889 = vadd.f32 %v8015, %v8703
    %v8890 = vadd.f32 %v8016, %v8706
    %v8891 = vadd.f32 %v8017, %v8708
    %v8892 = vadd.f32 %v8018, %v8711
    %v8893 = vadd.f32 %v8019, %v8713
    %v8894 = vadd.f32 %v8020, %v8716
    %v8895 = vadd.f32 %v8021, %v8718
    %v8896 = vadd.f32 %v8022, %v8721
    %v8897 = vadd.f32 %v8023, %v8723
    %v8898 = vadd.f32 %v8024, %v8726
    %v8899 = vadd.f32 %v8025, %v8728
    %v8900 = vadd.f32 %v8026, %v8731
    %v8901 = vadd.f32 %v8027, %v8733
    %v8902 = vadd.f32 %v8028, %v8736
    %v8903 = vadd.f32 %v8029, %v8738
    %v8904 = vadd.f32 %v8030, %v8741
    %v8905 = vadd.f32 %v8031, %v8743
    %v8906 = vadd.f32 %v8032, %v8746
    %v8907 = vadd.f32 %v8033, %v8748
    %v8908 = vadd.f32 %v8034, %v8751
    %v8909 = vadd.f32 %v8035, %v8753
    %v8910 = vadd.f32 %v8036, %v8756
    %v8911 = vadd.f32 %v8037, %v8758
    %v8912 = vadd.f32 %v8038, %v8761
    %v8913 = vadd.f32 %v8039, %v8763
    %v8914 = vadd.f32 %v8040, %v8766
    %v8915 = vadd.f32 %v8041, %v8768
    %v8916 = vadd.f32 %v8042, %v8771
    %v8917 = vadd.f32 %v8043, %v8773
    %v8918 = vadd.f32 %v8044, %v8776
    %v8919 = vadd.f32 %v8045, %v8778
    %v8920 = vadd.f32 %v8046, %v8781
    %v8921 = vadd.f32 %v8047, %v8783
    %v8922 = vadd.f32 %v8048, %v8786
    %v8923 = vadd.f32 %v8049, %v8788
    %v8924 = vadd.f32 %v8050, %v8791
    %v8925 = vadd.f32 %v8051, %v8793
    %v8926 = vadd.f32 %v8052, %v8796
    %v8927 = vadd.f32 %v8053, %v8798
    %vm8928 = vmand %vm782, %vm1038
    %vm8929 = vmand %vm783, %vm1039
    %vm8930 = vmand %vm784, %vm1040
    %vm8931 = vmand %vm785, %vm1041
    %vm8932 = vmand %vm786, %vm1042
    %vm8933 = vmand %vm787, %vm1043
    %vm8934 = vmand %vm788, %vm1044
    %vm8935 = vmand %vm789, %vm1045
    %vm8936 = vmand %vm790, %vm1046
    %vm8937 = vmand %vm791, %vm1047
    %vm8938 = vmand %vm792, %vm1048
    %vm8939 = vmand %vm793, %vm1049
    %vm8940 = vmand %vm794, %vm1050
    %vm8941 = vmand %vm795, %vm1051
    %vm8942 = vmand %vm796, %vm1052
    %vm8943 = vmand %vm797, %vm1053
    %vm8944 = vmand %vm798, %vm1054
    %vm8945 = vmand %vm799, %vm1055
    %vm8946 = vmand %vm800, %vm1056
    %vm8947 = vmand %vm801, %vm1057
    %vm8948 = vmand %vm802, %vm1058
    %vm8949 = vmand %vm803, %vm1059
    %vm8950 = vmand %vm804, %vm1060
    %vm8951 = vmand %vm805, %vm1061
    %vm8952 = vmand %vm806, %vm1062
    %vm8953 = vmand %vm807, %vm1063
    %vm8954 = vmand %vm808, %vm1064
    %vm8955 = vmand %vm809, %vm1065
    %vm8956 = vmand %vm810, %vm1066
    %vm8957 = vmand %vm811, %vm1067
    %vm8958 = vmand %vm812, %vm1068
    %vm8959 = vmand %vm813, %vm1069
    %vm8960 = vmand %vm814, %vm1070
    %vm8961 = vmand %vm815, %vm1071
    %vm8962 = vmand %vm816, %vm1072
    %vm8963 = vmand %vm817, %vm1073
    %vm8964 = vmand %vm818, %vm1074
    %vm8965 = vmand %vm819, %vm1075
    %vm8966 = vmand %vm820, %vm1076
    %vm8967 = vmand %vm821, %vm1077
    %vm8968 = vmand %vm822, %vm1078
    %vm8969 = vmand %vm823, %vm1079
    %vm8970 = vmand %vm824, %vm1080
    %vm8971 = vmand %vm825, %vm1081
    %vm8972 = vmand %vm826, %vm1082
    %vm8973 = vmand %vm827, %vm1083
    %vm8974 = vmand %vm828, %vm1084
    %vm8975 = vmand %vm829, %vm1085
    %vm8976 = vmand %vm830, %vm1086
    %vm8977 = vmand %vm831, %vm1087
    %vm8978 = vmand %vm832, %vm1088
    %vm8979 = vmand %vm833, %vm1089
    %vm8980 = vmand %vm834, %vm1090
    %vm8981 = vmand %vm835, %vm1091
    %vm8982 = vmand %vm836, %vm1092
    %vm8983 = vmand %vm837, %vm1093
    %vm8984 = vmand %vm838, %vm1094
    %vm8985 = vmand %vm839, %vm1095
    %vm8986 = vmand %vm840, %vm1096
    %vm8987 = vmand %vm841, %vm1097
    %vm8988 = vmand %vm842, %vm1098
    %vm8989 = vmand %vm843, %vm1099
    %vm8990 = vmand %vm844, %vm1100
    %vm8991 = vmand %vm845, %vm1101
    %vm8992 = vmand %vm846, %vm1102
    %vm8993 = vmand %vm847, %vm1103
    %vm8994 = vmand %vm848, %vm1104
    %vm8995 = vmand %vm849, %vm1105
    %vm8996 = vmand %vm850, %vm1106
    %vm8997 = vmand %vm851, %vm1107
    %vm8998 = vmand %vm852, %vm1108
    %vm8999 = vmand %vm853, %vm1109
    %vm9000 = vmand %vm854, %vm1110
    %vm9001 = vmand %vm855, %vm1111
    %vm9002 = vmand %vm856, %vm1112
    %vm9003 = vmand %vm857, %vm1113
    %vm9004 = vmand %vm858, %vm1114
    %vm9005 = vmand %vm859, %vm1115
    %vm9006 = vmand %vm860, %vm1116
    %vm9007 = vmand %vm861, %vm1117
    %vm9008 = vmand %vm862, %vm1118
    %vm9009 = vmand %vm863, %vm1119
    %vm9010 = vmand %vm864, %vm1120
    %vm9011 = vmand %vm865, %vm1121
    %vm9012 = vmand %vm866, %vm1122
    %vm9013 = vmand %vm867, %vm1123
    %vm9014 = vmand %vm868, %vm1124
    %vm9015 = vmand %vm869, %vm1125
    %vm9016 = vmand %vm870, %vm1126
    %vm9017 = vmand %vm871, %vm1127
    %vm9018 = vmand %vm872, %vm1128
    %vm9019 = vmand %vm873, %vm1129
    %vm9020 = vmand %vm874, %vm1130
    %vm9021 = vmand %vm875, %vm1131
    %vm9022 = vmand %vm876, %vm1132
    %vm9023 = vmand %vm877, %vm1133
    %vm9024 = vmand %vm878, %vm1134
    %vm9025 = vmand %vm879, %vm1135
    %vm9026 = vmand %vm880, %vm1136
    %vm9027 = vmand %vm881, %vm1137
    %vm9028 = vmand %vm882, %vm1138
    %vm9029 = vmand %vm883, %vm1139
    %vm9030 = vmand %vm884, %vm1140
    %vm9031 = vmand %vm885, %vm1141
    %vm9032 = vmand %vm886, %vm1142
    %vm9033 = vmand %vm887, %vm1143
    %vm9034 = vmand %vm888, %vm1144
    %vm9035 = vmand %vm889, %vm1145
    %vm9036 = vmand %vm890, %vm1146
    %vm9037 = vmand %vm891, %vm1147
    %vm9038 = vmand %vm892, %vm1148
    %vm9039 = vmand %vm893, %vm1149
    %vm9040 = vmand %vm894, %vm1150
    %vm9041 = vmand %vm895, %vm1151
    %vm9042 = vmand %vm896, %vm1152
    %vm9043 = vmand %vm897, %vm1153
    %vm9044 = vmand %vm898, %vm1154
    %vm9045 = vmand %vm899, %vm1155
    %vm9046 = vmand %vm900, %vm1156
    %vm9047 = vmand %vm901, %vm1157
    %vm9048 = vmand %vm902, %vm1158
    %vm9049 = vmand %vm903, %vm1159
    %vm9050 = vmand %vm904, %vm1160
    %vm9051 = vmand %vm905, %vm1161
    %vm9052 = vmand %vm906, %vm1162
    %vm9053 = vmand %vm907, %vm1163
    %vm9054 = vmand %vm908, %vm1164
    %vm9055 = vmand %vm909, %vm1165
    %v9056 = vsel %vm8928, %v3552, 0.0
    %v9057 = vsel %vm8929, %v3551, 0.0
    %v9058 = vsel %vm8930, %v3550, 0.0
    %v9059 = vsel %vm8931, %v3549, 0.0
    %v9060 = vsel %vm8932, %v3548, 0.0
    %v9061 = vsel %vm8933, %v3547, 0.0
    %v9062 = vsel %vm8934, %v3546, 0.0
    %v9063 = vsel %vm8935, %v3545, 0.0
    %v9064 = vsel %vm8936, %v3544, 0.0
    %v9065 = vsel %vm8937, %v3543, 0.0
    %v9066 = vsel %vm8938, %v3542, 0.0
    %v9067 = vsel %vm8939, %v3541, 0.0
    %v9068 = vsel %vm8940, %v3540, 0.0
    %v9069 = vsel %vm8941, %v3539, 0.0
    %v9070 = vsel %vm8942, %v3538, 0.0
    %v9071 = vsel %vm8943, %v3537, 0.0
    %v9072 = vsel %vm8944, %v3536, 0.0
    %v9073 = vsel %vm8945, %v3535, 0.0
    %v9074 = vsel %vm8946, %v3534, 0.0
    %v9075 = vsel %vm8947, %v3533, 0.0
    %v9076 = vsel %vm8948, %v3532, 0.0
    %v9077 = vsel %vm8949, %v3531, 0.0
    %v9078 = vsel %vm8950, %v3530, 0.0
    %v9079 = vsel %vm8951, %v3529, 0.0
    %v9080 = vsel %vm8952, %v3528, 0.0
    %v9081 = vsel %vm8953, %v3527, 0.0
    %v9082 = vsel %vm8954, %v3526, 0.0
    %v9083 = vsel %vm8955, %v3525, 0.0
    %v9084 = vsel %vm8956, %v3524, 0.0
    %v9085 = vsel %vm8957, %v3523, 0.0
    %v9086 = vsel %vm8958, %v3522, 0.0
    %v9087 = vsel %vm8959, %v3521, 0.0
    %v9088 = vsel %vm8960, %v3520, 0.0
    %v9089 = vsel %vm8961, %v3519, 0.0
    %v9090 = vsel %vm8962, %v3518, 0.0
    %v9091 = vsel %vm8963, %v3517, 0.0
    %v9092 = vsel %vm8964, %v3516, 0.0
    %v9093 = vsel %vm8965, %v3515, 0.0
    %v9094 = vsel %vm8966, %v3514, 0.0
    %v9095 = vsel %vm8967, %v3513, 0.0
    %v9096 = vsel %vm8968, %v3512, 0.0
    %v9097 = vsel %vm8969, %v3511, 0.0
    %v9098 = vsel %vm8970, %v3510, 0.0
    %v9099 = vsel %vm8971, %v3509, 0.0
    %v9100 = vsel %vm8972, %v3508, 0.0
    %v9101 = vsel %vm8973, %v3507, 0.0
    %v9102 = vsel %vm8974, %v3506, 0.0
    %v9103 = vsel %vm8975, %v3505, 0.0
    %v9104 = vsel %vm8976, %v3504, 0.0
    %v9105 = vsel %vm8977, %v3503, 0.0
    %v9106 = vsel %vm8978, %v3502, 0.0
    %v9107 = vsel %vm8979, %v3501, 0.0
    %v9108 = vsel %vm8980, %v3500, 0.0
    %v9109 = vsel %vm8981, %v3499, 0.0
    %v9110 = vsel %vm8982, %v3498, 0.0
    %v9111 = vsel %vm8983, %v3497, 0.0
    %v9112 = vsel %vm8984, %v3496, 0.0
    %v9113 = vsel %vm8985, %v3495, 0.0
    %v9114 = vsel %vm8986, %v3494, 0.0
    %v9115 = vsel %vm8987, %v3493, 0.0
    %v9116 = vsel %vm8988, %v3492, 0.0
    %v9117 = vsel %vm8989, %v3491, 0.0
    %v9118 = vsel %vm8990, %v3490, 0.0
    %v9119 = vsel %vm8991, %v3489, 0.0
    %v9120 = vsel %vm8992, %v3488, 0.0
    %v9121 = vsel %vm8993, %v3487, 0.0
    %v9122 = vsel %vm8994, %v3486, 0.0
    %v9123 = vsel %vm8995, %v3485, 0.0
    %v9124 = vsel %vm8996, %v3484, 0.0
    %v9125 = vsel %vm8997, %v3483, 0.0
    %v9126 = vsel %vm8998, %v3482, 0.0
    %v9127 = vsel %vm8999, %v3481, 0.0
    %v9128 = vsel %vm9000, %v3480, 0.0
    %v9129 = vsel %vm9001, %v3479, 0.0
    %v9130 = vsel %vm9002, %v3478, 0.0
    %v9131 = vsel %vm9003, %v3477, 0.0
    %v9132 = vsel %vm9004, %v3476, 0.0
    %v9133 = vsel %vm9005, %v3475, 0.0
    %v9134 = vsel %vm9006, %v3474, 0.0
    %v9135 = vsel %vm9007, %v3473, 0.0
    %v9136 = vsel %vm9008, %v3472, 0.0
    %v9137 = vsel %vm9009, %v3471, 0.0
    %v9138 = vsel %vm9010, %v3470, 0.0
    %v9139 = vsel %vm9011, %v3469, 0.0
    %v9140 = vsel %vm9012, %v3468, 0.0
    %v9141 = vsel %vm9013, %v3467, 0.0
    %v9142 = vsel %vm9014, %v3466, 0.0
    %v9143 = vsel %vm9015, %v3465, 0.0
    %v9144 = vsel %vm9016, %v3464, 0.0
    %v9145 = vsel %vm9017, %v3463, 0.0
    %v9146 = vsel %vm9018, %v3462, 0.0
    %v9147 = vsel %vm9019, %v3461, 0.0
    %v9148 = vsel %vm9020, %v3460, 0.0
    %v9149 = vsel %vm9021, %v3459, 0.0
    %v9150 = vsel %vm9022, %v3458, 0.0
    %v9151 = vsel %vm9023, %v3457, 0.0
    %v9152 = vsel %vm9024, %v3456, 0.0
    %v9153 = vsel %vm9025, %v3455, 0.0
    %v9154 = vsel %vm9026, %v3454, 0.0
    %v9155 = vsel %vm9027, %v3453, 0.0
    %v9156 = vsel %vm9028, %v3452, 0.0
    %v9157 = vsel %vm9029, %v3451, 0.0
    %v9158 = vsel %vm9030, %v3450, 0.0
    %v9159 = vsel %vm9031, %v3449, 0.0
    %v9160 = vsel %vm9032, %v3448, 0.0
    %v9161 = vsel %vm9033, %v3447, 0.0
    %v9162 = vsel %vm9034, %v3446, 0.0
    %v9163 = vsel %vm9035, %v3445, 0.0
    %v9164 = vsel %vm9036, %v3444, 0.0
    %v9165 = vsel %vm9037, %v3443, 0.0
    %v9166 = vsel %vm9038, %v3442, 0.0
    %v9167 = vsel %vm9039, %v3441, 0.0
    %v9168 = vsel %vm9040, %v3440, 0.0
    %v9169 = vsel %vm9041, %v3439, 0.0
    %v9170 = vsel %vm9042, %v3438, 0.0
    %v9171 = vsel %vm9043, %v3437, 0.0
    %v9172 = vsel %vm9044, %v3436, 0.0
    %v9173 = vsel %vm9045, %v3435, 0.0
    %v9174 = vsel %vm9046, %v3434, 0.0
    %v9175 = vsel %vm9047, %v3433, 0.0
    %v9176 = vsel %vm9048, %v3432, 0.0
    %v9177 = vsel %vm9049, %v3431, 0.0
    %v9178 = vsel %vm9050, %v3430, 0.0
    %v9179 = vsel %vm9051, %v3429, 0.0
    %v9180 = vsel %vm9052, %v3428, 0.0
    %v9181 = vsel %vm9053, %v3555, 0.0
    %v9182 = vsel %vm9054, %v3554, 0.0
    %v9183 = vsel %vm9055, %v3553, 0.0
    %v9184 = vpack.c.bf16 %v9057, %v9056
    %v9185 = vpack.c.bf16 %v9059, %v9058
    %v9186 = vpack.c.bf16 %v9061, %v9060
    %v9187 = vpack.c.bf16 %v9063, %v9062
    %v9188 = vpack.c.bf16 %v9065, %v9064
    %v9189 = vpack.c.bf16 %v9067, %v9066
    %v9190 = vpack.c.bf16 %v9069, %v9068
    %v9191 = vpack.c.bf16 %v9071, %v9070
    %v9192 = vpack.c.bf16 %v9073, %v9072
    %v9193 = vpack.c.bf16 %v9075, %v9074
    %v9194 = vpack.c.bf16 %v9077, %v9076
    %v9195 = vpack.c.bf16 %v9079, %v9078
    %v9196 = vpack.c.bf16 %v9081, %v9080
    %v9197 = vpack.c.bf16 %v9083, %v9082
    %v9198 = vpack.c.bf16 %v9085, %v9084
    %v9199 = vpack.c.bf16 %v9087, %v9086
    %v9200 = vpack.c.bf16 %v9089, %v9088
    %v9201 = vpack.c.bf16 %v9091, %v9090
    %v9202 = vpack.c.bf16 %v9093, %v9092
    %v9203 = vpack.c.bf16 %v9095, %v9094
    %v9204 = vpack.c.bf16 %v9097, %v9096
    %v9205 = vpack.c.bf16 %v9099, %v9098
    %v9206 = vpack.c.bf16 %v9101, %v9100
    %v9207 = vpack.c.bf16 %v9103, %v9102
    %v9208 = vpack.c.bf16 %v9105, %v9104
    %v9209 = vpack.c.bf16 %v9107, %v9106
    %v9210 = vpack.c.bf16 %v9109, %v9108
    %v9211 = vpack.c.bf16 %v9111, %v9110
    %v9212 = vpack.c.bf16 %v9113, %v9112
    %v9213 = vpack.c.bf16 %v9115, %v9114
    %v9214 = vpack.c.bf16 %v9117, %v9116
    %v9215 = vpack.c.bf16 %v9119, %v9118
    %v9216 = vpack.c.bf16 %v9121, %v9120
    %v9217 = vpack.c.bf16 %v9123, %v9122
    %v9218 = vpack.c.bf16 %v9125, %v9124
    %v9219 = vpack.c.bf16 %v9127, %v9126
    %v9220 = vpack.c.bf16 %v9129, %v9128
    %v9221 = vpack.c.bf16 %v9131, %v9130
    %v9222 = vpack.c.bf16 %v9133, %v9132
    %v9223 = vpack.c.bf16 %v9135, %v9134
    %v9224 = vpack.c.bf16 %v9137, %v9136
    %v9225 = vpack.c.bf16 %v9139, %v9138
    %v9226 = vpack.c.bf16 %v9141, %v9140
    %v9227 = vpack.c.bf16 %v9143, %v9142
    %v9228 = vpack.c.bf16 %v9145, %v9144
    %v9229 = vpack.c.bf16 %v9147, %v9146
    %v9230 = vpack.c.bf16 %v9149, %v9148
    %v9231 = vpack.c.bf16 %v9151, %v9150
    %v9232 = vpack.c.bf16 %v9153, %v9152
    %v9233 = vpack.c.bf16 %v9155, %v9154
    %v9234 = vpack.c.bf16 %v9157, %v9156
    %v9235 = vpack.c.bf16 %v9159, %v9158
    %v9236 = vpack.c.bf16 %v9161, %v9160
    %v9237 = vpack.c.bf16 %v9163, %v9162
    %v9238 = vpack.c.bf16 %v9165, %v9164
    %v9239 = vpack.c.bf16 %v9167, %v9166
    %v9240 = vpack.c.bf16 %v9169, %v9168
    %v9241 = vpack.c.bf16 %v9171, %v9170
    %v9242 = vpack.c.bf16 %v9173, %v9172
    %v9243 = vpack.c.bf16 %v9175, %v9174
    %v9244 = vpack.c.bf16 %v9177, %v9176
    %v9245 = vpack.c.bf16 %v9179, %v9178
    %v9246 = vpack.c.bf16 %v9181, %v9180
    %v9247 = vpack.c.bf16 %v9183, %v9182
    %s9248 = scalar_lea.vmem %s1, 256
    %v9249 = vld [vmem:[%s9248] sm:$0xf]
    %v9250 = vld [vmem:[%s9248 + $0x4] sm:$0xf]
    %v9251 = vld [vmem:[%s9248 + $0x8] sm:$0xf]
    %v9252 = vld [vmem:[%s9248 + $0xc] sm:$0xf]
    %v9253 = vld [vmem:[%s9248 + $0x10] sm:$0xf]
    %v9254 = vld [vmem:[%s9248 + $0x14] sm:$0xf]
    %v9255 = vld [vmem:[%s9248 + $0x18] sm:$0xf]
    %v9256 = vld [vmem:[%s9248 + $0x1c] sm:$0xf]
    %v9265 = vunpack.c.l.b16 %v9249
    %v9266 = vunpack.c.l.b16 %v9250
    %v9267 = vunpack.c.l.b16 %v9251
    %v9268 = vunpack.c.l.b16 %v9252
    %v9269 = vunpack.c.l.b16 %v9253
    %v9270 = vunpack.c.l.b16 %v9254
    %v9271 = vunpack.c.l.b16 %v9255
    %v9272 = vunpack.c.l.b16 %v9256
    %v9273 = vpack.c.b16 %v9266, %v9265
    %v9274 = vpack.c.b16 %v9268, %v9267
    %v9275 = vpack.c.b16 %v9270, %v9269
    %v9276 = vpack.c.b16 %v9272, %v9271
    %v9282 = vsel %vm1775, %v9184, 0
    %v9285 = vsel %vm1775, %v9185, 0
    %v9288 = vsel %vm1775, %v9186, 0
    %v9291 = vsel %vm1775, %v9187, 0
    %v9294 = vsel %vm1775, %v9188, 0
    %v9297 = vsel %vm1775, %v9189, 0
    %v9300 = vsel %vm1775, %v9190, 0
    %v9303 = vsel %vm1775, %v9191, 0
    %v9306 = vsel %vm1775, %v9192, 0
    %v9309 = vsel %vm1775, %v9193, 0
    %v9312 = vsel %vm1775, %v9194, 0
    %v9315 = vsel %vm1775, %v9195, 0
    %v9318 = vsel %vm1775, %v9196, 0
    %v9321 = vsel %vm1775, %v9197, 0
    %v9324 = vsel %vm1775, %v9198, 0
    %v9327 = vsel %vm1775, %v9199, 0
    %v9330 = vsel %vm1775, %v9200, 0
    %v9333 = vsel %vm1775, %v9201, 0
    %v9336 = vsel %vm1775, %v9202, 0
    %v9339 = vsel %vm1775, %v9203, 0
    %v9342 = vsel %vm1775, %v9204, 0
    %v9345 = vsel %vm1775, %v9205, 0
    %v9348 = vsel %vm1775, %v9206, 0
    %v9351 = vsel %vm1775, %v9207, 0
    %v9354 = vsel %vm1775, %v9208, 0
    %v9357 = vsel %vm1775, %v9209, 0
    %v9360 = vsel %vm1775, %v9210, 0
    %v9363 = vsel %vm1775, %v9211, 0
    %v9366 = vsel %vm1775, %v9212, 0
    %v9369 = vsel %vm1775, %v9213, 0
    %v9372 = vsel %vm1775, %v9214, 0
    %v9375 = vsel %vm1775, %v9215, 0
    %v9378 = vsel %vm1775, %v9216, 0
    %v9381 = vsel %vm1775, %v9217, 0
    %v9384 = vsel %vm1775, %v9218, 0
    %v9387 = vsel %vm1775, %v9219, 0
    %v9390 = vsel %vm1775, %v9220, 0
    %v9393 = vsel %vm1775, %v9221, 0
    %v9396 = vsel %vm1775, %v9222, 0
    %v9399 = vsel %vm1775, %v9223, 0
    %v9402 = vsel %vm1775, %v9224, 0
    %v9405 = vsel %vm1775, %v9225, 0
    %v9408 = vsel %vm1775, %v9226, 0
    %v9411 = vsel %vm1775, %v9227, 0
    %v9414 = vsel %vm1775, %v9228, 0
    %v9417 = vsel %vm1775, %v9229, 0
    %v9420 = vsel %vm1775, %v9230, 0
    %v9423 = vsel %vm1775, %v9231, 0
    %v9426 = vsel %vm1775, %v9232, 0
    %v9429 = vsel %vm1775, %v9233, 0
    %v9432 = vsel %vm1775, %v9234, 0
    %v9435 = vsel %vm1775, %v9235, 0
    %v9438 = vsel %vm1775, %v9236, 0
    %v9441 = vsel %vm1775, %v9237, 0
    %v9444 = vsel %vm1775, %v9238, 0
    %v9447 = vsel %vm1775, %v9239, 0
    %v9450 = vsel %vm1775, %v9240, 0
    %v9453 = vsel %vm1775, %v9241, 0
    %v9456 = vsel %vm1775, %v9242, 0
    %v9459 = vsel %vm1775, %v9243, 0
    %v9462 = vsel %vm1775, %v9244, 0
    %v9465 = vsel %vm1775, %v9245, 0
    %v9468 = vsel %vm1775, %v9246, 0
    %v9471 = vsel %vm1775, %v9247, 0
    %9473 = vmatpush.bf16.msra.mxu0 0
    %9474 = vmatpush.bf16.msra.mxu0 0
    %9475 = vmatpush.bf16.msra.mxu0 0
    %9476 = vmatpush.bf16.msra.mxu0 0
    %9477 = vmatpush.bf16.msra.mxu0 %v9276
    %9478 = vmatpush.bf16.msra.mxu0 %v9275
    %9479 = vmatpush.bf16.msra.mxu0 %v9274
    %9480 = vmatpush.bf16.msra.mxu0 %v9273
    %9481 = vmatmul.bf16.gmra.mxu0 %v9282
    %v9482 = vpop.f32.mrf.mxu0
    %v9483 = vadd.f32 0.0, %v9482
    %v9484 = vpop.f32.mrf.mxu0
    %v9485 = vadd.f32 0.0, %v9484
    %9486 = vmatmul.bf16.gmra.mxu0 %v9285
    %v9487 = vpop.f32.mrf.mxu0
    %v9488 = vadd.f32 0.0, %v9487
    %v9489 = vpop.f32.mrf.mxu0
    %v9490 = vadd.f32 0.0, %v9489
    %9491 = vmatmul.bf16.gmra.mxu0 %v9288
    %v9492 = vpop.f32.mrf.mxu0
    %v9493 = vadd.f32 0.0, %v9492
    %v9494 = vpop.f32.mrf.mxu0
    %v9495 = vadd.f32 0.0, %v9494
    %9496 = vmatmul.bf16.gmra.mxu0 %v9291
    %v9497 = vpop.f32.mrf.mxu0
    %v9498 = vadd.f32 0.0, %v9497
    %v9499 = vpop.f32.mrf.mxu0
    %v9500 = vadd.f32 0.0, %v9499
    %9501 = vmatmul.bf16.gmra.mxu0 %v9294
    %v9502 = vpop.f32.mrf.mxu0
    %v9503 = vadd.f32 0.0, %v9502
    %v9504 = vpop.f32.mrf.mxu0
    %v9505 = vadd.f32 0.0, %v9504
    %9506 = vmatmul.bf16.gmra.mxu0 %v9297
    %v9507 = vpop.f32.mrf.mxu0
    %v9508 = vadd.f32 0.0, %v9507
    %v9509 = vpop.f32.mrf.mxu0
    %v9510 = vadd.f32 0.0, %v9509
    %9511 = vmatmul.bf16.gmra.mxu0 %v9300
    %v9512 = vpop.f32.mrf.mxu0
    %v9513 = vadd.f32 0.0, %v9512
    %v9514 = vpop.f32.mrf.mxu0
    %v9515 = vadd.f32 0.0, %v9514
    %9516 = vmatmul.bf16.gmra.mxu0 %v9303
    %v9517 = vpop.f32.mrf.mxu0
    %v9518 = vadd.f32 0.0, %v9517
    %v9519 = vpop.f32.mrf.mxu0
    %v9520 = vadd.f32 0.0, %v9519
    %9521 = vmatmul.bf16.gmra.mxu0 %v9306
    %v9522 = vpop.f32.mrf.mxu0
    %v9523 = vadd.f32 0.0, %v9522
    %v9524 = vpop.f32.mrf.mxu0
    %v9525 = vadd.f32 0.0, %v9524
    %9526 = vmatmul.bf16.gmra.mxu0 %v9309
    %v9527 = vpop.f32.mrf.mxu0
    %v9528 = vadd.f32 0.0, %v9527
    %v9529 = vpop.f32.mrf.mxu0
    %v9530 = vadd.f32 0.0, %v9529
    %9531 = vmatmul.bf16.gmra.mxu0 %v9312
    %v9532 = vpop.f32.mrf.mxu0
    %v9533 = vadd.f32 0.0, %v9532
    %v9534 = vpop.f32.mrf.mxu0
    %v9535 = vadd.f32 0.0, %v9534
    %9536 = vmatmul.bf16.gmra.mxu0 %v9315
    %v9537 = vpop.f32.mrf.mxu0
    %v9538 = vadd.f32 0.0, %v9537
    %v9539 = vpop.f32.mrf.mxu0
    %v9540 = vadd.f32 0.0, %v9539
    %9541 = vmatmul.bf16.gmra.mxu0 %v9318
    %v9542 = vpop.f32.mrf.mxu0
    %v9543 = vadd.f32 0.0, %v9542
    %v9544 = vpop.f32.mrf.mxu0
    %v9545 = vadd.f32 0.0, %v9544
    %9546 = vmatmul.bf16.gmra.mxu0 %v9321
    %v9547 = vpop.f32.mrf.mxu0
    %v9548 = vadd.f32 0.0, %v9547
    %v9549 = vpop.f32.mrf.mxu0
    %v9550 = vadd.f32 0.0, %v9549
    %9551 = vmatmul.bf16.gmra.mxu0 %v9324
    %v9552 = vpop.f32.mrf.mxu0
    %v9553 = vadd.f32 0.0, %v9552
    %v9554 = vpop.f32.mrf.mxu0
    %v9555 = vadd.f32 0.0, %v9554
    %9556 = vmatmul.bf16.gmra.mxu0 %v9327
    %v9557 = vpop.f32.mrf.mxu0
    %v9558 = vadd.f32 0.0, %v9557
    %v9559 = vpop.f32.mrf.mxu0
    %v9560 = vadd.f32 0.0, %v9559
    %9561 = vmatmul.bf16.gmra.mxu0 %v9330
    %v9562 = vpop.f32.mrf.mxu0
    %v9563 = vadd.f32 0.0, %v9562
    %v9564 = vpop.f32.mrf.mxu0
    %v9565 = vadd.f32 0.0, %v9564
    %9566 = vmatmul.bf16.gmra.mxu0 %v9333
    %v9567 = vpop.f32.mrf.mxu0
    %v9568 = vadd.f32 0.0, %v9567
    %v9569 = vpop.f32.mrf.mxu0
    %v9570 = vadd.f32 0.0, %v9569
    %9571 = vmatmul.bf16.gmra.mxu0 %v9336
    %v9572 = vpop.f32.mrf.mxu0
    %v9573 = vadd.f32 0.0, %v9572
    %v9574 = vpop.f32.mrf.mxu0
    %v9575 = vadd.f32 0.0, %v9574
    %9576 = vmatmul.bf16.gmra.mxu0 %v9339
    %v9577 = vpop.f32.mrf.mxu0
    %v9578 = vadd.f32 0.0, %v9577
    %v9579 = vpop.f32.mrf.mxu0
    %v9580 = vadd.f32 0.0, %v9579
    %9581 = vmatmul.bf16.gmra.mxu0 %v9342
    %v9582 = vpop.f32.mrf.mxu0
    %v9583 = vadd.f32 0.0, %v9582
    %v9584 = vpop.f32.mrf.mxu0
    %v9585 = vadd.f32 0.0, %v9584
    %9586 = vmatmul.bf16.gmra.mxu0 %v9345
    %v9587 = vpop.f32.mrf.mxu0
    %v9588 = vadd.f32 0.0, %v9587
    %v9589 = vpop.f32.mrf.mxu0
    %v9590 = vadd.f32 0.0, %v9589
    %9591 = vmatmul.bf16.gmra.mxu0 %v9348
    %v9592 = vpop.f32.mrf.mxu0
    %v9593 = vadd.f32 0.0, %v9592
    %v9594 = vpop.f32.mrf.mxu0
    %v9595 = vadd.f32 0.0, %v9594
    %9596 = vmatmul.bf16.gmra.mxu0 %v9351
    %v9597 = vpop.f32.mrf.mxu0
    %v9598 = vadd.f32 0.0, %v9597
    %v9599 = vpop.f32.mrf.mxu0
    %v9600 = vadd.f32 0.0, %v9599
    %9601 = vmatmul.bf16.gmra.mxu0 %v9354
    %v9602 = vpop.f32.mrf.mxu0
    %v9603 = vadd.f32 0.0, %v9602
    %v9604 = vpop.f32.mrf.mxu0
    %v9605 = vadd.f32 0.0, %v9604
    %9606 = vmatmul.bf16.gmra.mxu0 %v9357
    %v9607 = vpop.f32.mrf.mxu0
    %v9608 = vadd.f32 0.0, %v9607
    %v9609 = vpop.f32.mrf.mxu0
    %v9610 = vadd.f32 0.0, %v9609
    %9611 = vmatmul.bf16.gmra.mxu0 %v9360
    %v9612 = vpop.f32.mrf.mxu0
    %v9613 = vadd.f32 0.0, %v9612
    %v9614 = vpop.f32.mrf.mxu0
    %v9615 = vadd.f32 0.0, %v9614
    %9616 = vmatmul.bf16.gmra.mxu0 %v9363
    %v9617 = vpop.f32.mrf.mxu0
    %v9618 = vadd.f32 0.0, %v9617
    %v9619 = vpop.f32.mrf.mxu0
    %v9620 = vadd.f32 0.0, %v9619
    %9621 = vmatmul.bf16.gmra.mxu0 %v9366
    %v9622 = vpop.f32.mrf.mxu0
    %v9623 = vadd.f32 0.0, %v9622
    %v9624 = vpop.f32.mrf.mxu0
    %v9625 = vadd.f32 0.0, %v9624
    %9626 = vmatmul.bf16.gmra.mxu0 %v9369
    %v9627 = vpop.f32.mrf.mxu0
    %v9628 = vadd.f32 0.0, %v9627
    %v9629 = vpop.f32.mrf.mxu0
    %v9630 = vadd.f32 0.0, %v9629
    %9631 = vmatmul.bf16.gmra.mxu0 %v9372
    %v9632 = vpop.f32.mrf.mxu0
    %v9633 = vadd.f32 0.0, %v9632
    %v9634 = vpop.f32.mrf.mxu0
    %v9635 = vadd.f32 0.0, %v9634
    %9636 = vmatmul.bf16.gmra.mxu0 %v9375
    %v9637 = vpop.f32.mrf.mxu0
    %v9638 = vadd.f32 0.0, %v9637
    %v9639 = vpop.f32.mrf.mxu0
    %v9640 = vadd.f32 0.0, %v9639
    %9641 = vmatmul.bf16.gmra.mxu0 %v9378
    %v9642 = vpop.f32.mrf.mxu0
    %v9643 = vadd.f32 0.0, %v9642
    %v9644 = vpop.f32.mrf.mxu0
    %v9645 = vadd.f32 0.0, %v9644
    %9646 = vmatmul.bf16.gmra.mxu0 %v9381
    %v9647 = vpop.f32.mrf.mxu0
    %v9648 = vadd.f32 0.0, %v9647
    %v9649 = vpop.f32.mrf.mxu0
    %v9650 = vadd.f32 0.0, %v9649
    %9651 = vmatmul.bf16.gmra.mxu0 %v9384
    %v9652 = vpop.f32.mrf.mxu0
    %v9653 = vadd.f32 0.0, %v9652
    %v9654 = vpop.f32.mrf.mxu0
    %v9655 = vadd.f32 0.0, %v9654
    %9656 = vmatmul.bf16.gmra.mxu0 %v9387
    %v9657 = vpop.f32.mrf.mxu0
    %v9658 = vadd.f32 0.0, %v9657
    %v9659 = vpop.f32.mrf.mxu0
    %v9660 = vadd.f32 0.0, %v9659
    %9661 = vmatmul.bf16.gmra.mxu0 %v9390
    %v9662 = vpop.f32.mrf.mxu0
    %v9663 = vadd.f32 0.0, %v9662
    %v9664 = vpop.f32.mrf.mxu0
    %v9665 = vadd.f32 0.0, %v9664
    %9666 = vmatmul.bf16.gmra.mxu0 %v9393
    %v9667 = vpop.f32.mrf.mxu0
    %v9668 = vadd.f32 0.0, %v9667
    %v9669 = vpop.f32.mrf.mxu0
    %v9670 = vadd.f32 0.0, %v9669
    %9671 = vmatmul.bf16.gmra.mxu0 %v9396
    %v9672 = vpop.f32.mrf.mxu0
    %v9673 = vadd.f32 0.0, %v9672
    %v9674 = vpop.f32.mrf.mxu0
    %v9675 = vadd.f32 0.0, %v9674
    %9676 = vmatmul.bf16.gmra.mxu0 %v9399
    %v9677 = vpop.f32.mrf.mxu0
    %v9678 = vadd.f32 0.0, %v9677
    %v9679 = vpop.f32.mrf.mxu0
    %v9680 = vadd.f32 0.0, %v9679
    %9681 = vmatmul.bf16.gmra.mxu0 %v9402
    %v9682 = vpop.f32.mrf.mxu0
    %v9683 = vadd.f32 0.0, %v9682
    %v9684 = vpop.f32.mrf.mxu0
    %v9685 = vadd.f32 0.0, %v9684
    %9686 = vmatmul.bf16.gmra.mxu0 %v9405
    %v9687 = vpop.f32.mrf.mxu0
    %v9688 = vadd.f32 0.0, %v9687
    %v9689 = vpop.f32.mrf.mxu0
    %v9690 = vadd.f32 0.0, %v9689
    %9691 = vmatmul.bf16.gmra.mxu0 %v9408
    %v9692 = vpop.f32.mrf.mxu0
    %v9693 = vadd.f32 0.0, %v9692
    %v9694 = vpop.f32.mrf.mxu0
    %v9695 = vadd.f32 0.0, %v9694
    %9696 = vmatmul.bf16.gmra.mxu0 %v9411
    %v9697 = vpop.f32.mrf.mxu0
    %v9698 = vadd.f32 0.0, %v9697
    %v9699 = vpop.f32.mrf.mxu0
    %v9700 = vadd.f32 0.0, %v9699
    %9701 = vmatmul.bf16.gmra.mxu0 %v9414
    %v9702 = vpop.f32.mrf.mxu0
    %v9703 = vadd.f32 0.0, %v9702
    %v9704 = vpop.f32.mrf.mxu0
    %v9705 = vadd.f32 0.0, %v9704
    %9706 = vmatmul.bf16.gmra.mxu0 %v9417
    %v9707 = vpop.f32.mrf.mxu0
    %v9708 = vadd.f32 0.0, %v9707
    %v9709 = vpop.f32.mrf.mxu0
    %v9710 = vadd.f32 0.0, %v9709
    %9711 = vmatmul.bf16.gmra.mxu0 %v9420
    %v9712 = vpop.f32.mrf.mxu0
    %v9713 = vadd.f32 0.0, %v9712
    %v9714 = vpop.f32.mrf.mxu0
    %v9715 = vadd.f32 0.0, %v9714
    %9716 = vmatmul.bf16.gmra.mxu0 %v9423
    %v9717 = vpop.f32.mrf.mxu0
    %v9718 = vadd.f32 0.0, %v9717
    %v9719 = vpop.f32.mrf.mxu0
    %v9720 = vadd.f32 0.0, %v9719
    %9721 = vmatmul.bf16.gmra.mxu0 %v9426
    %v9722 = vpop.f32.mrf.mxu0
    %v9723 = vadd.f32 0.0, %v9722
    %v9724 = vpop.f32.mrf.mxu0
    %v9725 = vadd.f32 0.0, %v9724
    %9726 = vmatmul.bf16.gmra.mxu0 %v9429
    %v9727 = vpop.f32.mrf.mxu0
    %v9728 = vadd.f32 0.0, %v9727
    %v9729 = vpop.f32.mrf.mxu0
    %v9730 = vadd.f32 0.0, %v9729
    %9731 = vmatmul.bf16.gmra.mxu0 %v9432
    %v9732 = vpop.f32.mrf.mxu0
    %v9733 = vadd.f32 0.0, %v9732
    %v9734 = vpop.f32.mrf.mxu0
    %v9735 = vadd.f32 0.0, %v9734
    %9736 = vmatmul.bf16.gmra.mxu0 %v9435
    %v9737 = vpop.f32.mrf.mxu0
    %v9738 = vadd.f32 0.0, %v9737
    %v9739 = vpop.f32.mrf.mxu0
    %v9740 = vadd.f32 0.0, %v9739
    %9741 = vmatmul.bf16.gmra.mxu0 %v9438
    %v9742 = vpop.f32.mrf.mxu0
    %v9743 = vadd.f32 0.0, %v9742
    %v9744 = vpop.f32.mrf.mxu0
    %v9745 = vadd.f32 0.0, %v9744
    %9746 = vmatmul.bf16.gmra.mxu0 %v9441
    %v9747 = vpop.f32.mrf.mxu0
    %v9748 = vadd.f32 0.0, %v9747
    %v9749 = vpop.f32.mrf.mxu0
    %v9750 = vadd.f32 0.0, %v9749
    %9751 = vmatmul.bf16.gmra.mxu0 %v9444
    %v9752 = vpop.f32.mrf.mxu0
    %v9753 = vadd.f32 0.0, %v9752
    %v9754 = vpop.f32.mrf.mxu0
    %v9755 = vadd.f32 0.0, %v9754
    %9756 = vmatmul.bf16.gmra.mxu0 %v9447
    %v9757 = vpop.f32.mrf.mxu0
    %v9758 = vadd.f32 0.0, %v9757
    %v9759 = vpop.f32.mrf.mxu0
    %v9760 = vadd.f32 0.0, %v9759
    %9761 = vmatmul.bf16.gmra.mxu0 %v9450
    %v9762 = vpop.f32.mrf.mxu0
    %v9763 = vadd.f32 0.0, %v9762
    %v9764 = vpop.f32.mrf.mxu0
    %v9765 = vadd.f32 0.0, %v9764
    %9766 = vmatmul.bf16.gmra.mxu0 %v9453
    %v9767 = vpop.f32.mrf.mxu0
    %v9768 = vadd.f32 0.0, %v9767
    %v9769 = vpop.f32.mrf.mxu0
    %v9770 = vadd.f32 0.0, %v9769
    %9771 = vmatmul.bf16.gmra.mxu0 %v9456
    %v9772 = vpop.f32.mrf.mxu0
    %v9773 = vadd.f32 0.0, %v9772
    %v9774 = vpop.f32.mrf.mxu0
    %v9775 = vadd.f32 0.0, %v9774
    %9776 = vmatmul.bf16.gmra.mxu0 %v9459
    %v9777 = vpop.f32.mrf.mxu0
    %v9778 = vadd.f32 0.0, %v9777
    %v9779 = vpop.f32.mrf.mxu0
    %v9780 = vadd.f32 0.0, %v9779
    %9781 = vmatmul.bf16.gmra.mxu0 %v9462
    %v9782 = vpop.f32.mrf.mxu0
    %v9783 = vadd.f32 0.0, %v9782
    %v9784 = vpop.f32.mrf.mxu0
    %v9785 = vadd.f32 0.0, %v9784
    %9786 = vmatmul.bf16.gmra.mxu0 %v9465
    %v9787 = vpop.f32.mrf.mxu0
    %v9788 = vadd.f32 0.0, %v9787
    %v9789 = vpop.f32.mrf.mxu0
    %v9790 = vadd.f32 0.0, %v9789
    %9791 = vmatmul.bf16.gmra.mxu0 %v9468
    %v9792 = vpop.f32.mrf.mxu0
    %v9793 = vadd.f32 0.0, %v9792
    %v9794 = vpop.f32.mrf.mxu0
    %v9795 = vadd.f32 0.0, %v9794
    %9796 = vmatmul.bf16.gmra.mxu0 %v9471
    %v9797 = vpop.f32.mrf.mxu0
    %v9798 = vadd.f32 0.0, %v9797
    %v9799 = vpop.f32.mrf.mxu0
    %v9800 = vadd.f32 0.0, %v9799
    %9801 = vdwg.mxu0
    %v9802 = vadd.f32 %v8800, %v9483
    %v9803 = vadd.f32 %v8801, %v9485
    %v9804 = vadd.f32 %v8802, %v9488
    %v9805 = vadd.f32 %v8803, %v9490
    %v9806 = vadd.f32 %v8804, %v9493
    %v9807 = vadd.f32 %v8805, %v9495
    %v9808 = vadd.f32 %v8806, %v9498
    %v9809 = vadd.f32 %v8807, %v9500
    %v9810 = vadd.f32 %v8808, %v9503
    %v9811 = vadd.f32 %v8809, %v9505
    %v9812 = vadd.f32 %v8810, %v9508
    %v9813 = vadd.f32 %v8811, %v9510
    %v9814 = vadd.f32 %v8812, %v9513
    %v9815 = vadd.f32 %v8813, %v9515
    %v9816 = vadd.f32 %v8814, %v9518
    %v9817 = vadd.f32 %v8815, %v9520
    %v9818 = vadd.f32 %v8816, %v9523
    %v9819 = vadd.f32 %v8817, %v9525
    %v9820 = vadd.f32 %v8818, %v9528
    %v9821 = vadd.f32 %v8819, %v9530
    %v9822 = vadd.f32 %v8820, %v9533
    %v9823 = vadd.f32 %v8821, %v9535
    %v9824 = vadd.f32 %v8822, %v9538
    %v9825 = vadd.f32 %v8823, %v9540
    %v9826 = vadd.f32 %v8824, %v9543
    %v9827 = vadd.f32 %v8825, %v9545
    %v9828 = vadd.f32 %v8826, %v9548
    %v9829 = vadd.f32 %v8827, %v9550
    %v9830 = vadd.f32 %v8828, %v9553
    %v9831 = vadd.f32 %v8829, %v9555
    %v9832 = vadd.f32 %v8830, %v9558
    %v9833 = vadd.f32 %v8831, %v9560
    %v9834 = vadd.f32 %v8832, %v9563
    %v9835 = vadd.f32 %v8833, %v9565
    %v9836 = vadd.f32 %v8834, %v9568
    %v9837 = vadd.f32 %v8835, %v9570
    %v9838 = vadd.f32 %v8836, %v9573
    %v9839 = vadd.f32 %v8837, %v9575
    %v9840 = vadd.f32 %v8838, %v9578
    %v9841 = vadd.f32 %v8839, %v9580
    %v9842 = vadd.f32 %v8840, %v9583
    %v9843 = vadd.f32 %v8841, %v9585
    %v9844 = vadd.f32 %v8842, %v9588
    %v9845 = vadd.f32 %v8843, %v9590
    %v9846 = vadd.f32 %v8844, %v9593
    %v9847 = vadd.f32 %v8845, %v9595
    %v9848 = vadd.f32 %v8846, %v9598
    %v9849 = vadd.f32 %v8847, %v9600
    %v9850 = vadd.f32 %v8848, %v9603
    %v9851 = vadd.f32 %v8849, %v9605
    %v9852 = vadd.f32 %v8850, %v9608
    %v9853 = vadd.f32 %v8851, %v9610
    %v9854 = vadd.f32 %v8852, %v9613
    %v9855 = vadd.f32 %v8853, %v9615
    %v9856 = vadd.f32 %v8854, %v9618
    %v9857 = vadd.f32 %v8855, %v9620
    %v9858 = vadd.f32 %v8856, %v9623
    %v9859 = vadd.f32 %v8857, %v9625
    %v9860 = vadd.f32 %v8858, %v9628
    %v9861 = vadd.f32 %v8859, %v9630
    %v9862 = vadd.f32 %v8860, %v9633
    %v9863 = vadd.f32 %v8861, %v9635
    %v9864 = vadd.f32 %v8862, %v9638
    %v9865 = vadd.f32 %v8863, %v9640
    %v9866 = vadd.f32 %v8864, %v9643
    %v9867 = vadd.f32 %v8865, %v9645
    %v9868 = vadd.f32 %v8866, %v9648
    %v9869 = vadd.f32 %v8867, %v9650
    %v9870 = vadd.f32 %v8868, %v9653
    %v9871 = vadd.f32 %v8869, %v9655
    %v9872 = vadd.f32 %v8870, %v9658
    %v9873 = vadd.f32 %v8871, %v9660
    %v9874 = vadd.f32 %v8872, %v9663
    %v9875 = vadd.f32 %v8873, %v9665
    %v9876 = vadd.f32 %v8874, %v9668
    %v9877 = vadd.f32 %v8875, %v9670
    %v9878 = vadd.f32 %v8876, %v9673
    %v9879 = vadd.f32 %v8877, %v9675
    %v9880 = vadd.f32 %v8878, %v9678
    %v9881 = vadd.f32 %v8879, %v9680
    %v9882 = vadd.f32 %v8880, %v9683
    %v9883 = vadd.f32 %v8881, %v9685
    %v9884 = vadd.f32 %v8882, %v9688
    %v9885 = vadd.f32 %v8883, %v9690
    %v9886 = vadd.f32 %v8884, %v9693
    %v9887 = vadd.f32 %v8885, %v9695
    %v9888 = vadd.f32 %v8886, %v9698
    %v9889 = vadd.f32 %v8887, %v9700
    %v9890 = vadd.f32 %v8888, %v9703
    %v9891 = vadd.f32 %v8889, %v9705
    %v9892 = vadd.f32 %v8890, %v9708
    %v9893 = vadd.f32 %v8891, %v9710
    %v9894 = vadd.f32 %v8892, %v9713
    %v9895 = vadd.f32 %v8893, %v9715
    %v9896 = vadd.f32 %v8894, %v9718
    %v9897 = vadd.f32 %v8895, %v9720
    %v9898 = vadd.f32 %v8896, %v9723
    %v9899 = vadd.f32 %v8897, %v9725
    %v9900 = vadd.f32 %v8898, %v9728
    %v9901 = vadd.f32 %v8899, %v9730
    %v9902 = vadd.f32 %v8900, %v9733
    %v9903 = vadd.f32 %v8901, %v9735
    %v9904 = vadd.f32 %v8902, %v9738
    %v9905 = vadd.f32 %v8903, %v9740
    %v9906 = vadd.f32 %v8904, %v9743
    %v9907 = vadd.f32 %v8905, %v9745
    %v9908 = vadd.f32 %v8906, %v9748
    %v9909 = vadd.f32 %v8907, %v9750
    %v9910 = vadd.f32 %v8908, %v9753
    %v9911 = vadd.f32 %v8909, %v9755
    %v9912 = vadd.f32 %v8910, %v9758
    %v9913 = vadd.f32 %v8911, %v9760
    %v9914 = vadd.f32 %v8912, %v9763
    %v9915 = vadd.f32 %v8913, %v9765
    %v9916 = vadd.f32 %v8914, %v9768
    %v9917 = vadd.f32 %v8915, %v9770
    %v9918 = vadd.f32 %v8916, %v9773
    %v9919 = vadd.f32 %v8917, %v9775
    %v9920 = vadd.f32 %v8918, %v9778
    %v9921 = vadd.f32 %v8919, %v9780
    %v9922 = vadd.f32 %v8920, %v9783
    %v9923 = vadd.f32 %v8921, %v9785
    %v9924 = vadd.f32 %v8922, %v9788
    %v9925 = vadd.f32 %v8923, %v9790
    %v9926 = vadd.f32 %v8924, %v9793
    %v9927 = vadd.f32 %v8925, %v9795
    %v9928 = vadd.f32 %v8926, %v9798
    %v9929 = vadd.f32 %v8927, %v9800
    %9930 = vst.msk [vmem:[#allocation2] sm:$0xff] %vm1775, %v9802
    %9931 = vst.msk [vmem:[#allocation2 + $0x8] sm:$0xff] %vm1775, %v9803
    %9932 = vst.msk [vmem:[#allocation2 + $0x10] sm:$0xff] %vm1775, %v9804
    %9933 = vst.msk [vmem:[#allocation2 + $0x18] sm:$0xff] %vm1775, %v9805
    %9934 = vst.msk [vmem:[#allocation2 + $0x20] sm:$0xff] %vm1775, %v9806
    %9935 = vst.msk [vmem:[#allocation2 + $0x28] sm:$0xff] %vm1775, %v9807
    %9936 = vst.msk [vmem:[#allocation2 + $0x30] sm:$0xff] %vm1775, %v9808
    %9937 = vst.msk [vmem:[#allocation2 + $0x38] sm:$0xff] %vm1775, %v9809
    %9938 = vst.msk [vmem:[#allocation2 + $0x40] sm:$0xff] %vm1775, %v9810
    %9939 = vst.msk [vmem:[#allocation2 + $0x48] sm:$0xff] %vm1775, %v9811
    %9940 = vst.msk [vmem:[#allocation2 + $0x50] sm:$0xff] %vm1775, %v9812
    %9941 = vst.msk [vmem:[#allocation2 + $0x58] sm:$0xff] %vm1775, %v9813
    %9942 = vst.msk [vmem:[#allocation2 + $0x60] sm:$0xff] %vm1775, %v9814
    %9943 = vst.msk [vmem:[#allocation2 + $0x68] sm:$0xff] %vm1775, %v9815
    %9944 = vst.msk [vmem:[#allocation2 + $0x70] sm:$0xff] %vm1775, %v9816
    %9945 = vst.msk [vmem:[#allocation2 + $0x78] sm:$0xff] %vm1775, %v9817
    %9946 = vst.msk [vmem:[#allocation2 + $0x80] sm:$0xff] %vm1775, %v9818
    %9947 = vst.msk [vmem:[#allocation2 + $0x88] sm:$0xff] %vm1775, %v9819
    %9948 = vst.msk [vmem:[#allocation2 + $0x90] sm:$0xff] %vm1775, %v9820
    %9949 = vst.msk [vmem:[#allocation2 + $0x98] sm:$0xff] %vm1775, %v9821
    %9950 = vst.msk [vmem:[#allocation2 + $0xa0] sm:$0xff] %vm1775, %v9822
    %9951 = vst.msk [vmem:[#allocation2 + $0xa8] sm:$0xff] %vm1775, %v9823
    %9952 = vst.msk [vmem:[#allocation2 + $0xb0] sm:$0xff] %vm1775, %v9824
    %9953 = vst.msk [vmem:[#allocation2 + $0xb8] sm:$0xff] %vm1775, %v9825
    %9954 = vst.msk [vmem:[#allocation2 + $0xc0] sm:$0xff] %vm1775, %v9826
    %9955 = vst.msk [vmem:[#allocation2 + $0xc8] sm:$0xff] %vm1775, %v9827
    %9956 = vst.msk [vmem:[#allocation2 + $0xd0] sm:$0xff] %vm1775, %v9828
    %9957 = vst.msk [vmem:[#allocation2 + $0xd8] sm:$0xff] %vm1775, %v9829
    %9958 = vst.msk [vmem:[#allocation2 + $0xe0] sm:$0xff] %vm1775, %v9830
    %9959 = vst.msk [vmem:[#allocation2 + $0xe8] sm:$0xff] %vm1775, %v9831
    %9960 = vst.msk [vmem:[#allocation2 + $0xf0] sm:$0xff] %vm1775, %v9832
    %9961 = vst.msk [vmem:[#allocation2 + $0xf8] sm:$0xff] %vm1775, %v9833
    %9962 = vst.msk [vmem:[#allocation2 + $0x100] sm:$0xff] %vm1775, %v9834
    %9963 = vst.msk [vmem:[#allocation2 + $0x108] sm:$0xff] %vm1775, %v9835
    %9964 = vst.msk [vmem:[#allocation2 + $0x110] sm:$0xff] %vm1775, %v9836
    %9965 = vst.msk [vmem:[#allocation2 + $0x118] sm:$0xff] %vm1775, %v9837
    %9966 = vst.msk [vmem:[#allocation2 + $0x120] sm:$0xff] %vm1775, %v9838
    %9967 = vst.msk [vmem:[#allocation2 + $0x128] sm:$0xff] %vm1775, %v9839
    %9968 = vst.msk [vmem:[#allocation2 + $0x130] sm:$0xff] %vm1775, %v9840
    %9969 = vst.msk [vmem:[#allocation2 + $0x138] sm:$0xff] %vm1775, %v9841
    %9970 = vst.msk [vmem:[#allocation2 + $0x140] sm:$0xff] %vm1775, %v9842
    %9971 = vst.msk [vmem:[#allocation2 + $0x148] sm:$0xff] %vm1775, %v9843
    %9972 = vst.msk [vmem:[#allocation2 + $0x150] sm:$0xff] %vm1775, %v9844
    %9973 = vst.msk [vmem:[#allocation2 + $0x158] sm:$0xff] %vm1775, %v9845
    %9974 = vst.msk [vmem:[#allocation2 + $0x160] sm:$0xff] %vm1775, %v9846
    %9975 = vst.msk [vmem:[#allocation2 + $0x168] sm:$0xff] %vm1775, %v9847
    %9976 = vst.msk [vmem:[#allocation2 + $0x170] sm:$0xff] %vm1775, %v9848
    %9977 = vst.msk [vmem:[#allocation2 + $0x178] sm:$0xff] %vm1775, %v9849
    %9978 = vst.msk [vmem:[#allocation2 + $0x180] sm:$0xff] %vm1775, %v9850
    %9979 = vst.msk [vmem:[#allocation2 + $0x188] sm:$0xff] %vm1775, %v9851
    %9980 = vst.msk [vmem:[#allocation2 + $0x190] sm:$0xff] %vm1775, %v9852
    %9981 = vst.msk [vmem:[#allocation2 + $0x198] sm:$0xff] %vm1775, %v9853
    %9982 = vst.msk [vmem:[#allocation2 + $0x1a0] sm:$0xff] %vm1775, %v9854
    %9983 = vst.msk [vmem:[#allocation2 + $0x1a8] sm:$0xff] %vm1775, %v9855
    %9984 = vst.msk [vmem:[#allocation2 + $0x1b0] sm:$0xff] %vm1775, %v9856
    %9985 = vst.msk [vmem:[#allocation2 + $0x1b8] sm:$0xff] %vm1775, %v9857
    %9986 = vst.msk [vmem:[#allocation2 + $0x1c0] sm:$0xff] %vm1775, %v9858
    %9987 = vst.msk [vmem:[#allocation2 + $0x1c8] sm:$0xff] %vm1775, %v9859
    %9988 = vst.msk [vmem:[#allocation2 + $0x1d0] sm:$0xff] %vm1775, %v9860
    %9989 = vst.msk [vmem:[#allocation2 + $0x1d8] sm:$0xff] %vm1775, %v9861
    %9990 = vst.msk [vmem:[#allocation2 + $0x1e0] sm:$0xff] %vm1775, %v9862
    %9991 = vst.msk [vmem:[#allocation2 + $0x1e8] sm:$0xff] %vm1775, %v9863
    %9992 = vst.msk [vmem:[#allocation2 + $0x1f0] sm:$0xff] %vm1775, %v9864
    %9993 = vst.msk [vmem:[#allocation2 + $0x1f8] sm:$0xff] %vm1775, %v9865
    %9994 = vst.msk [vmem:[#allocation2 + $0x200] sm:$0xff] %vm1775, %v9866
    %9995 = vst.msk [vmem:[#allocation2 + $0x208] sm:$0xff] %vm1775, %v9867
    %9996 = vst.msk [vmem:[#allocation2 + $0x210] sm:$0xff] %vm1775, %v9868
    %9997 = vst.msk [vmem:[#allocation2 + $0x218] sm:$0xff] %vm1775, %v9869
    %9998 = vst.msk [vmem:[#allocation2 + $0x220] sm:$0xff] %vm1775, %v9870
    %9999 = vst.msk [vmem:[#allocation2 + $0x228] sm:$0xff] %vm1775, %v9871
    %10000 = vst.msk [vmem:[#allocation2 + $0x230] sm:$0xff] %vm1775, %v9872
    %10001 = vst.msk [vmem:[#allocation2 + $0x238] sm:$0xff] %vm1775, %v9873
    %10002 = vst.msk [vmem:[#allocation2 + $0x240] sm:$0xff] %vm1775, %v9874
    %10003 = vst.msk [vmem:[#allocation2 + $0x248] sm:$0xff] %vm1775, %v9875
    %10004 = vst.msk [vmem:[#allocation2 + $0x250] sm:$0xff] %vm1775, %v9876
    %10005 = vst.msk [vmem:[#allocation2 + $0x258] sm:$0xff] %vm1775, %v9877
    %10006 = vst.msk [vmem:[#allocation2 + $0x260] sm:$0xff] %vm1775, %v9878
    %10007 = vst.msk [vmem:[#allocation2 + $0x268] sm:$0xff] %vm1775, %v9879
    %10008 = vst.msk [vmem:[#allocation2 + $0x270] sm:$0xff] %vm1775, %v9880
    %10009 = vst.msk [vmem:[#allocation2 + $0x278] sm:$0xff] %vm1775, %v9881
    %10010 = vst.msk [vmem:[#allocation2 + $0x280] sm:$0xff] %vm1775, %v9882
    %10011 = vst.msk [vmem:[#allocation2 + $0x288] sm:$0xff] %vm1775, %v9883
    %10012 = vst.msk [vmem:[#allocation2 + $0x290] sm:$0xff] %vm1775, %v9884
    %10013 = vst.msk [vmem:[#allocation2 + $0x298] sm:$0xff] %vm1775, %v9885
    %10014 = vst.msk [vmem:[#allocation2 + $0x2a0] sm:$0xff] %vm1775, %v9886
    %10015 = vst.msk [vmem:[#allocation2 + $0x2a8] sm:$0xff] %vm1775, %v9887
    %10016 = vst.msk [vmem:[#allocation2 + $0x2b0] sm:$0xff] %vm1775, %v9888
    %10017 = vst.msk [vmem:[#allocation2 + $0x2b8] sm:$0xff] %vm1775, %v9889
    %10018 = vst.msk [vmem:[#allocation2 + $0x2c0] sm:$0xff] %vm1775, %v9890
    %10019 = vst.msk [vmem:[#allocation2 + $0x2c8] sm:$0xff] %vm1775, %v9891
    %10020 = vst.msk [vmem:[#allocation2 + $0x2d0] sm:$0xff] %vm1775, %v9892
    %10021 = vst.msk [vmem:[#allocation2 + $0x2d8] sm:$0xff] %vm1775, %v9893
    %10022 = vst.msk [vmem:[#allocation2 + $0x2e0] sm:$0xff] %vm1775, %v9894
    %10023 = vst.msk [vmem:[#allocation2 + $0x2e8] sm:$0xff] %vm1775, %v9895
    %10024 = vst.msk [vmem:[#allocation2 + $0x2f0] sm:$0xff] %vm1775, %v9896
    %10025 = vst.msk [vmem:[#allocation2 + $0x2f8] sm:$0xff] %vm1775, %v9897
    %10026 = vst.msk [vmem:[#allocation2 + $0x300] sm:$0xff] %vm1775, %v9898
    %10027 = vst.msk [vmem:[#allocation2 + $0x308] sm:$0xff] %vm1775, %v9899
    %10028 = vst.msk [vmem:[#allocation2 + $0x310] sm:$0xff] %vm1775, %v9900
    %10029 = vst.msk [vmem:[#allocation2 + $0x318] sm:$0xff] %vm1775, %v9901
    %10030 = vst.msk [vmem:[#allocation2 + $0x320] sm:$0xff] %vm1775, %v9902
    %10031 = vst.msk [vmem:[#allocation2 + $0x328] sm:$0xff] %vm1775, %v9903
    %10032 = vst.msk [vmem:[#allocation2 + $0x330] sm:$0xff] %vm1775, %v9904
    %10033 = vst.msk [vmem:[#allocation2 + $0x338] sm:$0xff] %vm1775, %v9905
    %10034 = vst.msk [vmem:[#allocation2 + $0x340] sm:$0xff] %vm1775, %v9906
    %10035 = vst.msk [vmem:[#allocation2 + $0x348] sm:$0xff] %vm1775, %v9907
    %10036 = vst.msk [vmem:[#allocation2 + $0x350] sm:$0xff] %vm1775, %v9908
    %10037 = vst.msk [vmem:[#allocation2 + $0x358] sm:$0xff] %vm1775, %v9909
    %10038 = vst.msk [vmem:[#allocation2 + $0x360] sm:$0xff] %vm1775, %v9910
    %10039 = vst.msk [vmem:[#allocation2 + $0x368] sm:$0xff] %vm1775, %v9911
    %10040 = vst.msk [vmem:[#allocation2 + $0x370] sm:$0xff] %vm1775, %v9912
    %10041 = vst.msk [vmem:[#allocation2 + $0x378] sm:$0xff] %vm1775, %v9913
    %10042 = vst.msk [vmem:[#allocation2 + $0x380] sm:$0xff] %vm1775, %v9914
    %10043 = vst.msk [vmem:[#allocation2 + $0x388] sm:$0xff] %vm1775, %v9915
    %10044 = vst.msk [vmem:[#allocation2 + $0x390] sm:$0xff] %vm1775, %v9916
    %10045 = vst.msk [vmem:[#allocation2 + $0x398] sm:$0xff] %vm1775, %v9917
    %10046 = vst.msk [vmem:[#allocation2 + $0x3a0] sm:$0xff] %vm1775, %v9918
    %10047 = vst.msk [vmem:[#allocation2 + $0x3a8] sm:$0xff] %vm1775, %v9919
    %10048 = vst.msk [vmem:[#allocation2 + $0x3b0] sm:$0xff] %vm1775, %v9920
    %10049 = vst.msk [vmem:[#allocation2 + $0x3b8] sm:$0xff] %vm1775, %v9921
    %10050 = vst.msk [vmem:[#allocation2 + $0x3c0] sm:$0xff] %vm1775, %v9922
    %10051 = vst.msk [vmem:[#allocation2 + $0x3c8] sm:$0xff] %vm1775, %v9923
    %10052 = vst.msk [vmem:[#allocation2 + $0x3d0] sm:$0xff] %vm1775, %v9924
    %10053 = vst.msk [vmem:[#allocation2 + $0x3d8] sm:$0xff] %vm1775, %v9925
    %10054 = vst.msk [vmem:[#allocation2 + $0x3e0] sm:$0xff] %vm1775, %v9926
    %10055 = vst.msk [vmem:[#allocation2 + $0x3e8] sm:$0xff] %vm1775, %v9927
    %10056 = vst.msk [vmem:[#allocation2 + $0x3f0] sm:$0xff] %vm1775, %v9928
    %10057 = vst.msk [vmem:[#allocation2 + $0x3f8] sm:$0xff] %vm1775, %v9929
    // Predicated region
    $region10: #{cdcconv_forward.1} parent=1 // pred_check
      _
    $region11: #{cdcconv_forward.1} parent=1 // pred_check_branch
      %10059 = sbr.rel (0) target = $region13
    $region12: #{cdcconv_forward.1} parent=1 // pred_region
      %10061 = vsyncadd [#allocation3], 0
      %s10062 = sshll.u32 [#allocation2], 4
      %s10063 = int_to_ptr.vmem [resolvable:$true] %s10062
      %s10064 = sshll.u32 %s2, 4
      %s10065 = int_to_ptr.hbm [resolvable:$true] %s10064
      %10070 = dma.vmem_to_hbm [thread:$0]  %s10063, 16384, %s10065, [#allocation3], 128, 128, 8
    $region13: #{cdcconv_forward.1} parent=1 // pred_fallthru
      _
    // Predicated region
    $region14: #{cdcconv_forward.1} parent=1 // pred_check
      _
    $region15: #{cdcconv_forward.1} parent=1 // pred_check_branch
      %10072 = sbr.rel (0) target = $region17
    $region16: #{cdcconv_forward.1} parent=1 // pred_region
      %10074 = dma.done [#allocation3], 16384
    $region17: #{cdcconv_forward.1} parent=1 // pred_fallthru
      _
    %10075 = vsyncpa [#allocation3], 1

</llo_original>
